<compile_context>
chip_gen: v6e
topology: v6e:2x2x1
jax: 0.10.0
libtpu: 0.0.40
codegen_flags: <defaults>
</compile_context>

<pallas_src>
import functools
import math

import jax
import jax.numpy as jnp
from jax.experimental import pallas as pl
from jax.experimental.pallas import tpu as pltpu


# ----------------------------------------------------------------------------
# helpers
# ----------------------------------------------------------------------------
def _mish(y):
    # mish(y) = y * tanh(softplus(y)).  Single-exp form:
    #   t = exp(-|y|)
    #   y >= 0: tanh(sp) = (1 + 2t) / (1 + 2t + 2t^2)
    #   y <  0: tanh(sp) = (2t + t^2) / (2 + 2t + t^2)
    # One EUP exp + one EUP approx reciprocal (+ a VPU Newton step) per element.
    t = jnp.exp(-jnp.abs(y))
    t2 = t * t
    nonneg = y >= 0.0
    num = jnp.where(nonneg, 1.0 + 2.0 * t, 2.0 * t + t2)
    den = jnp.where(nonneg, 1.0 + 2.0 * t + 2.0 * t2, 2.0 + 2.0 * t + t2)
    r = pl.reciprocal(den, approx=True)
    r = r * (2.0 - den * r)            # Newton refinement -> ~f32-exact divide
    return y * num * r


def _mish_ref(y):                      # pure-JAX reference mish
    return y * jnp.tanh(jax.nn.softplus(y))


def _pick_row_tile(n_rows, block_rows):
    """Largest row tile that fits, but keep >=2 grid steps when rows allow it so
    both v7x TensorCores get work (no effect on v5e/v6e)."""
    tm = min(n_rows, block_rows)
    if tm == n_rows and n_rows >= 16 and n_rows % 16 == 0:
        tm = n_rows // 2
    return tm


def _pick_groups(n_groups, max_groups):
    """Patch-groups per grid step: >=2 'parallel' steps when possible (v7x) and
    bounded by max_groups (VMEM budget; keep ~64 for v7x's 64 MiB VMEM)."""
    n_steps = pl.cdiv(n_groups, max_groups)
    if n_groups > 1:
        n_steps = max(2, n_steps)
    return pl.cdiv(n_groups, n_steps)


# ----------------------------------------------------------------------------
# Row-tiled pointwise (1x1) conv: (N, Cin) @ (Cin, Cout) + bias [+ Mish]
#   - grid over row tiles, bf16 resident weights, "parallel" semantics
# ----------------------------------------------------------------------------
def _matmul_bias_kernel(x_ref, w_ref, b_ref, o_ref, *, activation):
    y = jnp.dot(x_ref[...].astype(jnp.bfloat16), w_ref[...],
                preferred_element_type=jnp.float32)
    y = y + b_ref[...]
    if activation == "mish":
        y = _mish(y)
    o_ref[...] = y.astype(o_ref.dtype)


def pointwise_conv(x2d, w, b, activation=None, block_rows=1024):
    N, Cin = x2d.shape
    Cout = w.shape[1]
    tm = _pick_row_tile(N, block_rows)
    n_pad = pl.cdiv(N, tm) * tm
    if n_pad != N:                      # zero-pad tail: zeros stay finite in mish
        x2d = jnp.concatenate([x2d, jnp.zeros((n_pad - N, Cin), x2d.dtype)], axis=0)
    grid = (n_pad // tm,)
    cost = pl.CostEstimate(
        flops=int(2 * N * Cin * Cout),
        transcendentals=int(N * Cout) if activation == "mish" else 0,
        bytes_accessed=int(4 * N * (Cin + Cout) + 2 * Cin * Cout + 4 * Cout),
    )
    out = pl.pallas_call(
        functools.partial(_matmul_bias_kernel, activation=activation),
        out_shape=jax.ShapeDtypeStruct((n_pad, Cout), jnp.float32),
        grid=grid,
        in_specs=[
            pl.BlockSpec((tm, Cin), lambda i: (i, 0)),
            pl.BlockSpec((Cin, Cout), lambda i: (0, 0)),     # resident bf16 weights
            pl.BlockSpec((1, Cout), lambda i: (0, 0)),       # resident bias
        ],
        out_specs=pl.BlockSpec((tm, Cout), lambda i: (i, 0)),
        compiler_params=pltpu.CompilerParams(
            dimension_semantics=("parallel",),
            vmem_limit_bytes=32 * 1024 * 1024,
        ),
        cost_estimate=cost,
    )(x2d, w.astype(jnp.bfloat16), b.reshape(1, Cout))
    return out[:N]


# ----------------------------------------------------------------------------
# Fused stage kernel: per grid step a block of Gb patch-groups (Gb, P, Cin) is
#   (1) run through the stage-body pointwise conv + Mish (residual base `feat`),
#   (2) projected to per-head Q/K/V with host-split weights (2-D matmuls),
#   (3) attended per head via ONE batched einsum pair (softmax over the *query*
#       axis, torch Softmax(dim=-2)),
#   (4) head-concat folded into the first MLP matmul, Mish, second MLP matmul,
#   (5) residual-added and stored.  No HBM intermediates.
# ----------------------------------------------------------------------------
def _attention_stage_kernel(x_ref, sw_ref, sb_ref, wq_ref, wk_ref, wv_ref,
                            posq_ref, posk_ref, bv_ref, w1_ref, b1_ref,
                            w2_ref, b2_ref, o_ref, *, heads, pc, scale):
    gb, P, _ = x_ref.shape
    C = heads * pc
    GP = gb * P
    bf16 = jnp.bfloat16

    x_in = x_ref[...].reshape(GP, x_ref.shape[2])               # (GP, Cin) f32

    # (1) stage-body pointwise conv + Mish (stand-in for the ConvNeXt stage)
    feat = jnp.dot(x_in.astype(bf16), sw_ref[...],
                   preferred_element_type=jnp.float32) + sb_ref[...]
    feat = _mish(feat)                                          # (GP, C) residual base
    fb = feat.astype(bf16)

    # (2) per-head Q/K/V projections; weights pre-split on host -> no lane slicing
    q_parts, k_parts, v_parts = [], [], []
    for h in range(heads):
        qh = jnp.dot(fb, wq_ref[h], preferred_element_type=jnp.float32)
        kh = jnp.dot(fb, wk_ref[h], preferred_element_type=jnp.float32)
        vh = jnp.dot(fb, wv_ref[h], preferred_element_type=jnp.float32)
        q_parts.append(qh.reshape(gb, P, pc) + posq_ref[h])     # pos + bias folded
        k_parts.append(kh.reshape(gb, P, pc) + posk_ref[h])
        v_parts.append(vh.reshape(gb, P, pc) + bv_ref[h])

    # batch axis = (head, group): one batched einsum for scores / attend
    q = jnp.concatenate(q_parts, axis=0).astype(bf16)           # (heads*gb, P, pc)
    k = jnp.concatenate(k_parts, axis=0).astype(bf16)
    v = jnp.concatenate(v_parts, axis=0).astype(bf16)

    s = jnp.einsum("bpc,bqc->bpq", q, k,
                   preferred_element_type=jnp.float32) * scale  # (heads*gb, P, P)
    # torch.nn.Softmax(dim=-2): softmax over the query axis (axis 1 here)
    m = jnp.max(s, axis=1, keepdims=True)
    e = jnp.exp(s - m)
    den = jnp.sum(e, axis=1, keepdims=True)
    r = pl.reciprocal(den, approx=True)
    r = r * (2.0 - den * r)                                     # Newton step
    attn = e * r
    o = jnp.einsum("bpq,bqc->bpc", attn.astype(bf16), v,
                   preferred_element_type=jnp.float32)          # (heads*gb, P, pc)

    # (4) head-concat folded into MLP-1: concat_h(o_h) @ W1 == sum_h o_h @ W1_h
    h1 = None
    for h in range(heads):
        oh = o[h * gb:(h + 1) * gb].reshape(GP, pc).astype(bf16)
        part = jnp.dot(oh, w1_ref[h], preferred_element_type=jnp.float32)
        h1 = part if h1 is None else h1 + part
    h1 = _mish(h1 + b1_ref[...])
    y = jnp.dot(h1.astype(bf16), w2_ref[...],
                preferred_element_type=jnp.float32) + b2_ref[...]

    # (5) residual with the attention-layer input (= stage-body output)
    o_ref[...] = (y + feat).reshape(gb, P, C).astype(o_ref.dtype)


def attention_stage(x_nhwc, sw, sb, p, patch_size, heads, max_groups=64):
    """y = AttentionLayer(mish(pointwise_conv(x))) -- one fused pallas_call."""
    B, H, W, Cin = x_nhwc.shape
    ph, pw = patch_size
    C = p["mw2"].shape[1]
    pc = C // heads
    nH, nW = H // ph, W // pw
    P = ph * pw
    G = B * nH * nW
    scale = 1.0 / math.sqrt(pc)
    bf16 = jnp.bfloat16

    # XLA glue: (B,H,W,Cin) -> (G, P, Cin) patch groups; channels stay on lanes.
    xp = x_nhwc.reshape(B, nH, ph, nW, pw, Cin).transpose(0, 1, 3, 2, 4, 5)
    xp = xp.reshape(G, P, Cin)

    Gb = _pick_groups(G, max_groups)
    g_pad = pl.cdiv(G, Gb) * Gb
    if g_pad != G:                      # zero-pad tail groups (finite through softmax)
        xp = jnp.concatenate([xp, jnp.zeros((g_pad - G, P, Cin), xp.dtype)], axis=0)
    grid = (g_pad // Gb,)

    # Host-side (free) weight re-layout: bf16 weights, per-head splits, bias+pos fold.
    def split_cols(w):                  # (K, C) -> (heads, K, pc), head-major columns
        return w.reshape(w.shape[0], heads, pc).transpose(1, 0, 2).astype(bf16)

    wq3, wk3, wv3 = split_cols(p["wq"]), split_cols(p["wk"]), split_cols(p["wv"])
    posq = p["pos"][None] + p["bq"].reshape(heads, 1, pc)       # (heads, P, pc) f32
    posk = p["pos"][None] + p["bk"].reshape(heads, 1, pc)
    bv3 = p["bv"].reshape(heads, 1, pc)
    w13 = p["mw1"].reshape(heads, pc, C).astype(bf16)           # per-head W1 rows
    w2b = p["mw2"].astype(bf16)
    # NOTE: at real ConvNeXt channel counts, single-buffer these resident weights
    # (pipeline_mode=pl.Buffered(1)) to halve their VMEM footprint on v7x (64 MiB).

    cost = pl.CostEstimate(
        flops=int(2 * G * P * (Cin * C + 5 * C * C + 2 * P * C)),
        transcendentals=int(G * P * (2 * C + heads * P)),
        bytes_accessed=int(4 * G * P * (Cin + C) + 2 * (Cin * C + 5 * C * C)
                           + 4 * (2 * heads * P * pc + 4 * C)),
    )

    out = pl.pallas_call(
        functools.partial(_attention_stage_kernel, heads=heads, pc=pc, scale=scale),
        out_shape=jax.ShapeDtypeStruct((g_pad, P, C), jnp.float32),
        grid=grid,
        in_specs=[
            pl.BlockSpec((Gb, P, Cin), lambda g: (g, 0, 0)),          # streaming x
            pl.BlockSpec((Cin, C), lambda g: (0, 0)),                 # stage conv W
            pl.BlockSpec((1, C), lambda g: (0, 0)),                   # stage conv b
            pl.BlockSpec((heads, C, pc), lambda g: (0, 0, 0)),        # Wq per head
            pl.BlockSpec((heads, C, pc), lambda g: (0, 0, 0)),        # Wk per head
            pl.BlockSpec((heads, C, pc), lambda g: (0, 0, 0)),        # Wv per head
            pl.BlockSpec((heads, P, pc), lambda g: (0, 0, 0)),        # pos + bq
            pl.BlockSpec((heads, P, pc), lambda g: (0, 0, 0)),        # pos + bk
            pl.BlockSpec((heads, 1, pc), lambda g: (0, 0, 0)),        # bv
            pl.BlockSpec((heads, pc, C), lambda g: (0, 0, 0)),        # W1 per head
            pl.BlockSpec((1, C), lambda g: (0, 0)),                   # b1
            pl.BlockSpec((C, C), lambda g: (0, 0)),                   # W2
            pl.BlockSpec((1, C), lambda g: (0, 0)),                   # b2
        ],
        out_specs=pl.BlockSpec((Gb, P, C), lambda g: (g, 0, 0)),
        compiler_params=pltpu.CompilerParams(
            dimension_semantics=("parallel",),
            vmem_limit_bytes=32 * 1024 * 1024,
        ),
        cost_estimate=cost,
    )(xp, sw.astype(bf16), sb.reshape(1, C), wq3, wk3, wv3, posq, posk, bv3,
      w13, p["mb1"].reshape(1, C), w2b, p["mb2"].reshape(1, C))

    out = out[:G].reshape(B, nH, nW, ph, pw, C).transpose(0, 1, 3, 2, 4, 5)
    return out.reshape(B, H, W, C)


# Pure-JAX f32 reference of the fused stage (stage conv + Mish + AttentionLayer).
def attention_stage_ref(x_nhwc, sw, sb, p, patch_size, heads):
    feat = _mish_ref(x_nhwc @ sw + sb)
    B, H, W, C = feat.shape
    ph, pw = patch_size
    pc = C // heads
    nH, nW, P = H // ph, W // pw, ph * pw
    q = feat @ p["wq"] + p["bq"]
    k = feat @ p["wk"] + p["bk"]
    v = feat @ p["wv"] + p["bv"]

    def grp(t):
        t = t.reshape(B, nH, ph, nW, pw, heads, pc)
        return t.transpose(0, 1, 3, 5, 2, 4, 6).reshape(B, nH, nW, heads, P, pc)

    qg, kg, vg = grp(q) + p["pos"], grp(k) + p["pos"], grp(v)
    s = jnp.einsum("...pc,...qc->...pq", qg, kg) / math.sqrt(pc)
    a = jax.nn.softmax(s, axis=-2)            # torch Softmax(dim=-2)
    o = jnp.einsum("...pq,...qc->...pc", a, vg)
    o = o.reshape(B, nH, nW, heads, ph, pw, pc).transpose(0, 1, 4, 2, 5, 3, 6)
    o = o.reshape(B, H, W, C)
    h1 = _mish_ref(o @ p["mw1"] + p["mb1"])
    return h1 @ p["mw2"] + p["mb2"] + feat


# ----------------------------------------------------------------------------
# Backbone stand-in.
# TODO(synk): timm pretrained ConvNeXt stem/stages cannot be reproduced without a
# checkpoint; replaced with deterministic patchify + pointwise(Mish) stand-ins that
# preserve the spatial/channel progression (stride-4 stem, stride-2 stages).
# ----------------------------------------------------------------------------
def patchify_conv(x, w, b, patch):
    B, H, W, C = x.shape
    nH, nW = H // patch, W // patch
    xp = x.reshape(B, nH, patch, nW, patch, C).transpose(0, 1, 3, 2, 4, 5)
    xp = xp.reshape(B * nH * nW, patch * patch * C)
    y = pointwise_conv(xp, w, b)
    return y.reshape(B, nH, nW, -1)


def pw_feature(x, w, b, activation=None):
    B, H, W, C = x.shape
    y = pointwise_conv(x.reshape(B * H * W, C), w, b, activation)
    return y.reshape(B, H, W, -1)


def attention_convnext_forward(x_nchw, prm):
    x = jnp.transpose(x_nchw, (0, 2, 3, 1))  # NCHW -> NHWC
    outputs = []

    x = patchify_conv(x, prm["stem_w"], prm["stem_b"], patch=4)        # stem_0/stem_1
    x = attention_stage(x, prm["s0_w"], prm["s0_b"], prm["att1"], (4, 4), 2)
    outputs.append(jnp.transpose(x, (0, 3, 1, 2)))

    x = patchify_conv(x, prm["s1_dw"], prm["s1_db"], patch=2)          # stages_1 down
    x = attention_stage(x, prm["s1_w"], prm["s1_b"], prm["att2"], (2, 2), 2)
    outputs.append(jnp.transpose(x, (0, 3, 1, 2)))

    x = patchify_conv(x, prm["s2_dw"], prm["s2_db"], patch=2)          # stages_2 down
    x = attention_stage(x, prm["s2_w"], prm["s2_b"], prm["att3"], (2, 2), 2)
    outputs.append(jnp.transpose(x, (0, 3, 1, 2)))

    x = patchify_conv(x, prm["s3_dw"], prm["s3_db"], patch=2)          # stages_3 down
    x = pw_feature(x, prm["s3_w"], prm["s3_b"], activation="mish")
    outputs.append(jnp.transpose(x, (0, 3, 1, 2)))
    return outputs


# ----------------------------------------------------------------------------
# Deterministic parameter init
# ----------------------------------------------------------------------------
def _dense(key, cin, cout):
    kw, kb = jax.random.split(key)
    w = jax.random.normal(kw, (cin, cout), jnp.float32) * 0.05
    b = jax.random.normal(kb, (cout,), jnp.float32) * 0.01
    return w, b


def _att_params(key, channel, patch_size, heads):
    ph, pw = patch_size
    pc = channel // heads
    ks = jax.random.split(key, 6)
    wq, bq = _dense(ks[0], channel, channel)
    wk, bk = _dense(ks[1], channel, channel)
    wv, bv = _dense(ks[2], channel, channel)
    mw1, mb1 = _dense(ks[3], channel, channel)
    mw2, mb2 = _dense(ks[4], channel, channel)
    # torch.nn.init.orthogonal_(empty(h*w, channel//heads)) -> used as (P, pc)
    pos = jax.nn.initializers.orthogonal()(ks[5], (ph * pw, pc), jnp.float32)
    return dict(wq=wq, bq=bq, wk=wk, bk=bk, wv=wv, bv=bv, pos=pos,
                mw1=mw1, mb1=mb1, mw2=mw2, mb2=mb2)


def init_params(key):
    C = [16, 32, 64, 128]  # small stand-in for convnext feature channels
    in_ch = 4              # aux_hog=True
    ks = jax.random.split(key, 12)
    P = {}
    P["stem_w"], P["stem_b"] = _dense(ks[0], 4 * 4 * in_ch, C[0])
    P["s0_w"], P["s0_b"] = _dense(ks[1], C[0], C[0])
    P["att1"] = _att_params(ks[2], C[0], (4, 4), 2)
    P["s1_dw"], P["s1_db"] = _dense(ks[3], 2 * 2 * C[0], C[1])
    P["s1_w"], P["s1_b"] = _dense(ks[4], C[1], C[1])
    P["att2"] = _att_params(ks[5], C[1], (2, 2), 2)
    P["s2_dw"], P["s2_db"] = _dense(ks[6], 2 * 2 * C[1], C[2])
    P["s2_w"], P["s2_b"] = _dense(ks[7], C[2], C[2])
    P["att3"] = _att_params(ks[8], C[2], (2, 2), 2)
    P["s3_dw"], P["s3_db"] = _dense(ks[9], 2 * 2 * C[2], C[3])
    P["s3_w"], P["s3_b"] = _dense(ks[10], C[3], C[3])
    return P


# ----------------------------------------------------------------------------
# main
# ----------------------------------------------------------------------------
if __name__ == "__main__":
    key = jax.random.PRNGKey(0)
    params = init_params(key)
    x = jax.random.normal(jax.random.fold_in(key, 999), (2, 4, 32, 32), jnp.float32)

    outs = jax.jit(lambda xx: attention_convnext_forward(xx, params))(x)
    outs = [jax.block_until_ready(o) for o in outs]
    expected = [(2, 16, 8, 8), (2, 32, 4, 4), (2, 64, 2, 2), (2, 128, 1, 1)]
    assert [tuple(o.shape) for o in outs] == expected, [o.shape for o in outs]
    assert all(bool(jnp.all(jnp.isfinite(o))) for o in outs)

    # correctness: fused stage kernel vs pure-JAX f32 reference of the module.
    # Tolerance 1e-2 covers the bf16 matmul operands (f32 accumulation) and the
    # Newton-refined approximate reciprocals.
    xa = jax.random.normal(jax.random.fold_in(key, 7), (2, 8, 8, 16), jnp.float32)
    got = jax.block_until_ready(jax.jit(
        lambda t: attention_stage(t, params["s0_w"], params["s0_b"],
                                  params["att1"], (4, 4), 2))(xa))
    ref = attention_stage_ref(xa, params["s0_w"], params["s0_b"],
                              params["att1"], (4, 4), 2)
    assert bool(jnp.allclose(got, ref, rtol=1e-2, atol=1e-2)), \
        float(jnp.max(jnp.abs(got - ref)))

    xb = jax.random.normal(jax.random.fold_in(key, 11), (2, 4, 4, 32), jnp.float32)
    got2 = jax.block_until_ready(jax.jit(
        lambda t: attention_stage(t, params["s1_w"], params["s1_b"],
                                  params["att2"], (2, 2), 2))(xb))
    ref2 = attention_stage_ref(xb, params["s1_w"], params["s1_b"],
                               params["att2"], (2, 2), 2)
    assert bool(jnp.allclose(got2, ref2, rtol=1e-2, atol=1e-2)), \
        float(jnp.max(jnp.abs(got2 - ref2)))

    print("KERNEL_OK")
</pallas_src>

<mosaic_0001>
module attributes {stable_mosaic.version = 11 : i64} {
  func.func @_matmul_bias_kernel(%arg0: i32, %arg1: memref<64x64xf32, #tpu.memory_space<vmem>>, %arg2: memref<64x16xbf16, #tpu.memory_space<vmem>>, %arg3: memref<1x16xf32, #tpu.memory_space<vmem>>, %arg4: memref<64x16xf32, #tpu.memory_space<vmem>>) attributes {dimension_semantics = [#tpu.dimension_semantics<parallel>], iteration_bounds = array<i64: 2>, scalar_prefetch = 0 : i64, scratch_operands = 0 : i64, tpu.core_type = #tpu.core_type<tc>, window_params = [{transform_indices = @transform_0, window_bounds = array<i64: 64, 64>}, {pipeline_mode = #tpu.pipeline_mode<synchronous>, transform_indices = @transform_1, window_bounds = array<i64: 64, 16>}, {pipeline_mode = #tpu.pipeline_mode<synchronous>, transform_indices = @transform_2, window_bounds = array<i64: 1, 16>}, {transform_indices = @transform_3, window_bounds = array<i64: 64, 16>}]} {
    %c0 = arith.constant 0 : index
    %c0_0 = arith.constant 0 : index
    %0 = vector.load %arg1[%c0, %c0_0] : memref<64x64xf32, #tpu.memory_space<vmem>>, vector<64x64xf32>
    %1 = arith.truncf %0 : vector<64x64xf32> to vector<64x64xbf16>
    %c0_1 = arith.constant 0 : index
    %c0_2 = arith.constant 0 : index
    %2 = vector.load %arg2[%c0_1, %c0_2] : memref<64x16xbf16, #tpu.memory_space<vmem>>, vector<64x16xbf16>
    %cst = arith.constant dense<0.000000e+00> : vector<64x16xf32>
    %3 = tpu.matmul %1, %2, %cst {dimension_numbers = #tpu.dot_dimension_numbers<[1], [0], [0], [1], [0, 0, 1, 1], [], []>} : vector<64x64xbf16>, vector<64x16xbf16>, vector<64x16xf32> -> vector<64x16xf32>
    %c0_3 = arith.constant 0 : index
    %c0_4 = arith.constant 0 : index
    %4 = vector.load %arg3[%c0_3, %c0_4] : memref<1x16xf32, #tpu.memory_space<vmem>>, vector<1x16xf32>
    %5 = vector.broadcast %4 : vector<1x16xf32> to vector<64x16xf32>
    %6 = arith.addf %3, %5 : vector<64x16xf32>
    %c0_5 = arith.constant 0 : index
    %c0_6 = arith.constant 0 : index
    %7 = vector.load %arg4[%c0_5, %c0_6] : memref<64x16xf32, #tpu.memory_space<vmem>>, vector<64x16xf32>
    tpu.vector_store %arg4[%c0_5, %c0_6], %6 {strides = array<i32>} : memref<64x16xf32, #tpu.memory_space<vmem>>, vector<64x16xf32>,
    return
  }
  func.func @transform_0(%arg0: i32) -> (i32, i32) {
    %c0_i32 = arith.constant 0 : i32
    %c0_i32_0 = arith.constant 0 : i32
    return %arg0, %c0_i32 : i32, i32
  }
  func.func @transform_1(%arg0: i32) -> (i32, i32) {
    %c0_i32 = arith.constant 0 : i32
    %c0_i32_0 = arith.constant 0 : i32
    %c0_i32_1 = arith.constant 0 : i32
    return %c0_i32, %c0_i32_0 : i32, i32
  }
  func.func @transform_2(%arg0: i32) -> (i32, i32) {
    %c0_i32 = arith.constant 0 : i32
    %c0_i32_0 = arith.constant 0 : i32
    %c0_i32_1 = arith.constant 0 : i32
    return %c0_i32, %c0_i32_0 : i32, i32
  }
  func.func @transform_3(%arg0: i32) -> (i32, i32) {
    %c0_i32 = arith.constant 0 : i32
    %c0_i32_0 = arith.constant 0 : i32
    return %arg0, %c0_i32 : i32, i32
  }
}

module attributes {stable_mosaic.version = 11 : i64} {
  func.func @_attention_stage_kernel(%arg0: i32, %arg1: memref<4x16x16xf32, #tpu.memory_space<vmem>>, %arg2: memref<16x16xbf16, #tpu.memory_space<vmem>>, %arg3: memref<1x16xf32, #tpu.memory_space<vmem>>, %arg4: memref<2x16x8xbf16, #tpu.memory_space<vmem>>, %arg5: memref<2x16x8xbf16, #tpu.memory_space<vmem>>, %arg6: memref<2x16x8xbf16, #tpu.memory_space<vmem>>, %arg7: memref<2x16x8xf32, #tpu.memory_space<vmem>>, %arg8: memref<2x16x8xf32, #tpu.memory_space<vmem>>, %arg9: memref<2x1x8xf32, #tpu.memory_space<vmem>>, %arg10: memref<2x8x16xbf16, #tpu.memory_space<vmem>>, %arg11: memref<1x16xf32, #tpu.memory_space<vmem>>, %arg12: memref<16x16xbf16, #tpu.memory_space<vmem>>, %arg13: memref<1x16xf32, #tpu.memory_space<vmem>>, %arg14: memref<4x16x16xf32, #tpu.memory_space<vmem>>) attributes {dimension_semantics = [#tpu.dimension_semantics<parallel>], iteration_bounds = array<i64: 2>, scalar_prefetch = 0 : i64, scratch_operands = 0 : i64, tpu.core_type = #tpu.core_type<tc>, window_params = [{transform_indices = @transform_0, window_bounds = array<i64: 4, 16, 16>}, {pipeline_mode = #tpu.pipeline_mode<synchronous>, transform_indices = @transform_1, window_bounds = array<i64: 16, 16>}, {pipeline_mode = #tpu.pipeline_mode<synchronous>, transform_indices = @transform_2, window_bounds = array<i64: 1, 16>}, {pipeline_mode = #tpu.pipeline_mode<synchronous>, transform_indices = @transform_3, window_bounds = array<i64: 2, 16, 8>}, {pipeline_mode = #tpu.pipeline_mode<synchronous>, transform_indices = @transform_4, window_bounds = array<i64: 2, 16, 8>}, {pipeline_mode = #tpu.pipeline_mode<synchronous>, transform_indices = @transform_5, window_bounds = array<i64: 2, 16, 8>}, {pipeline_mode = #tpu.pipeline_mode<synchronous>, transform_indices = @transform_6, window_bounds = array<i64: 2, 16, 8>}, {pipeline_mode = #tpu.pipeline_mode<synchronous>, transform_indices = @transform_7, window_bounds = array<i64: 2, 16, 8>}, {pipeline_mode = #tpu.pipeline_mode<synchronous>, transform_indices = @transform_8, window_bounds = array<i64: 2, 1, 8>}, {pipeline_mode = #tpu.pipeline_mode<synchronous>, transform_indices = @transform_9, window_bounds = array<i64: 2, 8, 16>}, {pipeline_mode = #tpu.pipeline_mode<synchronous>, transform_indices = @transform_10, window_bounds = array<i64: 1, 16>}, {pipeline_mode = #tpu.pipeline_mode<synchronous>, transform_indices = @transform_11, window_bounds = array<i64: 16, 16>}, {pipeline_mode = #tpu.pipeline_mode<synchronous>, transform_indices = @transform_12, window_bounds = array<i64: 1, 16>}, {transform_indices = @transform_13, window_bounds = array<i64: 4, 16, 16>}]} {
    %c0 = arith.constant 0 : index
    %c0_0 = arith.constant 0 : index
    %c0_1 = arith.constant 0 : index
    %0 = vector.load %arg1[%c0, %c0_0, %c0_1] : memref<4x16x16xf32, #tpu.memory_space<vmem>>, vector<4x16x16xf32>
    %1 = vector.shape_cast %0 : vector<4x16x16xf32> to vector<64x16xf32>
    %2 = arith.truncf %1 : vector<64x16xf32> to vector<64x16xbf16>
    %c0_2 = arith.constant 0 : index
    %c0_3 = arith.constant 0 : index
    %3 = vector.load %arg2[%c0_2, %c0_3] : memref<16x16xbf16, #tpu.memory_space<vmem>>, vector<16x16xbf16>
    %cst = arith.constant dense<0.000000e+00> : vector<64x16xf32>
    %4 = tpu.matmul %2, %3, %cst {dimension_numbers = #tpu.dot_dimension_numbers<[1], [0], [0], [1], [0, 0, 1, 1], [], []>} : vector<64x16xbf16>, vector<16x16xbf16>, vector<64x16xf32> -> vector<64x16xf32>
    %c0_4 = arith.constant 0 : index
    %c0_5 = arith.constant 0 : index
    %5 = vector.load %arg3[%c0_4, %c0_5] : memref<1x16xf32, #tpu.memory_space<vmem>>, vector<1x16xf32>
    %6 = vector.broadcast %5 : vector<1x16xf32> to vector<64x16xf32>
    %7 = arith.addf %4, %6 : vector<64x16xf32>
    %8 = math.absf %7 : vector<64x16xf32>
    %cst_6 = arith.constant 0.000000e+00 : f32
    %9 = vector.broadcast %cst_6 : f32 to vector<64x16xf32>
    %10 = arith.subf %9, %8 : vector<64x16xf32>
    %11 = math.exp %10 : vector<64x16xf32>
    %12 = arith.mulf %11, %11 : vector<64x16xf32>
    %cst_7 = arith.constant 0.000000e+00 : f32
    %13 = vector.broadcast %cst_7 : f32 to vector<64x16xf32>
    %14 = arith.cmpf oge, %7, %13 : vector<64x16xf32>
    %cst_8 = arith.constant 2.000000e+00 : f32
    %15 = vector.broadcast %cst_8 : f32 to vector<64x16xf32>
    %16 = arith.mulf %15, %11 : vector<64x16xf32>
    %cst_9 = arith.constant 1.000000e+00 : f32
    %17 = vector.broadcast %cst_9 : f32 to vector<64x16xf32>
    %18 = arith.addf %17, %16 : vector<64x16xf32>
    %cst_10 = arith.constant 2.000000e+00 : f32
    %19 = vector.broadcast %cst_10 : f32 to vector<64x16xf32>
    %20 = arith.mulf %19, %11 : vector<64x16xf32>
    %21 = arith.addf %20, %12 : vector<64x16xf32>
    %22 = arith.select %14, %18, %21 : vector<64x16xi1>, vector<64x16xf32>
    %cst_11 = arith.constant 2.000000e+00 : f32
    %23 = vector.broadcast %cst_11 : f32 to vector<64x16xf32>
    %24 = arith.mulf %23, %11 : vector<64x16xf32>
    %cst_12 = arith.constant 1.000000e+00 : f32
    %25 = vector.broadcast %cst_12 : f32 to vector<64x16xf32>
    %26 = arith.addf %25, %24 : vector<64x16xf32>
    %cst_13 = arith.constant 2.000000e+00 : f32
    %27 = vector.broadcast %cst_13 : f32 to vector<64x16xf32>
    %28 = arith.mulf %27, %12 : vector<64x16xf32>
    %29 = arith.addf %26, %28 : vector<64x16xf32>
    %cst_14 = arith.constant 2.000000e+00 : f32
    %30 = vector.broadcast %cst_14 : f32 to vector<64x16xf32>
    %31 = arith.mulf %30, %11 : vector<64x16xf32>
    %cst_15 = arith.constant 2.000000e+00 : f32
    %32 = vector.broadcast %cst_15 : f32 to vector<64x16xf32>
    %33 = arith.addf %32, %31 : vector<64x16xf32>
    %34 = arith.addf %33, %12 : vector<64x16xf32>
    %35 = arith.select %14, %29, %34 : vector<64x16xi1>, vector<64x16xf32>
    %36 = tpu.reciprocal %35 {approx = true} : vector<64x16xf32> -> vector<64x16xf32>
    %37 = arith.mulf %35, %36 : vector<64x16xf32>
    %cst_16 = arith.constant 2.000000e+00 : f32
    %38 = vector.broadcast %cst_16 : f32 to vector<64x16xf32>
    %39 = arith.subf %38, %37 : vector<64x16xf32>
    %40 = arith.mulf %36, %39 : vector<64x16xf32>
    %41 = arith.mulf %7, %22 : vector<64x16xf32>
    %42 = arith.mulf %41, %40 : vector<64x16xf32>
    %43 = arith.truncf %42 : vector<64x16xf32> to vector<64x16xbf16>
    %c0_17 = arith.constant 0 : index
    %c0_18 = arith.constant 0 : index
    %c0_19 = arith.constant 0 : index
    %44 = vector.load %arg4[%c0_17, %c0_18, %c0_19] : memref<2x16x8xbf16, #tpu.memory_space<vmem>>, vector<1x16x8xbf16>
    %45 = vector.shape_cast %44 : vector<1x16x8xbf16> to vector<16x8xbf16>
    %cst_20 = arith.constant dense<0.000000e+00> : vector<64x8xf32>
    %46 = tpu.matmul %43, %45, %cst_20 {dimension_numbers = #tpu.dot_dimension_numbers<[1], [0], [0], [1], [0, 0, 1, 1], [], []>} : vector<64x16xbf16>, vector<16x8xbf16>, vector<64x8xf32> -> vector<64x8xf32>
    %c0_21 = arith.constant 0 : index
    %c0_22 = arith.constant 0 : index
    %c0_23 = arith.constant 0 : index
    %47 = vector.load %arg5[%c0_21, %c0_22, %c0_23] : memref<2x16x8xbf16, #tpu.memory_space<vmem>>, vector<1x16x8xbf16>
    %48 = vector.shape_cast %47 : vector<1x16x8xbf16> to vector<16x8xbf16>
    %cst_24 = arith.constant dense<0.000000e+00> : vector<64x8xf32>
    %49 = tpu.matmul %43, %48, %cst_24 {dimension_numbers = #tpu.dot_dimension_numbers<[1], [0], [0], [1], [0, 0, 1, 1], [], []>} : vector<64x16xbf16>, vector<16x8xbf16>, vector<64x8xf32> -> vector<64x8xf32>
    %c0_25 = arith.constant 0 : index
    %c0_26 = arith.constant 0 : index
    %c0_27 = arith.constant 0 : index
    %50 = vector.load %arg6[%c0_25, %c0_26, %c0_27] : memref<2x16x8xbf16, #tpu.memory_space<vmem>>, vector<1x16x8xbf16>
    %51 = vector.shape_cast %50 : vector<1x16x8xbf16> to vector<16x8xbf16>
    %cst_28 = arith.constant dense<0.000000e+00> : vector<64x8xf32>
    %52 = tpu.matmul %43, %51, %cst_28 {dimension_numbers = #tpu.dot_dimension_numbers<[1], [0], [0], [1], [0, 0, 1, 1], [], []>} : vector<64x16xbf16>, vector<16x8xbf16>, vector<64x8xf32> -> vector<64x8xf32>
    %53 = vector.shape_cast %46 : vector<64x8xf32> to vector<4x16x8xf32>
    %c0_29 = arith.constant 0 : index
    %c0_30 = arith.constant 0 : index
    %c0_31 = arith.constant 0 : index
    %54 = vector.load %arg7[%c0_29, %c0_30, %c0_31] : memref<2x16x8xf32, #tpu.memory_space<vmem>>, vector<1x16x8xf32>
    %55 = vector.shape_cast %54 : vector<1x16x8xf32> to vector<16x8xf32>
    %56 = vector.shape_cast %55 : vector<16x8xf32> to vector<1x16x8xf32>
    %57 = vector.broadcast %56 : vector<1x16x8xf32> to vector<4x16x8xf32>
    %58 = arith.addf %53, %57 : vector<4x16x8xf32>
    %59 = vector.shape_cast %49 : vector<64x8xf32> to vector<4x16x8xf32>
    %c0_32 = arith.constant 0 : index
    %c0_33 = arith.constant 0 : index
    %c0_34 = arith.constant 0 : index
    %60 = vector.load %arg8[%c0_32, %c0_33, %c0_34] : memref<2x16x8xf32, #tpu.memory_space<vmem>>, vector<1x16x8xf32>
    %61 = vector.shape_cast %60 : vector<1x16x8xf32> to vector<16x8xf32>
    %62 = vector.shape_cast %61 : vector<16x8xf32> to vector<1x16x8xf32>
    %63 = vector.broadcast %62 : vector<1x16x8xf32> to vector<4x16x8xf32>
    %64 = arith.addf %59, %63 : vector<4x16x8xf32>
    %65 = vector.shape_cast %52 : vector<64x8xf32> to vector<4x16x8xf32>
    %c0_35 = arith.constant 0 : index
    %c0_36 = arith.constant 0 : index
    %c0_37 = arith.constant 0 : index
    %66 = vector.load %arg9[%c0_35, %c0_36, %c0_37] : memref<2x1x8xf32, #tpu.memory_space<vmem>>, vector<1x1x8xf32>
    %67 = vector.shape_cast %66 : vector<1x1x8xf32> to vector<1x8xf32>
    %68 = vector.shape_cast %67 : vector<1x8xf32> to vector<1x1x8xf32>
    %69 = vector.broadcast %68 : vector<1x1x8xf32> to vector<4x16x8xf32>
    %70 = arith.addf %65, %69 : vector<4x16x8xf32>
    %c1 = arith.constant 1 : index
    %c0_38 = arith.constant 0 : index
    %c0_39 = arith.constant 0 : index
    %71 = vector.load %arg4[%c1, %c0_38, %c0_39] : memref<2x16x8xbf16, #tpu.memory_space<vmem>>, vector<1x16x8xbf16>
    %72 = vector.shape_cast %71 : vector<1x16x8xbf16> to vector<16x8xbf16>
    %cst_40 = arith.constant dense<0.000000e+00> : vector<64x8xf32>
    %73 = tpu.matmul %43, %72, %cst_40 {dimension_numbers = #tpu.dot_dimension_numbers<[1], [0], [0], [1], [0, 0, 1, 1], [], []>} : vector<64x16xbf16>, vector<16x8xbf16>, vector<64x8xf32> -> vector<64x8xf32>
    %c1_41 = arith.constant 1 : index
    %c0_42 = arith.constant 0 : index
    %c0_43 = arith.constant 0 : index
    %74 = vector.load %arg5[%c1_41, %c0_42, %c0_43] : memref<2x16x8xbf16, #tpu.memory_space<vmem>>, vector<1x16x8xbf16>
    %75 = vector.shape_cast %74 : vector<1x16x8xbf16> to vector<16x8xbf16>
    %cst_44 = arith.constant dense<0.000000e+00> : vector<64x8xf32>
    %76 = tpu.matmul %43, %75, %cst_44 {dimension_numbers = #tpu.dot_dimension_numbers<[1], [0], [0], [1], [0, 0, 1, 1], [], []>} : vector<64x16xbf16>, vector<16x8xbf16>, vector<64x8xf32> -> vector<64x8xf32>
    %c1_45 = arith.constant 1 : index
    %c0_46 = arith.constant 0 : index
    %c0_47 = arith.constant 0 : index
    %77 = vector.load %arg6[%c1_45, %c0_46, %c0_47] : memref<2x16x8xbf16, #tpu.memory_space<vmem>>, vector<1x16x8xbf16>
    %78 = vector.shape_cast %77 : vector<1x16x8xbf16> to vector<16x8xbf16>
    %cst_48 = arith.constant dense<0.000000e+00> : vector<64x8xf32>
    %79 = tpu.matmul %43, %78, %cst_48 {dimension_numbers = #tpu.dot_dimension_numbers<[1], [0], [0], [1], [0, 0, 1, 1], [], []>} : vector<64x16xbf16>, vector<16x8xbf16>, vector<64x8xf32> -> vector<64x8xf32>
    %80 = vector.shape_cast %73 : vector<64x8xf32> to vector<4x16x8xf32>
    %c1_49 = arith.constant 1 : index
    %c0_50 = arith.constant 0 : index
    %c0_51 = arith.constant 0 : index
    %81 = vector.load %arg7[%c1_49, %c0_50, %c0_51] : memref<2x16x8xf32, #tpu.memory_space<vmem>>, vector<1x16x8xf32>
    %82 = vector.shape_cast %81 : vector<1x16x8xf32> to vector<16x8xf32>
    %83 = vector.shape_cast %82 : vector<16x8xf32> to vector<1x16x8xf32>
    %84 = vector.broadcast %83 : vector<1x16x8xf32> to vector<4x16x8xf32>
    %85 = arith.addf %80, %84 : vector<4x16x8xf32>
    %86 = vector.shape_cast %76 : vector<64x8xf32> to vector<4x16x8xf32>
    %c1_52 = arith.constant 1 : index
    %c0_53 = arith.constant 0 : index
    %c0_54 = arith.constant 0 : index
    %87 = vector.load %arg8[%c1_52, %c0_53, %c0_54] : memref<2x16x8xf32, #tpu.memory_space<vmem>>, vector<1x16x8xf32>
    %88 = vector.shape_cast %87 : vector<1x16x8xf32> to vector<16x8xf32>
    %89 = vector.shape_cast %88 : vector<16x8xf32> to vector<1x16x8xf32>
    %90 = vector.broadcast %89 : vector<1x16x8xf32> to vector<4x16x8xf32>
    %91 = arith.addf %86, %90 : vector<4x16x8xf32>
    %92 = vector.shape_cast %79 : vector<64x8xf32> to vector<4x16x8xf32>
    %c1_55 = arith.constant 1 : index
    %c0_56 = arith.constant 0 : index
    %c0_57 = arith.constant 0 : index
    %93 = vector.load %arg9[%c1_55, %c0_56, %c0_57] : memref<2x1x8xf32, #tpu.memory_space<vmem>>, vector<1x1x8xf32>
    %94 = vector.shape_cast %93 : vector<1x1x8xf32> to vector<1x8xf32>
    %95 = vector.shape_cast %94 : vector<1x8xf32> to vector<1x1x8xf32>
    %96 = vector.broadcast %95 : vector<1x1x8xf32> to vector<4x16x8xf32>
    %97 = arith.addf %92, %96 : vector<4x16x8xf32>
    %98 = tpu.concatenate %58, %85 in 0 : vector<4x16x8xf32>, vector<4x16x8xf32> -> vector<8x16x8xf32>
    %99 = arith.truncf %98 : vector<8x16x8xf32> to vector<8x16x8xbf16>
    %100 = tpu.concatenate %64, %91 in 0 : vector<4x16x8xf32>, vector<4x16x8xf32> -> vector<8x16x8xf32>
    %101 = arith.truncf %100 : vector<8x16x8xf32> to vector<8x16x8xbf16>
    %102 = tpu.concatenate %70, %97 in 0 : vector<4x16x8xf32>, vector<4x16x8xf32> -> vector<8x16x8xf32>
    %103 = arith.truncf %102 : vector<8x16x8xf32> to vector<8x16x8xbf16>
    "tpu.trace_start"() <{level = 10 : i32, message = "bpc,bqc->bpq"}> : () -> ()
    %cst_58 = arith.constant dense<0.000000e+00> : vector<8x16x16xf32>
    %104 = tpu.matmul %99, %101, %cst_58 {dimension_numbers = #tpu.dot_dimension_numbers<[2], [2], [1], [1], [0, 0, 0, 1, 1, 1], [0], [0]>} : vector<8x16x8xbf16>, vector<8x16x8xbf16>, vector<8x16x16xf32> -> vector<8x16x16xf32>
    "tpu.trace_stop"() : () -> ()
    %cst_59 = arith.constant 0.353553385 : f32
    %105 = vector.broadcast %cst_59 : f32 to vector<8x16x16xf32>
    %106 = arith.mulf %104, %105 : vector<8x16x16xf32>
    %cst_60 = arith.constant dense<0xFF800000> : vector<8x16xf32>
    %107 = vector.multi_reduction <maximumf>, %106, %cst_60 [1] : vector<8x16x16xf32> to vector<8x16xf32>
    %108 = vector.shape_cast %107 : vector<8x16xf32> to vector<8x1x16xf32>
    %109 = vector.broadcast %108 : vector<8x1x16xf32> to vector<8x16x16xf32>
    %110 = arith.subf %106, %109 : vector<8x16x16xf32>
    %111 = math.exp %110 : vector<8x16x16xf32>
    %cst_61 = arith.constant dense<0.000000e+00> : vector<8x16xf32>
    %112 = vector.multi_reduction <add>, %111, %cst_61 [1] : vector<8x16x16xf32> to vector<8x16xf32>
    %113 = vector.shape_cast %112 : vector<8x16xf32> to vector<8x1x16xf32>
    %114 = tpu.reciprocal %113 {approx = true} : vector<8x1x16xf32> -> vector<8x1x16xf32>
    %115 = arith.mulf %113, %114 : vector<8x1x16xf32>
    %cst_62 = arith.constant 2.000000e+00 : f32
    %116 = vector.broadcast %cst_62 : f32 to vector<8x1x16xf32>
    %117 = arith.subf %116, %115 : vector<8x1x16xf32>
    %118 = arith.mulf %114, %117 : vector<8x1x16xf32>
    %119 = vector.broadcast %118 : vector<8x1x16xf32> to vector<8x16x16xf32>
    %120 = arith.mulf %111, %119 : vector<8x16x16xf32>
    %121 = arith.truncf %120 : vector<8x16x16xf32> to vector<8x16x16xbf16>
    "tpu.trace_start"() <{level = 10 : i32, message = "bpq,bqc->bpc"}> : () -> ()
    %cst_63 = arith.constant dense<0.000000e+00> : vector<8x16x8xf32>
    %122 = tpu.matmul %121, %103, %cst_63 {dimension_numbers = #tpu.dot_dimension_numbers<[2], [1], [1], [2], [0, 0, 0, 1, 1, 2], [0], [0]>} : vector<8x16x16xbf16>, vector<8x16x8xbf16>, vector<8x16x8xf32> -> vector<8x16x8xf32>
    "tpu.trace_stop"() : () -> ()
    %123 = vector.extract_strided_slice %122 {offsets = [0, 0, 0], sizes = [4, 16, 8], strides = [1, 1, 1]} : vector<8x16x8xf32> to vector<4x16x8xf32>
    %124 = vector.shape_cast %123 : vector<4x16x8xf32> to vector<64x8xf32>
    %125 = arith.truncf %124 : vector<64x8xf32> to vector<64x8xbf16>
    %c0_64 = arith.constant 0 : index
    %c0_65 = arith.constant 0 : index
    %c0_66 = arith.constant 0 : index
    %126 = vector.load %arg10[%c0_64, %c0_65, %c0_66] : memref<2x8x16xbf16, #tpu.memory_space<vmem>>, vector<1x8x16xbf16>
    %127 = vector.shape_cast %126 : vector<1x8x16xbf16> to vector<8x16xbf16>
    %cst_67 = arith.constant dense<0.000000e+00> : vector<64x16xf32>
    %128 = tpu.matmul %125, %127, %cst_67 {dimension_numbers = #tpu.dot_dimension_numbers<[1], [0], [0], [1], [0, 0, 1, 1], [], []>} : vector<64x8xbf16>, vector<8x16xbf16>, vector<64x16xf32> -> vector<64x16xf32>
    %129 = vector.extract_strided_slice %122 {offsets = [4, 0, 0], sizes = [4, 16, 8], strides = [1, 1, 1]} : vector<8x16x8xf32> to vector<4x16x8xf32>
    %130 = vector.shape_cast %129 : vector<4x16x8xf32> to vector<64x8xf32>
    %131 = arith.truncf %130 : vector<64x8xf32> to vector<64x8xbf16>
    %c1_68 = arith.constant 1 : index
    %c0_69 = arith.constant 0 : index
    %c0_70 = arith.constant 0 : index
    %132 = vector.load %arg10[%c1_68, %c0_69, %c0_70] : memref<2x8x16xbf16, #tpu.memory_space<vmem>>, vector<1x8x16xbf16>
    %133 = vector.shape_cast %132 : vector<1x8x16xbf16> to vector<8x16xbf16>
    %cst_71 = arith.constant dense<0.000000e+00> : vector<64x16xf32>
    %134 = tpu.matmul %131, %133, %cst_71 {dimension_numbers = #tpu.dot_dimension_numbers<[1], [0], [0], [1], [0, 0, 1, 1], [], []>} : vector<64x8xbf16>, vector<8x16xbf16>, vector<64x16xf32> -> vector<64x16xf32>
    %135 = arith.addf %128, %134 : vector<64x16xf32>
    %c0_72 = arith.constant 0 : index
    %c0_73 = arith.constant 0 : index
    %136 = vector.load %arg11[%c0_72, %c0_73] : memref<1x16xf32, #tpu.memory_space<vmem>>, vector<1x16xf32>
    %137 = vector.broadcast %136 : vector<1x16xf32> to vector<64x16xf32>
    %138 = arith.addf %135, %137 : vector<64x16xf32>
    %139 = math.absf %138 : vector<64x16xf32>
    %cst_74 = arith.constant 0.000000e+00 : f32
    %140 = vector.broadcast %cst_74 : f32 to vector<64x16xf32>
    %141 = arith.subf %140, %139 : vector<64x16xf32>
    %142 = math.exp %141 : vector<64x16xf32>
    %143 = arith.mulf %142, %142 : vector<64x16xf32>
    %cst_75 = arith.constant 0.000000e+00 : f32
    %144 = vector.broadcast %cst_75 : f32 to vector<64x16xf32>
    %145 = arith.cmpf oge, %138, %144 : vector<64x16xf32>
    %cst_76 = arith.constant 2.000000e+00 : f32
    %146 = vector.broadcast %cst_76 : f32 to vector<64x16xf32>
    %147 = arith.mulf %146, %142 : vector<64x16xf32>
    %cst_77 = arith.constant 1.000000e+00 : f32
    %148 = vector.broadcast %cst_77 : f32 to vector<64x16xf32>
    %149 = arith.addf %148, %147 : vector<64x16xf32>
    %cst_78 = arith.constant 2.000000e+00 : f32
    %150 = vector.broadcast %cst_78 : f32 to vector<64x16xf32>
    %151 = arith.mulf %150, %142 : vector<64x16xf32>
    %152 = arith.addf %151, %143 : vector<64x16xf32>
    %153 = arith.select %145, %149, %152 : vector<64x16xi1>, vector<64x16xf32>
    %cst_79 = arith.constant 2.000000e+00 : f32
    %154 = vector.broadcast %cst_79 : f32 to vector<64x16xf32>
    %155 = arith.mulf %154, %142 : vector<64x16xf32>
    %cst_80 = arith.constant 1.000000e+00 : f32
    %156 = vector.broadcast %cst_80 : f32 to vector<64x16xf32>
    %157 = arith.addf %156, %155 : vector<64x16xf32>
    %cst_81 = arith.constant 2.000000e+00 : f32
    %158 = vector.broadcast %cst_81 : f32 to vector<64x16xf32>
    %159 = arith.mulf %158, %143 : vector<64x16xf32>
    %160 = arith.addf %157, %159 : vector<64x16xf32>
    %cst_82 = arith.constant 2.000000e+00 : f32
    %161 = vector.broadcast %cst_82 : f32 to vector<64x16xf32>
    %162 = arith.mulf %161, %142 : vector<64x16xf32>
    %cst_83 = arith.constant 2.000000e+00 : f32
    %163 = vector.broadcast %cst_83 : f32 to vector<64x16xf32>
    %164 = arith.addf %163, %162 : vector<64x16xf32>
    %165 = arith.addf %164, %143 : vector<64x16xf32>
    %166 = arith.select %145, %160, %165 : vector<64x16xi1>, vector<64x16xf32>
    %167 = tpu.reciprocal %166 {approx = true} : vector<64x16xf32> -> vector<64x16xf32>
    %168 = arith.mulf %166, %167 : vector<64x16xf32>
    %cst_84 = arith.constant 2.000000e+00 : f32
    %169 = vector.broadcast %cst_84 : f32 to vector<64x16xf32>
    %170 = arith.subf %169, %168 : vector<64x16xf32>
    %171 = arith.mulf %167, %170 : vector<64x16xf32>
    %172 = arith.mulf %138, %153 : vector<64x16xf32>
    %173 = arith.mulf %172, %171 : vector<64x16xf32>
    %174 = arith.truncf %173 : vector<64x16xf32> to vector<64x16xbf16>
    %c0_85 = arith.constant 0 : index
    %c0_86 = arith.constant 0 : index
    %175 = vector.load %arg12[%c0_85, %c0_86] : memref<16x16xbf16, #tpu.memory_space<vmem>>, vector<16x16xbf16>
    %cst_87 = arith.constant dense<0.000000e+00> : vector<64x16xf32>
    %176 = tpu.matmul %174, %175, %cst_87 {dimension_numbers = #tpu.dot_dimension_numbers<[1], [0], [0], [1], [0, 0, 1, 1], [], []>} : vector<64x16xbf16>, vector<16x16xbf16>, vector<64x16xf32> -> vector<64x16xf32>
    %c0_88 = arith.constant 0 : index
    %c0_89 = arith.constant 0 : index
    %177 = vector.load %arg13[%c0_88, %c0_89] : memref<1x16xf32, #tpu.memory_space<vmem>>, vector<1x16xf32>
    %178 = vector.broadcast %177 : vector<1x16xf32> to vector<64x16xf32>
    %179 = arith.addf %176, %178 : vector<64x16xf32>
    %180 = arith.addf %179, %42 : vector<64x16xf32>
    %181 = vector.shape_cast %180 : vector<64x16xf32> to vector<4x16x16xf32>
    %c0_90 = arith.constant 0 : index
    %c0_91 = arith.constant 0 : index
    %c0_92 = arith.constant 0 : index
    %182 = vector.load %arg14[%c0_90, %c0_91, %c0_92] : memref<4x16x16xf32, #tpu.memory_space<vmem>>, vector<4x16x16xf32>
    tpu.vector_store %arg14[%c0_90, %c0_91, %c0_92], %181 {strides = array<i32>} : memref<4x16x16xf32, #tpu.memory_space<vmem>>, vector<4x16x16xf32>,
    return
  }
  func.func @transform_0(%arg0: i32) -> (i32, i32, i32) {
    %c0_i32 = arith.constant 0 : i32
    %c0_i32_0 = arith.constant 0 : i32
    %c0_i32_1 = arith.constant 0 : i32
    return %arg0, %c0_i32, %c0_i32_0 : i32, i32, i32
  }
  func.func @transform_1(%arg0: i32) -> (i32, i32) {
    %c0_i32 = arith.constant 0 : i32
    %c0_i32_0 = arith.constant 0 : i32
    %c0_i32_1 = arith.constant 0 : i32
    return %c0_i32, %c0_i32_0 : i32, i32
  }
  func.func @transform_2(%arg0: i32) -> (i32, i32) {
    %c0_i32 = arith.constant 0 : i32
    %c0_i32_0 = arith.constant 0 : i32
    %c0_i32_1 = arith.constant 0 : i32
    return %c0_i32, %c0_i32_0 : i32, i32
  }
  func.func @transform_3(%arg0: i32) -> (i32, i32, i32) {
    %c0_i32 = arith.constant 0 : i32
    %c0_i32_0 = arith.constant 0 : i32
    %c0_i32_1 = arith.constant 0 : i32
    %c0_i32_2 = arith.constant 0 : i32
    return %c0_i32, %c0_i32_0, %c0_i32_1 : i32, i32, i32
  }
  func.func @transform_4(%arg0: i32) -> (i32, i32, i32) {
    %c0_i32 = arith.constant 0 : i32
    %c0_i32_0 = arith.constant 0 : i32
    %c0_i32_1 = arith.constant 0 : i32
    %c0_i32_2 = arith.constant 0 : i32
    return %c0_i32, %c0_i32_0, %c0_i32_1 : i32, i32, i32
  }
  func.func @transform_5(%arg0: i32) -> (i32, i32, i32) {
    %c0_i32 = arith.constant 0 : i32
    %c0_i32_0 = arith.constant 0 : i32
    %c0_i32_1 = arith.constant 0 : i32
    %c0_i32_2 = arith.constant 0 : i32
    return %c0_i32, %c0_i32_0, %c0_i32_1 : i32, i32, i32
  }
  func.func @transform_6(%arg0: i32) -> (i32, i32, i32) {
    %c0_i32 = arith.constant 0 : i32
    %c0_i32_0 = arith.constant 0 : i32
    %c0_i32_1 = arith.constant 0 : i32
    %c0_i32_2 = arith.constant 0 : i32
    return %c0_i32, %c0_i32_0, %c0_i32_1 : i32, i32, i32
  }
  func.func @transform_7(%arg0: i32) -> (i32, i32, i32) {
    %c0_i32 = arith.constant 0 : i32
    %c0_i32_0 = arith.constant 0 : i32
    %c0_i32_1 = arith.constant 0 : i32
    %c0_i32_2 = arith.constant 0 : i32
    return %c0_i32, %c0_i32_0, %c0_i32_1 : i32, i32, i32
  }
  func.func @transform_8(%arg0: i32) -> (i32, i32, i32) {
    %c0_i32 = arith.constant 0 : i32
    %c0_i32_0 = arith.constant 0 : i32
    %c0_i32_1 = arith.constant 0 : i32
    %c0_i32_2 = arith.constant 0 : i32
    return %c0_i32, %c0_i32_0, %c0_i32_1 : i32, i32, i32
  }
  func.func @transform_9(%arg0: i32) -> (i32, i32, i32) {
    %c0_i32 = arith.constant 0 : i32
    %c0_i32_0 = arith.constant 0 : i32
    %c0_i32_1 = arith.constant 0 : i32
    %c0_i32_2 = arith.constant 0 : i32
    return %c0_i32, %c0_i32_0, %c0_i32_1 : i32, i32, i32
  }
  func.func @transform_10(%arg0: i32) -> (i32, i32) {
    %c0_i32 = arith.constant 0 : i32
    %c0_i32_0 = arith.constant 0 : i32
    %c0_i32_1 = arith.constant 0 : i32
    return %c0_i32, %c0_i32_0 : i32, i32
  }
  func.func @transform_11(%arg0: i32) -> (i32, i32) {
    %c0_i32 = arith.constant 0 : i32
    %c0_i32_0 = arith.constant 0 : i32
    %c0_i32_1 = arith.constant 0 : i32
    return %c0_i32, %c0_i32_0 : i32, i32
  }
  func.func @transform_12(%arg0: i32) -> (i32, i32) {
    %c0_i32 = arith.constant 0 : i32
    %c0_i32_0 = arith.constant 0 : i32
    %c0_i32_1 = arith.constant 0 : i32
    return %c0_i32, %c0_i32_0 : i32, i32
  }
  func.func @transform_13(%arg0: i32) -> (i32, i32, i32) {
    %c0_i32 = arith.constant 0 : i32
    %c0_i32_0 = arith.constant 0 : i32
    %c0_i32_1 = arith.constant 0 : i32
    return %arg0, %c0_i32, %c0_i32_0 : i32, i32, i32
  }
}

module attributes {stable_mosaic.version = 11 : i64} {
  func.func @_matmul_bias_kernel(%arg0: i32, %arg1: memref<16x64xf32, #tpu.memory_space<vmem>>, %arg2: memref<64x32xbf16, #tpu.memory_space<vmem>>, %arg3: memref<1x32xf32, #tpu.memory_space<vmem>>, %arg4: memref<16x32xf32, #tpu.memory_space<vmem>>) attributes {dimension_semantics = [#tpu.dimension_semantics<parallel>], iteration_bounds = array<i64: 2>, scalar_prefetch = 0 : i64, scratch_operands = 0 : i64, tpu.core_type = #tpu.core_type<tc>, window_params = [{transform_indices = @transform_0, window_bounds = array<i64: 16, 64>}, {pipeline_mode = #tpu.pipeline_mode<synchronous>, transform_indices = @transform_1, window_bounds = array<i64: 64, 32>}, {pipeline_mode = #tpu.pipeline_mode<synchronous>, transform_indices = @transform_2, window_bounds = array<i64: 1, 32>}, {transform_indices = @transform_3, window_bounds = array<i64: 16, 32>}]} {
    %c0 = arith.constant 0 : index
    %c0_0 = arith.constant 0 : index
    %0 = vector.load %arg1[%c0, %c0_0] : memref<16x64xf32, #tpu.memory_space<vmem>>, vector<16x64xf32>
    %1 = arith.truncf %0 : vector<16x64xf32> to vector<16x64xbf16>
    %c0_1 = arith.constant 0 : index
    %c0_2 = arith.constant 0 : index
    %2 = vector.load %arg2[%c0_1, %c0_2] : memref<64x32xbf16, #tpu.memory_space<vmem>>, vector<64x32xbf16>
    %cst = arith.constant dense<0.000000e+00> : vector<16x32xf32>
    %3 = tpu.matmul %1, %2, %cst {dimension_numbers = #tpu.dot_dimension_numbers<[1], [0], [0], [1], [0, 0, 1, 1], [], []>} : vector<16x64xbf16>, vector<64x32xbf16>, vector<16x32xf32> -> vector<16x32xf32>
    %c0_3 = arith.constant 0 : index
    %c0_4 = arith.constant 0 : index
    %4 = vector.load %arg3[%c0_3, %c0_4] : memref<1x32xf32, #tpu.memory_space<vmem>>, vector<1x32xf32>
    %5 = vector.broadcast %4 : vector<1x32xf32> to vector<16x32xf32>
    %6 = arith.addf %3, %5 : vector<16x32xf32>
    %c0_5 = arith.constant 0 : index
    %c0_6 = arith.constant 0 : index
    %7 = vector.load %arg4[%c0_5, %c0_6] : memref<16x32xf32, #tpu.memory_space<vmem>>, vector<16x32xf32>
    tpu.vector_store %arg4[%c0_5, %c0_6], %6 {strides = array<i32>} : memref<16x32xf32, #tpu.memory_space<vmem>>, vector<16x32xf32>,
    return
  }
  func.func @transform_0(%arg0: i32) -> (i32, i32) {
    %c0_i32 = arith.constant 0 : i32
    %c0_i32_0 = arith.constant 0 : i32
    return %arg0, %c0_i32 : i32, i32
  }
  func.func @transform_1(%arg0: i32) -> (i32, i32) {
    %c0_i32 = arith.constant 0 : i32
    %c0_i32_0 = arith.constant 0 : i32
    %c0_i32_1 = arith.constant 0 : i32
    return %c0_i32, %c0_i32_0 : i32, i32
  }
  func.func @transform_2(%arg0: i32) -> (i32, i32) {
    %c0_i32 = arith.constant 0 : i32
    %c0_i32_0 = arith.constant 0 : i32
    %c0_i32_1 = arith.constant 0 : i32
    return %c0_i32, %c0_i32_0 : i32, i32
  }
  func.func @transform_3(%arg0: i32) -> (i32, i32) {
    %c0_i32 = arith.constant 0 : i32
    %c0_i32_0 = arith.constant 0 : i32
    return %arg0, %c0_i32 : i32, i32
  }
}

module attributes {stable_mosaic.version = 11 : i64} {
  func.func @_attention_stage_kernel(%arg0: i32, %arg1: memref<4x4x32xf32, #tpu.memory_space<vmem>>, %arg2: memref<32x32xbf16, #tpu.memory_space<vmem>>, %arg3: memref<1x32xf32, #tpu.memory_space<vmem>>, %arg4: memref<2x32x16xbf16, #tpu.memory_space<vmem>>, %arg5: memref<2x32x16xbf16, #tpu.memory_space<vmem>>, %arg6: memref<2x32x16xbf16, #tpu.memory_space<vmem>>, %arg7: memref<2x4x16xf32, #tpu.memory_space<vmem>>, %arg8: memref<2x4x16xf32, #tpu.memory_space<vmem>>, %arg9: memref<2x1x16xf32, #tpu.memory_space<vmem>>, %arg10: memref<2x16x32xbf16, #tpu.memory_space<vmem>>, %arg11: memref<1x32xf32, #tpu.memory_space<vmem>>, %arg12: memref<32x32xbf16, #tpu.memory_space<vmem>>, %arg13: memref<1x32xf32, #tpu.memory_space<vmem>>, %arg14: memref<4x4x32xf32, #tpu.memory_space<vmem>>) attributes {dimension_semantics = [#tpu.dimension_semantics<parallel>], iteration_bounds = array<i64: 2>, scalar_prefetch = 0 : i64, scratch_operands = 0 : i64, tpu.core_type = #tpu.core_type<tc>, window_params = [{transform_indices = @transform_0, window_bounds = array<i64: 4, 4, 32>}, {pipeline_mode = #tpu.pipeline_mode<synchronous>, transform_indices = @transform_1, window_bounds = array<i64: 32, 32>}, {pipeline_mode = #tpu.pipeline_mode<synchronous>, transform_indices = @transform_2, window_bounds = array<i64: 1, 32>}, {pipeline_mode = #tpu.pipeline_mode<synchronous>, transform_indices = @transform_3, window_bounds = array<i64: 2, 32, 16>}, {pipeline_mode = #tpu.pipeline_mode<synchronous>, transform_indices = @transform_4, window_bounds = array<i64: 2, 32, 16>}, {pipeline_mode = #tpu.pipeline_mode<synchronous>, transform_indices = @transform_5, window_bounds = array<i64: 2, 32, 16>}, {pipeline_mode = #tpu.pipeline_mode<synchronous>, transform_indices = @transform_6, window_bounds = array<i64: 2, 4, 16>}, {pipeline_mode = #tpu.pipeline_mode<synchronous>, transform_indices = @transform_7, window_bounds = array<i64: 2, 4, 16>}, {pipeline_mode = #tpu.pipeline_mode<synchronous>, transform_indices = @transform_8, window_bounds = array<i64: 2, 1, 16>}, {pipeline_mode = #tpu.pipeline_mode<synchronous>, transform_indices = @transform_9, window_bounds = array<i64: 2, 16, 32>}, {pipeline_mode = #tpu.pipeline_mode<synchronous>, transform_indices = @transform_10, window_bounds = array<i64: 1, 32>}, {pipeline_mode = #tpu.pipeline_mode<synchronous>, transform_indices = @transform_11, window_bounds = array<i64: 32, 32>}, {pipeline_mode = #tpu.pipeline_mode<synchronous>, transform_indices = @transform_12, window_bounds = array<i64: 1, 32>}, {transform_indices = @transform_13, window_bounds = array<i64: 4, 4, 32>}]} {
    %c0 = arith.constant 0 : index
    %c0_0 = arith.constant 0 : index
    %c0_1 = arith.constant 0 : index
    %0 = vector.load %arg1[%c0, %c0_0, %c0_1] : memref<4x4x32xf32, #tpu.memory_space<vmem>>, vector<4x4x32xf32>
    %1 = vector.shape_cast %0 : vector<4x4x32xf32> to vector<16x32xf32>
    %2 = arith.truncf %1 : vector<16x32xf32> to vector<16x32xbf16>
    %c0_2 = arith.constant 0 : index
    %c0_3 = arith.constant 0 : index
    %3 = vector.load %arg2[%c0_2, %c0_3] : memref<32x32xbf16, #tpu.memory_space<vmem>>, vector<32x32xbf16>
    %cst = arith.constant dense<0.000000e+00> : vector<16x32xf32>
    %4 = tpu.matmul %2, %3, %cst {dimension_numbers = #tpu.dot_dimension_numbers<[1], [0], [0], [1], [0, 0, 1, 1], [], []>} : vector<16x32xbf16>, vector<32x32xbf16>, vector<16x32xf32> -> vector<16x32xf32>
    %c0_4 = arith.constant 0 : index
    %c0_5 = arith.constant 0 : index
    %5 = vector.load %arg3[%c0_4, %c0_5] : memref<1x32xf32, #tpu.memory_space<vmem>>, vector<1x32xf32>
    %6 = vector.broadcast %5 : vector<1x32xf32> to vector<16x32xf32>
    %7 = arith.addf %4, %6 : vector<16x32xf32>
    %8 = math.absf %7 : vector<16x32xf32>
    %cst_6 = arith.constant 0.000000e+00 : f32
    %9 = vector.broadcast %cst_6 : f32 to vector<16x32xf32>
    %10 = arith.subf %9, %8 : vector<16x32xf32>
    %11 = math.exp %10 : vector<16x32xf32>
    %12 = arith.mulf %11, %11 : vector<16x32xf32>
    %cst_7 = arith.constant 0.000000e+00 : f32
    %13 = vector.broadcast %cst_7 : f32 to vector<16x32xf32>
    %14 = arith.cmpf oge, %7, %13 : vector<16x32xf32>
    %cst_8 = arith.constant 2.000000e+00 : f32
    %15 = vector.broadcast %cst_8 : f32 to vector<16x32xf32>
    %16 = arith.mulf %15, %11 : vector<16x32xf32>
    %cst_9 = arith.constant 1.000000e+00 : f32
    %17 = vector.broadcast %cst_9 : f32 to vector<16x32xf32>
    %18 = arith.addf %17, %16 : vector<16x32xf32>
    %cst_10 = arith.constant 2.000000e+00 : f32
    %19 = vector.broadcast %cst_10 : f32 to vector<16x32xf32>
    %20 = arith.mulf %19, %11 : vector<16x32xf32>
    %21 = arith.addf %20, %12 : vector<16x32xf32>
    %22 = arith.select %14, %18, %21 : vector<16x32xi1>, vector<16x32xf32>
    %cst_11 = arith.constant 2.000000e+00 : f32
    %23 = vector.broadcast %cst_11 : f32 to vector<16x32xf32>
    %24 = arith.mulf %23, %11 : vector<16x32xf32>
    %cst_12 = arith.constant 1.000000e+00 : f32
    %25 = vector.broadcast %cst_12 : f32 to vector<16x32xf32>
    %26 = arith.addf %25, %24 : vector<16x32xf32>
    %cst_13 = arith.constant 2.000000e+00 : f32
    %27 = vector.broadcast %cst_13 : f32 to vector<16x32xf32>
    %28 = arith.mulf %27, %12 : vector<16x32xf32>
    %29 = arith.addf %26, %28 : vector<16x32xf32>
    %cst_14 = arith.constant 2.000000e+00 : f32
    %30 = vector.broadcast %cst_14 : f32 to vector<16x32xf32>
    %31 = arith.mulf %30, %11 : vector<16x32xf32>
    %cst_15 = arith.constant 2.000000e+00 : f32
    %32 = vector.broadcast %cst_15 : f32 to vector<16x32xf32>
    %33 = arith.addf %32, %31 : vector<16x32xf32>
    %34 = arith.addf %33, %12 : vector<16x32xf32>
    %35 = arith.select %14, %29, %34 : vector<16x32xi1>, vector<16x32xf32>
    %36 = tpu.reciprocal %35 {approx = true} : vector<16x32xf32> -> vector<16x32xf32>
    %37 = arith.mulf %35, %36 : vector<16x32xf32>
    %cst_16 = arith.constant 2.000000e+00 : f32
    %38 = vector.broadcast %cst_16 : f32 to vector<16x32xf32>
    %39 = arith.subf %38, %37 : vector<16x32xf32>
    %40 = arith.mulf %36, %39 : vector<16x32xf32>
    %41 = arith.mulf %7, %22 : vector<16x32xf32>
    %42 = arith.mulf %41, %40 : vector<16x32xf32>
    %43 = arith.truncf %42 : vector<16x32xf32> to vector<16x32xbf16>
    %c0_17 = arith.constant 0 : index
    %c0_18 = arith.constant 0 : index
    %c0_19 = arith.constant 0 : index
    %44 = vector.load %arg4[%c0_17, %c0_18, %c0_19] : memref<2x32x16xbf16, #tpu.memory_space<vmem>>, vector<1x32x16xbf16>
    %45 = vector.shape_cast %44 : vector<1x32x16xbf16> to vector<32x16xbf16>
    %cst_20 = arith.constant dense<0.000000e+00> : vector<16x16xf32>
    %46 = tpu.matmul %43, %45, %cst_20 {dimension_numbers = #tpu.dot_dimension_numbers<[1], [0], [0], [1], [0, 0, 1, 1], [], []>} : vector<16x32xbf16>, vector<32x16xbf16>, vector<16x16xf32> -> vector<16x16xf32>
    %c0_21 = arith.constant 0 : index
    %c0_22 = arith.constant 0 : index
    %c0_23 = arith.constant 0 : index
    %47 = vector.load %arg5[%c0_21, %c0_22, %c0_23] : memref<2x32x16xbf16, #tpu.memory_space<vmem>>, vector<1x32x16xbf16>
    %48 = vector.shape_cast %47 : vector<1x32x16xbf16> to vector<32x16xbf16>
    %cst_24 = arith.constant dense<0.000000e+00> : vector<16x16xf32>
    %49 = tpu.matmul %43, %48, %cst_24 {dimension_numbers = #tpu.dot_dimension_numbers<[1], [0], [0], [1], [0, 0, 1, 1], [], []>} : vector<16x32xbf16>, vector<32x16xbf16>, vector<16x16xf32> -> vector<16x16xf32>
    %c0_25 = arith.constant 0 : index
    %c0_26 = arith.constant 0 : index
    %c0_27 = arith.constant 0 : index
    %50 = vector.load %arg6[%c0_25, %c0_26, %c0_27] : memref<2x32x16xbf16, #tpu.memory_space<vmem>>, vector<1x32x16xbf16>
    %51 = vector.shape_cast %50 : vector<1x32x16xbf16> to vector<32x16xbf16>
    %cst_28 = arith.constant dense<0.000000e+00> : vector<16x16xf32>
    %52 = tpu.matmul %43, %51, %cst_28 {dimension_numbers = #tpu.dot_dimension_numbers<[1], [0], [0], [1], [0, 0, 1, 1], [], []>} : vector<16x32xbf16>, vector<32x16xbf16>, vector<16x16xf32> -> vector<16x16xf32>
    %53 = vector.shape_cast %46 : vector<16x16xf32> to vector<4x4x16xf32>
    %c0_29 = arith.constant 0 : index
    %c0_30 = arith.constant 0 : index
    %c0_31 = arith.constant 0 : index
    %54 = vector.load %arg7[%c0_29, %c0_30, %c0_31] : memref<2x4x16xf32, #tpu.memory_space<vmem>>, vector<1x4x16xf32>
    %55 = vector.shape_cast %54 : vector<1x4x16xf32> to vector<4x16xf32>
    %56 = vector.shape_cast %55 : vector<4x16xf32> to vector<1x4x16xf32>
    %57 = vector.broadcast %56 : vector<1x4x16xf32> to vector<4x4x16xf32>
    %58 = arith.addf %53, %57 : vector<4x4x16xf32>
    %59 = vector.shape_cast %49 : vector<16x16xf32> to vector<4x4x16xf32>
    %c0_32 = arith.constant 0 : index
    %c0_33 = arith.constant 0 : index
    %c0_34 = arith.constant 0 : index
    %60 = vector.load %arg8[%c0_32, %c0_33, %c0_34] : memref<2x4x16xf32, #tpu.memory_space<vmem>>, vector<1x4x16xf32>
    %61 = vector.shape_cast %60 : vector<1x4x16xf32> to vector<4x16xf32>
    %62 = vector.shape_cast %61 : vector<4x16xf32> to vector<1x4x16xf32>
    %63 = vector.broadcast %62 : vector<1x4x16xf32> to vector<4x4x16xf32>
    %64 = arith.addf %59, %63 : vector<4x4x16xf32>
    %65 = vector.shape_cast %52 : vector<16x16xf32> to vector<4x4x16xf32>
    %c0_35 = arith.constant 0 : index
    %c0_36 = arith.constant 0 : index
    %c0_37 = arith.constant 0 : index
    %66 = vector.load %arg9[%c0_35, %c0_36, %c0_37] : memref<2x1x16xf32, #tpu.memory_space<vmem>>, vector<1x1x16xf32>
    %67 = vector.shape_cast %66 : vector<1x1x16xf32> to vector<1x16xf32>
    %68 = vector.shape_cast %67 : vector<1x16xf32> to vector<1x1x16xf32>
    %69 = vector.broadcast %68 : vector<1x1x16xf32> to vector<4x4x16xf32>
    %70 = arith.addf %65, %69 : vector<4x4x16xf32>
    %c1 = arith.constant 1 : index
    %c0_38 = arith.constant 0 : index
    %c0_39 = arith.constant 0 : index
    %71 = vector.load %arg4[%c1, %c0_38, %c0_39] : memref<2x32x16xbf16, #tpu.memory_space<vmem>>, vector<1x32x16xbf16>
    %72 = vector.shape_cast %71 : vector<1x32x16xbf16> to vector<32x16xbf16>
    %cst_40 = arith.constant dense<0.000000e+00> : vector<16x16xf32>
    %73 = tpu.matmul %43, %72, %cst_40 {dimension_numbers = #tpu.dot_dimension_numbers<[1], [0], [0], [1], [0, 0, 1, 1], [], []>} : vector<16x32xbf16>, vector<32x16xbf16>, vector<16x16xf32> -> vector<16x16xf32>
    %c1_41 = arith.constant 1 : index
    %c0_42 = arith.constant 0 : index
    %c0_43 = arith.constant 0 : index
    %74 = vector.load %arg5[%c1_41, %c0_42, %c0_43] : memref<2x32x16xbf16, #tpu.memory_space<vmem>>, vector<1x32x16xbf16>
    %75 = vector.shape_cast %74 : vector<1x32x16xbf16> to vector<32x16xbf16>
    %cst_44 = arith.constant dense<0.000000e+00> : vector<16x16xf32>
    %76 = tpu.matmul %43, %75, %cst_44 {dimension_numbers = #tpu.dot_dimension_numbers<[1], [0], [0], [1], [0, 0, 1, 1], [], []>} : vector<16x32xbf16>, vector<32x16xbf16>, vector<16x16xf32> -> vector<16x16xf32>
    %c1_45 = arith.constant 1 : index
    %c0_46 = arith.constant 0 : index
    %c0_47 = arith.constant 0 : index
    %77 = vector.load %arg6[%c1_45, %c0_46, %c0_47] : memref<2x32x16xbf16, #tpu.memory_space<vmem>>, vector<1x32x16xbf16>
    %78 = vector.shape_cast %77 : vector<1x32x16xbf16> to vector<32x16xbf16>
    %cst_48 = arith.constant dense<0.000000e+00> : vector<16x16xf32>
    %79 = tpu.matmul %43, %78, %cst_48 {dimension_numbers = #tpu.dot_dimension_numbers<[1], [0], [0], [1], [0, 0, 1, 1], [], []>} : vector<16x32xbf16>, vector<32x16xbf16>, vector<16x16xf32> -> vector<16x16xf32>
    %80 = vector.shape_cast %73 : vector<16x16xf32> to vector<4x4x16xf32>
    %c1_49 = arith.constant 1 : index
    %c0_50 = arith.constant 0 : index
    %c0_51 = arith.constant 0 : index
    %81 = vector.load %arg7[%c1_49, %c0_50, %c0_51] : memref<2x4x16xf32, #tpu.memory_space<vmem>>, vector<1x4x16xf32>
    %82 = vector.shape_cast %81 : vector<1x4x16xf32> to vector<4x16xf32>
    %83 = vector.shape_cast %82 : vector<4x16xf32> to vector<1x4x16xf32>
    %84 = vector.broadcast %83 : vector<1x4x16xf32> to vector<4x4x16xf32>
    %85 = arith.addf %80, %84 : vector<4x4x16xf32>
    %86 = vector.shape_cast %76 : vector<16x16xf32> to vector<4x4x16xf32>
    %c1_52 = arith.constant 1 : index
    %c0_53 = arith.constant 0 : index
    %c0_54 = arith.constant 0 : index
    %87 = vector.load %arg8[%c1_52, %c0_53, %c0_54] : memref<2x4x16xf32, #tpu.memory_space<vmem>>, vector<1x4x16xf32>
    %88 = vector.shape_cast %87 : vector<1x4x16xf32> to vector<4x16xf32>
    %89 = vector.shape_cast %88 : vector<4x16xf32> to vector<1x4x16xf32>
    %90 = vector.broadcast %89 : vector<1x4x16xf32> to vector<4x4x16xf32>
    %91 = arith.addf %86, %90 : vector<4x4x16xf32>
    %92 = vector.shape_cast %79 : vector<16x16xf32> to vector<4x4x16xf32>
    %c1_55 = arith.constant 1 : index
    %c0_56 = arith.constant 0 : index
    %c0_57 = arith.constant 0 : index
    %93 = vector.load %arg9[%c1_55, %c0_56, %c0_57] : memref<2x1x16xf32, #tpu.memory_space<vmem>>, vector<1x1x16xf32>
    %94 = vector.shape_cast %93 : vector<1x1x16xf32> to vector<1x16xf32>
    %95 = vector.shape_cast %94 : vector<1x16xf32> to vector<1x1x16xf32>
    %96 = vector.broadcast %95 : vector<1x1x16xf32> to vector<4x4x16xf32>
    %97 = arith.addf %92, %96 : vector<4x4x16xf32>
    %98 = tpu.concatenate %58, %85 in 0 : vector<4x4x16xf32>, vector<4x4x16xf32> -> vector<8x4x16xf32>
    %99 = arith.truncf %98 : vector<8x4x16xf32> to vector<8x4x16xbf16>
    %100 = tpu.concatenate %64, %91 in 0 : vector<4x4x16xf32>, vector<4x4x16xf32> -> vector<8x4x16xf32>
    %101 = arith.truncf %100 : vector<8x4x16xf32> to vector<8x4x16xbf16>
    %102 = tpu.concatenate %70, %97 in 0 : vector<4x4x16xf32>, vector<4x4x16xf32> -> vector<8x4x16xf32>
    %103 = arith.truncf %102 : vector<8x4x16xf32> to vector<8x4x16xbf16>
    "tpu.trace_start"() <{level = 10 : i32, message = "bpc,bqc->bpq"}> : () -> ()
    %cst_58 = arith.constant dense<0.000000e+00> : vector<8x4x4xf32>
    %104 = tpu.matmul %99, %101, %cst_58 {dimension_numbers = #tpu.dot_dimension_numbers<[2], [2], [1], [1], [0, 0, 0, 1, 1, 1], [0], [0]>} : vector<8x4x16xbf16>, vector<8x4x16xbf16>, vector<8x4x4xf32> -> vector<8x4x4xf32>
    "tpu.trace_stop"() : () -> ()
    %cst_59 = arith.constant 2.500000e-01 : f32
    %105 = vector.broadcast %cst_59 : f32 to vector<8x4x4xf32>
    %106 = arith.mulf %104, %105 : vector<8x4x4xf32>
    %cst_60 = arith.constant dense<0xFF800000> : vector<8x4xf32>
    %107 = vector.multi_reduction <maximumf>, %106, %cst_60 [1] : vector<8x4x4xf32> to vector<8x4xf32>
    %108 = vector.shape_cast %107 : vector<8x4xf32> to vector<8x1x4xf32>
    %109 = vector.broadcast %108 : vector<8x1x4xf32> to vector<8x4x4xf32>
    %110 = arith.subf %106, %109 : vector<8x4x4xf32>
    %111 = math.exp %110 : vector<8x4x4xf32>
    %cst_61 = arith.constant dense<0.000000e+00> : vector<8x4xf32>
    %112 = vector.multi_reduction <add>, %111, %cst_61 [1] : vector<8x4x4xf32> to vector<8x4xf32>
    %113 = vector.shape_cast %112 : vector<8x4xf32> to vector<8x1x4xf32>
    %114 = tpu.reciprocal %113 {approx = true} : vector<8x1x4xf32> -> vector<8x1x4xf32>
    %115 = arith.mulf %113, %114 : vector<8x1x4xf32>
    %cst_62 = arith.constant 2.000000e+00 : f32
    %116 = vector.broadcast %cst_62 : f32 to vector<8x1x4xf32>
    %117 = arith.subf %116, %115 : vector<8x1x4xf32>
    %118 = arith.mulf %114, %117 : vector<8x1x4xf32>
    %119 = vector.broadcast %118 : vector<8x1x4xf32> to vector<8x4x4xf32>
    %120 = arith.mulf %111, %119 : vector<8x4x4xf32>
    %121 = arith.truncf %120 : vector<8x4x4xf32> to vector<8x4x4xbf16>
    "tpu.trace_start"() <{level = 10 : i32, message = "bpq,bqc->bpc"}> : () -> ()
    %cst_63 = arith.constant dense<0.000000e+00> : vector<8x4x16xf32>
    %122 = tpu.matmul %121, %103, %cst_63 {dimension_numbers = #tpu.dot_dimension_numbers<[2], [1], [1], [2], [0, 0, 0, 1, 1, 2], [0], [0]>} : vector<8x4x4xbf16>, vector<8x4x16xbf16>, vector<8x4x16xf32> -> vector<8x4x16xf32>
    "tpu.trace_stop"() : () -> ()
    %123 = vector.extract_strided_slice %122 {offsets = [0, 0, 0], sizes = [4, 4, 16], strides = [1, 1, 1]} : vector<8x4x16xf32> to vector<4x4x16xf32>
    %124 = vector.shape_cast %123 : vector<4x4x16xf32> to vector<16x16xf32>
    %125 = arith.truncf %124 : vector<16x16xf32> to vector<16x16xbf16>
    %c0_64 = arith.constant 0 : index
    %c0_65 = arith.constant 0 : index
    %c0_66 = arith.constant 0 : index
    %126 = vector.load %arg10[%c0_64, %c0_65, %c0_66] : memref<2x16x32xbf16, #tpu.memory_space<vmem>>, vector<1x16x32xbf16>
    %127 = vector.shape_cast %126 : vector<1x16x32xbf16> to vector<16x32xbf16>
    %cst_67 = arith.constant dense<0.000000e+00> : vector<16x32xf32>
    %128 = tpu.matmul %125, %127, %cst_67 {dimension_numbers = #tpu.dot_dimension_numbers<[1], [0], [0], [1], [0, 0, 1, 1], [], []>} : vector<16x16xbf16>, vector<16x32xbf16>, vector<16x32xf32> -> vector<16x32xf32>
    %129 = vector.extract_strided_slice %122 {offsets = [4, 0, 0], sizes = [4, 4, 16], strides = [1, 1, 1]} : vector<8x4x16xf32> to vector<4x4x16xf32>
    %130 = vector.shape_cast %129 : vector<4x4x16xf32> to vector<16x16xf32>
    %131 = arith.truncf %130 : vector<16x16xf32> to vector<16x16xbf16>
    %c1_68 = arith.constant 1 : index
    %c0_69 = arith.constant 0 : index
    %c0_70 = arith.constant 0 : index
    %132 = vector.load %arg10[%c1_68, %c0_69, %c0_70] : memref<2x16x32xbf16, #tpu.memory_space<vmem>>, vector<1x16x32xbf16>
    %133 = vector.shape_cast %132 : vector<1x16x32xbf16> to vector<16x32xbf16>
    %cst_71 = arith.constant dense<0.000000e+00> : vector<16x32xf32>
    %134 = tpu.matmul %131, %133, %cst_71 {dimension_numbers = #tpu.dot_dimension_numbers<[1], [0], [0], [1], [0, 0, 1, 1], [], []>} : vector<16x16xbf16>, vector<16x32xbf16>, vector<16x32xf32> -> vector<16x32xf32>
    %135 = arith.addf %128, %134 : vector<16x32xf32>
    %c0_72 = arith.constant 0 : index
    %c0_73 = arith.constant 0 : index
    %136 = vector.load %arg11[%c0_72, %c0_73] : memref<1x32xf32, #tpu.memory_space<vmem>>, vector<1x32xf32>
    %137 = vector.broadcast %136 : vector<1x32xf32> to vector<16x32xf32>
    %138 = arith.addf %135, %137 : vector<16x32xf32>
    %139 = math.absf %138 : vector<16x32xf32>
    %cst_74 = arith.constant 0.000000e+00 : f32
    %140 = vector.broadcast %cst_74 : f32 to vector<16x32xf32>
    %141 = arith.subf %140, %139 : vector<16x32xf32>
    %142 = math.exp %141 : vector<16x32xf32>
    %143 = arith.mulf %142, %142 : vector<16x32xf32>
    %cst_75 = arith.constant 0.000000e+00 : f32
    %144 = vector.broadcast %cst_75 : f32 to vector<16x32xf32>
    %145 = arith.cmpf oge, %138, %144 : vector<16x32xf32>
    %cst_76 = arith.constant 2.000000e+00 : f32
    %146 = vector.broadcast %cst_76 : f32 to vector<16x32xf32>
    %147 = arith.mulf %146, %142 : vector<16x32xf32>
    %cst_77 = arith.constant 1.000000e+00 : f32
    %148 = vector.broadcast %cst_77 : f32 to vector<16x32xf32>
    %149 = arith.addf %148, %147 : vector<16x32xf32>
    %cst_78 = arith.constant 2.000000e+00 : f32
    %150 = vector.broadcast %cst_78 : f32 to vector<16x32xf32>
    %151 = arith.mulf %150, %142 : vector<16x32xf32>
    %152 = arith.addf %151, %143 : vector<16x32xf32>
    %153 = arith.select %145, %149, %152 : vector<16x32xi1>, vector<16x32xf32>
    %cst_79 = arith.constant 2.000000e+00 : f32
    %154 = vector.broadcast %cst_79 : f32 to vector<16x32xf32>
    %155 = arith.mulf %154, %142 : vector<16x32xf32>
    %cst_80 = arith.constant 1.000000e+00 : f32
    %156 = vector.broadcast %cst_80 : f32 to vector<16x32xf32>
    %157 = arith.addf %156, %155 : vector<16x32xf32>
    %cst_81 = arith.constant 2.000000e+00 : f32
    %158 = vector.broadcast %cst_81 : f32 to vector<16x32xf32>
    %159 = arith.mulf %158, %143 : vector<16x32xf32>
    %160 = arith.addf %157, %159 : vector<16x32xf32>
    %cst_82 = arith.constant 2.000000e+00 : f32
    %161 = vector.broadcast %cst_82 : f32 to vector<16x32xf32>
    %162 = arith.mulf %161, %142 : vector<16x32xf32>
    %cst_83 = arith.constant 2.000000e+00 : f32
    %163 = vector.broadcast %cst_83 : f32 to vector<16x32xf32>
    %164 = arith.addf %163, %162 : vector<16x32xf32>
    %165 = arith.addf %164, %143 : vector<16x32xf32>
    %166 = arith.select %145, %160, %165 : vector<16x32xi1>, vector<16x32xf32>
    %167 = tpu.reciprocal %166 {approx = true} : vector<16x32xf32> -> vector<16x32xf32>
    %168 = arith.mulf %166, %167 : vector<16x32xf32>
    %cst_84 = arith.constant 2.000000e+00 : f32
    %169 = vector.broadcast %cst_84 : f32 to vector<16x32xf32>
    %170 = arith.subf %169, %168 : vector<16x32xf32>
    %171 = arith.mulf %167, %170 : vector<16x32xf32>
    %172 = arith.mulf %138, %153 : vector<16x32xf32>
    %173 = arith.mulf %172, %171 : vector<16x32xf32>
    %174 = arith.truncf %173 : vector<16x32xf32> to vector<16x32xbf16>
    %c0_85 = arith.constant 0 : index
    %c0_86 = arith.constant 0 : index
    %175 = vector.load %arg12[%c0_85, %c0_86] : memref<32x32xbf16, #tpu.memory_space<vmem>>, vector<32x32xbf16>
    %cst_87 = arith.constant dense<0.000000e+00> : vector<16x32xf32>
    %176 = tpu.matmul %174, %175, %cst_87 {dimension_numbers = #tpu.dot_dimension_numbers<[1], [0], [0], [1], [0, 0, 1, 1], [], []>} : vector<16x32xbf16>, vector<32x32xbf16>, vector<16x32xf32> -> vector<16x32xf32>
    %c0_88 = arith.constant 0 : index
    %c0_89 = arith.constant 0 : index
    %177 = vector.load %arg13[%c0_88, %c0_89] : memref<1x32xf32, #tpu.memory_space<vmem>>, vector<1x32xf32>
    %178 = vector.broadcast %177 : vector<1x32xf32> to vector<16x32xf32>
    %179 = arith.addf %176, %178 : vector<16x32xf32>
    %180 = arith.addf %179, %42 : vector<16x32xf32>
    %181 = vector.shape_cast %180 : vector<16x32xf32> to vector<4x4x32xf32>
    %c0_90 = arith.constant 0 : index
    %c0_91 = arith.constant 0 : index
    %c0_92 = arith.constant 0 : index
    %182 = vector.load %arg14[%c0_90, %c0_91, %c0_92] : memref<4x4x32xf32, #tpu.memory_space<vmem>>, vector<4x4x32xf32>
    tpu.vector_store %arg14[%c0_90, %c0_91, %c0_92], %181 {strides = array<i32>} : memref<4x4x32xf32, #tpu.memory_space<vmem>>, vector<4x4x32xf32>,
    return
  }
  func.func @transform_0(%arg0: i32) -> (i32, i32, i32) {
    %c0_i32 = arith.constant 0 : i32
    %c0_i32_0 = arith.constant 0 : i32
    %c0_i32_1 = arith.constant 0 : i32
    return %arg0, %c0_i32, %c0_i32_0 : i32, i32, i32
  }
  func.func @transform_1(%arg0: i32) -> (i32, i32) {
    %c0_i32 = arith.constant 0 : i32
    %c0_i32_0 = arith.constant 0 : i32
    %c0_i32_1 = arith.constant 0 : i32
    return %c0_i32, %c0_i32_0 : i32, i32
  }
  func.func @transform_2(%arg0: i32) -> (i32, i32) {
    %c0_i32 = arith.constant 0 : i32
    %c0_i32_0 = arith.constant 0 : i32
    %c0_i32_1 = arith.constant 0 : i32
    return %c0_i32, %c0_i32_0 : i32, i32
  }
  func.func @transform_3(%arg0: i32) -> (i32, i32, i32) {
    %c0_i32 = arith.constant 0 : i32
    %c0_i32_0 = arith.constant 0 : i32
    %c0_i32_1 = arith.constant 0 : i32
    %c0_i32_2 = arith.constant 0 : i32
    return %c0_i32, %c0_i32_0, %c0_i32_1 : i32, i32, i32
  }
  func.func @transform_4(%arg0: i32) -> (i32, i32, i32) {
    %c0_i32 = arith.constant 0 : i32
    %c0_i32_0 = arith.constant 0 : i32
    %c0_i32_1 = arith.constant 0 : i32
    %c0_i32_2 = arith.constant 0 : i32
    return %c0_i32, %c0_i32_0, %c0_i32_1 : i32, i32, i32
  }
  func.func @transform_5(%arg0: i32) -> (i32, i32, i32) {
    %c0_i32 = arith.constant 0 : i32
    %c0_i32_0 = arith.constant 0 : i32
    %c0_i32_1 = arith.constant 0 : i32
    %c0_i32_2 = arith.constant 0 : i32
    return %c0_i32, %c0_i32_0, %c0_i32_1 : i32, i32, i32
  }
  func.func @transform_6(%arg0: i32) -> (i32, i32, i32) {
    %c0_i32 = arith.constant 0 : i32
    %c0_i32_0 = arith.constant 0 : i32
    %c0_i32_1 = arith.constant 0 : i32
    %c0_i32_2 = arith.constant 0 : i32
    return %c0_i32, %c0_i32_0, %c0_i32_1 : i32, i32, i32
  }
  func.func @transform_7(%arg0: i32) -> (i32, i32, i32) {
    %c0_i32 = arith.constant 0 : i32
    %c0_i32_0 = arith.constant 0 : i32
    %c0_i32_1 = arith.constant 0 : i32
    %c0_i32_2 = arith.constant 0 : i32
    return %c0_i32, %c0_i32_0, %c0_i32_1 : i32, i32, i32
  }
  func.func @transform_8(%arg0: i32) -> (i32, i32, i32) {
    %c0_i32 = arith.constant 0 : i32
    %c0_i32_0 = arith.constant 0 : i32
    %c0_i32_1 = arith.constant 0 : i32
    %c0_i32_2 = arith.constant 0 : i32
    return %c0_i32, %c0_i32_0, %c0_i32_1 : i32, i32, i32
  }
  func.func @transform_9(%arg0: i32) -> (i32, i32, i32) {
    %c0_i32 = arith.constant 0 : i32
    %c0_i32_0 = arith.constant 0 : i32
    %c0_i32_1 = arith.constant 0 : i32
    %c0_i32_2 = arith.constant 0 : i32
    return %c0_i32, %c0_i32_0, %c0_i32_1 : i32, i32, i32
  }
  func.func @transform_10(%arg0: i32) -> (i32, i32) {
    %c0_i32 = arith.constant 0 : i32
    %c0_i32_0 = arith.constant 0 : i32
    %c0_i32_1 = arith.constant 0 : i32
    return %c0_i32, %c0_i32_0 : i32, i32
  }
  func.func @transform_11(%arg0: i32) -> (i32, i32) {
    %c0_i32 = arith.constant 0 : i32
    %c0_i32_0 = arith.constant 0 : i32
    %c0_i32_1 = arith.constant 0 : i32
    return %c0_i32, %c0_i32_0 : i32, i32
  }
  func.func @transform_12(%arg0: i32) -> (i32, i32) {
    %c0_i32 = arith.constant 0 : i32
    %c0_i32_0 = arith.constant 0 : i32
    %c0_i32_1 = arith.constant 0 : i32
    return %c0_i32, %c0_i32_0 : i32, i32
  }
  func.func @transform_13(%arg0: i32) -> (i32, i32, i32) {
    %c0_i32 = arith.constant 0 : i32
    %c0_i32_0 = arith.constant 0 : i32
    %c0_i32_1 = arith.constant 0 : i32
    return %arg0, %c0_i32, %c0_i32_0 : i32, i32, i32
  }
}

module attributes {stable_mosaic.version = 11 : i64} {
  func.func @_matmul_bias_kernel(%arg0: i32, %arg1: memref<8x128xf32, #tpu.memory_space<vmem>>, %arg2: memref<128x64xbf16, #tpu.memory_space<vmem>>, %arg3: memref<1x64xf32, #tpu.memory_space<vmem>>, %arg4: memref<8x64xf32, #tpu.memory_space<vmem>>) attributes {dimension_semantics = [#tpu.dimension_semantics<parallel>], iteration_bounds = array<i64: 1>, scalar_prefetch = 0 : i64, scratch_operands = 0 : i64, tpu.core_type = #tpu.core_type<tc>, window_params = [{transform_indices = @transform_0, window_bounds = array<i64: 8, 128>}, {pipeline_mode = #tpu.pipeline_mode<synchronous>, transform_indices = @transform_1, window_bounds = array<i64: 128, 64>}, {pipeline_mode = #tpu.pipeline_mode<synchronous>, transform_indices = @transform_2, window_bounds = array<i64: 1, 64>}, {transform_indices = @transform_3, window_bounds = array<i64: 8, 64>}]} {
    %c0 = arith.constant 0 : index
    %c0_0 = arith.constant 0 : index
    %0 = vector.load %arg1[%c0, %c0_0] : memref<8x128xf32, #tpu.memory_space<vmem>>, vector<8x128xf32>
    %1 = arith.truncf %0 : vector<8x128xf32> to vector<8x128xbf16>
    %c0_1 = arith.constant 0 : index
    %c0_2 = arith.constant 0 : index
    %2 = vector.load %arg2[%c0_1, %c0_2] : memref<128x64xbf16, #tpu.memory_space<vmem>>, vector<128x64xbf16>
    %cst = arith.constant dense<0.000000e+00> : vector<8x64xf32>
    %3 = tpu.matmul %1, %2, %cst {dimension_numbers = #tpu.dot_dimension_numbers<[1], [0], [0], [1], [0, 0, 1, 1], [], []>} : vector<8x128xbf16>, vector<128x64xbf16>, vector<8x64xf32> -> vector<8x64xf32>
    %c0_3 = arith.constant 0 : index
    %c0_4 = arith.constant 0 : index
    %4 = vector.load %arg3[%c0_3, %c0_4] : memref<1x64xf32, #tpu.memory_space<vmem>>, vector<1x64xf32>
    %5 = vector.broadcast %4 : vector<1x64xf32> to vector<8x64xf32>
    %6 = arith.addf %3, %5 : vector<8x64xf32>
    %c0_5 = arith.constant 0 : index
    %c0_6 = arith.constant 0 : index
    %7 = vector.load %arg4[%c0_5, %c0_6] : memref<8x64xf32, #tpu.memory_space<vmem>>, vector<8x64xf32>
    tpu.vector_store %arg4[%c0_5, %c0_6], %6 {strides = array<i32>} : memref<8x64xf32, #tpu.memory_space<vmem>>, vector<8x64xf32>,
    return
  }
  func.func @transform_0(%arg0: i32) -> (i32, i32) {
    %c0_i32 = arith.constant 0 : i32
    %c0_i32_0 = arith.constant 0 : i32
    return %arg0, %c0_i32 : i32, i32
  }
  func.func @transform_1(%arg0: i32) -> (i32, i32) {
    %c0_i32 = arith.constant 0 : i32
    %c0_i32_0 = arith.constant 0 : i32
    %c0_i32_1 = arith.constant 0 : i32
    return %c0_i32, %c0_i32_0 : i32, i32
  }
  func.func @transform_2(%arg0: i32) -> (i32, i32) {
    %c0_i32 = arith.constant 0 : i32
    %c0_i32_0 = arith.constant 0 : i32
    %c0_i32_1 = arith.constant 0 : i32
    return %c0_i32, %c0_i32_0 : i32, i32
  }
  func.func @transform_3(%arg0: i32) -> (i32, i32) {
    %c0_i32 = arith.constant 0 : i32
    %c0_i32_0 = arith.constant 0 : i32
    return %arg0, %c0_i32 : i32, i32
  }
}

module attributes {stable_mosaic.version = 11 : i64} {
  func.func @_attention_stage_kernel(%arg0: i32, %arg1: memref<1x4x64xf32, #tpu.memory_space<vmem>>, %arg2: memref<64x64xbf16, #tpu.memory_space<vmem>>, %arg3: memref<1x64xf32, #tpu.memory_space<vmem>>, %arg4: memref<2x64x32xbf16, #tpu.memory_space<vmem>>, %arg5: memref<2x64x32xbf16, #tpu.memory_space<vmem>>, %arg6: memref<2x64x32xbf16, #tpu.memory_space<vmem>>, %arg7: memref<2x4x32xf32, #tpu.memory_space<vmem>>, %arg8: memref<2x4x32xf32, #tpu.memory_space<vmem>>, %arg9: memref<2x1x32xf32, #tpu.memory_space<vmem>>, %arg10: memref<2x32x64xbf16, #tpu.memory_space<vmem>>, %arg11: memref<1x64xf32, #tpu.memory_space<vmem>>, %arg12: memref<64x64xbf16, #tpu.memory_space<vmem>>, %arg13: memref<1x64xf32, #tpu.memory_space<vmem>>, %arg14: memref<1x4x64xf32, #tpu.memory_space<vmem>>) attributes {dimension_semantics = [#tpu.dimension_semantics<parallel>], iteration_bounds = array<i64: 2>, scalar_prefetch = 0 : i64, scratch_operands = 0 : i64, tpu.core_type = #tpu.core_type<tc>, window_params = [{transform_indices = @transform_0, window_bounds = array<i64: 1, 4, 64>}, {pipeline_mode = #tpu.pipeline_mode<synchronous>, transform_indices = @transform_1, window_bounds = array<i64: 64, 64>}, {pipeline_mode = #tpu.pipeline_mode<synchronous>, transform_indices = @transform_2, window_bounds = array<i64: 1, 64>}, {pipeline_mode = #tpu.pipeline_mode<synchronous>, transform_indices = @transform_3, window_bounds = array<i64: 2, 64, 32>}, {pipeline_mode = #tpu.pipeline_mode<synchronous>, transform_indices = @transform_4, window_bounds = array<i64: 2, 64, 32>}, {pipeline_mode = #tpu.pipeline_mode<synchronous>, transform_indices = @transform_5, window_bounds = array<i64: 2, 64, 32>}, {pipeline_mode = #tpu.pipeline_mode<synchronous>, transform_indices = @transform_6, window_bounds = array<i64: 2, 4, 32>}, {pipeline_mode = #tpu.pipeline_mode<synchronous>, transform_indices = @transform_7, window_bounds = array<i64: 2, 4, 32>}, {pipeline_mode = #tpu.pipeline_mode<synchronous>, transform_indices = @transform_8, window_bounds = array<i64: 2, 1, 32>}, {pipeline_mode = #tpu.pipeline_mode<synchronous>, transform_indices = @transform_9, window_bounds = array<i64: 2, 32, 64>}, {pipeline_mode = #tpu.pipeline_mode<synchronous>, transform_indices = @transform_10, window_bounds = array<i64: 1, 64>}, {pipeline_mode = #tpu.pipeline_mode<synchronous>, transform_indices = @transform_11, window_bounds = array<i64: 64, 64>}, {pipeline_mode = #tpu.pipeline_mode<synchronous>, transform_indices = @transform_12, window_bounds = array<i64: 1, 64>}, {transform_indices = @transform_13, window_bounds = array<i64: 1, 4, 64>}]} {
    %c0 = arith.constant 0 : index
    %c0_0 = arith.constant 0 : index
    %c0_1 = arith.constant 0 : index
    %0 = vector.load %arg1[%c0, %c0_0, %c0_1] : memref<1x4x64xf32, #tpu.memory_space<vmem>>, vector<1x4x64xf32>
    %1 = vector.shape_cast %0 : vector<1x4x64xf32> to vector<4x64xf32>
    %2 = arith.truncf %1 : vector<4x64xf32> to vector<4x64xbf16>
    %c0_2 = arith.constant 0 : index
    %c0_3 = arith.constant 0 : index
    %3 = vector.load %arg2[%c0_2, %c0_3] : memref<64x64xbf16, #tpu.memory_space<vmem>>, vector<64x64xbf16>
    %cst = arith.constant dense<0.000000e+00> : vector<4x64xf32>
    %4 = tpu.matmul %2, %3, %cst {dimension_numbers = #tpu.dot_dimension_numbers<[1], [0], [0], [1], [0, 0, 1, 1], [], []>} : vector<4x64xbf16>, vector<64x64xbf16>, vector<4x64xf32> -> vector<4x64xf32>
    %c0_4 = arith.constant 0 : index
    %c0_5 = arith.constant 0 : index
    %5 = vector.load %arg3[%c0_4, %c0_5] : memref<1x64xf32, #tpu.memory_space<vmem>>, vector<1x64xf32>
    %6 = vector.broadcast %5 : vector<1x64xf32> to vector<4x64xf32>
    %7 = arith.addf %4, %6 : vector<4x64xf32>
    %8 = math.absf %7 : vector<4x64xf32>
    %cst_6 = arith.constant 0.000000e+00 : f32
    %9 = vector.broadcast %cst_6 : f32 to vector<4x64xf32>
    %10 = arith.subf %9, %8 : vector<4x64xf32>
    %11 = math.exp %10 : vector<4x64xf32>
    %12 = arith.mulf %11, %11 : vector<4x64xf32>
    %cst_7 = arith.constant 0.000000e+00 : f32
    %13 = vector.broadcast %cst_7 : f32 to vector<4x64xf32>
    %14 = arith.cmpf oge, %7, %13 : vector<4x64xf32>
    %cst_8 = arith.constant 2.000000e+00 : f32
    %15 = vector.broadcast %cst_8 : f32 to vector<4x64xf32>
    %16 = arith.mulf %15, %11 : vector<4x64xf32>
    %cst_9 = arith.constant 1.000000e+00 : f32
    %17 = vector.broadcast %cst_9 : f32 to vector<4x64xf32>
    %18 = arith.addf %17, %16 : vector<4x64xf32>
    %cst_10 = arith.constant 2.000000e+00 : f32
    %19 = vector.broadcast %cst_10 : f32 to vector<4x64xf32>
    %20 = arith.mulf %19, %11 : vector<4x64xf32>
    %21 = arith.addf %20, %12 : vector<4x64xf32>
    %22 = arith.select %14, %18, %21 : vector<4x64xi1>, vector<4x64xf32>
    %cst_11 = arith.constant 2.000000e+00 : f32
    %23 = vector.broadcast %cst_11 : f32 to vector<4x64xf32>
    %24 = arith.mulf %23, %11 : vector<4x64xf32>
    %cst_12 = arith.constant 1.000000e+00 : f32
    %25 = vector.broadcast %cst_12 : f32 to vector<4x64xf32>
    %26 = arith.addf %25, %24 : vector<4x64xf32>
    %cst_13 = arith.constant 2.000000e+00 : f32
    %27 = vector.broadcast %cst_13 : f32 to vector<4x64xf32>
    %28 = arith.mulf %27, %12 : vector<4x64xf32>
    %29 = arith.addf %26, %28 : vector<4x64xf32>
    %cst_14 = arith.constant 2.000000e+00 : f32
    %30 = vector.broadcast %cst_14 : f32 to vector<4x64xf32>
    %31 = arith.mulf %30, %11 : vector<4x64xf32>
    %cst_15 = arith.constant 2.000000e+00 : f32
    %32 = vector.broadcast %cst_15 : f32 to vector<4x64xf32>
    %33 = arith.addf %32, %31 : vector<4x64xf32>
    %34 = arith.addf %33, %12 : vector<4x64xf32>
    %35 = arith.select %14, %29, %34 : vector<4x64xi1>, vector<4x64xf32>
    %36 = tpu.reciprocal %35 {approx = true} : vector<4x64xf32> -> vector<4x64xf32>
    %37 = arith.mulf %35, %36 : vector<4x64xf32>
    %cst_16 = arith.constant 2.000000e+00 : f32
    %38 = vector.broadcast %cst_16 : f32 to vector<4x64xf32>
    %39 = arith.subf %38, %37 : vector<4x64xf32>
    %40 = arith.mulf %36, %39 : vector<4x64xf32>
    %41 = arith.mulf %7, %22 : vector<4x64xf32>
    %42 = arith.mulf %41, %40 : vector<4x64xf32>
    %43 = arith.truncf %42 : vector<4x64xf32> to vector<4x64xbf16>
    %c0_17 = arith.constant 0 : index
    %c0_18 = arith.constant 0 : index
    %c0_19 = arith.constant 0 : index
    %44 = vector.load %arg4[%c0_17, %c0_18, %c0_19] : memref<2x64x32xbf16, #tpu.memory_space<vmem>>, vector<1x64x32xbf16>
    %45 = vector.shape_cast %44 : vector<1x64x32xbf16> to vector<64x32xbf16>
    %cst_20 = arith.constant dense<0.000000e+00> : vector<4x32xf32>
    %46 = tpu.matmul %43, %45, %cst_20 {dimension_numbers = #tpu.dot_dimension_numbers<[1], [0], [0], [1], [0, 0, 1, 1], [], []>} : vector<4x64xbf16>, vector<64x32xbf16>, vector<4x32xf32> -> vector<4x32xf32>
    %c0_21 = arith.constant 0 : index
    %c0_22 = arith.constant 0 : index
    %c0_23 = arith.constant 0 : index
    %47 = vector.load %arg5[%c0_21, %c0_22, %c0_23] : memref<2x64x32xbf16, #tpu.memory_space<vmem>>, vector<1x64x32xbf16>
    %48 = vector.shape_cast %47 : vector<1x64x32xbf16> to vector<64x32xbf16>
    %cst_24 = arith.constant dense<0.000000e+00> : vector<4x32xf32>
    %49 = tpu.matmul %43, %48, %cst_24 {dimension_numbers = #tpu.dot_dimension_numbers<[1], [0], [0], [1], [0, 0, 1, 1], [], []>} : vector<4x64xbf16>, vector<64x32xbf16>, vector<4x32xf32> -> vector<4x32xf32>
    %c0_25 = arith.constant 0 : index
    %c0_26 = arith.constant 0 : index
    %c0_27 = arith.constant 0 : index
    %50 = vector.load %arg6[%c0_25, %c0_26, %c0_27] : memref<2x64x32xbf16, #tpu.memory_space<vmem>>, vector<1x64x32xbf16>
    %51 = vector.shape_cast %50 : vector<1x64x32xbf16> to vector<64x32xbf16>
    %cst_28 = arith.constant dense<0.000000e+00> : vector<4x32xf32>
    %52 = tpu.matmul %43, %51, %cst_28 {dimension_numbers = #tpu.dot_dimension_numbers<[1], [0], [0], [1], [0, 0, 1, 1], [], []>} : vector<4x64xbf16>, vector<64x32xbf16>, vector<4x32xf32> -> vector<4x32xf32>
    %53 = vector.shape_cast %46 : vector<4x32xf32> to vector<1x4x32xf32>
    %c0_29 = arith.constant 0 : index
    %c0_30 = arith.constant 0 : index
    %c0_31 = arith.constant 0 : index
    %54 = vector.load %arg7[%c0_29, %c0_30, %c0_31] : memref<2x4x32xf32, #tpu.memory_space<vmem>>, vector<1x4x32xf32>
    %55 = vector.shape_cast %54 : vector<1x4x32xf32> to vector<4x32xf32>
    %56 = vector.shape_cast %55 : vector<4x32xf32> to vector<1x4x32xf32>
    %57 = arith.addf %53, %56 : vector<1x4x32xf32>
    %58 = vector.shape_cast %49 : vector<4x32xf32> to vector<1x4x32xf32>
    %c0_32 = arith.constant 0 : index
    %c0_33 = arith.constant 0 : index
    %c0_34 = arith.constant 0 : index
    %59 = vector.load %arg8[%c0_32, %c0_33, %c0_34] : memref<2x4x32xf32, #tpu.memory_space<vmem>>, vector<1x4x32xf32>
    %60 = vector.shape_cast %59 : vector<1x4x32xf32> to vector<4x32xf32>
    %61 = vector.shape_cast %60 : vector<4x32xf32> to vector<1x4x32xf32>
    %62 = arith.addf %58, %61 : vector<1x4x32xf32>
    %63 = vector.shape_cast %52 : vector<4x32xf32> to vector<1x4x32xf32>
    %c0_35 = arith.constant 0 : index
    %c0_36 = arith.constant 0 : index
    %c0_37 = arith.constant 0 : index
    %64 = vector.load %arg9[%c0_35, %c0_36, %c0_37] : memref<2x1x32xf32, #tpu.memory_space<vmem>>, vector<1x1x32xf32>
    %65 = vector.shape_cast %64 : vector<1x1x32xf32> to vector<1x32xf32>
    %66 = vector.shape_cast %65 : vector<1x32xf32> to vector<1x1x32xf32>
    %67 = vector.broadcast %66 : vector<1x1x32xf32> to vector<1x4x32xf32>
    %68 = arith.addf %63, %67 : vector<1x4x32xf32>
    %c1 = arith.constant 1 : index
    %c0_38 = arith.constant 0 : index
    %c0_39 = arith.constant 0 : index
    %69 = vector.load %arg4[%c1, %c0_38, %c0_39] : memref<2x64x32xbf16, #tpu.memory_space<vmem>>, vector<1x64x32xbf16>
    %70 = vector.shape_cast %69 : vector<1x64x32xbf16> to vector<64x32xbf16>
    %cst_40 = arith.constant dense<0.000000e+00> : vector<4x32xf32>
    %71 = tpu.matmul %43, %70, %cst_40 {dimension_numbers = #tpu.dot_dimension_numbers<[1], [0], [0], [1], [0, 0, 1, 1], [], []>} : vector<4x64xbf16>, vector<64x32xbf16>, vector<4x32xf32> -> vector<4x32xf32>
    %c1_41 = arith.constant 1 : index
    %c0_42 = arith.constant 0 : index
    %c0_43 = arith.constant 0 : index
    %72 = vector.load %arg5[%c1_41, %c0_42, %c0_43] : memref<2x64x32xbf16, #tpu.memory_space<vmem>>, vector<1x64x32xbf16>
    %73 = vector.shape_cast %72 : vector<1x64x32xbf16> to vector<64x32xbf16>
    %cst_44 = arith.constant dense<0.000000e+00> : vector<4x32xf32>
    %74 = tpu.matmul %43, %73, %cst_44 {dimension_numbers = #tpu.dot_dimension_numbers<[1], [0], [0], [1], [0, 0, 1, 1], [], []>} : vector<4x64xbf16>, vector<64x32xbf16>, vector<4x32xf32> -> vector<4x32xf32>
    %c1_45 = arith.constant 1 : index
    %c0_46 = arith.constant 0 : index
    %c0_47 = arith.constant 0 : index
    %75 = vector.load %arg6[%c1_45, %c0_46, %c0_47] : memref<2x64x32xbf16, #tpu.memory_space<vmem>>, vector<1x64x32xbf16>
    %76 = vector.shape_cast %75 : vector<1x64x32xbf16> to vector<64x32xbf16>
    %cst_48 = arith.constant dense<0.000000e+00> : vector<4x32xf32>
    %77 = tpu.matmul %43, %76, %cst_48 {dimension_numbers = #tpu.dot_dimension_numbers<[1], [0], [0], [1], [0, 0, 1, 1], [], []>} : vector<4x64xbf16>, vector<64x32xbf16>, vector<4x32xf32> -> vector<4x32xf32>
    %78 = vector.shape_cast %71 : vector<4x32xf32> to vector<1x4x32xf32>
    %c1_49 = arith.constant 1 : index
    %c0_50 = arith.constant 0 : index
    %c0_51 = arith.constant 0 : index
    %79 = vector.load %arg7[%c1_49, %c0_50, %c0_51] : memref<2x4x32xf32, #tpu.memory_space<vmem>>, vector<1x4x32xf32>
    %80 = vector.shape_cast %79 : vector<1x4x32xf32> to vector<4x32xf32>
    %81 = vector.shape_cast %80 : vector<4x32xf32> to vector<1x4x32xf32>
    %82 = arith.addf %78, %81 : vector<1x4x32xf32>
    %83 = vector.shape_cast %74 : vector<4x32xf32> to vector<1x4x32xf32>
    %c1_52 = arith.constant 1 : index
    %c0_53 = arith.constant 0 : index
    %c0_54 = arith.constant 0 : index
    %84 = vector.load %arg8[%c1_52, %c0_53, %c0_54] : memref<2x4x32xf32, #tpu.memory_space<vmem>>, vector<1x4x32xf32>
    %85 = vector.shape_cast %84 : vector<1x4x32xf32> to vector<4x32xf32>
    %86 = vector.shape_cast %85 : vector<4x32xf32> to vector<1x4x32xf32>
    %87 = arith.addf %83, %86 : vector<1x4x32xf32>
    %88 = vector.shape_cast %77 : vector<4x32xf32> to vector<1x4x32xf32>
    %c1_55 = arith.constant 1 : index
    %c0_56 = arith.constant 0 : index
    %c0_57 = arith.constant 0 : index
    %89 = vector.load %arg9[%c1_55, %c0_56, %c0_57] : memref<2x1x32xf32, #tpu.memory_space<vmem>>, vector<1x1x32xf32>
    %90 = vector.shape_cast %89 : vector<1x1x32xf32> to vector<1x32xf32>
    %91 = vector.shape_cast %90 : vector<1x32xf32> to vector<1x1x32xf32>
    %92 = vector.broadcast %91 : vector<1x1x32xf32> to vector<1x4x32xf32>
    %93 = arith.addf %88, %92 : vector<1x4x32xf32>
    %94 = tpu.concatenate %57, %82 in 0 : vector<1x4x32xf32>, vector<1x4x32xf32> -> vector<2x4x32xf32>
    %95 = arith.truncf %94 : vector<2x4x32xf32> to vector<2x4x32xbf16>
    %96 = tpu.concatenate %62, %87 in 0 : vector<1x4x32xf32>, vector<1x4x32xf32> -> vector<2x4x32xf32>
    %97 = arith.truncf %96 : vector<2x4x32xf32> to vector<2x4x32xbf16>
    %98 = tpu.concatenate %68, %93 in 0 : vector<1x4x32xf32>, vector<1x4x32xf32> -> vector<2x4x32xf32>
    %99 = arith.truncf %98 : vector<2x4x32xf32> to vector<2x4x32xbf16>
    "tpu.trace_start"() <{level = 10 : i32, message = "bpc,bqc->bpq"}> : () -> ()
    %cst_58 = arith.constant dense<0.000000e+00> : vector<2x4x4xf32>
    %100 = tpu.matmul %95, %97, %cst_58 {dimension_numbers = #tpu.dot_dimension_numbers<[2], [2], [1], [1], [0, 0, 0, 1, 1, 1], [0], [0]>} : vector<2x4x32xbf16>, vector<2x4x32xbf16>, vector<2x4x4xf32> -> vector<2x4x4xf32>
    "tpu.trace_stop"() : () -> ()
    %cst_59 = arith.constant 0.176776692 : f32
    %101 = vector.broadcast %cst_59 : f32 to vector<2x4x4xf32>
    %102 = arith.mulf %100, %101 : vector<2x4x4xf32>
    %cst_60 = arith.constant dense<0xFF800000> : vector<2x4xf32>
    %103 = vector.multi_reduction <maximumf>, %102, %cst_60 [1] : vector<2x4x4xf32> to vector<2x4xf32>
    %104 = vector.shape_cast %103 : vector<2x4xf32> to vector<2x1x4xf32>
    %105 = vector.broadcast %104 : vector<2x1x4xf32> to vector<2x4x4xf32>
    %106 = arith.subf %102, %105 : vector<2x4x4xf32>
    %107 = math.exp %106 : vector<2x4x4xf32>
    %cst_61 = arith.constant dense<0.000000e+00> : vector<2x4xf32>
    %108 = vector.multi_reduction <add>, %107, %cst_61 [1] : vector<2x4x4xf32> to vector<2x4xf32>
    %109 = vector.shape_cast %108 : vector<2x4xf32> to vector<2x1x4xf32>
    %110 = tpu.reciprocal %109 {approx = true} : vector<2x1x4xf32> -> vector<2x1x4xf32>
    %111 = arith.mulf %109, %110 : vector<2x1x4xf32>
    %cst_62 = arith.constant 2.000000e+00 : f32
    %112 = vector.broadcast %cst_62 : f32 to vector<2x1x4xf32>
    %113 = arith.subf %112, %111 : vector<2x1x4xf32>
    %114 = arith.mulf %110, %113 : vector<2x1x4xf32>
    %115 = vector.broadcast %114 : vector<2x1x4xf32> to vector<2x4x4xf32>
    %116 = arith.mulf %107, %115 : vector<2x4x4xf32>
    %117 = arith.truncf %116 : vector<2x4x4xf32> to vector<2x4x4xbf16>
    "tpu.trace_start"() <{level = 10 : i32, message = "bpq,bqc->bpc"}> : () -> ()
    %cst_63 = arith.constant dense<0.000000e+00> : vector<2x4x32xf32>
    %118 = tpu.matmul %117, %99, %cst_63 {dimension_numbers = #tpu.dot_dimension_numbers<[2], [1], [1], [2], [0, 0, 0, 1, 1, 2], [0], [0]>} : vector<2x4x4xbf16>, vector<2x4x32xbf16>, vector<2x4x32xf32> -> vector<2x4x32xf32>
    "tpu.trace_stop"() : () -> ()
    %119 = vector.extract_strided_slice %118 {offsets = [0, 0, 0], sizes = [1, 4, 32], strides = [1, 1, 1]} : vector<2x4x32xf32> to vector<1x4x32xf32>
    %120 = vector.shape_cast %119 : vector<1x4x32xf32> to vector<4x32xf32>
    %121 = arith.truncf %120 : vector<4x32xf32> to vector<4x32xbf16>
    %c0_64 = arith.constant 0 : index
    %c0_65 = arith.constant 0 : index
    %c0_66 = arith.constant 0 : index
    %122 = vector.load %arg10[%c0_64, %c0_65, %c0_66] : memref<2x32x64xbf16, #tpu.memory_space<vmem>>, vector<1x32x64xbf16>
    %123 = vector.shape_cast %122 : vector<1x32x64xbf16> to vector<32x64xbf16>
    %cst_67 = arith.constant dense<0.000000e+00> : vector<4x64xf32>
    %124 = tpu.matmul %121, %123, %cst_67 {dimension_numbers = #tpu.dot_dimension_numbers<[1], [0], [0], [1], [0, 0, 1, 1], [], []>} : vector<4x32xbf16>, vector<32x64xbf16>, vector<4x64xf32> -> vector<4x64xf32>
    %125 = vector.extract_strided_slice %118 {offsets = [1, 0, 0], sizes = [1, 4, 32], strides = [1, 1, 1]} : vector<2x4x32xf32> to vector<1x4x32xf32>
    %126 = vector.shape_cast %125 : vector<1x4x32xf32> to vector<4x32xf32>
    %127 = arith.truncf %126 : vector<4x32xf32> to vector<4x32xbf16>
    %c1_68 = arith.constant 1 : index
    %c0_69 = arith.constant 0 : index
    %c0_70 = arith.constant 0 : index
    %128 = vector.load %arg10[%c1_68, %c0_69, %c0_70] : memref<2x32x64xbf16, #tpu.memory_space<vmem>>, vector<1x32x64xbf16>
    %129 = vector.shape_cast %128 : vector<1x32x64xbf16> to vector<32x64xbf16>
    %cst_71 = arith.constant dense<0.000000e+00> : vector<4x64xf32>
    %130 = tpu.matmul %127, %129, %cst_71 {dimension_numbers = #tpu.dot_dimension_numbers<[1], [0], [0], [1], [0, 0, 1, 1], [], []>} : vector<4x32xbf16>, vector<32x64xbf16>, vector<4x64xf32> -> vector<4x64xf32>
    %131 = arith.addf %124, %130 : vector<4x64xf32>
    %c0_72 = arith.constant 0 : index
    %c0_73 = arith.constant 0 : index
    %132 = vector.load %arg11[%c0_72, %c0_73] : memref<1x64xf32, #tpu.memory_space<vmem>>, vector<1x64xf32>
    %133 = vector.broadcast %132 : vector<1x64xf32> to vector<4x64xf32>
    %134 = arith.addf %131, %133 : vector<4x64xf32>
    %135 = math.absf %134 : vector<4x64xf32>
    %cst_74 = arith.constant 0.000000e+00 : f32
    %136 = vector.broadcast %cst_74 : f32 to vector<4x64xf32>
    %137 = arith.subf %136, %135 : vector<4x64xf32>
    %138 = math.exp %137 : vector<4x64xf32>
    %139 = arith.mulf %138, %138 : vector<4x64xf32>
    %cst_75 = arith.constant 0.000000e+00 : f32
    %140 = vector.broadcast %cst_75 : f32 to vector<4x64xf32>
    %141 = arith.cmpf oge, %134, %140 : vector<4x64xf32>
    %cst_76 = arith.constant 2.000000e+00 : f32
    %142 = vector.broadcast %cst_76 : f32 to vector<4x64xf32>
    %143 = arith.mulf %142, %138 : vector<4x64xf32>
    %cst_77 = arith.constant 1.000000e+00 : f32
    %144 = vector.broadcast %cst_77 : f32 to vector<4x64xf32>
    %145 = arith.addf %144, %143 : vector<4x64xf32>
    %cst_78 = arith.constant 2.000000e+00 : f32
    %146 = vector.broadcast %cst_78 : f32 to vector<4x64xf32>
    %147 = arith.mulf %146, %138 : vector<4x64xf32>
    %148 = arith.addf %147, %139 : vector<4x64xf32>
    %149 = arith.select %141, %145, %148 : vector<4x64xi1>, vector<4x64xf32>
    %cst_79 = arith.constant 2.000000e+00 : f32
    %150 = vector.broadcast %cst_79 : f32 to vector<4x64xf32>
    %151 = arith.mulf %150, %138 : vector<4x64xf32>
    %cst_80 = arith.constant 1.000000e+00 : f32
    %152 = vector.broadcast %cst_80 : f32 to vector<4x64xf32>
    %153 = arith.addf %152, %151 : vector<4x64xf32>
    %cst_81 = arith.constant 2.000000e+00 : f32
    %154 = vector.broadcast %cst_81 : f32 to vector<4x64xf32>
    %155 = arith.mulf %154, %139 : vector<4x64xf32>
    %156 = arith.addf %153, %155 : vector<4x64xf32>
    %cst_82 = arith.constant 2.000000e+00 : f32
    %157 = vector.broadcast %cst_82 : f32 to vector<4x64xf32>
    %158 = arith.mulf %157, %138 : vector<4x64xf32>
    %cst_83 = arith.constant 2.000000e+00 : f32
    %159 = vector.broadcast %cst_83 : f32 to vector<4x64xf32>
    %160 = arith.addf %159, %158 : vector<4x64xf32>
    %161 = arith.addf %160, %139 : vector<4x64xf32>
    %162 = arith.select %141, %156, %161 : vector<4x64xi1>, vector<4x64xf32>
    %163 = tpu.reciprocal %162 {approx = true} : vector<4x64xf32> -> vector<4x64xf32>
    %164 = arith.mulf %162, %163 : vector<4x64xf32>
    %cst_84 = arith.constant 2.000000e+00 : f32
    %165 = vector.broadcast %cst_84 : f32 to vector<4x64xf32>
    %166 = arith.subf %165, %164 : vector<4x64xf32>
    %167 = arith.mulf %163, %166 : vector<4x64xf32>
    %168 = arith.mulf %134, %149 : vector<4x64xf32>
    %169 = arith.mulf %168, %167 : vector<4x64xf32>
    %170 = arith.truncf %169 : vector<4x64xf32> to vector<4x64xbf16>
    %c0_85 = arith.constant 0 : index
    %c0_86 = arith.constant 0 : index
    %171 = vector.load %arg12[%c0_85, %c0_86] : memref<64x64xbf16, #tpu.memory_space<vmem>>, vector<64x64xbf16>
    %cst_87 = arith.constant dense<0.000000e+00> : vector<4x64xf32>
    %172 = tpu.matmul %170, %171, %cst_87 {dimension_numbers = #tpu.dot_dimension_numbers<[1], [0], [0], [1], [0, 0, 1, 1], [], []>} : vector<4x64xbf16>, vector<64x64xbf16>, vector<4x64xf32> -> vector<4x64xf32>
    %c0_88 = arith.constant 0 : index
    %c0_89 = arith.constant 0 : index
    %173 = vector.load %arg13[%c0_88, %c0_89] : memref<1x64xf32, #tpu.memory_space<vmem>>, vector<1x64xf32>
    %174 = vector.broadcast %173 : vector<1x64xf32> to vector<4x64xf32>
    %175 = arith.addf %172, %174 : vector<4x64xf32>
    %176 = arith.addf %175, %42 : vector<4x64xf32>
    %177 = vector.shape_cast %176 : vector<4x64xf32> to vector<1x4x64xf32>
    %c0_90 = arith.constant 0 : index
    %c0_91 = arith.constant 0 : index
    %c0_92 = arith.constant 0 : index
    %178 = vector.load %arg14[%c0_90, %c0_91, %c0_92] : memref<1x4x64xf32, #tpu.memory_space<vmem>>, vector<1x4x64xf32>
    tpu.vector_store %arg14[%c0_90, %c0_91, %c0_92], %177 {strides = array<i32>} : memref<1x4x64xf32, #tpu.memory_space<vmem>>, vector<1x4x64xf32>,
    return
  }
  func.func @transform_0(%arg0: i32) -> (i32, i32, i32) {
    %c0_i32 = arith.constant 0 : i32
    %c0_i32_0 = arith.constant 0 : i32
    %c0_i32_1 = arith.constant 0 : i32
    return %arg0, %c0_i32, %c0_i32_0 : i32, i32, i32
  }
  func.func @transform_1(%arg0: i32) -> (i32, i32) {
    %c0_i32 = arith.constant 0 : i32
    %c0_i32_0 = arith.constant 0 : i32
    %c0_i32_1 = arith.constant 0 : i32
    return %c0_i32, %c0_i32_0 : i32, i32
  }
  func.func @transform_2(%arg0: i32) -> (i32, i32) {
    %c0_i32 = arith.constant 0 : i32
    %c0_i32_0 = arith.constant 0 : i32
    %c0_i32_1 = arith.constant 0 : i32
    return %c0_i32, %c0_i32_0 : i32, i32
  }
  func.func @transform_3(%arg0: i32) -> (i32, i32, i32) {
    %c0_i32 = arith.constant 0 : i32
    %c0_i32_0 = arith.constant 0 : i32
    %c0_i32_1 = arith.constant 0 : i32
    %c0_i32_2 = arith.constant 0 : i32
    return %c0_i32, %c0_i32_0, %c0_i32_1 : i32, i32, i32
  }
  func.func @transform_4(%arg0: i32) -> (i32, i32, i32) {
    %c0_i32 = arith.constant 0 : i32
    %c0_i32_0 = arith.constant 0 : i32
    %c0_i32_1 = arith.constant 0 : i32
    %c0_i32_2 = arith.constant 0 : i32
    return %c0_i32, %c0_i32_0, %c0_i32_1 : i32, i32, i32
  }
  func.func @transform_5(%arg0: i32) -> (i32, i32, i32) {
    %c0_i32 = arith.constant 0 : i32
    %c0_i32_0 = arith.constant 0 : i32
    %c0_i32_1 = arith.constant 0 : i32
    %c0_i32_2 = arith.constant 0 : i32
    return %c0_i32, %c0_i32_0, %c0_i32_1 : i32, i32, i32
  }
  func.func @transform_6(%arg0: i32) -> (i32, i32, i32) {
    %c0_i32 = arith.constant 0 : i32
    %c0_i32_0 = arith.constant 0 : i32
    %c0_i32_1 = arith.constant 0 : i32
    %c0_i32_2 = arith.constant 0 : i32
    return %c0_i32, %c0_i32_0, %c0_i32_1 : i32, i32, i32
  }
  func.func @transform_7(%arg0: i32) -> (i32, i32, i32) {
    %c0_i32 = arith.constant 0 : i32
    %c0_i32_0 = arith.constant 0 : i32
    %c0_i32_1 = arith.constant 0 : i32
    %c0_i32_2 = arith.constant 0 : i32
    return %c0_i32, %c0_i32_0, %c0_i32_1 : i32, i32, i32
  }
  func.func @transform_8(%arg0: i32) -> (i32, i32, i32) {
    %c0_i32 = arith.constant 0 : i32
    %c0_i32_0 = arith.constant 0 : i32
    %c0_i32_1 = arith.constant 0 : i32
    %c0_i32_2 = arith.constant 0 : i32
    return %c0_i32, %c0_i32_0, %c0_i32_1 : i32, i32, i32
  }
  func.func @transform_9(%arg0: i32) -> (i32, i32, i32) {
    %c0_i32 = arith.constant 0 : i32
    %c0_i32_0 = arith.constant 0 : i32
    %c0_i32_1 = arith.constant 0 : i32
    %c0_i32_2 = arith.constant 0 : i32
    return %c0_i32, %c0_i32_0, %c0_i32_1 : i32, i32, i32
  }
  func.func @transform_10(%arg0: i32) -> (i32, i32) {
    %c0_i32 = arith.constant 0 : i32
    %c0_i32_0 = arith.constant 0 : i32
    %c0_i32_1 = arith.constant 0 : i32
    return %c0_i32, %c0_i32_0 : i32, i32
  }
  func.func @transform_11(%arg0: i32) -> (i32, i32) {
    %c0_i32 = arith.constant 0 : i32
    %c0_i32_0 = arith.constant 0 : i32
    %c0_i32_1 = arith.constant 0 : i32
    return %c0_i32, %c0_i32_0 : i32, i32
  }
  func.func @transform_12(%arg0: i32) -> (i32, i32) {
    %c0_i32 = arith.constant 0 : i32
    %c0_i32_0 = arith.constant 0 : i32
    %c0_i32_1 = arith.constant 0 : i32
    return %c0_i32, %c0_i32_0 : i32, i32
  }
  func.func @transform_13(%arg0: i32) -> (i32, i32, i32) {
    %c0_i32 = arith.constant 0 : i32
    %c0_i32_0 = arith.constant 0 : i32
    %c0_i32_1 = arith.constant 0 : i32
    return %arg0, %c0_i32, %c0_i32_0 : i32, i32, i32
  }
}

module attributes {stable_mosaic.version = 11 : i64} {
  func.func @_matmul_bias_kernel(%arg0: i32, %arg1: memref<2x256xf32, #tpu.memory_space<vmem>>, %arg2: memref<256x128xbf16, #tpu.memory_space<vmem>>, %arg3: memref<1x128xf32, #tpu.memory_space<vmem>>, %arg4: memref<2x128xf32, #tpu.memory_space<vmem>>) attributes {dimension_semantics = [#tpu.dimension_semantics<parallel>], iteration_bounds = array<i64: 1>, scalar_prefetch = 0 : i64, scratch_operands = 0 : i64, tpu.core_type = #tpu.core_type<tc>, window_params = [{transform_indices = @transform_0, window_bounds = array<i64: 2, 256>}, {pipeline_mode = #tpu.pipeline_mode<synchronous>, transform_indices = @transform_1, window_bounds = array<i64: 256, 128>}, {pipeline_mode = #tpu.pipeline_mode<synchronous>, transform_indices = @transform_2, window_bounds = array<i64: 1, 128>}, {transform_indices = @transform_3, window_bounds = array<i64: 2, 128>}]} {
    %c0 = arith.constant 0 : index
    %c0_0 = arith.constant 0 : index
    %0 = vector.load %arg1[%c0, %c0_0] : memref<2x256xf32, #tpu.memory_space<vmem>>, vector<2x256xf32>
    %1 = arith.truncf %0 : vector<2x256xf32> to vector<2x256xbf16>
    %c0_1 = arith.constant 0 : index
    %c0_2 = arith.constant 0 : index
    %2 = vector.load %arg2[%c0_1, %c0_2] : memref<256x128xbf16, #tpu.memory_space<vmem>>, vector<256x128xbf16>
    %cst = arith.constant dense<0.000000e+00> : vector<2x128xf32>
    %3 = tpu.matmul %1, %2, %cst {dimension_numbers = #tpu.dot_dimension_numbers<[1], [0], [0], [1], [0, 0, 1, 1], [], []>} : vector<2x256xbf16>, vector<256x128xbf16>, vector<2x128xf32> -> vector<2x128xf32>
    %c0_3 = arith.constant 0 : index
    %c0_4 = arith.constant 0 : index
    %4 = vector.load %arg3[%c0_3, %c0_4] : memref<1x128xf32, #tpu.memory_space<vmem>>, vector<1x128xf32>
    %5 = vector.broadcast %4 : vector<1x128xf32> to vector<2x128xf32>
    %6 = arith.addf %3, %5 : vector<2x128xf32>
    %c0_5 = arith.constant 0 : index
    %c0_6 = arith.constant 0 : index
    %7 = vector.load %arg4[%c0_5, %c0_6] : memref<2x128xf32, #tpu.memory_space<vmem>>, vector<2x128xf32>
    tpu.vector_store %arg4[%c0_5, %c0_6], %6 {strides = array<i32>} : memref<2x128xf32, #tpu.memory_space<vmem>>, vector<2x128xf32>,
    return
  }
  func.func @transform_0(%arg0: i32) -> (i32, i32) {
    %c0_i32 = arith.constant 0 : i32
    %c0_i32_0 = arith.constant 0 : i32
    return %arg0, %c0_i32 : i32, i32
  }
  func.func @transform_1(%arg0: i32) -> (i32, i32) {
    %c0_i32 = arith.constant 0 : i32
    %c0_i32_0 = arith.constant 0 : i32
    %c0_i32_1 = arith.constant 0 : i32
    return %c0_i32, %c0_i32_0 : i32, i32
  }
  func.func @transform_2(%arg0: i32) -> (i32, i32) {
    %c0_i32 = arith.constant 0 : i32
    %c0_i32_0 = arith.constant 0 : i32
    %c0_i32_1 = arith.constant 0 : i32
    return %c0_i32, %c0_i32_0 : i32, i32
  }
  func.func @transform_3(%arg0: i32) -> (i32, i32) {
    %c0_i32 = arith.constant 0 : i32
    %c0_i32_0 = arith.constant 0 : i32
    return %arg0, %c0_i32 : i32, i32
  }
}

module attributes {stable_mosaic.version = 11 : i64} {
  func.func @_matmul_bias_kernel(%arg0: i32, %arg1: memref<2x128xf32, #tpu.memory_space<vmem>>, %arg2: memref<128x128xbf16, #tpu.memory_space<vmem>>, %arg3: memref<1x128xf32, #tpu.memory_space<vmem>>, %arg4: memref<2x128xf32, #tpu.memory_space<vmem>>) attributes {dimension_semantics = [#tpu.dimension_semantics<parallel>], iteration_bounds = array<i64: 1>, scalar_prefetch = 0 : i64, scratch_operands = 0 : i64, tpu.core_type = #tpu.core_type<tc>, window_params = [{transform_indices = @transform_0, window_bounds = array<i64: 2, 128>}, {pipeline_mode = #tpu.pipeline_mode<synchronous>, transform_indices = @transform_1, window_bounds = array<i64: 128, 128>}, {pipeline_mode = #tpu.pipeline_mode<synchronous>, transform_indices = @transform_2, window_bounds = array<i64: 1, 128>}, {transform_indices = @transform_3, window_bounds = array<i64: 2, 128>}]} {
    %c0 = arith.constant 0 : index
    %c0_0 = arith.constant 0 : index
    %0 = vector.load %arg1[%c0, %c0_0] : memref<2x128xf32, #tpu.memory_space<vmem>>, vector<2x128xf32>
    %1 = arith.truncf %0 : vector<2x128xf32> to vector<2x128xbf16>
    %c0_1 = arith.constant 0 : index
    %c0_2 = arith.constant 0 : index
    %2 = vector.load %arg2[%c0_1, %c0_2] : memref<128x128xbf16, #tpu.memory_space<vmem>>, vector<128x128xbf16>
    %cst = arith.constant dense<0.000000e+00> : vector<2x128xf32>
    %3 = tpu.matmul %1, %2, %cst {dimension_numbers = #tpu.dot_dimension_numbers<[1], [0], [0], [1], [0, 0, 1, 1], [], []>} : vector<2x128xbf16>, vector<128x128xbf16>, vector<2x128xf32> -> vector<2x128xf32>
    %c0_3 = arith.constant 0 : index
    %c0_4 = arith.constant 0 : index
    %4 = vector.load %arg3[%c0_3, %c0_4] : memref<1x128xf32, #tpu.memory_space<vmem>>, vector<1x128xf32>
    %5 = vector.broadcast %4 : vector<1x128xf32> to vector<2x128xf32>
    %6 = arith.addf %3, %5 : vector<2x128xf32>
    %7 = math.absf %6 : vector<2x128xf32>
    %cst_5 = arith.constant 0.000000e+00 : f32
    %8 = vector.broadcast %cst_5 : f32 to vector<2x128xf32>
    %9 = arith.subf %8, %7 : vector<2x128xf32>
    %10 = math.exp %9 : vector<2x128xf32>
    %11 = arith.mulf %10, %10 : vector<2x128xf32>
    %cst_6 = arith.constant 0.000000e+00 : f32
    %12 = vector.broadcast %cst_6 : f32 to vector<2x128xf32>
    %13 = arith.cmpf oge, %6, %12 : vector<2x128xf32>
    %cst_7 = arith.constant 2.000000e+00 : f32
    %14 = vector.broadcast %cst_7 : f32 to vector<2x128xf32>
    %15 = arith.mulf %14, %10 : vector<2x128xf32>
    %cst_8 = arith.constant 1.000000e+00 : f32
    %16 = vector.broadcast %cst_8 : f32 to vector<2x128xf32>
    %17 = arith.addf %16, %15 : vector<2x128xf32>
    %cst_9 = arith.constant 2.000000e+00 : f32
    %18 = vector.broadcast %cst_9 : f32 to vector<2x128xf32>
    %19 = arith.mulf %18, %10 : vector<2x128xf32>
    %20 = arith.addf %19, %11 : vector<2x128xf32>
    %21 = arith.select %13, %17, %20 : vector<2x128xi1>, vector<2x128xf32>
    %cst_10 = arith.constant 2.000000e+00 : f32
    %22 = vector.broadcast %cst_10 : f32 to vector<2x128xf32>
    %23 = arith.mulf %22, %10 : vector<2x128xf32>
    %cst_11 = arith.constant 1.000000e+00 : f32
    %24 = vector.broadcast %cst_11 : f32 to vector<2x128xf32>
    %25 = arith.addf %24, %23 : vector<2x128xf32>
    %cst_12 = arith.constant 2.000000e+00 : f32
    %26 = vector.broadcast %cst_12 : f32 to vector<2x128xf32>
    %27 = arith.mulf %26, %11 : vector<2x128xf32>
    %28 = arith.addf %25, %27 : vector<2x128xf32>
    %cst_13 = arith.constant 2.000000e+00 : f32
    %29 = vector.broadcast %cst_13 : f32 to vector<2x128xf32>
    %30 = arith.mulf %29, %10 : vector<2x128xf32>
    %cst_14 = arith.constant 2.000000e+00 : f32
    %31 = vector.broadcast %cst_14 : f32 to vector<2x128xf32>
    %32 = arith.addf %31, %30 : vector<2x128xf32>
    %33 = arith.addf %32, %11 : vector<2x128xf32>
    %34 = arith.select %13, %28, %33 : vector<2x128xi1>, vector<2x128xf32>
    %35 = tpu.reciprocal %34 {approx = true} : vector<2x128xf32> -> vector<2x128xf32>
    %36 = arith.mulf %34, %35 : vector<2x128xf32>
    %cst_15 = arith.constant 2.000000e+00 : f32
    %37 = vector.broadcast %cst_15 : f32 to vector<2x128xf32>
    %38 = arith.subf %37, %36 : vector<2x128xf32>
    %39 = arith.mulf %35, %38 : vector<2x128xf32>
    %40 = arith.mulf %6, %21 : vector<2x128xf32>
    %41 = arith.mulf %40, %39 : vector<2x128xf32>
    %c0_16 = arith.constant 0 : index
    %c0_17 = arith.constant 0 : index
    %42 = vector.load %arg4[%c0_16, %c0_17] : memref<2x128xf32, #tpu.memory_space<vmem>>, vector<2x128xf32>
    tpu.vector_store %arg4[%c0_16, %c0_17], %41 {strides = array<i32>} : memref<2x128xf32, #tpu.memory_space<vmem>>, vector<2x128xf32>,
    return
  }
  func.func @transform_0(%arg0: i32) -> (i32, i32) {
    %c0_i32 = arith.constant 0 : i32
    %c0_i32_0 = arith.constant 0 : i32
    return %arg0, %c0_i32 : i32, i32
  }
  func.func @transform_1(%arg0: i32) -> (i32, i32) {
    %c0_i32 = arith.constant 0 : i32
    %c0_i32_0 = arith.constant 0 : i32
    %c0_i32_1 = arith.constant 0 : i32
    return %c0_i32, %c0_i32_0 : i32, i32
  }
  func.func @transform_2(%arg0: i32) -> (i32, i32) {
    %c0_i32 = arith.constant 0 : i32
    %c0_i32_0 = arith.constant 0 : i32
    %c0_i32_1 = arith.constant 0 : i32
    return %c0_i32, %c0_i32_0 : i32, i32
  }
  func.func @transform_3(%arg0: i32) -> (i32, i32) {
    %c0_i32 = arith.constant 0 : i32
    %c0_i32_0 = arith.constant 0 : i32
    return %arg0, %c0_i32 : i32, i32
  }
}

</mosaic_0001>

<llo_original>
// kernel: _lambda_.8
$region0: #{_lambda_.8}
  #allocation0 [shape = 'u32[]', space=smem, size = 0x4, offset = 0x4, fixed_abs, tag = 'smem constant byte address 0x4 - core index']
  #allocation1 [shape = 'u32[144,128]{1,0:T(1,128)}', space=vmem, size = 0x12000, scoped, tag = 'internal scratch']
  %s0 = inlined_call_operand.vmem [shape: f32[128,64], index: 0, kind: input, shape index: {}]
  %s1 = inlined_call_operand.vmem [shape: bf16[64,16], index: 1, kind: input, shape index: {}]
  %s2 = inlined_call_operand.vmem [shape: f32[1,16], index: 2, kind: input, shape index: {}]
  %s3 = inlined_call_operand.vmem [shape: f32[128,16], index: 3, kind: output, shape index: {}]
  %s4 = sld [smem:[#allocation0]]
  $region45: #{_lambda_.8} parent=0
    _
  %s6 = ssub.s32 1, %s4
  %s7 = scalar_select 0, %s6, %s4
  loop: start=0, step=1, limit=4
  $region2: #{_lambda_.8} parent=0 // loop_pre_header
    _
  $region3: #{_lambda_.8} parent=0 // loop_header
    %s9 = sphi 0, %s13
    %p10 = scmp.ge.s32.totalorder %s9, 4
    %s19 = sphi 0, %s21
    %s22 = sphi 0, %s19
    %s23 = sphi 0, %s22
    %s39 = sphi 0, %s23
    %s43 = sphi 0, %s43
    %s45 = sphi 0, %s43
    %s46 = sphi 0, %s45
    %s60 = sphi 0, %s46
    %s64 = sphi 0, %s64
    %s66 = sphi 0, %s64
    %s67 = sphi 0, %s66
    %s81 = sphi 0, %s67
    %s87 = sphi 0, %s89
    %s90 = sphi 0, %s87
    %s91 = sphi 0, %s90
    %s107 = sphi 0, %s91
  $region4: #{_lambda_.8} parent=0 // loop_header_branch
    %12 = sbr.rel (%p10) target = $region8
  $region5: #{_lambda_.8} parent=0 // loop_body
    %s14 = ssub.s32 %s9, 1
    %s15 = ssub.s32 %s9, 2
    %s16 = sadd.s32 %s9, 1
    %s17 = ssub.s32 %s9, %s16
    %p18 = scmp.eq.s32.totalorder %s17, 0
    %s20 = sadd.s32 %s19, 1
    %s21 = scalar_select %p18, %s19, %s20
    %p24 = pneg %p18
    %p25 = scmp.eq.s32.totalorder %s9, 1
    %p26 = por %p24, %p25
    %p27 = scmp.ne.s32.totalorder %s19, %s22
    %p28 = scmp.eq.s32.totalorder %s9, 0
    %p29 = por %p27, %p28
    %p30 = scmp.ne.s32.totalorder %s19, %s22
    %p31 = scmp.eq.s32.totalorder %s14, 1
    %p32 = por %p30, %p31
    %p33 = scmp.ne.s32.totalorder %s22, %s23
    %p34 = scmp.eq.s32.totalorder %s14, 0
    %p35 = por %p33, %p34
    %p36 = scmp.ne.s32.totalorder %s22, %s23
    %p37 = scmp.eq.s32.totalorder %s15, 1
    %p38 = por %p36, %p37
    %p40 = scmp.ne.s32.totalorder %s23, %s39
    %p41 = scmp.eq.s32.totalorder %s15, 0
    %p42 = por %p40, %p41
    %s44 = sadd.s32 %s43, 1
    %p47 = scmp.eq.s32.totalorder %s9, 1
    %p48 = scmp.ne.s32.totalorder %s43, %s45
    %p49 = scmp.eq.s32.totalorder %s9, 0
    %p50 = por %p48, %p49
    %p51 = scmp.ne.s32.totalorder %s43, %s45
    %p52 = scmp.eq.s32.totalorder %s14, 1
    %p53 = por %p51, %p52
    %p54 = scmp.ne.s32.totalorder %s45, %s46
    %p55 = scmp.eq.s32.totalorder %s14, 0
    %p56 = por %p54, %p55
    %p57 = scmp.ne.s32.totalorder %s45, %s46
    %p58 = scmp.eq.s32.totalorder %s15, 1
    %p59 = por %p57, %p58
    %p61 = scmp.ne.s32.totalorder %s46, %s60
    %p62 = scmp.eq.s32.totalorder %s15, 0
    %p63 = por %p61, %p62
    %s65 = sadd.s32 %s64, 1
    %p68 = scmp.eq.s32.totalorder %s9, 1
    %p69 = scmp.ne.s32.totalorder %s64, %s66
    %p70 = scmp.eq.s32.totalorder %s9, 0
    %p71 = por %p69, %p70
    %p72 = scmp.ne.s32.totalorder %s64, %s66
    %p73 = scmp.eq.s32.totalorder %s14, 1
    %p74 = por %p72, %p73
    %p75 = scmp.ne.s32.totalorder %s66, %s67
    %p76 = scmp.eq.s32.totalorder %s14, 0
    %p77 = por %p75, %p76
    %p78 = scmp.ne.s32.totalorder %s66, %s67
    %p79 = scmp.eq.s32.totalorder %s15, 1
    %p80 = por %p78, %p79
    %p82 = scmp.ne.s32.totalorder %s67, %s81
    %p83 = scmp.eq.s32.totalorder %s15, 0
    %p84 = por %p82, %p83
    %s85 = ssub.s32 %s9, %s16
    %p86 = scmp.eq.s32.totalorder %s85, 0
    %s88 = sadd.s32 %s87, 1
    %s89 = scalar_select %p86, %s87, %s88
    %p92 = pneg %p86
    %p93 = scmp.eq.s32.totalorder %s9, 1
    %p94 = por %p92, %p93
    %p95 = scmp.ne.s32.totalorder %s87, %s90
    %p96 = scmp.eq.s32.totalorder %s9, 0
    %p97 = por %p95, %p96
    %p98 = scmp.ne.s32.totalorder %s87, %s90
    %p99 = scmp.eq.s32.totalorder %s14, 1
    %p100 = por %p98, %p99
    %p101 = scmp.ne.s32.totalorder %s90, %s91
    %p102 = scmp.eq.s32.totalorder %s14, 0
    %p103 = por %p101, %p102
    %p104 = scmp.ne.s32.totalorder %s90, %s91
    %p105 = scmp.eq.s32.totalorder %s15, 1
    %p106 = por %p104, %p105
    %p108 = scmp.ne.s32.totalorder %s91, %s107
    %p109 = scmp.eq.s32.totalorder %s15, 0
    %p110 = por %p108, %p109
    %p111 = scmp.le.s32.totalorder 1, %s9
    %p112 = scmp.lt.s32.totalorder %s9, 3
    %p113 = pnand %p111, %p112
    %p114 = pneg %p113
    // Predicated region
    $region9: #{_lambda_.8} parent=5 // pred_check
      _
    $region10: #{_lambda_.8} parent=5 // pred_check_branch
      %116 = sbr.rel (%p113) target = $region12
    $region11: #{_lambda_.8} parent=5 // pred_region
      %s117 = ssub.s32 %s9, 1
      // Predicated region
      $region13: #{_lambda_.8} parent=11 // pred_check
        %p118 = pneg %p56
      $region14: #{_lambda_.8} parent=11 // pred_check_branch
        %120 = sbr.rel (%p118) target = $region16
      $region15: #{_lambda_.8} parent=11 // pred_region
        _
      $region16: #{_lambda_.8} parent=11 // pred_fallthru
        _
      // Predicated region
      $region17: #{_lambda_.8} parent=11 // pred_check
        %p121 = pneg %p77
      $region18: #{_lambda_.8} parent=11 // pred_check_branch
        %123 = sbr.rel (%p121) target = $region20
      $region19: #{_lambda_.8} parent=11 // pred_region
        _
      $region20: #{_lambda_.8} parent=11 // pred_fallthru
        _
    $region12: #{_lambda_.8} parent=5 // pred_fallthru
      _
    %p124 = scmp.lt.s32.totalorder %s9, 2
    // Predicated region
    $region21: #{_lambda_.8} parent=5 // pred_check
      %p125 = pneg %p124
    $region22: #{_lambda_.8} parent=5 // pred_check_branch
      %127 = sbr.rel (%p125) target = $region24
    $region23: #{_lambda_.8} parent=5 // pred_region
      // Predicated region
      $region25: #{_lambda_.8} parent=23 // pred_check
        %p128 = pneg %p29
      $region26: #{_lambda_.8} parent=23 // pred_check_branch
        %130 = sbr.rel (%p128) target = $region28
      $region27: #{_lambda_.8} parent=23 // pred_region
        %s131 = smul.u32 8, %s9
        %p132 = scmp.lt.s32.totalorder %s131, 15
        %s133 = scalar_select %p132, %s131, 15
        %s134 = smul.addr %s133, 8
        %s135 = scalar_lea.vmem %s0, %s134
        %s136 = smul.u32 8, %s9
      $region28: #{_lambda_.8} parent=23 // pred_fallthru
        _
    $region24: #{_lambda_.8} parent=5 // pred_fallthru
      _
    %p137 = scmp.le.s32.totalorder 1, %s9
    %p138 = scmp.lt.s32.totalorder %s9, 3
    %p139 = pnand %p137, %p138
    %p140 = pneg %p139
    // Predicated region
    $region29: #{_lambda_.8} parent=5 // pred_check
      _
    $region30: #{_lambda_.8} parent=5 // pred_check_branch
      %142 = sbr.rel (%p139) target = $region32
    $region31: #{_lambda_.8} parent=5 // pred_region
      %s143 = ssub.s32 %s9, 1
      %s144 = smul.u32 8, %s14
      %p145 = scmp.lt.s32.totalorder %s144, 15
      %s146 = scalar_select %p145, %s144, 15
      %s147 = smul.addr %s146, 8
      %s148 = scalar_lea.vmem %s0, %s147
      %p149 = pneg %p35
      %p150 = pneg %p32
      %p151 = pneg %p56
      %p152 = pneg %p53
      %p153 = pneg %p77
      %p154 = pneg %p74
      %p155 = pneg %p103
      %p156 = pneg %p100
      %s157 = smul.u32 8, %s14
      %p158 = scmp.lt.s32.totalorder %s157, 15
      %s159 = scalar_select %p158, %s157, 15
      %s160 = smul.addr %s159, 8
      %s161 = scalar_lea.vmem %s3, %s160
      %s162 = smul.u32 8, %s14
      %p163 = scmp.lt.s32.totalorder %s162, 15
      %s164 = scalar_select %p163, %s162, 15
      %s165 = smul.addr %s164, 8
      %s166 = scalar_lea.vmem %s0, %s165
      %s167 = smul.u32 8, %s14
      %s168 = smul.u32 8, %s14
      %p169 = scmp.lt.s32.totalorder %s168, 15
      %s170 = scalar_select %p169, %s168, 15
      %s171 = smul.addr %s170, 8
      %s172 = scalar_lea.vmem %s3, %s171
      %s173 = smul.u32 8, %s14
      %v175 = vld [vmem:[%s166] sm:$0xff]
      %v176 = vld [vmem:[%s166 + $0x8] sm:$0xff]
      %v177 = vld [vmem:[%s166 + $0x10] sm:$0xff]
      %v178 = vld [vmem:[%s166 + $0x18] sm:$0xff]
      %v179 = vld [vmem:[%s166 + $0x20] sm:$0xff]
      %v180 = vld [vmem:[%s166 + $0x28] sm:$0xff]
      %v181 = vld [vmem:[%s166 + $0x30] sm:$0xff]
      %v182 = vld [vmem:[%s166 + $0x38] sm:$0xff]
      %v183 = vpack.c.bf16 %v176, %v175
      %v184 = vpack.c.bf16 %v178, %v177
      %v185 = vpack.c.bf16 %v180, %v179
      %v186 = vpack.c.bf16 %v182, %v181
      %v187 = vld [vmem:[%s1] sm:$0xf]
      %v188 = vld [vmem:[%s1 + $0x4] sm:$0xf]
      %v189 = vld [vmem:[%s1 + $0x8] sm:$0xf]
      %v190 = vld [vmem:[%s1 + $0xc] sm:$0xf]
      %v191 = vld [vmem:[%s1 + $0x10] sm:$0xf]
      %v192 = vld [vmem:[%s1 + $0x14] sm:$0xf]
      %v193 = vld [vmem:[%s1 + $0x18] sm:$0xf]
      %v194 = vld [vmem:[%s1 + $0x1c] sm:$0xf]
      %v195 = vld [vmem:[%s2] sm:$0x1]
      %v197 = vlaneseq
      %v198 = vshrl.u32 %v197, 7
      %v199 = vsub.s32 0, %v198
      %v200 = vrot.slane %v195, %v199
      %v210 = vunpack.c.l.b16 %v187
      %v211 = vunpack.c.l.b16 %v188
      %v212 = vunpack.c.l.b16 %v189
      %v213 = vunpack.c.l.b16 %v190
      %v214 = vunpack.c.l.b16 %v191
      %v215 = vunpack.c.l.b16 %v192
      %v216 = vunpack.c.l.b16 %v193
      %v217 = vunpack.c.l.b16 %v194
      %v218 = vpack.c.b16 %v211, %v210
      %v219 = vpack.c.b16 %v213, %v212
      %v220 = vpack.c.b16 %v215, %v214
      %v221 = vpack.c.b16 %v217, %v216
      %vm226 = vcmask 523264
      %v228 = vsel %vm226, %v183, 0
      %v231 = vsel %vm226, %v184, 0
      %v234 = vsel %vm226, %v185, 0
      %v237 = vsel %vm226, %v186, 0
      %239 = vmatprep.subr.bf16.mxu0 0
      %240 = vmatpush1.bf16.msra.mxu0 0
      %241 = vmatprep.subr.bf16.mxu0 0
      %242 = vmatpush1.bf16.msra.mxu0 0
      %243 = vmatprep.subr.bf16.mxu0 0
      %244 = vmatpush1.bf16.msra.mxu0 0
      %245 = vmatprep.subr.bf16.mxu0 0
      %246 = vmatpush1.bf16.msra.mxu0 0
      %247 = vmatprep.subr.bf16.mxu0 0
      %248 = vmatpush1.bf16.msra.mxu0 %v221
      %249 = vmatprep.subr.bf16.mxu0 0
      %250 = vmatpush1.bf16.msra.mxu0 %v220
      %251 = vmatprep.subr.bf16.mxu0 0
      %252 = vmatpush1.bf16.msra.mxu0 %v219
      %253 = vmatprep.subr.bf16.mxu0 0
      %254 = vmatpush1.bf16.msra.mxu0 %v218
      %255 = vmatprep.subr.bf16.mxu0 0
      %256 = vmatpush2.bf16.msra.mxu0 0
      %257 = vmatprep.subr.bf16.mxu0 0
      %258 = vmatpush2.bf16.msra.mxu0 0
      %259 = vmatprep.subr.bf16.mxu0 0
      %260 = vmatpush2.bf16.msra.mxu0 0
      %261 = vmatprep.subr.bf16.mxu0 0
      %262 = vmatpush2.bf16.msra.mxu0 0
      %263 = vmatprep.subr.bf16.mxu0 0
      %264 = vmatpush2.bf16.msra.mxu0 0
      %265 = vmatprep.subr.bf16.mxu0 0
      %266 = vmatpush2.bf16.msra.mxu0 0
      %267 = vmatprep.subr.bf16.mxu0 0
      %268 = vmatpush2.bf16.msra.mxu0 0
      %269 = vmatprep.subr.bf16.mxu0 0
      %270 = vmatpush2.bf16.msra.mxu0 0
      %271 = vmatprep.mubr.bf16.mxu0 0
      %272 = vmatmul.mubr.bf16.gmra.mxu0 %v228
      %v273 = vpop.f32.mrf.mxu0
      %v274 = vadd.f32 %v200, %v273
      %v275 = vpop.f32.mrf.mxu0
      %v276 = vpop.f32.mrf.mxu0
      %v277 = vadd.f32 %v200, %v276
      %v278 = vpop.f32.mrf.mxu0
      %279 = vmatprep.mubr.bf16.mxu0 0
      %280 = vmatmul.mubr.bf16.gmra.mxu0 %v231
      %v281 = vpop.f32.mrf.mxu0
      %v282 = vadd.f32 %v200, %v281
      %v283 = vpop.f32.mrf.mxu0
      %v284 = vpop.f32.mrf.mxu0
      %v285 = vadd.f32 %v200, %v284
      %v286 = vpop.f32.mrf.mxu0
      %287 = vmatprep.mubr.bf16.mxu0 0
      %288 = vmatmul.mubr.bf16.gmra.mxu0 %v234
      %v289 = vpop.f32.mrf.mxu0
      %v290 = vadd.f32 %v200, %v289
      %v291 = vpop.f32.mrf.mxu0
      %v292 = vpop.f32.mrf.mxu0
      %v293 = vadd.f32 %v200, %v292
      %v294 = vpop.f32.mrf.mxu0
      %295 = vmatprep.mubr.bf16.mxu0 0
      %296 = vmatmul.mubr.bf16.gmra.mxu0 %v237
      %v297 = vpop.f32.mrf.mxu0
      %v298 = vadd.f32 %v200, %v297
      %v299 = vpop.f32.mrf.mxu0
      %v300 = vpop.f32.mrf.mxu0
      %v301 = vadd.f32 %v200, %v300
      %v302 = vpop.f32.mrf.mxu0
      %303 = vdwg.mxu0
      %vm304 = vcmask 130048
      %305 = vst.msk [vmem:[%s172] sm:$0xff] %vm304, %v274
      %306 = vst.msk [vmem:[%s172 + $0x8] sm:$0xff] %vm304, %v277
      %307 = vst.msk [vmem:[%s172 + $0x10] sm:$0xff] %vm304, %v282
      %308 = vst.msk [vmem:[%s172 + $0x18] sm:$0xff] %vm304, %v285
      %309 = vst.msk [vmem:[%s172 + $0x20] sm:$0xff] %vm304, %v290
      %310 = vst.msk [vmem:[%s172 + $0x28] sm:$0xff] %vm304, %v293
      %311 = vst.msk [vmem:[%s172 + $0x30] sm:$0xff] %vm304, %v298
      %312 = vst.msk [vmem:[%s172 + $0x38] sm:$0xff] %vm304, %v301
      %s313 = smul.u32 8, %s14
      %p314 = scmp.lt.s32.totalorder %s313, 15
      %s315 = scalar_select %p314, %s313, 15
      %s316 = smul.addr %s315, 8
      %s317 = scalar_lea.vmem %s3, %s316
      // Predicated region
      $region33: #{_lambda_.8} parent=31 // pred_check
        %p318 = pneg %p100
      $region34: #{_lambda_.8} parent=31 // pred_check_branch
        %320 = sbr.rel (%p318) target = $region36
      $region35: #{_lambda_.8} parent=31 // pred_region
        %s321 = smul.u32 8, %s14
      $region36: #{_lambda_.8} parent=31 // pred_fallthru
        _
    $region32: #{_lambda_.8} parent=5 // pred_fallthru
      _
    %p322 = scmp.le.s32.totalorder 2, %s9
    // Predicated region
    $region37: #{_lambda_.8} parent=5 // pred_check
      %p323 = pneg %p322
    $region38: #{_lambda_.8} parent=5 // pred_check_branch
      %325 = sbr.rel (%p323) target = $region40
    $region39: #{_lambda_.8} parent=5 // pred_region
      %s326 = ssub.s32 %s9, 2
      // Predicated region
      $region41: #{_lambda_.8} parent=39 // pred_check
        %p327 = pneg %p106
      $region42: #{_lambda_.8} parent=39 // pred_check_branch
        %329 = sbr.rel (%p327) target = $region44
      $region43: #{_lambda_.8} parent=39 // pred_region
        %s330 = smul.u32 8, %s15
        %p331 = scmp.lt.s32.totalorder %s330, 15
        %s332 = scalar_select %p331, %s330, 15
        %s333 = smul.addr %s332, 8
        %s334 = scalar_lea.vmem %s3, %s333
      $region44: #{_lambda_.8} parent=39 // pred_fallthru
        _
    $region40: #{_lambda_.8} parent=5 // pred_fallthru
      _
  $region6: #{_lambda_.8} parent=0 // loop_footer
    %s13 = sadd.s32 1, %s9
  $region7: #{_lambda_.8} parent=0 // loop_footer_branch
    %8 = sbr.rel target = $region3
  $region8: #{_lambda_.8} parent=0 // loop_exit
    _

// kernel: _lambda_.10
$region0: #{_lambda_.10}
  #allocation0 [shape = 'u32[]', space=smem, size = 0x4, offset = 0x4, fixed_abs, tag = 'smem constant byte address 0x4 - core index']
  #allocation1 [shape = 'u32[144,128]{1,0:T(1,128)}', space=vmem, size = 0x12000, scoped, tag = 'internal scratch']
  %s0 = inlined_call_operand.vmem [shape: f32[32,64], index: 0, kind: input, shape index: {}]
  %s1 = inlined_call_operand.vmem [shape: bf16[64,32], index: 1, kind: input, shape index: {}]
  %s2 = inlined_call_operand.vmem [shape: f32[1,32], index: 2, kind: input, shape index: {}]
  %s3 = inlined_call_operand.vmem [shape: f32[32,32], index: 3, kind: output, shape index: {}]
  %s4 = sld [smem:[#allocation0]]
  $region45: #{_lambda_.10} parent=0
    _
  %s6 = ssub.s32 1, %s4
  %s7 = scalar_select 0, %s6, %s4
  loop: start=0, step=1, limit=4
  $region2: #{_lambda_.10} parent=0 // loop_pre_header
    _
  $region3: #{_lambda_.10} parent=0 // loop_header
    %s9 = sphi 0, %s13
    %p10 = scmp.ge.s32.totalorder %s9, 4
    %s19 = sphi 0, %s21
    %s22 = sphi 0, %s19
    %s23 = sphi 0, %s22
    %s39 = sphi 0, %s23
    %s43 = sphi 0, %s43
    %s45 = sphi 0, %s43
    %s46 = sphi 0, %s45
    %s60 = sphi 0, %s46
    %s64 = sphi 0, %s64
    %s66 = sphi 0, %s64
    %s67 = sphi 0, %s66
    %s81 = sphi 0, %s67
    %s87 = sphi 0, %s89
    %s90 = sphi 0, %s87
    %s91 = sphi 0, %s90
    %s107 = sphi 0, %s91
  $region4: #{_lambda_.10} parent=0 // loop_header_branch
    %12 = sbr.rel (%p10) target = $region8
  $region5: #{_lambda_.10} parent=0 // loop_body
    %s14 = ssub.s32 %s9, 1
    %s15 = ssub.s32 %s9, 2
    %s16 = sadd.s32 %s9, 1
    %s17 = ssub.s32 %s9, %s16
    %p18 = scmp.eq.s32.totalorder %s17, 0
    %s20 = sadd.s32 %s19, 1
    %s21 = scalar_select %p18, %s19, %s20
    %p24 = pneg %p18
    %p25 = scmp.eq.s32.totalorder %s9, 1
    %p26 = por %p24, %p25
    %p27 = scmp.ne.s32.totalorder %s19, %s22
    %p28 = scmp.eq.s32.totalorder %s9, 0
    %p29 = por %p27, %p28
    %p30 = scmp.ne.s32.totalorder %s19, %s22
    %p31 = scmp.eq.s32.totalorder %s14, 1
    %p32 = por %p30, %p31
    %p33 = scmp.ne.s32.totalorder %s22, %s23
    %p34 = scmp.eq.s32.totalorder %s14, 0
    %p35 = por %p33, %p34
    %p36 = scmp.ne.s32.totalorder %s22, %s23
    %p37 = scmp.eq.s32.totalorder %s15, 1
    %p38 = por %p36, %p37
    %p40 = scmp.ne.s32.totalorder %s23, %s39
    %p41 = scmp.eq.s32.totalorder %s15, 0
    %p42 = por %p40, %p41
    %s44 = sadd.s32 %s43, 1
    %p47 = scmp.eq.s32.totalorder %s9, 1
    %p48 = scmp.ne.s32.totalorder %s43, %s45
    %p49 = scmp.eq.s32.totalorder %s9, 0
    %p50 = por %p48, %p49
    %p51 = scmp.ne.s32.totalorder %s43, %s45
    %p52 = scmp.eq.s32.totalorder %s14, 1
    %p53 = por %p51, %p52
    %p54 = scmp.ne.s32.totalorder %s45, %s46
    %p55 = scmp.eq.s32.totalorder %s14, 0
    %p56 = por %p54, %p55
    %p57 = scmp.ne.s32.totalorder %s45, %s46
    %p58 = scmp.eq.s32.totalorder %s15, 1
    %p59 = por %p57, %p58
    %p61 = scmp.ne.s32.totalorder %s46, %s60
    %p62 = scmp.eq.s32.totalorder %s15, 0
    %p63 = por %p61, %p62
    %s65 = sadd.s32 %s64, 1
    %p68 = scmp.eq.s32.totalorder %s9, 1
    %p69 = scmp.ne.s32.totalorder %s64, %s66
    %p70 = scmp.eq.s32.totalorder %s9, 0
    %p71 = por %p69, %p70
    %p72 = scmp.ne.s32.totalorder %s64, %s66
    %p73 = scmp.eq.s32.totalorder %s14, 1
    %p74 = por %p72, %p73
    %p75 = scmp.ne.s32.totalorder %s66, %s67
    %p76 = scmp.eq.s32.totalorder %s14, 0
    %p77 = por %p75, %p76
    %p78 = scmp.ne.s32.totalorder %s66, %s67
    %p79 = scmp.eq.s32.totalorder %s15, 1
    %p80 = por %p78, %p79
    %p82 = scmp.ne.s32.totalorder %s67, %s81
    %p83 = scmp.eq.s32.totalorder %s15, 0
    %p84 = por %p82, %p83
    %s85 = ssub.s32 %s9, %s16
    %p86 = scmp.eq.s32.totalorder %s85, 0
    %s88 = sadd.s32 %s87, 1
    %s89 = scalar_select %p86, %s87, %s88
    %p92 = pneg %p86
    %p93 = scmp.eq.s32.totalorder %s9, 1
    %p94 = por %p92, %p93
    %p95 = scmp.ne.s32.totalorder %s87, %s90
    %p96 = scmp.eq.s32.totalorder %s9, 0
    %p97 = por %p95, %p96
    %p98 = scmp.ne.s32.totalorder %s87, %s90
    %p99 = scmp.eq.s32.totalorder %s14, 1
    %p100 = por %p98, %p99
    %p101 = scmp.ne.s32.totalorder %s90, %s91
    %p102 = scmp.eq.s32.totalorder %s14, 0
    %p103 = por %p101, %p102
    %p104 = scmp.ne.s32.totalorder %s90, %s91
    %p105 = scmp.eq.s32.totalorder %s15, 1
    %p106 = por %p104, %p105
    %p108 = scmp.ne.s32.totalorder %s91, %s107
    %p109 = scmp.eq.s32.totalorder %s15, 0
    %p110 = por %p108, %p109
    %p111 = scmp.le.s32.totalorder 1, %s9
    %p112 = scmp.lt.s32.totalorder %s9, 3
    %p113 = pnand %p111, %p112
    %p114 = pneg %p113
    // Predicated region
    $region9: #{_lambda_.10} parent=5 // pred_check
      _
    $region10: #{_lambda_.10} parent=5 // pred_check_branch
      %116 = sbr.rel (%p113) target = $region12
    $region11: #{_lambda_.10} parent=5 // pred_region
      %s117 = ssub.s32 %s9, 1
      // Predicated region
      $region13: #{_lambda_.10} parent=11 // pred_check
        %p118 = pneg %p56
      $region14: #{_lambda_.10} parent=11 // pred_check_branch
        %120 = sbr.rel (%p118) target = $region16
      $region15: #{_lambda_.10} parent=11 // pred_region
        _
      $region16: #{_lambda_.10} parent=11 // pred_fallthru
        _
      // Predicated region
      $region17: #{_lambda_.10} parent=11 // pred_check
        %p121 = pneg %p77
      $region18: #{_lambda_.10} parent=11 // pred_check_branch
        %123 = sbr.rel (%p121) target = $region20
      $region19: #{_lambda_.10} parent=11 // pred_region
        _
      $region20: #{_lambda_.10} parent=11 // pred_fallthru
        _
    $region12: #{_lambda_.10} parent=5 // pred_fallthru
      _
    %p124 = scmp.lt.s32.totalorder %s9, 2
    // Predicated region
    $region21: #{_lambda_.10} parent=5 // pred_check
      %p125 = pneg %p124
    $region22: #{_lambda_.10} parent=5 // pred_check_branch
      %127 = sbr.rel (%p125) target = $region24
    $region23: #{_lambda_.10} parent=5 // pred_region
      // Predicated region
      $region25: #{_lambda_.10} parent=23 // pred_check
        %p128 = pneg %p29
      $region26: #{_lambda_.10} parent=23 // pred_check_branch
        %130 = sbr.rel (%p128) target = $region28
      $region27: #{_lambda_.10} parent=23 // pred_region
        %s131 = smul.u32 2, %s9
        %p132 = scmp.lt.s32.totalorder %s131, 3
        %s133 = scalar_select %p132, %s131, 3
        %s134 = smul.addr %s133, 8
        %s135 = scalar_lea.vmem %s0, %s134
        %s136 = smul.u32 2, %s9
      $region28: #{_lambda_.10} parent=23 // pred_fallthru
        _
    $region24: #{_lambda_.10} parent=5 // pred_fallthru
      _
    %p137 = scmp.le.s32.totalorder 1, %s9
    %p138 = scmp.lt.s32.totalorder %s9, 3
    %p139 = pnand %p137, %p138
    %p140 = pneg %p139
    // Predicated region
    $region29: #{_lambda_.10} parent=5 // pred_check
      _
    $region30: #{_lambda_.10} parent=5 // pred_check_branch
      %142 = sbr.rel (%p139) target = $region32
    $region31: #{_lambda_.10} parent=5 // pred_region
      %s143 = ssub.s32 %s9, 1
      %s144 = smul.u32 2, %s14
      %p145 = scmp.lt.s32.totalorder %s144, 3
      %s146 = scalar_select %p145, %s144, 3
      %s147 = smul.addr %s146, 8
      %s148 = scalar_lea.vmem %s0, %s147
      %p149 = pneg %p35
      %p150 = pneg %p32
      %p151 = pneg %p56
      %p152 = pneg %p53
      %p153 = pneg %p77
      %p154 = pneg %p74
      %p155 = pneg %p103
      %p156 = pneg %p100
      %s157 = smul.u32 2, %s14
      %p158 = scmp.lt.s32.totalorder %s157, 3
      %s159 = scalar_select %p158, %s157, 3
      %s160 = smul.addr %s159, 8
      %s161 = scalar_lea.vmem %s3, %s160
      %s162 = smul.u32 2, %s14
      %p163 = scmp.lt.s32.totalorder %s162, 3
      %s164 = scalar_select %p163, %s162, 3
      %s165 = smul.addr %s164, 8
      %s166 = scalar_lea.vmem %s0, %s165
      %s167 = smul.u32 2, %s14
      %s168 = smul.u32 2, %s14
      %p169 = scmp.lt.s32.totalorder %s168, 3
      %s170 = scalar_select %p169, %s168, 3
      %s171 = smul.addr %s170, 8
      %s172 = scalar_lea.vmem %s3, %s171
      %s173 = smul.u32 2, %s14
      %v175 = vld [vmem:[%s166] sm:$0xff]
      %v176 = vld [vmem:[%s166 + $0x8] sm:$0xff]
      %v177 = vpack.c.bf16 %v176, %v175
      %v178 = vld [vmem:[%s1] sm:$0xf]
      %v179 = vld [vmem:[%s1 + $0x4] sm:$0xf]
      %v180 = vld [vmem:[%s1 + $0x8] sm:$0xf]
      %v181 = vld [vmem:[%s1 + $0xc] sm:$0xf]
      %v182 = vld [vmem:[%s1 + $0x10] sm:$0xf]
      %v183 = vld [vmem:[%s1 + $0x14] sm:$0xf]
      %v184 = vld [vmem:[%s1 + $0x18] sm:$0xf]
      %v185 = vld [vmem:[%s1 + $0x1c] sm:$0xf]
      %v186 = vld [vmem:[%s2] sm:$0x1]
      %v188 = vlaneseq
      %v189 = vshrl.u32 %v188, 7
      %v190 = vsub.s32 0, %v189
      %v191 = vrot.slane %v186, %v190
      %v201 = vunpack.c.l.b16 %v178
      %v202 = vunpack.c.l.b16 %v179
      %v203 = vunpack.c.l.b16 %v180
      %v204 = vunpack.c.l.b16 %v181
      %v205 = vunpack.c.l.b16 %v182
      %v206 = vunpack.c.l.b16 %v183
      %v207 = vunpack.c.l.b16 %v184
      %v208 = vunpack.c.l.b16 %v185
      %v209 = vpack.c.b16 %v202, %v201
      %v210 = vpack.c.b16 %v204, %v203
      %v211 = vpack.c.b16 %v206, %v205
      %v212 = vpack.c.b16 %v208, %v207
      %vm217 = vcmask 523264
      %v219 = vsel %vm217, %v177, 0
      %221 = vmatprep.subr.bf16.mxu0 0
      %222 = vmatpush1.bf16.msra.mxu0 0
      %223 = vmatprep.subr.bf16.mxu0 0
      %224 = vmatpush1.bf16.msra.mxu0 0
      %225 = vmatprep.subr.bf16.mxu0 0
      %226 = vmatpush1.bf16.msra.mxu0 0
      %227 = vmatprep.subr.bf16.mxu0 0
      %228 = vmatpush1.bf16.msra.mxu0 0
      %229 = vmatprep.subr.bf16.mxu0 0
      %230 = vmatpush1.bf16.msra.mxu0 %v212
      %231 = vmatprep.subr.bf16.mxu0 0
      %232 = vmatpush1.bf16.msra.mxu0 %v211
      %233 = vmatprep.subr.bf16.mxu0 0
      %234 = vmatpush1.bf16.msra.mxu0 %v210
      %235 = vmatprep.subr.bf16.mxu0 0
      %236 = vmatpush1.bf16.msra.mxu0 %v209
      %237 = vmatprep.subr.bf16.mxu0 0
      %238 = vmatpush2.bf16.msra.mxu0 0
      %239 = vmatprep.subr.bf16.mxu0 0
      %240 = vmatpush2.bf16.msra.mxu0 0
      %241 = vmatprep.subr.bf16.mxu0 0
      %242 = vmatpush2.bf16.msra.mxu0 0
      %243 = vmatprep.subr.bf16.mxu0 0
      %244 = vmatpush2.bf16.msra.mxu0 0
      %245 = vmatprep.subr.bf16.mxu0 0
      %246 = vmatpush2.bf16.msra.mxu0 0
      %247 = vmatprep.subr.bf16.mxu0 0
      %248 = vmatpush2.bf16.msra.mxu0 0
      %249 = vmatprep.subr.bf16.mxu0 0
      %250 = vmatpush2.bf16.msra.mxu0 0
      %251 = vmatprep.subr.bf16.mxu0 0
      %252 = vmatpush2.bf16.msra.mxu0 0
      %253 = vmatprep.mubr.bf16.mxu0 0
      %254 = vmatmul.mubr.bf16.gmra.mxu0 %v219
      %v255 = vpop.f32.mrf.mxu0
      %v256 = vadd.f32 %v191, %v255
      %v257 = vpop.f32.mrf.mxu0
      %v258 = vpop.f32.mrf.mxu0
      %v259 = vadd.f32 %v191, %v258
      %v260 = vpop.f32.mrf.mxu0
      %261 = vdwg.mxu0
      %vm262 = vcmask 261120
      %263 = vst.msk [vmem:[%s172] sm:$0xff] %vm262, %v256
      %264 = vst.msk [vmem:[%s172 + $0x8] sm:$0xff] %vm262, %v259
      %s265 = smul.u32 2, %s14
      %p266 = scmp.lt.s32.totalorder %s265, 3
      %s267 = scalar_select %p266, %s265, 3
      %s268 = smul.addr %s267, 8
      %s269 = scalar_lea.vmem %s3, %s268
      // Predicated region
      $region33: #{_lambda_.10} parent=31 // pred_check
        %p270 = pneg %p100
      $region34: #{_lambda_.10} parent=31 // pred_check_branch
        %272 = sbr.rel (%p270) target = $region36
      $region35: #{_lambda_.10} parent=31 // pred_region
        %s273 = smul.u32 2, %s14
      $region36: #{_lambda_.10} parent=31 // pred_fallthru
        _
    $region32: #{_lambda_.10} parent=5 // pred_fallthru
      _
    %p274 = scmp.le.s32.totalorder 2, %s9
    // Predicated region
    $region37: #{_lambda_.10} parent=5 // pred_check
      %p275 = pneg %p274
    $region38: #{_lambda_.10} parent=5 // pred_check_branch
      %277 = sbr.rel (%p275) target = $region40
    $region39: #{_lambda_.10} parent=5 // pred_region
      %s278 = ssub.s32 %s9, 2
      // Predicated region
      $region41: #{_lambda_.10} parent=39 // pred_check
        %p279 = pneg %p106
      $region42: #{_lambda_.10} parent=39 // pred_check_branch
        %281 = sbr.rel (%p279) target = $region44
      $region43: #{_lambda_.10} parent=39 // pred_region
        %s282 = smul.u32 2, %s15
        %p283 = scmp.lt.s32.totalorder %s282, 3
        %s284 = scalar_select %p283, %s282, 3
        %s285 = smul.addr %s284, 8
        %s286 = scalar_lea.vmem %s3, %s285
      $region44: #{_lambda_.10} parent=39 // pred_fallthru
        _
    $region40: #{_lambda_.10} parent=5 // pred_fallthru
      _
  $region6: #{_lambda_.10} parent=0 // loop_footer
    %s13 = sadd.s32 1, %s9
  $region7: #{_lambda_.10} parent=0 // loop_footer_branch
    %8 = sbr.rel target = $region3
  $region8: #{_lambda_.10} parent=0 // loop_exit
    _

// kernel: _lambda_.12
$region0: #{_lambda_.12}
  #allocation0 [shape = 'u32[]', space=smem, size = 0x4, offset = 0x4, fixed_abs, tag = 'smem constant byte address 0x4 - core index']
  #allocation1 [shape = 'u32[144,128]{1,0:T(1,128)}', space=vmem, size = 0x12000, scoped, tag = 'internal scratch']
  %s0 = inlined_call_operand.vmem [shape: f32[8,128], index: 0, kind: input, shape index: {}]
  %s1 = inlined_call_operand.vmem [shape: bf16[128,64], index: 1, kind: input, shape index: {}]
  %s2 = inlined_call_operand.vmem [shape: f32[1,64], index: 2, kind: input, shape index: {}]
  %s3 = inlined_call_operand.vmem [shape: f32[8,64], index: 3, kind: output, shape index: {}]
  %s4 = sld [smem:[#allocation0]]
  $region22: #{_lambda_.12} parent=0
    _
  %s6 = ssub.s32 1, %s4
  %s7 = scalar_select 0, %s6, %s4
  // Predicated region
  $region2: #{_lambda_.12} parent=0 // pred_check
    _
  $region3: #{_lambda_.12} parent=0 // pred_check_branch
    %9 = sbr.rel (0) target = $region5
  $region4: #{_lambda_.12} parent=0 // pred_region
    _
  $region5: #{_lambda_.12} parent=0 // pred_fallthru
    _
  // Predicated region
  $region6: #{_lambda_.12} parent=0 // pred_check
    _
  $region7: #{_lambda_.12} parent=0 // pred_check_branch
    %11 = sbr.rel (0) target = $region9
  $region8: #{_lambda_.12} parent=0 // pred_region
    _
  $region9: #{_lambda_.12} parent=0 // pred_fallthru
    _
  // Predicated region
  $region10: #{_lambda_.12} parent=0 // pred_check
    _
  $region11: #{_lambda_.12} parent=0 // pred_check_branch
    %13 = sbr.rel (0) target = $region13
  $region12: #{_lambda_.12} parent=0 // pred_region
    _
  $region13: #{_lambda_.12} parent=0 // pred_fallthru
    _
  %v15 = vld [vmem:[%s0] sm:$0xff]
  %v16 = vpack.c.bf16 %v15, %v15
  %v17 = vld [vmem:[%s1] sm:$0xf]
  %v18 = vld [vmem:[%s1 + $0x4] sm:$0xf]
  %v19 = vld [vmem:[%s1 + $0x8] sm:$0xf]
  %v20 = vld [vmem:[%s1 + $0xc] sm:$0xf]
  %v21 = vld [vmem:[%s1 + $0x10] sm:$0xf]
  %v22 = vld [vmem:[%s1 + $0x14] sm:$0xf]
  %v23 = vld [vmem:[%s1 + $0x18] sm:$0xf]
  %v24 = vld [vmem:[%s1 + $0x1c] sm:$0xf]
  %v25 = vld [vmem:[%s1 + $0x20] sm:$0xf]
  %v26 = vld [vmem:[%s1 + $0x24] sm:$0xf]
  %v27 = vld [vmem:[%s1 + $0x28] sm:$0xf]
  %v28 = vld [vmem:[%s1 + $0x2c] sm:$0xf]
  %v29 = vld [vmem:[%s1 + $0x30] sm:$0xf]
  %v30 = vld [vmem:[%s1 + $0x34] sm:$0xf]
  %v31 = vld [vmem:[%s1 + $0x38] sm:$0xf]
  %v32 = vld [vmem:[%s1 + $0x3c] sm:$0xf]
  %v33 = vld [vmem:[%s2] sm:$0x1]
  %v35 = vlaneseq
  %v36 = vshrl.u32 %v35, 7
  %v37 = vsub.s32 0, %v36
  %v38 = vrot.slane %v33, %v37
  %v56 = vunpack.c.l.b16 %v17
  %v57 = vunpack.c.l.b16 %v18
  %v58 = vunpack.c.l.b16 %v19
  %v59 = vunpack.c.l.b16 %v20
  %v60 = vunpack.c.l.b16 %v21
  %v61 = vunpack.c.l.b16 %v22
  %v62 = vunpack.c.l.b16 %v23
  %v63 = vunpack.c.l.b16 %v24
  %v64 = vunpack.c.l.b16 %v25
  %v65 = vunpack.c.l.b16 %v26
  %v66 = vunpack.c.l.b16 %v27
  %v67 = vunpack.c.l.b16 %v28
  %v68 = vunpack.c.l.b16 %v29
  %v69 = vunpack.c.l.b16 %v30
  %v70 = vunpack.c.l.b16 %v31
  %v71 = vunpack.c.l.b16 %v32
  %v72 = vpack.c.b16 %v57, %v56
  %v73 = vpack.c.b16 %v59, %v58
  %v74 = vpack.c.b16 %v61, %v60
  %v75 = vpack.c.b16 %v63, %v62
  %v76 = vpack.c.b16 %v65, %v64
  %v77 = vpack.c.b16 %v67, %v66
  %v78 = vpack.c.b16 %v69, %v68
  %v79 = vpack.c.b16 %v71, %v70
  %88 = vmatprep.subr.bf16.mxu0 0
  %89 = vmatpush1.bf16.msra.mxu0 %v79
  %90 = vmatprep.subr.bf16.mxu0 0
  %91 = vmatpush1.bf16.msra.mxu0 %v78
  %92 = vmatprep.subr.bf16.mxu0 0
  %93 = vmatpush1.bf16.msra.mxu0 %v77
  %94 = vmatprep.subr.bf16.mxu0 0
  %95 = vmatpush1.bf16.msra.mxu0 %v76
  %96 = vmatprep.subr.bf16.mxu0 0
  %97 = vmatpush1.bf16.msra.mxu0 %v75
  %98 = vmatprep.subr.bf16.mxu0 0
  %99 = vmatpush1.bf16.msra.mxu0 %v74
  %100 = vmatprep.subr.bf16.mxu0 0
  %101 = vmatpush1.bf16.msra.mxu0 %v73
  %102 = vmatprep.subr.bf16.mxu0 0
  %103 = vmatpush1.bf16.msra.mxu0 %v72
  %104 = vmatprep.subr.bf16.mxu0 0
  %105 = vmatpush2.bf16.msra.mxu0 0
  %106 = vmatprep.subr.bf16.mxu0 0
  %107 = vmatpush2.bf16.msra.mxu0 0
  %108 = vmatprep.subr.bf16.mxu0 0
  %109 = vmatpush2.bf16.msra.mxu0 0
  %110 = vmatprep.subr.bf16.mxu0 0
  %111 = vmatpush2.bf16.msra.mxu0 0
  %112 = vmatprep.subr.bf16.mxu0 0
  %113 = vmatpush2.bf16.msra.mxu0 0
  %114 = vmatprep.subr.bf16.mxu0 0
  %115 = vmatpush2.bf16.msra.mxu0 0
  %116 = vmatprep.subr.bf16.mxu0 0
  %117 = vmatpush2.bf16.msra.mxu0 0
  %118 = vmatprep.subr.bf16.mxu0 0
  %119 = vmatpush2.bf16.msra.mxu0 0
  %120 = vmatprep.mubr.bf16.mxu0 0
  %121 = vmatmul.mubr.bf16.gmra.mxu0 %v16
  %v122 = vpop.f32.mrf.mxu0
  %v123 = vadd.f32 %v38, %v122
  %v124 = vpop.f32.mrf.mxu0
  %v125 = vpop.f32.mrf.mxu0
  %v126 = vpop.f32.mrf.mxu0
  %127 = vdwg.mxu0
  %vm128 = vcmask 523264
  %129 = vst.msk [vmem:[%s3] sm:$0xff] %vm128, %v123
  // Predicated region
  $region14: #{_lambda_.12} parent=0 // pred_check
    _
  $region15: #{_lambda_.12} parent=0 // pred_check_branch
    %131 = sbr.rel (0) target = $region17
  $region16: #{_lambda_.12} parent=0 // pred_region
    _
  $region17: #{_lambda_.12} parent=0 // pred_fallthru
    _
  // Predicated region
  $region18: #{_lambda_.12} parent=0 // pred_check
    _
  $region19: #{_lambda_.12} parent=0 // pred_check_branch
    %133 = sbr.rel (0) target = $region21
  $region20: #{_lambda_.12} parent=0 // pred_region
    _
  $region21: #{_lambda_.12} parent=0 // pred_fallthru
    _

// kernel: _lambda_.9
$region0: #{_lambda_.9}
  #allocation0 [shape = 'u32[]', space=smem, size = 0x4, offset = 0x4, fixed_abs, tag = 'smem constant byte address 0x4 - core index']
  #allocation1 [shape = 'u32[144,128]{1,0:T(1,128)}', space=vmem, size = 0x12000, scoped, tag = 'internal scratch']
  %s0 = inlined_call_operand.vmem [shape: f32[8,16,16], index: 0, kind: input, shape index: {}]
  %s1 = inlined_call_operand.vmem [shape: bf16[16,16], index: 1, kind: input, shape index: {}]
  %s2 = inlined_call_operand.vmem [shape: f32[1,16], index: 2, kind: input, shape index: {}]
  %s3 = inlined_call_operand.vmem [shape: bf16[2,16,8], index: 3, kind: input, shape index: {}]
  %s4 = inlined_call_operand.vmem [shape: bf16[2,16,8], index: 4, kind: input, shape index: {}]
  %s5 = inlined_call_operand.vmem [shape: bf16[2,16,8], index: 5, kind: input, shape index: {}]
  %s6 = inlined_call_operand.vmem [shape: f32[2,16,8], index: 6, kind: input, shape index: {}]
  %s7 = inlined_call_operand.vmem [shape: f32[2,16,8], index: 7, kind: input, shape index: {}]
  %s8 = inlined_call_operand.vmem [shape: f32[2,1,8], index: 8, kind: input, shape index: {}]
  %s9 = inlined_call_operand.vmem [shape: bf16[2,8,16], index: 9, kind: input, shape index: {}]
  %s10 = inlined_call_operand.vmem [shape: f32[1,16], index: 10, kind: input, shape index: {}]
  %s11 = inlined_call_operand.vmem [shape: bf16[16,16], index: 11, kind: input, shape index: {}]
  %s12 = inlined_call_operand.vmem [shape: f32[1,16], index: 12, kind: input, shape index: {}]
  %s13 = inlined_call_operand.vmem [shape: f32[8,16,16], index: 13, kind: output, shape index: {}]
  %s14 = sld [smem:[#allocation0]]
  $region85: #{_lambda_.9} parent=0
    _
  %s16 = ssub.s32 1, %s14
  %s17 = scalar_select 0, %s16, %s14
  loop: start=0, step=1, limit=4
  $region2: #{_lambda_.9} parent=0 // loop_pre_header
    _
  $region3: #{_lambda_.9} parent=0 // loop_header
    %s19 = sphi 0, %s23
    %p20 = scmp.ge.s32.totalorder %s19, 4
    %s29 = sphi 0, %s31
    %s32 = sphi 0, %s29
    %s33 = sphi 0, %s32
    %s49 = sphi 0, %s33
    %s53 = sphi 0, %s53
    %s55 = sphi 0, %s53
    %s56 = sphi 0, %s55
    %s70 = sphi 0, %s56
    %s74 = sphi 0, %s74
    %s76 = sphi 0, %s74
    %s77 = sphi 0, %s76
    %s91 = sphi 0, %s77
    %s95 = sphi 0, %s95
    %s97 = sphi 0, %s95
    %s98 = sphi 0, %s97
    %s112 = sphi 0, %s98
    %s116 = sphi 0, %s116
    %s118 = sphi 0, %s116
    %s119 = sphi 0, %s118
    %s133 = sphi 0, %s119
    %s137 = sphi 0, %s137
    %s139 = sphi 0, %s137
    %s140 = sphi 0, %s139
    %s154 = sphi 0, %s140
    %s158 = sphi 0, %s158
    %s160 = sphi 0, %s158
    %s161 = sphi 0, %s160
    %s175 = sphi 0, %s161
    %s179 = sphi 0, %s179
    %s181 = sphi 0, %s179
    %s182 = sphi 0, %s181
    %s196 = sphi 0, %s182
    %s200 = sphi 0, %s200
    %s202 = sphi 0, %s200
    %s203 = sphi 0, %s202
    %s217 = sphi 0, %s203
    %s221 = sphi 0, %s221
    %s223 = sphi 0, %s221
    %s224 = sphi 0, %s223
    %s238 = sphi 0, %s224
    %s242 = sphi 0, %s242
    %s244 = sphi 0, %s242
    %s245 = sphi 0, %s244
    %s259 = sphi 0, %s245
    %s263 = sphi 0, %s263
    %s265 = sphi 0, %s263
    %s266 = sphi 0, %s265
    %s280 = sphi 0, %s266
    %s284 = sphi 0, %s284
    %s286 = sphi 0, %s284
    %s287 = sphi 0, %s286
    %s301 = sphi 0, %s287
    %s307 = sphi 0, %s309
    %s310 = sphi 0, %s307
    %s311 = sphi 0, %s310
    %s327 = sphi 0, %s311
  $region4: #{_lambda_.9} parent=0 // loop_header_branch
    %22 = sbr.rel (%p20) target = $region8
  $region5: #{_lambda_.9} parent=0 // loop_body
    %s24 = ssub.s32 %s19, 1
    %s25 = ssub.s32 %s19, 2
    %s26 = sadd.s32 %s19, 1
    %s27 = ssub.s32 %s19, %s26
    %p28 = scmp.eq.s32.totalorder %s27, 0
    %s30 = sadd.s32 %s29, 1
    %s31 = scalar_select %p28, %s29, %s30
    %p34 = pneg %p28
    %p35 = scmp.eq.s32.totalorder %s19, 1
    %p36 = por %p34, %p35
    %p37 = scmp.ne.s32.totalorder %s29, %s32
    %p38 = scmp.eq.s32.totalorder %s19, 0
    %p39 = por %p37, %p38
    %p40 = scmp.ne.s32.totalorder %s29, %s32
    %p41 = scmp.eq.s32.totalorder %s24, 1
    %p42 = por %p40, %p41
    %p43 = scmp.ne.s32.totalorder %s32, %s33
    %p44 = scmp.eq.s32.totalorder %s24, 0
    %p45 = por %p43, %p44
    %p46 = scmp.ne.s32.totalorder %s32, %s33
    %p47 = scmp.eq.s32.totalorder %s25, 1
    %p48 = por %p46, %p47
    %p50 = scmp.ne.s32.totalorder %s33, %s49
    %p51 = scmp.eq.s32.totalorder %s25, 0
    %p52 = por %p50, %p51
    %s54 = sadd.s32 %s53, 1
    %p57 = scmp.eq.s32.totalorder %s19, 1
    %p58 = scmp.ne.s32.totalorder %s53, %s55
    %p59 = scmp.eq.s32.totalorder %s19, 0
    %p60 = por %p58, %p59
    %p61 = scmp.ne.s32.totalorder %s53, %s55
    %p62 = scmp.eq.s32.totalorder %s24, 1
    %p63 = por %p61, %p62
    %p64 = scmp.ne.s32.totalorder %s55, %s56
    %p65 = scmp.eq.s32.totalorder %s24, 0
    %p66 = por %p64, %p65
    %p67 = scmp.ne.s32.totalorder %s55, %s56
    %p68 = scmp.eq.s32.totalorder %s25, 1
    %p69 = por %p67, %p68
    %p71 = scmp.ne.s32.totalorder %s56, %s70
    %p72 = scmp.eq.s32.totalorder %s25, 0
    %p73 = por %p71, %p72
    %s75 = sadd.s32 %s74, 1
    %p78 = scmp.eq.s32.totalorder %s19, 1
    %p79 = scmp.ne.s32.totalorder %s74, %s76
    %p80 = scmp.eq.s32.totalorder %s19, 0
    %p81 = por %p79, %p80
    %p82 = scmp.ne.s32.totalorder %s74, %s76
    %p83 = scmp.eq.s32.totalorder %s24, 1
    %p84 = por %p82, %p83
    %p85 = scmp.ne.s32.totalorder %s76, %s77
    %p86 = scmp.eq.s32.totalorder %s24, 0
    %p87 = por %p85, %p86
    %p88 = scmp.ne.s32.totalorder %s76, %s77
    %p89 = scmp.eq.s32.totalorder %s25, 1
    %p90 = por %p88, %p89
    %p92 = scmp.ne.s32.totalorder %s77, %s91
    %p93 = scmp.eq.s32.totalorder %s25, 0
    %p94 = por %p92, %p93
    %s96 = sadd.s32 %s95, 1
    %p99 = scmp.eq.s32.totalorder %s19, 1
    %p100 = scmp.ne.s32.totalorder %s95, %s97
    %p101 = scmp.eq.s32.totalorder %s19, 0
    %p102 = por %p100, %p101
    %p103 = scmp.ne.s32.totalorder %s95, %s97
    %p104 = scmp.eq.s32.totalorder %s24, 1
    %p105 = por %p103, %p104
    %p106 = scmp.ne.s32.totalorder %s97, %s98
    %p107 = scmp.eq.s32.totalorder %s24, 0
    %p108 = por %p106, %p107
    %p109 = scmp.ne.s32.totalorder %s97, %s98
    %p110 = scmp.eq.s32.totalorder %s25, 1
    %p111 = por %p109, %p110
    %p113 = scmp.ne.s32.totalorder %s98, %s112
    %p114 = scmp.eq.s32.totalorder %s25, 0
    %p115 = por %p113, %p114
    %s117 = sadd.s32 %s116, 1
    %p120 = scmp.eq.s32.totalorder %s19, 1
    %p121 = scmp.ne.s32.totalorder %s116, %s118
    %p122 = scmp.eq.s32.totalorder %s19, 0
    %p123 = por %p121, %p122
    %p124 = scmp.ne.s32.totalorder %s116, %s118
    %p125 = scmp.eq.s32.totalorder %s24, 1
    %p126 = por %p124, %p125
    %p127 = scmp.ne.s32.totalorder %s118, %s119
    %p128 = scmp.eq.s32.totalorder %s24, 0
    %p129 = por %p127, %p128
    %p130 = scmp.ne.s32.totalorder %s118, %s119
    %p131 = scmp.eq.s32.totalorder %s25, 1
    %p132 = por %p130, %p131
    %p134 = scmp.ne.s32.totalorder %s119, %s133
    %p135 = scmp.eq.s32.totalorder %s25, 0
    %p136 = por %p134, %p135
    %s138 = sadd.s32 %s137, 1
    %p141 = scmp.eq.s32.totalorder %s19, 1
    %p142 = scmp.ne.s32.totalorder %s137, %s139
    %p143 = scmp.eq.s32.totalorder %s19, 0
    %p144 = por %p142, %p143
    %p145 = scmp.ne.s32.totalorder %s137, %s139
    %p146 = scmp.eq.s32.totalorder %s24, 1
    %p147 = por %p145, %p146
    %p148 = scmp.ne.s32.totalorder %s139, %s140
    %p149 = scmp.eq.s32.totalorder %s24, 0
    %p150 = por %p148, %p149
    %p151 = scmp.ne.s32.totalorder %s139, %s140
    %p152 = scmp.eq.s32.totalorder %s25, 1
    %p153 = por %p151, %p152
    %p155 = scmp.ne.s32.totalorder %s140, %s154
    %p156 = scmp.eq.s32.totalorder %s25, 0
    %p157 = por %p155, %p156
    %s159 = sadd.s32 %s158, 1
    %p162 = scmp.eq.s32.totalorder %s19, 1
    %p163 = scmp.ne.s32.totalorder %s158, %s160
    %p164 = scmp.eq.s32.totalorder %s19, 0
    %p165 = por %p163, %p164
    %p166 = scmp.ne.s32.totalorder %s158, %s160
    %p167 = scmp.eq.s32.totalorder %s24, 1
    %p168 = por %p166, %p167
    %p169 = scmp.ne.s32.totalorder %s160, %s161
    %p170 = scmp.eq.s32.totalorder %s24, 0
    %p171 = por %p169, %p170
    %p172 = scmp.ne.s32.totalorder %s160, %s161
    %p173 = scmp.eq.s32.totalorder %s25, 1
    %p174 = por %p172, %p173
    %p176 = scmp.ne.s32.totalorder %s161, %s175
    %p177 = scmp.eq.s32.totalorder %s25, 0
    %p178 = por %p176, %p177
    %s180 = sadd.s32 %s179, 1
    %p183 = scmp.eq.s32.totalorder %s19, 1
    %p184 = scmp.ne.s32.totalorder %s179, %s181
    %p185 = scmp.eq.s32.totalorder %s19, 0
    %p186 = por %p184, %p185
    %p187 = scmp.ne.s32.totalorder %s179, %s181
    %p188 = scmp.eq.s32.totalorder %s24, 1
    %p189 = por %p187, %p188
    %p190 = scmp.ne.s32.totalorder %s181, %s182
    %p191 = scmp.eq.s32.totalorder %s24, 0
    %p192 = por %p190, %p191
    %p193 = scmp.ne.s32.totalorder %s181, %s182
    %p194 = scmp.eq.s32.totalorder %s25, 1
    %p195 = por %p193, %p194
    %p197 = scmp.ne.s32.totalorder %s182, %s196
    %p198 = scmp.eq.s32.totalorder %s25, 0
    %p199 = por %p197, %p198
    %s201 = sadd.s32 %s200, 1
    %p204 = scmp.eq.s32.totalorder %s19, 1
    %p205 = scmp.ne.s32.totalorder %s200, %s202
    %p206 = scmp.eq.s32.totalorder %s19, 0
    %p207 = por %p205, %p206
    %p208 = scmp.ne.s32.totalorder %s200, %s202
    %p209 = scmp.eq.s32.totalorder %s24, 1
    %p210 = por %p208, %p209
    %p211 = scmp.ne.s32.totalorder %s202, %s203
    %p212 = scmp.eq.s32.totalorder %s24, 0
    %p213 = por %p211, %p212
    %p214 = scmp.ne.s32.totalorder %s202, %s203
    %p215 = scmp.eq.s32.totalorder %s25, 1
    %p216 = por %p214, %p215
    %p218 = scmp.ne.s32.totalorder %s203, %s217
    %p219 = scmp.eq.s32.totalorder %s25, 0
    %p220 = por %p218, %p219
    %s222 = sadd.s32 %s221, 1
    %p225 = scmp.eq.s32.totalorder %s19, 1
    %p226 = scmp.ne.s32.totalorder %s221, %s223
    %p227 = scmp.eq.s32.totalorder %s19, 0
    %p228 = por %p226, %p227
    %p229 = scmp.ne.s32.totalorder %s221, %s223
    %p230 = scmp.eq.s32.totalorder %s24, 1
    %p231 = por %p229, %p230
    %p232 = scmp.ne.s32.totalorder %s223, %s224
    %p233 = scmp.eq.s32.totalorder %s24, 0
    %p234 = por %p232, %p233
    %p235 = scmp.ne.s32.totalorder %s223, %s224
    %p236 = scmp.eq.s32.totalorder %s25, 1
    %p237 = por %p235, %p236
    %p239 = scmp.ne.s32.totalorder %s224, %s238
    %p240 = scmp.eq.s32.totalorder %s25, 0
    %p241 = por %p239, %p240
    %s243 = sadd.s32 %s242, 1
    %p246 = scmp.eq.s32.totalorder %s19, 1
    %p247 = scmp.ne.s32.totalorder %s242, %s244
    %p248 = scmp.eq.s32.totalorder %s19, 0
    %p249 = por %p247, %p248
    %p250 = scmp.ne.s32.totalorder %s242, %s244
    %p251 = scmp.eq.s32.totalorder %s24, 1
    %p252 = por %p250, %p251
    %p253 = scmp.ne.s32.totalorder %s244, %s245
    %p254 = scmp.eq.s32.totalorder %s24, 0
    %p255 = por %p253, %p254
    %p256 = scmp.ne.s32.totalorder %s244, %s245
    %p257 = scmp.eq.s32.totalorder %s25, 1
    %p258 = por %p256, %p257
    %p260 = scmp.ne.s32.totalorder %s245, %s259
    %p261 = scmp.eq.s32.totalorder %s25, 0
    %p262 = por %p260, %p261
    %s264 = sadd.s32 %s263, 1
    %p267 = scmp.eq.s32.totalorder %s19, 1
    %p268 = scmp.ne.s32.totalorder %s263, %s265
    %p269 = scmp.eq.s32.totalorder %s19, 0
    %p270 = por %p268, %p269
    %p271 = scmp.ne.s32.totalorder %s263, %s265
    %p272 = scmp.eq.s32.totalorder %s24, 1
    %p273 = por %p271, %p272
    %p274 = scmp.ne.s32.totalorder %s265, %s266
    %p275 = scmp.eq.s32.totalorder %s24, 0
    %p276 = por %p274, %p275
    %p277 = scmp.ne.s32.totalorder %s265, %s266
    %p278 = scmp.eq.s32.totalorder %s25, 1
    %p279 = por %p277, %p278
    %p281 = scmp.ne.s32.totalorder %s266, %s280
    %p282 = scmp.eq.s32.totalorder %s25, 0
    %p283 = por %p281, %p282
    %s285 = sadd.s32 %s284, 1
    %p288 = scmp.eq.s32.totalorder %s19, 1
    %p289 = scmp.ne.s32.totalorder %s284, %s286
    %p290 = scmp.eq.s32.totalorder %s19, 0
    %p291 = por %p289, %p290
    %p292 = scmp.ne.s32.totalorder %s284, %s286
    %p293 = scmp.eq.s32.totalorder %s24, 1
    %p294 = por %p292, %p293
    %p295 = scmp.ne.s32.totalorder %s286, %s287
    %p296 = scmp.eq.s32.totalorder %s24, 0
    %p297 = por %p295, %p296
    %p298 = scmp.ne.s32.totalorder %s286, %s287
    %p299 = scmp.eq.s32.totalorder %s25, 1
    %p300 = por %p298, %p299
    %p302 = scmp.ne.s32.totalorder %s287, %s301
    %p303 = scmp.eq.s32.totalorder %s25, 0
    %p304 = por %p302, %p303
    %s305 = ssub.s32 %s19, %s26
    %p306 = scmp.eq.s32.totalorder %s305, 0
    %s308 = sadd.s32 %s307, 1
    %s309 = scalar_select %p306, %s307, %s308
    %p312 = pneg %p306
    %p313 = scmp.eq.s32.totalorder %s19, 1
    %p314 = por %p312, %p313
    %p315 = scmp.ne.s32.totalorder %s307, %s310
    %p316 = scmp.eq.s32.totalorder %s19, 0
    %p317 = por %p315, %p316
    %p318 = scmp.ne.s32.totalorder %s307, %s310
    %p319 = scmp.eq.s32.totalorder %s24, 1
    %p320 = por %p318, %p319
    %p321 = scmp.ne.s32.totalorder %s310, %s311
    %p322 = scmp.eq.s32.totalorder %s24, 0
    %p323 = por %p321, %p322
    %p324 = scmp.ne.s32.totalorder %s310, %s311
    %p325 = scmp.eq.s32.totalorder %s25, 1
    %p326 = por %p324, %p325
    %p328 = scmp.ne.s32.totalorder %s311, %s327
    %p329 = scmp.eq.s32.totalorder %s25, 0
    %p330 = por %p328, %p329
    %p331 = scmp.le.s32.totalorder 1, %s19
    %p332 = scmp.lt.s32.totalorder %s19, 3
    %p333 = pnand %p331, %p332
    %p334 = pneg %p333
    // Predicated region
    $region9: #{_lambda_.9} parent=5 // pred_check
      _
    $region10: #{_lambda_.9} parent=5 // pred_check_branch
      %336 = sbr.rel (%p333) target = $region12
    $region11: #{_lambda_.9} parent=5 // pred_region
      %s337 = ssub.s32 %s19, 1
      // Predicated region
      $region13: #{_lambda_.9} parent=11 // pred_check
        %p338 = pneg %p66
      $region14: #{_lambda_.9} parent=11 // pred_check_branch
        %340 = sbr.rel (%p338) target = $region16
      $region15: #{_lambda_.9} parent=11 // pred_region
        _
      $region16: #{_lambda_.9} parent=11 // pred_fallthru
        _
      // Predicated region
      $region17: #{_lambda_.9} parent=11 // pred_check
        %p341 = pneg %p87
      $region18: #{_lambda_.9} parent=11 // pred_check_branch
        %343 = sbr.rel (%p341) target = $region20
      $region19: #{_lambda_.9} parent=11 // pred_region
        _
      $region20: #{_lambda_.9} parent=11 // pred_fallthru
        _
      // Predicated region
      $region21: #{_lambda_.9} parent=11 // pred_check
        %p344 = pneg %p108
      $region22: #{_lambda_.9} parent=11 // pred_check_branch
        %346 = sbr.rel (%p344) target = $region24
      $region23: #{_lambda_.9} parent=11 // pred_region
        _
      $region24: #{_lambda_.9} parent=11 // pred_fallthru
        _
      // Predicated region
      $region25: #{_lambda_.9} parent=11 // pred_check
        %p347 = pneg %p129
      $region26: #{_lambda_.9} parent=11 // pred_check_branch
        %349 = sbr.rel (%p347) target = $region28
      $region27: #{_lambda_.9} parent=11 // pred_region
        _
      $region28: #{_lambda_.9} parent=11 // pred_fallthru
        _
      // Predicated region
      $region29: #{_lambda_.9} parent=11 // pred_check
        %p350 = pneg %p150
      $region30: #{_lambda_.9} parent=11 // pred_check_branch
        %352 = sbr.rel (%p350) target = $region32
      $region31: #{_lambda_.9} parent=11 // pred_region
        _
      $region32: #{_lambda_.9} parent=11 // pred_fallthru
        _
      // Predicated region
      $region33: #{_lambda_.9} parent=11 // pred_check
        %p353 = pneg %p171
      $region34: #{_lambda_.9} parent=11 // pred_check_branch
        %355 = sbr.rel (%p353) target = $region36
      $region35: #{_lambda_.9} parent=11 // pred_region
        _
      $region36: #{_lambda_.9} parent=11 // pred_fallthru
        _
      // Predicated region
      $region37: #{_lambda_.9} parent=11 // pred_check
        %p356 = pneg %p192
      $region38: #{_lambda_.9} parent=11 // pred_check_branch
        %358 = sbr.rel (%p356) target = $region40
      $region39: #{_lambda_.9} parent=11 // pred_region
        _
      $region40: #{_lambda_.9} parent=11 // pred_fallthru
        _
      // Predicated region
      $region41: #{_lambda_.9} parent=11 // pred_check
        %p359 = pneg %p213
      $region42: #{_lambda_.9} parent=11 // pred_check_branch
        %361 = sbr.rel (%p359) target = $region44
      $region43: #{_lambda_.9} parent=11 // pred_region
        _
      $region44: #{_lambda_.9} parent=11 // pred_fallthru
        _
      // Predicated region
      $region45: #{_lambda_.9} parent=11 // pred_check
        %p362 = pneg %p234
      $region46: #{_lambda_.9} parent=11 // pred_check_branch
        %364 = sbr.rel (%p362) target = $region48
      $region47: #{_lambda_.9} parent=11 // pred_region
        _
      $region48: #{_lambda_.9} parent=11 // pred_fallthru
        _
      // Predicated region
      $region49: #{_lambda_.9} parent=11 // pred_check
        %p365 = pneg %p255
      $region50: #{_lambda_.9} parent=11 // pred_check_branch
        %367 = sbr.rel (%p365) target = $region52
      $region51: #{_lambda_.9} parent=11 // pred_region
        _
      $region52: #{_lambda_.9} parent=11 // pred_fallthru
        _
      // Predicated region
      $region53: #{_lambda_.9} parent=11 // pred_check
        %p368 = pneg %p276
      $region54: #{_lambda_.9} parent=11 // pred_check_branch
        %370 = sbr.rel (%p368) target = $region56
      $region55: #{_lambda_.9} parent=11 // pred_region
        _
      $region56: #{_lambda_.9} parent=11 // pred_fallthru
        _
      // Predicated region
      $region57: #{_lambda_.9} parent=11 // pred_check
        %p371 = pneg %p297
      $region58: #{_lambda_.9} parent=11 // pred_check_branch
        %373 = sbr.rel (%p371) target = $region60
      $region59: #{_lambda_.9} parent=11 // pred_region
        _
      $region60: #{_lambda_.9} parent=11 // pred_fallthru
        _
    $region12: #{_lambda_.9} parent=5 // pred_fallthru
      _
    %p374 = scmp.lt.s32.totalorder %s19, 2
    // Predicated region
    $region61: #{_lambda_.9} parent=5 // pred_check
      %p375 = pneg %p374
    $region62: #{_lambda_.9} parent=5 // pred_check_branch
      %377 = sbr.rel (%p375) target = $region64
    $region63: #{_lambda_.9} parent=5 // pred_region
      // Predicated region
      $region65: #{_lambda_.9} parent=63 // pred_check
        %p378 = pneg %p39
      $region66: #{_lambda_.9} parent=63 // pred_check_branch
        %380 = sbr.rel (%p378) target = $region68
      $region67: #{_lambda_.9} parent=63 // pred_region
        %s381 = smul.u32 4, %s19
        %p382 = scmp.lt.s32.totalorder %s381, 7
        %s383 = scalar_select %p382, %s381, 7
        %s384 = smul.addr %s383, 2
        %s385 = smul.addr %s384, 8
        %s386 = scalar_lea.vmem %s0, %s385
        %s387 = smul.u32 4, %s19
      $region68: #{_lambda_.9} parent=63 // pred_fallthru
        _
    $region64: #{_lambda_.9} parent=5 // pred_fallthru
      _
    %p388 = scmp.le.s32.totalorder 1, %s19
    %p389 = scmp.lt.s32.totalorder %s19, 3
    %p390 = pnand %p388, %p389
    %p391 = pneg %p390
    // Predicated region
    $region69: #{_lambda_.9} parent=5 // pred_check
      _
    $region70: #{_lambda_.9} parent=5 // pred_check_branch
      %393 = sbr.rel (%p390) target = $region72
    $region71: #{_lambda_.9} parent=5 // pred_region
      %s394 = ssub.s32 %s19, 1
      %s395 = smul.u32 4, %s24
      %p396 = scmp.lt.s32.totalorder %s395, 7
      %s397 = scalar_select %p396, %s395, 7
      %s398 = smul.addr %s397, 2
      %s399 = smul.addr %s398, 8
      %s400 = scalar_lea.vmem %s0, %s399
      %p401 = pneg %p45
      %p402 = pneg %p42
      %p403 = pneg %p66
      %p404 = pneg %p63
      %p405 = pneg %p87
      %p406 = pneg %p84
      %p407 = pneg %p108
      %p408 = pneg %p105
      %p409 = pneg %p129
      %p410 = pneg %p126
      %p411 = pneg %p150
      %p412 = pneg %p147
      %p413 = pneg %p171
      %p414 = pneg %p168
      %p415 = pneg %p192
      %p416 = pneg %p189
      %p417 = pneg %p213
      %p418 = pneg %p210
      %p419 = pneg %p234
      %p420 = pneg %p231
      %p421 = pneg %p255
      %p422 = pneg %p252
      %p423 = pneg %p276
      %p424 = pneg %p273
      %p425 = pneg %p297
      %p426 = pneg %p294
      %p427 = pneg %p323
      %p428 = pneg %p320
      %s429 = smul.u32 4, %s24
      %p430 = scmp.lt.s32.totalorder %s429, 7
      %s431 = scalar_select %p430, %s429, 7
      %s432 = smul.addr %s431, 2
      %s433 = smul.addr %s432, 8
      %s434 = scalar_lea.vmem %s13, %s433
      %s435 = smul.u32 4, %s24
      %p436 = scmp.lt.s32.totalorder %s435, 7
      %s437 = scalar_select %p436, %s435, 7
      %s438 = smul.addr %s437, 2
      %s439 = smul.addr %s438, 8
      %s440 = scalar_lea.vmem %s0, %s439
      %s441 = smul.u32 4, %s24
      %s442 = smul.u32 4, %s24
      %p443 = scmp.lt.s32.totalorder %s442, 7
      %s444 = scalar_select %p443, %s442, 7
      %s445 = smul.addr %s444, 2
      %s446 = smul.addr %s445, 8
      %s447 = scalar_lea.vmem %s13, %s446
      %s448 = smul.u32 4, %s24
      %v450 = vld [vmem:[%s440] sm:$0xff]
      %v451 = vld [vmem:[%s440 + $0x8] sm:$0xff]
      %v452 = vld [vmem:[%s440 + $0x10] sm:$0xff]
      %v453 = vld [vmem:[%s440 + $0x18] sm:$0xff]
      %v454 = vld [vmem:[%s440 + $0x20] sm:$0xff]
      %v455 = vld [vmem:[%s440 + $0x28] sm:$0xff]
      %v456 = vld [vmem:[%s440 + $0x30] sm:$0xff]
      %v457 = vld [vmem:[%s440 + $0x38] sm:$0xff]
      %v458 = vpack.c.bf16 %v451, %v450
      %v459 = vpack.c.bf16 %v453, %v452
      %v460 = vpack.c.bf16 %v455, %v454
      %v461 = vpack.c.bf16 %v457, %v456
      %v462 = vld [vmem:[%s1] sm:$0xf]
      %v463 = vld [vmem:[%s1 + $0x4] sm:$0xf]
      %v464 = vld [vmem:[%s2] sm:$0x1]
      %v466 = vlaneseq
      %v467 = vshrl.u32 %v466, 7
      %v468 = vsub.s32 0, %v467
      %v469 = vrot.slane %v464, %v468
      %v473 = vunpack.c.l.b16 %v462
      %v474 = vunpack.c.l.b16 %v463
      %v475 = vpack.c.b16 %v474, %v473
      %vm477 = vcmask 130048
      %v479 = vsel %vm477, %v458, 0
      %v482 = vsel %vm477, %v459, 0
      %v485 = vsel %vm477, %v460, 0
      %v488 = vsel %vm477, %v461, 0
      %490 = vmatprep.subr.bf16.mxu0 0
      %491 = vmatpush1.bf16.msra.mxu0 0
      %492 = vmatprep.subr.bf16.mxu0 0
      %493 = vmatpush1.bf16.msra.mxu0 0
      %494 = vmatprep.subr.bf16.mxu0 0
      %495 = vmatpush1.bf16.msra.mxu0 0
      %496 = vmatprep.subr.bf16.mxu0 0
      %497 = vmatpush1.bf16.msra.mxu0 0
      %498 = vmatprep.subr.bf16.mxu0 0
      %499 = vmatpush1.bf16.msra.mxu0 0
      %500 = vmatprep.subr.bf16.mxu0 0
      %501 = vmatpush1.bf16.msra.mxu0 0
      %502 = vmatprep.subr.bf16.mxu0 0
      %503 = vmatpush1.bf16.msra.mxu0 0
      %504 = vmatprep.subr.bf16.mxu0 0
      %505 = vmatpush1.bf16.msra.mxu0 %v475
      %506 = vmatprep.subr.bf16.mxu0 0
      %507 = vmatpush2.bf16.msra.mxu0 0
      %508 = vmatprep.subr.bf16.mxu0 0
      %509 = vmatpush2.bf16.msra.mxu0 0
      %510 = vmatprep.subr.bf16.mxu0 0
      %511 = vmatpush2.bf16.msra.mxu0 0
      %512 = vmatprep.subr.bf16.mxu0 0
      %513 = vmatpush2.bf16.msra.mxu0 0
      %514 = vmatprep.subr.bf16.mxu0 0
      %515 = vmatpush2.bf16.msra.mxu0 0
      %516 = vmatprep.subr.bf16.mxu0 0
      %517 = vmatpush2.bf16.msra.mxu0 0
      %518 = vmatprep.subr.bf16.mxu0 0
      %519 = vmatpush2.bf16.msra.mxu0 0
      %520 = vmatprep.subr.bf16.mxu0 0
      %521 = vmatpush2.bf16.msra.mxu0 0
      %522 = vmatprep.mubr.bf16.mxu0 0
      %523 = vmatmul.mubr.bf16.gmra.mxu0 %v479
      %v524 = vpop.f32.mrf.mxu0
      %v525 = vadd.f32 %v469, %v524
      %v526 = vpop.f32.mrf.mxu0
      %v527 = vpop.f32.mrf.mxu0
      %v528 = vadd.f32 %v469, %v527
      %v529 = vpop.f32.mrf.mxu0
      %530 = vmatprep.mubr.bf16.mxu0 0
      %531 = vmatmul.mubr.bf16.gmra.mxu0 %v482
      %v532 = vpop.f32.mrf.mxu0
      %v533 = vadd.f32 %v469, %v532
      %v534 = vpop.f32.mrf.mxu0
      %v535 = vpop.f32.mrf.mxu0
      %v536 = vadd.f32 %v469, %v535
      %v537 = vpop.f32.mrf.mxu0
      %538 = vmatprep.mubr.bf16.mxu0 0
      %539 = vmatmul.mubr.bf16.gmra.mxu0 %v485
      %v540 = vpop.f32.mrf.mxu0
      %v541 = vadd.f32 %v469, %v540
      %v542 = vpop.f32.mrf.mxu0
      %v543 = vpop.f32.mrf.mxu0
      %v544 = vadd.f32 %v469, %v543
      %v545 = vpop.f32.mrf.mxu0
      %546 = vmatprep.mubr.bf16.mxu0 0
      %547 = vmatmul.mubr.bf16.gmra.mxu0 %v488
      %v548 = vpop.f32.mrf.mxu0
      %v549 = vadd.f32 %v469, %v548
      %v550 = vpop.f32.mrf.mxu0
      %v551 = vpop.f32.mrf.mxu0
      %v552 = vadd.f32 %v469, %v551
      %v553 = vpop.f32.mrf.mxu0
      %554 = vdwg.mxu0
      %v555 = vand.u32 2147483647, %v525
      %v556 = vand.u32 2147483647, %v528
      %v557 = vand.u32 2147483647, %v533
      %v558 = vand.u32 2147483647, %v536
      %v559 = vand.u32 2147483647, %v541
      %v560 = vand.u32 2147483647, %v544
      %v561 = vand.u32 2147483647, %v549
      %v562 = vand.u32 2147483647, %v552
      %v563 = vsub.f32 0.0, %v555
      %v564 = vsub.f32 0.0, %v556
      %v565 = vsub.f32 0.0, %v557
      %v566 = vsub.f32 0.0, %v558
      %v567 = vsub.f32 0.0, %v559
      %v568 = vsub.f32 0.0, %v560
      %v569 = vsub.f32 0.0, %v561
      %v570 = vsub.f32 0.0, %v562
      %v571 = vmul.f32 %v563, 1.442695
      %v572 = vpow.pop %v571
      %v573 = vmul.f32 %v564, 1.442695
      %v574 = vpow.pop %v573
      %v575 = vmul.f32 %v565, 1.442695
      %v576 = vpow.pop %v575
      %v577 = vmul.f32 %v566, 1.442695
      %v578 = vpow.pop %v577
      %v579 = vmul.f32 %v567, 1.442695
      %v580 = vpow.pop %v579
      %v581 = vmul.f32 %v568, 1.442695
      %v582 = vpow.pop %v581
      %v583 = vmul.f32 %v569, 1.442695
      %v584 = vpow.pop %v583
      %v585 = vmul.f32 %v570, 1.442695
      %v586 = vpow.pop %v585
      %v587 = vmul.f32 %v572, %v572
      %v588 = vmul.f32 %v574, %v574
      %v589 = vmul.f32 %v576, %v576
      %v590 = vmul.f32 %v578, %v578
      %v591 = vmul.f32 %v580, %v580
      %v592 = vmul.f32 %v582, %v582
      %v593 = vmul.f32 %v584, %v584
      %v594 = vmul.f32 %v586, %v586
      %vm595 = vcmp.ge.f32.partialorder %v525, 0.0
      %vm596 = vcmp.ge.f32.partialorder %v528, 0.0
      %vm597 = vcmp.ge.f32.partialorder %v533, 0.0
      %vm598 = vcmp.ge.f32.partialorder %v536, 0.0
      %vm599 = vcmp.ge.f32.partialorder %v541, 0.0
      %vm600 = vcmp.ge.f32.partialorder %v544, 0.0
      %vm601 = vcmp.ge.f32.partialorder %v549, 0.0
      %vm602 = vcmp.ge.f32.partialorder %v552, 0.0
      %v603 = vmul.f32 %v572, 2.0
      %v604 = vmul.f32 %v574, 2.0
      %v605 = vmul.f32 %v576, 2.0
      %v606 = vmul.f32 %v578, 2.0
      %v607 = vmul.f32 %v580, 2.0
      %v608 = vmul.f32 %v582, 2.0
      %v609 = vmul.f32 %v584, 2.0
      %v610 = vmul.f32 %v586, 2.0
      %v611 = vadd.f32 %v603, 1.0
      %v612 = vadd.f32 %v604, 1.0
      %v613 = vadd.f32 %v605, 1.0
      %v614 = vadd.f32 %v606, 1.0
      %v615 = vadd.f32 %v607, 1.0
      %v616 = vadd.f32 %v608, 1.0
      %v617 = vadd.f32 %v609, 1.0
      %v618 = vadd.f32 %v610, 1.0
      %v619 = vadd.f32 %v603, %v587
      %v620 = vadd.f32 %v604, %v588
      %v621 = vadd.f32 %v605, %v589
      %v622 = vadd.f32 %v606, %v590
      %v623 = vadd.f32 %v607, %v591
      %v624 = vadd.f32 %v608, %v592
      %v625 = vadd.f32 %v609, %v593
      %v626 = vadd.f32 %v610, %v594
      %v627 = vsel %vm595, %v611, %v619
      %v628 = vsel %vm596, %v612, %v620
      %v629 = vsel %vm597, %v613, %v621
      %v630 = vsel %vm598, %v614, %v622
      %v631 = vsel %vm599, %v615, %v623
      %v632 = vsel %vm600, %v616, %v624
      %v633 = vsel %vm601, %v617, %v625
      %v634 = vsel %vm602, %v618, %v626
      %v635 = vmul.f32 %v587, 2.0
      %v636 = vmul.f32 %v588, 2.0
      %v637 = vmul.f32 %v589, 2.0
      %v638 = vmul.f32 %v590, 2.0
      %v639 = vmul.f32 %v591, 2.0
      %v640 = vmul.f32 %v592, 2.0
      %v641 = vmul.f32 %v593, 2.0
      %v642 = vmul.f32 %v594, 2.0
      %v643 = vadd.f32 %v611, %v635
      %v644 = vadd.f32 %v612, %v636
      %v645 = vadd.f32 %v613, %v637
      %v646 = vadd.f32 %v614, %v638
      %v647 = vadd.f32 %v615, %v639
      %v648 = vadd.f32 %v616, %v640
      %v649 = vadd.f32 %v617, %v641
      %v650 = vadd.f32 %v618, %v642
      %v651 = vadd.f32 %v603, 2.0
      %v652 = vadd.f32 %v604, 2.0
      %v653 = vadd.f32 %v605, 2.0
      %v654 = vadd.f32 %v606, 2.0
      %v655 = vadd.f32 %v607, 2.0
      %v656 = vadd.f32 %v608, 2.0
      %v657 = vadd.f32 %v609, 2.0
      %v658 = vadd.f32 %v610, 2.0
      %v659 = vadd.f32 %v651, %v587
      %v660 = vadd.f32 %v652, %v588
      %v661 = vadd.f32 %v653, %v589
      %v662 = vadd.f32 %v654, %v590
      %v663 = vadd.f32 %v655, %v591
      %v664 = vadd.f32 %v656, %v592
      %v665 = vadd.f32 %v657, %v593
      %v666 = vadd.f32 %v658, %v594
      %v667 = vsel %vm595, %v643, %v659
      %v668 = vsel %vm596, %v644, %v660
      %v669 = vsel %vm597, %v645, %v661
      %v670 = vsel %vm598, %v646, %v662
      %v671 = vsel %vm599, %v647, %v663
      %v672 = vsel %vm600, %v648, %v664
      %v673 = vsel %vm601, %v649, %v665
      %v674 = vsel %vm602, %v650, %v666
      %v675 = vrcp.pop %v667
      %v676 = vrcp.pop %v668
      %v677 = vrcp.pop %v669
      %v678 = vrcp.pop %v670
      %v679 = vrcp.pop %v671
      %v680 = vrcp.pop %v672
      %v681 = vrcp.pop %v673
      %v682 = vrcp.pop %v674
      %v683 = vmul.f32 %v667, %v675
      %v684 = vmul.f32 %v668, %v676
      %v685 = vmul.f32 %v669, %v677
      %v686 = vmul.f32 %v670, %v678
      %v687 = vmul.f32 %v671, %v679
      %v688 = vmul.f32 %v672, %v680
      %v689 = vmul.f32 %v673, %v681
      %v690 = vmul.f32 %v674, %v682
      %v691 = vsub.f32 2.0, %v683
      %v692 = vsub.f32 2.0, %v684
      %v693 = vsub.f32 2.0, %v685
      %v694 = vsub.f32 2.0, %v686
      %v695 = vsub.f32 2.0, %v687
      %v696 = vsub.f32 2.0, %v688
      %v697 = vsub.f32 2.0, %v689
      %v698 = vsub.f32 2.0, %v690
      %v699 = vmul.f32 %v675, %v691
      %v700 = vmul.f32 %v676, %v692
      %v701 = vmul.f32 %v677, %v693
      %v702 = vmul.f32 %v678, %v694
      %v703 = vmul.f32 %v679, %v695
      %v704 = vmul.f32 %v680, %v696
      %v705 = vmul.f32 %v681, %v697
      %v706 = vmul.f32 %v682, %v698
      %v707 = vmul.f32 %v525, %v627
      %v708 = vmul.f32 %v528, %v628
      %v709 = vmul.f32 %v533, %v629
      %v710 = vmul.f32 %v536, %v630
      %v711 = vmul.f32 %v541, %v631
      %v712 = vmul.f32 %v544, %v632
      %v713 = vmul.f32 %v549, %v633
      %v714 = vmul.f32 %v552, %v634
      %v715 = vmul.f32 %v707, %v699
      %v716 = vmul.f32 %v708, %v700
      %v717 = vmul.f32 %v709, %v701
      %v718 = vmul.f32 %v710, %v702
      %v719 = vmul.f32 %v711, %v703
      %v720 = vmul.f32 %v712, %v704
      %v721 = vmul.f32 %v713, %v705
      %v722 = vmul.f32 %v714, %v706
      %v723 = vpack.c.bf16 %v716, %v715
      %v724 = vpack.c.bf16 %v718, %v717
      %v725 = vpack.c.bf16 %v720, %v719
      %v726 = vpack.c.bf16 %v722, %v721
      %v727 = vld [vmem:[%s3] sm:$0xf]
      %v728 = vld [vmem:[%s3 + $0x4] sm:$0xf]
      %v731 = vunpack.c.l.b16 %v727
      %v732 = vunpack.c.l.b16 %v728
      %v733 = vpack.c.b16 %v732, %v731
      %v736 = vsel %vm477, %v723, 0
      %v739 = vsel %vm477, %v724, 0
      %v742 = vsel %vm477, %v725, 0
      %v745 = vsel %vm477, %v726, 0
      %747 = vmatprep.subr.bf16.mxu0 0
      %748 = vmatpush1.bf16.msra.mxu0 0
      %749 = vmatprep.subr.bf16.mxu0 0
      %750 = vmatpush1.bf16.msra.mxu0 0
      %751 = vmatprep.subr.bf16.mxu0 0
      %752 = vmatpush1.bf16.msra.mxu0 0
      %753 = vmatprep.subr.bf16.mxu0 0
      %754 = vmatpush1.bf16.msra.mxu0 0
      %755 = vmatprep.subr.bf16.mxu0 0
      %756 = vmatpush1.bf16.msra.mxu0 0
      %757 = vmatprep.subr.bf16.mxu0 0
      %758 = vmatpush1.bf16.msra.mxu0 0
      %759 = vmatprep.subr.bf16.mxu0 0
      %760 = vmatpush1.bf16.msra.mxu0 0
      %761 = vmatprep.subr.bf16.mxu0 0
      %762 = vmatpush1.bf16.msra.mxu0 %v733
      %763 = vmatprep.subr.bf16.mxu0 0
      %764 = vmatpush2.bf16.msra.mxu0 0
      %765 = vmatprep.subr.bf16.mxu0 0
      %766 = vmatpush2.bf16.msra.mxu0 0
      %767 = vmatprep.subr.bf16.mxu0 0
      %768 = vmatpush2.bf16.msra.mxu0 0
      %769 = vmatprep.subr.bf16.mxu0 0
      %770 = vmatpush2.bf16.msra.mxu0 0
      %771 = vmatprep.subr.bf16.mxu0 0
      %772 = vmatpush2.bf16.msra.mxu0 0
      %773 = vmatprep.subr.bf16.mxu0 0
      %774 = vmatpush2.bf16.msra.mxu0 0
      %775 = vmatprep.subr.bf16.mxu0 0
      %776 = vmatpush2.bf16.msra.mxu0 0
      %777 = vmatprep.subr.bf16.mxu0 0
      %778 = vmatpush2.bf16.msra.mxu0 0
      %779 = vmatprep.mubr.bf16.mxu0 0
      %780 = vmatmul.mubr.bf16.gmra.mxu0 %v736
      %v781 = vpop.f32.mrf.mxu0
      %v782 = vadd.f32 0.0, %v781
      %v783 = vpop.f32.mrf.mxu0
      %v784 = vpop.f32.mrf.mxu0
      %v785 = vadd.f32 0.0, %v784
      %v786 = vpop.f32.mrf.mxu0
      %787 = vmatprep.mubr.bf16.mxu0 0
      %788 = vmatmul.mubr.bf16.gmra.mxu0 %v739
      %v789 = vpop.f32.mrf.mxu0
      %v790 = vadd.f32 0.0, %v789
      %v791 = vpop.f32.mrf.mxu0
      %v792 = vpop.f32.mrf.mxu0
      %v793 = vadd.f32 0.0, %v792
      %v794 = vpop.f32.mrf.mxu0
      %795 = vmatprep.mubr.bf16.mxu0 0
      %796 = vmatmul.mubr.bf16.gmra.mxu0 %v742
      %v797 = vpop.f32.mrf.mxu0
      %v798 = vadd.f32 0.0, %v797
      %v799 = vpop.f32.mrf.mxu0
      %v800 = vpop.f32.mrf.mxu0
      %v801 = vadd.f32 0.0, %v800
      %v802 = vpop.f32.mrf.mxu0
      %803 = vmatprep.mubr.bf16.mxu0 0
      %804 = vmatmul.mubr.bf16.gmra.mxu0 %v745
      %v805 = vpop.f32.mrf.mxu0
      %v806 = vadd.f32 0.0, %v805
      %v807 = vpop.f32.mrf.mxu0
      %v808 = vpop.f32.mrf.mxu0
      %v809 = vadd.f32 0.0, %v808
      %v810 = vpop.f32.mrf.mxu0
      %811 = vdwg.mxu0
      %v812 = vld [vmem:[%s4] sm:$0xf]
      %v813 = vld [vmem:[%s4 + $0x4] sm:$0xf]
      %v816 = vunpack.c.l.b16 %v812
      %v817 = vunpack.c.l.b16 %v813
      %v818 = vpack.c.b16 %v817, %v816
      %820 = vmatprep.subr.bf16.mxu0 0
      %821 = vmatpush1.bf16.msra.mxu0 0
      %822 = vmatprep.subr.bf16.mxu0 0
      %823 = vmatpush1.bf16.msra.mxu0 0
      %824 = vmatprep.subr.bf16.mxu0 0
      %825 = vmatpush1.bf16.msra.mxu0 0
      %826 = vmatprep.subr.bf16.mxu0 0
      %827 = vmatpush1.bf16.msra.mxu0 0
      %828 = vmatprep.subr.bf16.mxu0 0
      %829 = vmatpush1.bf16.msra.mxu0 0
      %830 = vmatprep.subr.bf16.mxu0 0
      %831 = vmatpush1.bf16.msra.mxu0 0
      %832 = vmatprep.subr.bf16.mxu0 0
      %833 = vmatpush1.bf16.msra.mxu0 0
      %834 = vmatprep.subr.bf16.mxu0 0
      %835 = vmatpush1.bf16.msra.mxu0 %v818
      %836 = vmatprep.subr.bf16.mxu0 0
      %837 = vmatpush2.bf16.msra.mxu0 0
      %838 = vmatprep.subr.bf16.mxu0 0
      %839 = vmatpush2.bf16.msra.mxu0 0
      %840 = vmatprep.subr.bf16.mxu0 0
      %841 = vmatpush2.bf16.msra.mxu0 0
      %842 = vmatprep.subr.bf16.mxu0 0
      %843 = vmatpush2.bf16.msra.mxu0 0
      %844 = vmatprep.subr.bf16.mxu0 0
      %845 = vmatpush2.bf16.msra.mxu0 0
      %846 = vmatprep.subr.bf16.mxu0 0
      %847 = vmatpush2.bf16.msra.mxu0 0
      %848 = vmatprep.subr.bf16.mxu0 0
      %849 = vmatpush2.bf16.msra.mxu0 0
      %850 = vmatprep.subr.bf16.mxu0 0
      %851 = vmatpush2.bf16.msra.mxu0 0
      %852 = vmatprep.mubr.bf16.mxu0 0
      %853 = vmatmul.mubr.bf16.gmra.mxu0 %v736
      %v854 = vpop.f32.mrf.mxu0
      %v855 = vadd.f32 0.0, %v854
      %v856 = vpop.f32.mrf.mxu0
      %v857 = vpop.f32.mrf.mxu0
      %v858 = vadd.f32 0.0, %v857
      %v859 = vpop.f32.mrf.mxu0
      %860 = vmatprep.mubr.bf16.mxu0 0
      %861 = vmatmul.mubr.bf16.gmra.mxu0 %v739
      %v862 = vpop.f32.mrf.mxu0
      %v863 = vadd.f32 0.0, %v862
      %v864 = vpop.f32.mrf.mxu0
      %v865 = vpop.f32.mrf.mxu0
      %v866 = vadd.f32 0.0, %v865
      %v867 = vpop.f32.mrf.mxu0
      %868 = vmatprep.mubr.bf16.mxu0 0
      %869 = vmatmul.mubr.bf16.gmra.mxu0 %v742
      %v870 = vpop.f32.mrf.mxu0
      %v871 = vadd.f32 0.0, %v870
      %v872 = vpop.f32.mrf.mxu0
      %v873 = vpop.f32.mrf.mxu0
      %v874 = vadd.f32 0.0, %v873
      %v875 = vpop.f32.mrf.mxu0
      %876 = vmatprep.mubr.bf16.mxu0 0
      %877 = vmatmul.mubr.bf16.gmra.mxu0 %v745
      %v878 = vpop.f32.mrf.mxu0
      %v879 = vadd.f32 0.0, %v878
      %v880 = vpop.f32.mrf.mxu0
      %v881 = vpop.f32.mrf.mxu0
      %v882 = vadd.f32 0.0, %v881
      %v883 = vpop.f32.mrf.mxu0
      %884 = vdwg.mxu0
      %v885 = vld [vmem:[%s5] sm:$0xf]
      %v886 = vld [vmem:[%s5 + $0x4] sm:$0xf]
      %v889 = vunpack.c.l.b16 %v885
      %v890 = vunpack.c.l.b16 %v886
      %v891 = vpack.c.b16 %v890, %v889
      %893 = vmatprep.subr.bf16.mxu0 0
      %894 = vmatpush1.bf16.msra.mxu0 0
      %895 = vmatprep.subr.bf16.mxu0 0
      %896 = vmatpush1.bf16.msra.mxu0 0
      %897 = vmatprep.subr.bf16.mxu0 0
      %898 = vmatpush1.bf16.msra.mxu0 0
      %899 = vmatprep.subr.bf16.mxu0 0
      %900 = vmatpush1.bf16.msra.mxu0 0
      %901 = vmatprep.subr.bf16.mxu0 0
      %902 = vmatpush1.bf16.msra.mxu0 0
      %903 = vmatprep.subr.bf16.mxu0 0
      %904 = vmatpush1.bf16.msra.mxu0 0
      %905 = vmatprep.subr.bf16.mxu0 0
      %906 = vmatpush1.bf16.msra.mxu0 0
      %907 = vmatprep.subr.bf16.mxu0 0
      %908 = vmatpush1.bf16.msra.mxu0 %v891
      %909 = vmatprep.subr.bf16.mxu0 0
      %910 = vmatpush2.bf16.msra.mxu0 0
      %911 = vmatprep.subr.bf16.mxu0 0
      %912 = vmatpush2.bf16.msra.mxu0 0
      %913 = vmatprep.subr.bf16.mxu0 0
      %914 = vmatpush2.bf16.msra.mxu0 0
      %915 = vmatprep.subr.bf16.mxu0 0
      %916 = vmatpush2.bf16.msra.mxu0 0
      %917 = vmatprep.subr.bf16.mxu0 0
      %918 = vmatpush2.bf16.msra.mxu0 0
      %919 = vmatprep.subr.bf16.mxu0 0
      %920 = vmatpush2.bf16.msra.mxu0 0
      %921 = vmatprep.subr.bf16.mxu0 0
      %922 = vmatpush2.bf16.msra.mxu0 0
      %923 = vmatprep.subr.bf16.mxu0 0
      %924 = vmatpush2.bf16.msra.mxu0 0
      %925 = vmatprep.mubr.bf16.mxu0 0
      %926 = vmatmul.mubr.bf16.gmra.mxu0 %v736
      %v927 = vpop.f32.mrf.mxu0
      %v928 = vadd.f32 0.0, %v927
      %v929 = vpop.f32.mrf.mxu0
      %v930 = vpop.f32.mrf.mxu0
      %v931 = vadd.f32 0.0, %v930
      %v932 = vpop.f32.mrf.mxu0
      %933 = vmatprep.mubr.bf16.mxu0 0
      %934 = vmatmul.mubr.bf16.gmra.mxu0 %v739
      %v935 = vpop.f32.mrf.mxu0
      %v936 = vadd.f32 0.0, %v935
      %v937 = vpop.f32.mrf.mxu0
      %v938 = vpop.f32.mrf.mxu0
      %v939 = vadd.f32 0.0, %v938
      %v940 = vpop.f32.mrf.mxu0
      %941 = vmatprep.mubr.bf16.mxu0 0
      %942 = vmatmul.mubr.bf16.gmra.mxu0 %v742
      %v943 = vpop.f32.mrf.mxu0
      %v944 = vadd.f32 0.0, %v943
      %v945 = vpop.f32.mrf.mxu0
      %v946 = vpop.f32.mrf.mxu0
      %v947 = vadd.f32 0.0, %v946
      %v948 = vpop.f32.mrf.mxu0
      %949 = vmatprep.mubr.bf16.mxu0 0
      %950 = vmatmul.mubr.bf16.gmra.mxu0 %v745
      %v951 = vpop.f32.mrf.mxu0
      %v952 = vadd.f32 0.0, %v951
      %v953 = vpop.f32.mrf.mxu0
      %v954 = vpop.f32.mrf.mxu0
      %v955 = vadd.f32 0.0, %v954
      %v956 = vpop.f32.mrf.mxu0
      %957 = vdwg.mxu0
      %v958 = vld [vmem:[%s6] sm:$0xff]
      %v959 = vld [vmem:[%s6 + $0x8] sm:$0xff]
      %v960 = vadd.f32 %v782, %v958
      %v961 = vadd.f32 %v785, %v959
      %v962 = vadd.f32 %v790, %v958
      %v963 = vadd.f32 %v793, %v959
      %v964 = vadd.f32 %v798, %v958
      %v965 = vadd.f32 %v801, %v959
      %v966 = vadd.f32 %v806, %v958
      %v967 = vadd.f32 %v809, %v959
      %v968 = vld [vmem:[%s7] sm:$0xff]
      %v969 = vld [vmem:[%s7 + $0x8] sm:$0xff]
      %v970 = vadd.f32 %v855, %v968
      %v971 = vadd.f32 %v858, %v969
      %v972 = vadd.f32 %v863, %v968
      %v973 = vadd.f32 %v866, %v969
      %v974 = vadd.f32 %v871, %v968
      %v975 = vadd.f32 %v874, %v969
      %v976 = vadd.f32 %v879, %v968
      %v977 = vadd.f32 %v882, %v969
      %v978 = vld [vmem:[%s8] sm:$0x1]
      %v980 = vlaneseq
      %v981 = vshrl.u32 %v980, 7
      %v982 = vsub.s32 0, %v981
      %v983 = vrot.slane %v978, %v982
      %v985 = vadd.f32 %v928, %v983
      %v986 = vadd.f32 %v931, %v983
      %v987 = vadd.f32 %v936, %v983
      %v988 = vadd.f32 %v939, %v983
      %v989 = vadd.f32 %v944, %v983
      %v990 = vadd.f32 %v947, %v983
      %v991 = vadd.f32 %v952, %v983
      %v992 = vadd.f32 %v955, %v983
      %s993 = scalar_lea.vmem %s3, 8
      %v994 = vld [vmem:[%s993] sm:$0xf]
      %v995 = vld [vmem:[%s993 + $0x4] sm:$0xf]
      %v998 = vunpack.c.l.b16 %v994
      %v999 = vunpack.c.l.b16 %v995
      %v1000 = vpack.c.b16 %v999, %v998
      %1002 = vmatprep.subr.bf16.mxu0 0
      %1003 = vmatpush1.bf16.msra.mxu0 0
      %1004 = vmatprep.subr.bf16.mxu0 0
      %1005 = vmatpush1.bf16.msra.mxu0 0
      %1006 = vmatprep.subr.bf16.mxu0 0
      %1007 = vmatpush1.bf16.msra.mxu0 0
      %1008 = vmatprep.subr.bf16.mxu0 0
      %1009 = vmatpush1.bf16.msra.mxu0 0
      %1010 = vmatprep.subr.bf16.mxu0 0
      %1011 = vmatpush1.bf16.msra.mxu0 0
      %1012 = vmatprep.subr.bf16.mxu0 0
      %1013 = vmatpush1.bf16.msra.mxu0 0
      %1014 = vmatprep.subr.bf16.mxu0 0
      %1015 = vmatpush1.bf16.msra.mxu0 0
      %1016 = vmatprep.subr.bf16.mxu0 0
      %1017 = vmatpush1.bf16.msra.mxu0 %v1000
      %1018 = vmatprep.subr.bf16.mxu0 0
      %1019 = vmatpush2.bf16.msra.mxu0 0
      %1020 = vmatprep.subr.bf16.mxu0 0
      %1021 = vmatpush2.bf16.msra.mxu0 0
      %1022 = vmatprep.subr.bf16.mxu0 0
      %1023 = vmatpush2.bf16.msra.mxu0 0
      %1024 = vmatprep.subr.bf16.mxu0 0
      %1025 = vmatpush2.bf16.msra.mxu0 0
      %1026 = vmatprep.subr.bf16.mxu0 0
      %1027 = vmatpush2.bf16.msra.mxu0 0
      %1028 = vmatprep.subr.bf16.mxu0 0
      %1029 = vmatpush2.bf16.msra.mxu0 0
      %1030 = vmatprep.subr.bf16.mxu0 0
      %1031 = vmatpush2.bf16.msra.mxu0 0
      %1032 = vmatprep.subr.bf16.mxu0 0
      %1033 = vmatpush2.bf16.msra.mxu0 0
      %1034 = vmatprep.mubr.bf16.mxu0 0
      %1035 = vmatmul.mubr.bf16.gmra.mxu0 %v736
      %v1036 = vpop.f32.mrf.mxu0
      %v1037 = vadd.f32 0.0, %v1036
      %v1038 = vpop.f32.mrf.mxu0
      %v1039 = vpop.f32.mrf.mxu0
      %v1040 = vadd.f32 0.0, %v1039
      %v1041 = vpop.f32.mrf.mxu0
      %1042 = vmatprep.mubr.bf16.mxu0 0
      %1043 = vmatmul.mubr.bf16.gmra.mxu0 %v739
      %v1044 = vpop.f32.mrf.mxu0
      %v1045 = vadd.f32 0.0, %v1044
      %v1046 = vpop.f32.mrf.mxu0
      %v1047 = vpop.f32.mrf.mxu0
      %v1048 = vadd.f32 0.0, %v1047
      %v1049 = vpop.f32.mrf.mxu0
      %1050 = vmatprep.mubr.bf16.mxu0 0
      %1051 = vmatmul.mubr.bf16.gmra.mxu0 %v742
      %v1052 = vpop.f32.mrf.mxu0
      %v1053 = vadd.f32 0.0, %v1052
      %v1054 = vpop.f32.mrf.mxu0
      %v1055 = vpop.f32.mrf.mxu0
      %v1056 = vadd.f32 0.0, %v1055
      %v1057 = vpop.f32.mrf.mxu0
      %1058 = vmatprep.mubr.bf16.mxu0 0
      %1059 = vmatmul.mubr.bf16.gmra.mxu0 %v745
      %v1060 = vpop.f32.mrf.mxu0
      %v1061 = vadd.f32 0.0, %v1060
      %v1062 = vpop.f32.mrf.mxu0
      %v1063 = vpop.f32.mrf.mxu0
      %v1064 = vadd.f32 0.0, %v1063
      %v1065 = vpop.f32.mrf.mxu0
      %1066 = vdwg.mxu0
      %s1067 = scalar_lea.vmem %s4, 8
      %v1068 = vld [vmem:[%s1067] sm:$0xf]
      %v1069 = vld [vmem:[%s1067 + $0x4] sm:$0xf]
      %v1072 = vunpack.c.l.b16 %v1068
      %v1073 = vunpack.c.l.b16 %v1069
      %v1074 = vpack.c.b16 %v1073, %v1072
      %1076 = vmatprep.subr.bf16.mxu0 0
      %1077 = vmatpush1.bf16.msra.mxu0 0
      %1078 = vmatprep.subr.bf16.mxu0 0
      %1079 = vmatpush1.bf16.msra.mxu0 0
      %1080 = vmatprep.subr.bf16.mxu0 0
      %1081 = vmatpush1.bf16.msra.mxu0 0
      %1082 = vmatprep.subr.bf16.mxu0 0
      %1083 = vmatpush1.bf16.msra.mxu0 0
      %1084 = vmatprep.subr.bf16.mxu0 0
      %1085 = vmatpush1.bf16.msra.mxu0 0
      %1086 = vmatprep.subr.bf16.mxu0 0
      %1087 = vmatpush1.bf16.msra.mxu0 0
      %1088 = vmatprep.subr.bf16.mxu0 0
      %1089 = vmatpush1.bf16.msra.mxu0 0
      %1090 = vmatprep.subr.bf16.mxu0 0
      %1091 = vmatpush1.bf16.msra.mxu0 %v1074
      %1092 = vmatprep.subr.bf16.mxu0 0
      %1093 = vmatpush2.bf16.msra.mxu0 0
      %1094 = vmatprep.subr.bf16.mxu0 0
      %1095 = vmatpush2.bf16.msra.mxu0 0
      %1096 = vmatprep.subr.bf16.mxu0 0
      %1097 = vmatpush2.bf16.msra.mxu0 0
      %1098 = vmatprep.subr.bf16.mxu0 0
      %1099 = vmatpush2.bf16.msra.mxu0 0
      %1100 = vmatprep.subr.bf16.mxu0 0
      %1101 = vmatpush2.bf16.msra.mxu0 0
      %1102 = vmatprep.subr.bf16.mxu0 0
      %1103 = vmatpush2.bf16.msra.mxu0 0
      %1104 = vmatprep.subr.bf16.mxu0 0
      %1105 = vmatpush2.bf16.msra.mxu0 0
      %1106 = vmatprep.subr.bf16.mxu0 0
      %1107 = vmatpush2.bf16.msra.mxu0 0
      %1108 = vmatprep.mubr.bf16.mxu0 0
      %1109 = vmatmul.mubr.bf16.gmra.mxu0 %v736
      %v1110 = vpop.f32.mrf.mxu0
      %v1111 = vadd.f32 0.0, %v1110
      %v1112 = vpop.f32.mrf.mxu0
      %v1113 = vpop.f32.mrf.mxu0
      %v1114 = vadd.f32 0.0, %v1113
      %v1115 = vpop.f32.mrf.mxu0
      %1116 = vmatprep.mubr.bf16.mxu0 0
      %1117 = vmatmul.mubr.bf16.gmra.mxu0 %v739
      %v1118 = vpop.f32.mrf.mxu0
      %v1119 = vadd.f32 0.0, %v1118
      %v1120 = vpop.f32.mrf.mxu0
      %v1121 = vpop.f32.mrf.mxu0
      %v1122 = vadd.f32 0.0, %v1121
      %v1123 = vpop.f32.mrf.mxu0
      %1124 = vmatprep.mubr.bf16.mxu0 0
      %1125 = vmatmul.mubr.bf16.gmra.mxu0 %v742
      %v1126 = vpop.f32.mrf.mxu0
      %v1127 = vadd.f32 0.0, %v1126
      %v1128 = vpop.f32.mrf.mxu0
      %v1129 = vpop.f32.mrf.mxu0
      %v1130 = vadd.f32 0.0, %v1129
      %v1131 = vpop.f32.mrf.mxu0
      %1132 = vmatprep.mubr.bf16.mxu0 0
      %1133 = vmatmul.mubr.bf16.gmra.mxu0 %v745
      %v1134 = vpop.f32.mrf.mxu0
      %v1135 = vadd.f32 0.0, %v1134
      %v1136 = vpop.f32.mrf.mxu0
      %v1137 = vpop.f32.mrf.mxu0
      %v1138 = vadd.f32 0.0, %v1137
      %v1139 = vpop.f32.mrf.mxu0
      %1140 = vdwg.mxu0
      %s1141 = scalar_lea.vmem %s5, 8
      %v1142 = vld [vmem:[%s1141] sm:$0xf]
      %v1143 = vld [vmem:[%s1141 + $0x4] sm:$0xf]
      %v1146 = vunpack.c.l.b16 %v1142
      %v1147 = vunpack.c.l.b16 %v1143
      %v1148 = vpack.c.b16 %v1147, %v1146
      %1150 = vmatprep.subr.bf16.mxu0 0
      %1151 = vmatpush1.bf16.msra.mxu0 0
      %1152 = vmatprep.subr.bf16.mxu0 0
      %1153 = vmatpush1.bf16.msra.mxu0 0
      %1154 = vmatprep.subr.bf16.mxu0 0
      %1155 = vmatpush1.bf16.msra.mxu0 0
      %1156 = vmatprep.subr.bf16.mxu0 0
      %1157 = vmatpush1.bf16.msra.mxu0 0
      %1158 = vmatprep.subr.bf16.mxu0 0
      %1159 = vmatpush1.bf16.msra.mxu0 0
      %1160 = vmatprep.subr.bf16.mxu0 0
      %1161 = vmatpush1.bf16.msra.mxu0 0
      %1162 = vmatprep.subr.bf16.mxu0 0
      %1163 = vmatpush1.bf16.msra.mxu0 0
      %1164 = vmatprep.subr.bf16.mxu0 0
      %1165 = vmatpush1.bf16.msra.mxu0 %v1148
      %1166 = vmatprep.subr.bf16.mxu0 0
      %1167 = vmatpush2.bf16.msra.mxu0 0
      %1168 = vmatprep.subr.bf16.mxu0 0
      %1169 = vmatpush2.bf16.msra.mxu0 0
      %1170 = vmatprep.subr.bf16.mxu0 0
      %1171 = vmatpush2.bf16.msra.mxu0 0
      %1172 = vmatprep.subr.bf16.mxu0 0
      %1173 = vmatpush2.bf16.msra.mxu0 0
      %1174 = vmatprep.subr.bf16.mxu0 0
      %1175 = vmatpush2.bf16.msra.mxu0 0
      %1176 = vmatprep.subr.bf16.mxu0 0
      %1177 = vmatpush2.bf16.msra.mxu0 0
      %1178 = vmatprep.subr.bf16.mxu0 0
      %1179 = vmatpush2.bf16.msra.mxu0 0
      %1180 = vmatprep.subr.bf16.mxu0 0
      %1181 = vmatpush2.bf16.msra.mxu0 0
      %1182 = vmatprep.mubr.bf16.mxu0 0
      %1183 = vmatmul.mubr.bf16.gmra.mxu0 %v736
      %v1184 = vpop.f32.mrf.mxu0
      %v1185 = vadd.f32 0.0, %v1184
      %v1186 = vpop.f32.mrf.mxu0
      %v1187 = vpop.f32.mrf.mxu0
      %v1188 = vadd.f32 0.0, %v1187
      %v1189 = vpop.f32.mrf.mxu0
      %1190 = vmatprep.mubr.bf16.mxu0 0
      %1191 = vmatmul.mubr.bf16.gmra.mxu0 %v739
      %v1192 = vpop.f32.mrf.mxu0
      %v1193 = vadd.f32 0.0, %v1192
      %v1194 = vpop.f32.mrf.mxu0
      %v1195 = vpop.f32.mrf.mxu0
      %v1196 = vadd.f32 0.0, %v1195
      %v1197 = vpop.f32.mrf.mxu0
      %1198 = vmatprep.mubr.bf16.mxu0 0
      %1199 = vmatmul.mubr.bf16.gmra.mxu0 %v742
      %v1200 = vpop.f32.mrf.mxu0
      %v1201 = vadd.f32 0.0, %v1200
      %v1202 = vpop.f32.mrf.mxu0
      %v1203 = vpop.f32.mrf.mxu0
      %v1204 = vadd.f32 0.0, %v1203
      %v1205 = vpop.f32.mrf.mxu0
      %1206 = vmatprep.mubr.bf16.mxu0 0
      %1207 = vmatmul.mubr.bf16.gmra.mxu0 %v745
      %v1208 = vpop.f32.mrf.mxu0
      %v1209 = vadd.f32 0.0, %v1208
      %v1210 = vpop.f32.mrf.mxu0
      %v1211 = vpop.f32.mrf.mxu0
      %v1212 = vadd.f32 0.0, %v1211
      %v1213 = vpop.f32.mrf.mxu0
      %1214 = vdwg.mxu0
      %s1215 = scalar_lea.vmem %s6, 16
      %v1216 = vld [vmem:[%s1215] sm:$0xff]
      %v1217 = vld [vmem:[%s1215 + $0x8] sm:$0xff]
      %v1218 = vadd.f32 %v1037, %v1216
      %v1219 = vadd.f32 %v1040, %v1217
      %v1220 = vadd.f32 %v1045, %v1216
      %v1221 = vadd.f32 %v1048, %v1217
      %v1222 = vadd.f32 %v1053, %v1216
      %v1223 = vadd.f32 %v1056, %v1217
      %v1224 = vadd.f32 %v1061, %v1216
      %v1225 = vadd.f32 %v1064, %v1217
      %s1226 = scalar_lea.vmem %s7, 16
      %v1227 = vld [vmem:[%s1226] sm:$0xff]
      %v1228 = vld [vmem:[%s1226 + $0x8] sm:$0xff]
      %v1229 = vadd.f32 %v1111, %v1227
      %v1230 = vadd.f32 %v1114, %v1228
      %v1231 = vadd.f32 %v1119, %v1227
      %v1232 = vadd.f32 %v1122, %v1228
      %v1233 = vadd.f32 %v1127, %v1227
      %v1234 = vadd.f32 %v1130, %v1228
      %v1235 = vadd.f32 %v1135, %v1227
      %v1236 = vadd.f32 %v1138, %v1228
      %s1237 = scalar_lea.vmem %s8, 1
      %v1238 = vld [vmem:[%s1237] sm:$0x1]
      %v1240 = vlaneseq
      %v1241 = vshrl.u32 %v1240, 7
      %v1242 = vsub.s32 0, %v1241
      %v1243 = vrot.slane %v1238, %v1242
      %v1245 = vadd.f32 %v1185, %v1243
      %v1246 = vadd.f32 %v1188, %v1243
      %v1247 = vadd.f32 %v1193, %v1243
      %v1248 = vadd.f32 %v1196, %v1243
      %v1249 = vadd.f32 %v1201, %v1243
      %v1250 = vadd.f32 %v1204, %v1243
      %v1251 = vadd.f32 %v1209, %v1243
      %v1252 = vadd.f32 %v1212, %v1243
      %v1253 = vpack.c.bf16 %v961, %v960
      %v1254 = vpack.c.bf16 %v963, %v962
      %v1255 = vpack.c.bf16 %v965, %v964
      %v1256 = vpack.c.bf16 %v967, %v966
      %v1257 = vpack.c.bf16 %v1219, %v1218
      %v1258 = vpack.c.bf16 %v1221, %v1220
      %v1259 = vpack.c.bf16 %v1223, %v1222
      %v1260 = vpack.c.bf16 %v1225, %v1224
      %v1261 = vpack.c.bf16 %v971, %v970
      %v1262 = vpack.c.bf16 %v973, %v972
      %v1263 = vpack.c.bf16 %v975, %v974
      %v1264 = vpack.c.bf16 %v977, %v976
      %v1265 = vpack.c.bf16 %v1230, %v1229
      %v1266 = vpack.c.bf16 %v1232, %v1231
      %v1267 = vpack.c.bf16 %v1234, %v1233
      %v1268 = vpack.c.bf16 %v1236, %v1235
      %v1269 = vpack.c.bf16 %v986, %v985
      %v1270 = vpack.c.bf16 %v988, %v987
      %v1271 = vpack.c.bf16 %v990, %v989
      %v1272 = vpack.c.bf16 %v992, %v991
      %v1273 = vpack.c.bf16 %v1246, %v1245
      %v1274 = vpack.c.bf16 %v1248, %v1247
      %v1275 = vpack.c.bf16 %v1250, %v1249
      %v1276 = vpack.c.bf16 %v1252, %v1251
      %vm1277 = vcmask 64512
      %v1279 = vsel %vm1277, %v1253, 0
      %v1282 = vsel %vm1277, %v1261, 0
      %1284 = vmatprep.subr.bf16.mxu0 0
      %1285 = vmatpush1.bf16.xpose.msra.mxu0 0
      %1286 = vmatprep.subr.bf16.mxu0 0
      %1287 = vmatpush1.bf16.xpose.msra.mxu0 0
      %1288 = vmatprep.subr.bf16.mxu0 0
      %1289 = vmatpush1.bf16.xpose.msra.mxu0 0
      %1290 = vmatprep.subr.bf16.mxu0 0
      %1291 = vmatpush1.bf16.xpose.msra.mxu0 0
      %1292 = vmatprep.subr.bf16.mxu0 0
      %1293 = vmatpush1.bf16.xpose.msra.mxu0 0
      %1294 = vmatprep.subr.bf16.mxu0 0
      %1295 = vmatpush1.bf16.xpose.msra.mxu0 0
      %1296 = vmatprep.subr.bf16.mxu0 0
      %1297 = vmatpush1.bf16.xpose.msra.mxu0 0
      %1298 = vmatprep.subr.bf16.mxu0 0
      %1299 = vmatpush1.bf16.xpose.msra.mxu0 %v1282
      %1300 = vmatprep.subr.bf16.mxu0 0
      %1301 = vmatpush2.bf16.xpose.msra.mxu0 0
      %1302 = vmatprep.subr.bf16.mxu0 0
      %1303 = vmatpush2.bf16.xpose.msra.mxu0 0
      %1304 = vmatprep.subr.bf16.mxu0 0
      %1305 = vmatpush2.bf16.xpose.msra.mxu0 0
      %1306 = vmatprep.subr.bf16.mxu0 0
      %1307 = vmatpush2.bf16.xpose.msra.mxu0 0
      %1308 = vmatprep.subr.bf16.mxu0 0
      %1309 = vmatpush2.bf16.xpose.msra.mxu0 0
      %1310 = vmatprep.subr.bf16.mxu0 0
      %1311 = vmatpush2.bf16.xpose.msra.mxu0 0
      %1312 = vmatprep.subr.bf16.mxu0 0
      %1313 = vmatpush2.bf16.xpose.msra.mxu0 0
      %1314 = vmatprep.subr.bf16.mxu0 0
      %1315 = vmatpush2.bf16.xpose.msra.mxu0 0
      %1316 = vmatprep.mubr.bf16.mxu0 0
      %1317 = vmatmul.mubr.bf16.gmra.mxu0 %v1279
      %v1318 = vpop.f32.mrf.mxu0
      %v1319 = vadd.f32 0.0, %v1318
      %v1320 = vpop.f32.mrf.mxu0
      %v1321 = vpop.f32.mrf.mxu0
      %v1322 = vadd.f32 0.0, %v1321
      %v1323 = vpop.f32.mrf.mxu0
      %1324 = vdwg.mxu0
      %v1326 = vsel %vm1277, %v1254, 0
      %v1329 = vsel %vm1277, %v1262, 0
      %1331 = vmatprep.subr.bf16.mxu0 0
      %1332 = vmatpush1.bf16.xpose.msra.mxu0 0
      %1333 = vmatprep.subr.bf16.mxu0 0
      %1334 = vmatpush1.bf16.xpose.msra.mxu0 0
      %1335 = vmatprep.subr.bf16.mxu0 0
      %1336 = vmatpush1.bf16.xpose.msra.mxu0 0
      %1337 = vmatprep.subr.bf16.mxu0 0
      %1338 = vmatpush1.bf16.xpose.msra.mxu0 0
      %1339 = vmatprep.subr.bf16.mxu0 0
      %1340 = vmatpush1.bf16.xpose.msra.mxu0 0
      %1341 = vmatprep.subr.bf16.mxu0 0
      %1342 = vmatpush1.bf16.xpose.msra.mxu0 0
      %1343 = vmatprep.subr.bf16.mxu0 0
      %1344 = vmatpush1.bf16.xpose.msra.mxu0 0
      %1345 = vmatprep.subr.bf16.mxu0 0
      %1346 = vmatpush1.bf16.xpose.msra.mxu0 %v1329
      %1347 = vmatprep.subr.bf16.mxu0 0
      %1348 = vmatpush2.bf16.xpose.msra.mxu0 0
      %1349 = vmatprep.subr.bf16.mxu0 0
      %1350 = vmatpush2.bf16.xpose.msra.mxu0 0
      %1351 = vmatprep.subr.bf16.mxu0 0
      %1352 = vmatpush2.bf16.xpose.msra.mxu0 0
      %1353 = vmatprep.subr.bf16.mxu0 0
      %1354 = vmatpush2.bf16.xpose.msra.mxu0 0
      %1355 = vmatprep.subr.bf16.mxu0 0
      %1356 = vmatpush2.bf16.xpose.msra.mxu0 0
      %1357 = vmatprep.subr.bf16.mxu0 0
      %1358 = vmatpush2.bf16.xpose.msra.mxu0 0
      %1359 = vmatprep.subr.bf16.mxu0 0
      %1360 = vmatpush2.bf16.xpose.msra.mxu0 0
      %1361 = vmatprep.subr.bf16.mxu0 0
      %1362 = vmatpush2.bf16.xpose.msra.mxu0 0
      %1363 = vmatprep.mubr.bf16.mxu0 0
      %1364 = vmatmul.mubr.bf16.gmra.mxu0 %v1326
      %v1365 = vpop.f32.mrf.mxu0
      %v1366 = vadd.f32 0.0, %v1365
      %v1367 = vpop.f32.mrf.mxu0
      %v1368 = vpop.f32.mrf.mxu0
      %v1369 = vadd.f32 0.0, %v1368
      %v1370 = vpop.f32.mrf.mxu0
      %1371 = vdwg.mxu0
      %v1373 = vsel %vm1277, %v1255, 0
      %v1376 = vsel %vm1277, %v1263, 0
      %1378 = vmatprep.subr.bf16.mxu0 0
      %1379 = vmatpush1.bf16.xpose.msra.mxu0 0
      %1380 = vmatprep.subr.bf16.mxu0 0
      %1381 = vmatpush1.bf16.xpose.msra.mxu0 0
      %1382 = vmatprep.subr.bf16.mxu0 0
      %1383 = vmatpush1.bf16.xpose.msra.mxu0 0
      %1384 = vmatprep.subr.bf16.mxu0 0
      %1385 = vmatpush1.bf16.xpose.msra.mxu0 0
      %1386 = vmatprep.subr.bf16.mxu0 0
      %1387 = vmatpush1.bf16.xpose.msra.mxu0 0
      %1388 = vmatprep.subr.bf16.mxu0 0
      %1389 = vmatpush1.bf16.xpose.msra.mxu0 0
      %1390 = vmatprep.subr.bf16.mxu0 0
      %1391 = vmatpush1.bf16.xpose.msra.mxu0 0
      %1392 = vmatprep.subr.bf16.mxu0 0
      %1393 = vmatpush1.bf16.xpose.msra.mxu0 %v1376
      %1394 = vmatprep.subr.bf16.mxu0 0
      %1395 = vmatpush2.bf16.xpose.msra.mxu0 0
      %1396 = vmatprep.subr.bf16.mxu0 0
      %1397 = vmatpush2.bf16.xpose.msra.mxu0 0
      %1398 = vmatprep.subr.bf16.mxu0 0
      %1399 = vmatpush2.bf16.xpose.msra.mxu0 0
      %1400 = vmatprep.subr.bf16.mxu0 0
      %1401 = vmatpush2.bf16.xpose.msra.mxu0 0
      %1402 = vmatprep.subr.bf16.mxu0 0
      %1403 = vmatpush2.bf16.xpose.msra.mxu0 0
      %1404 = vmatprep.subr.bf16.mxu0 0
      %1405 = vmatpush2.bf16.xpose.msra.mxu0 0
      %1406 = vmatprep.subr.bf16.mxu0 0
      %1407 = vmatpush2.bf16.xpose.msra.mxu0 0
      %1408 = vmatprep.subr.bf16.mxu0 0
      %1409 = vmatpush2.bf16.xpose.msra.mxu0 0
      %1410 = vmatprep.mubr.bf16.mxu0 0
      %1411 = vmatmul.mubr.bf16.gmra.mxu0 %v1373
      %v1412 = vpop.f32.mrf.mxu0
      %v1413 = vadd.f32 0.0, %v1412
      %v1414 = vpop.f32.mrf.mxu0
      %v1415 = vpop.f32.mrf.mxu0
      %v1416 = vadd.f32 0.0, %v1415
      %v1417 = vpop.f32.mrf.mxu0
      %1418 = vdwg.mxu0
      %v1420 = vsel %vm1277, %v1256, 0
      %v1423 = vsel %vm1277, %v1264, 0
      %1425 = vmatprep.subr.bf16.mxu0 0
      %1426 = vmatpush1.bf16.xpose.msra.mxu0 0
      %1427 = vmatprep.subr.bf16.mxu0 0
      %1428 = vmatpush1.bf16.xpose.msra.mxu0 0
      %1429 = vmatprep.subr.bf16.mxu0 0
      %1430 = vmatpush1.bf16.xpose.msra.mxu0 0
      %1431 = vmatprep.subr.bf16.mxu0 0
      %1432 = vmatpush1.bf16.xpose.msra.mxu0 0
      %1433 = vmatprep.subr.bf16.mxu0 0
      %1434 = vmatpush1.bf16.xpose.msra.mxu0 0
      %1435 = vmatprep.subr.bf16.mxu0 0
      %1436 = vmatpush1.bf16.xpose.msra.mxu0 0
      %1437 = vmatprep.subr.bf16.mxu0 0
      %1438 = vmatpush1.bf16.xpose.msra.mxu0 0
      %1439 = vmatprep.subr.bf16.mxu0 0
      %1440 = vmatpush1.bf16.xpose.msra.mxu0 %v1423
      %1441 = vmatprep.subr.bf16.mxu0 0
      %1442 = vmatpush2.bf16.xpose.msra.mxu0 0
      %1443 = vmatprep.subr.bf16.mxu0 0
      %1444 = vmatpush2.bf16.xpose.msra.mxu0 0
      %1445 = vmatprep.subr.bf16.mxu0 0
      %1446 = vmatpush2.bf16.xpose.msra.mxu0 0
      %1447 = vmatprep.subr.bf16.mxu0 0
      %1448 = vmatpush2.bf16.xpose.msra.mxu0 0
      %1449 = vmatprep.subr.bf16.mxu0 0
      %1450 = vmatpush2.bf16.xpose.msra.mxu0 0
      %1451 = vmatprep.subr.bf16.mxu0 0
      %1452 = vmatpush2.bf16.xpose.msra.mxu0 0
      %1453 = vmatprep.subr.bf16.mxu0 0
      %1454 = vmatpush2.bf16.xpose.msra.mxu0 0
      %1455 = vmatprep.subr.bf16.mxu0 0
      %1456 = vmatpush2.bf16.xpose.msra.mxu0 0
      %1457 = vmatprep.mubr.bf16.mxu0 0
      %1458 = vmatmul.mubr.bf16.gmra.mxu0 %v1420
      %v1459 = vpop.f32.mrf.mxu0
      %v1460 = vadd.f32 0.0, %v1459
      %v1461 = vpop.f32.mrf.mxu0
      %v1462 = vpop.f32.mrf.mxu0
      %v1463 = vadd.f32 0.0, %v1462
      %v1464 = vpop.f32.mrf.mxu0
      %1465 = vdwg.mxu0
      %v1467 = vsel %vm1277, %v1257, 0
      %v1470 = vsel %vm1277, %v1265, 0
      %1472 = vmatprep.subr.bf16.mxu0 0
      %1473 = vmatpush1.bf16.xpose.msra.mxu0 0
      %1474 = vmatprep.subr.bf16.mxu0 0
      %1475 = vmatpush1.bf16.xpose.msra.mxu0 0
      %1476 = vmatprep.subr.bf16.mxu0 0
      %1477 = vmatpush1.bf16.xpose.msra.mxu0 0
      %1478 = vmatprep.subr.bf16.mxu0 0
      %1479 = vmatpush1.bf16.xpose.msra.mxu0 0
      %1480 = vmatprep.subr.bf16.mxu0 0
      %1481 = vmatpush1.bf16.xpose.msra.mxu0 0
      %1482 = vmatprep.subr.bf16.mxu0 0
      %1483 = vmatpush1.bf16.xpose.msra.mxu0 0
      %1484 = vmatprep.subr.bf16.mxu0 0
      %1485 = vmatpush1.bf16.xpose.msra.mxu0 0
      %1486 = vmatprep.subr.bf16.mxu0 0
      %1487 = vmatpush1.bf16.xpose.msra.mxu0 %v1470
      %1488 = vmatprep.subr.bf16.mxu0 0
      %1489 = vmatpush2.bf16.xpose.msra.mxu0 0
      %1490 = vmatprep.subr.bf16.mxu0 0
      %1491 = vmatpush2.bf16.xpose.msra.mxu0 0
      %1492 = vmatprep.subr.bf16.mxu0 0
      %1493 = vmatpush2.bf16.xpose.msra.mxu0 0
      %1494 = vmatprep.subr.bf16.mxu0 0
      %1495 = vmatpush2.bf16.xpose.msra.mxu0 0
      %1496 = vmatprep.subr.bf16.mxu0 0
      %1497 = vmatpush2.bf16.xpose.msra.mxu0 0
      %1498 = vmatprep.subr.bf16.mxu0 0
      %1499 = vmatpush2.bf16.xpose.msra.mxu0 0
      %1500 = vmatprep.subr.bf16.mxu0 0
      %1501 = vmatpush2.bf16.xpose.msra.mxu0 0
      %1502 = vmatprep.subr.bf16.mxu0 0
      %1503 = vmatpush2.bf16.xpose.msra.mxu0 0
      %1504 = vmatprep.mubr.bf16.mxu0 0
      %1505 = vmatmul.mubr.bf16.gmra.mxu0 %v1467
      %v1506 = vpop.f32.mrf.mxu0
      %v1507 = vadd.f32 0.0, %v1506
      %v1508 = vpop.f32.mrf.mxu0
      %v1509 = vpop.f32.mrf.mxu0
      %v1510 = vadd.f32 0.0, %v1509
      %v1511 = vpop.f32.mrf.mxu0
      %1512 = vdwg.mxu0
      %v1514 = vsel %vm1277, %v1258, 0
      %v1517 = vsel %vm1277, %v1266, 0
      %1519 = vmatprep.subr.bf16.mxu0 0
      %1520 = vmatpush1.bf16.xpose.msra.mxu0 0
      %1521 = vmatprep.subr.bf16.mxu0 0
      %1522 = vmatpush1.bf16.xpose.msra.mxu0 0
      %1523 = vmatprep.subr.bf16.mxu0 0
      %1524 = vmatpush1.bf16.xpose.msra.mxu0 0
      %1525 = vmatprep.subr.bf16.mxu0 0
      %1526 = vmatpush1.bf16.xpose.msra.mxu0 0
      %1527 = vmatprep.subr.bf16.mxu0 0
      %1528 = vmatpush1.bf16.xpose.msra.mxu0 0
      %1529 = vmatprep.subr.bf16.mxu0 0
      %1530 = vmatpush1.bf16.xpose.msra.mxu0 0
      %1531 = vmatprep.subr.bf16.mxu0 0
      %1532 = vmatpush1.bf16.xpose.msra.mxu0 0
      %1533 = vmatprep.subr.bf16.mxu0 0
      %1534 = vmatpush1.bf16.xpose.msra.mxu0 %v1517
      %1535 = vmatprep.subr.bf16.mxu0 0
      %1536 = vmatpush2.bf16.xpose.msra.mxu0 0
      %1537 = vmatprep.subr.bf16.mxu0 0
      %1538 = vmatpush2.bf16.xpose.msra.mxu0 0
      %1539 = vmatprep.subr.bf16.mxu0 0
      %1540 = vmatpush2.bf16.xpose.msra.mxu0 0
      %1541 = vmatprep.subr.bf16.mxu0 0
      %1542 = vmatpush2.bf16.xpose.msra.mxu0 0
      %1543 = vmatprep.subr.bf16.mxu0 0
      %1544 = vmatpush2.bf16.xpose.msra.mxu0 0
      %1545 = vmatprep.subr.bf16.mxu0 0
      %1546 = vmatpush2.bf16.xpose.msra.mxu0 0
      %1547 = vmatprep.subr.bf16.mxu0 0
      %1548 = vmatpush2.bf16.xpose.msra.mxu0 0
      %1549 = vmatprep.subr.bf16.mxu0 0
      %1550 = vmatpush2.bf16.xpose.msra.mxu0 0
      %1551 = vmatprep.mubr.bf16.mxu0 0
      %1552 = vmatmul.mubr.bf16.gmra.mxu0 %v1514
      %v1553 = vpop.f32.mrf.mxu0
      %v1554 = vadd.f32 0.0, %v1553
      %v1555 = vpop.f32.mrf.mxu0
      %v1556 = vpop.f32.mrf.mxu0
      %v1557 = vadd.f32 0.0, %v1556
      %v1558 = vpop.f32.mrf.mxu0
      %1559 = vdwg.mxu0
      %v1561 = vsel %vm1277, %v1259, 0
      %v1564 = vsel %vm1277, %v1267, 0
      %1566 = vmatprep.subr.bf16.mxu0 0
      %1567 = vmatpush1.bf16.xpose.msra.mxu0 0
      %1568 = vmatprep.subr.bf16.mxu0 0
      %1569 = vmatpush1.bf16.xpose.msra.mxu0 0
      %1570 = vmatprep.subr.bf16.mxu0 0
      %1571 = vmatpush1.bf16.xpose.msra.mxu0 0
      %1572 = vmatprep.subr.bf16.mxu0 0
      %1573 = vmatpush1.bf16.xpose.msra.mxu0 0
      %1574 = vmatprep.subr.bf16.mxu0 0
      %1575 = vmatpush1.bf16.xpose.msra.mxu0 0
      %1576 = vmatprep.subr.bf16.mxu0 0
      %1577 = vmatpush1.bf16.xpose.msra.mxu0 0
      %1578 = vmatprep.subr.bf16.mxu0 0
      %1579 = vmatpush1.bf16.xpose.msra.mxu0 0
      %1580 = vmatprep.subr.bf16.mxu0 0
      %1581 = vmatpush1.bf16.xpose.msra.mxu0 %v1564
      %1582 = vmatprep.subr.bf16.mxu0 0
      %1583 = vmatpush2.bf16.xpose.msra.mxu0 0
      %1584 = vmatprep.subr.bf16.mxu0 0
      %1585 = vmatpush2.bf16.xpose.msra.mxu0 0
      %1586 = vmatprep.subr.bf16.mxu0 0
      %1587 = vmatpush2.bf16.xpose.msra.mxu0 0
      %1588 = vmatprep.subr.bf16.mxu0 0
      %1589 = vmatpush2.bf16.xpose.msra.mxu0 0
      %1590 = vmatprep.subr.bf16.mxu0 0
      %1591 = vmatpush2.bf16.xpose.msra.mxu0 0
      %1592 = vmatprep.subr.bf16.mxu0 0
      %1593 = vmatpush2.bf16.xpose.msra.mxu0 0
      %1594 = vmatprep.subr.bf16.mxu0 0
      %1595 = vmatpush2.bf16.xpose.msra.mxu0 0
      %1596 = vmatprep.subr.bf16.mxu0 0
      %1597 = vmatpush2.bf16.xpose.msra.mxu0 0
      %1598 = vmatprep.mubr.bf16.mxu0 0
      %1599 = vmatmul.mubr.bf16.gmra.mxu0 %v1561
      %v1600 = vpop.f32.mrf.mxu0
      %v1601 = vadd.f32 0.0, %v1600
      %v1602 = vpop.f32.mrf.mxu0
      %v1603 = vpop.f32.mrf.mxu0
      %v1604 = vadd.f32 0.0, %v1603
      %v1605 = vpop.f32.mrf.mxu0
      %1606 = vdwg.mxu0
      %v1608 = vsel %vm1277, %v1260, 0
      %v1611 = vsel %vm1277, %v1268, 0
      %1613 = vmatprep.subr.bf16.mxu0 0
      %1614 = vmatpush1.bf16.xpose.msra.mxu0 0
      %1615 = vmatprep.subr.bf16.mxu0 0
      %1616 = vmatpush1.bf16.xpose.msra.mxu0 0
      %1617 = vmatprep.subr.bf16.mxu0 0
      %1618 = vmatpush1.bf16.xpose.msra.mxu0 0
      %1619 = vmatprep.subr.bf16.mxu0 0
      %1620 = vmatpush1.bf16.xpose.msra.mxu0 0
      %1621 = vmatprep.subr.bf16.mxu0 0
      %1622 = vmatpush1.bf16.xpose.msra.mxu0 0
      %1623 = vmatprep.subr.bf16.mxu0 0
      %1624 = vmatpush1.bf16.xpose.msra.mxu0 0
      %1625 = vmatprep.subr.bf16.mxu0 0
      %1626 = vmatpush1.bf16.xpose.msra.mxu0 0
      %1627 = vmatprep.subr.bf16.mxu0 0
      %1628 = vmatpush1.bf16.xpose.msra.mxu0 %v1611
      %1629 = vmatprep.subr.bf16.mxu0 0
      %1630 = vmatpush2.bf16.xpose.msra.mxu0 0
      %1631 = vmatprep.subr.bf16.mxu0 0
      %1632 = vmatpush2.bf16.xpose.msra.mxu0 0
      %1633 = vmatprep.subr.bf16.mxu0 0
      %1634 = vmatpush2.bf16.xpose.msra.mxu0 0
      %1635 = vmatprep.subr.bf16.mxu0 0
      %1636 = vmatpush2.bf16.xpose.msra.mxu0 0
      %1637 = vmatprep.subr.bf16.mxu0 0
      %1638 = vmatpush2.bf16.xpose.msra.mxu0 0
      %1639 = vmatprep.subr.bf16.mxu0 0
      %1640 = vmatpush2.bf16.xpose.msra.mxu0 0
      %1641 = vmatprep.subr.bf16.mxu0 0
      %1642 = vmatpush2.bf16.xpose.msra.mxu0 0
      %1643 = vmatprep.subr.bf16.mxu0 0
      %1644 = vmatpush2.bf16.xpose.msra.mxu0 0
      %1645 = vmatprep.mubr.bf16.mxu0 0
      %1646 = vmatmul.mubr.bf16.gmra.mxu0 %v1608
      %v1647 = vpop.f32.mrf.mxu0
      %v1648 = vadd.f32 0.0, %v1647
      %v1649 = vpop.f32.mrf.mxu0
      %v1650 = vpop.f32.mrf.mxu0
      %v1651 = vadd.f32 0.0, %v1650
      %v1652 = vpop.f32.mrf.mxu0
      %1653 = vdwg.mxu0
      %v1654 = vmul.f32 %v1319, 0.35355338
      %v1655 = vmul.f32 %v1322, 0.35355338
      %v1656 = vmul.f32 %v1366, 0.35355338
      %v1657 = vmul.f32 %v1369, 0.35355338
      %v1658 = vmul.f32 %v1413, 0.35355338
      %v1659 = vmul.f32 %v1416, 0.35355338
      %v1660 = vmul.f32 %v1460, 0.35355338
      %v1661 = vmul.f32 %v1463, 0.35355338
      %v1662 = vmul.f32 %v1507, 0.35355338
      %v1663 = vmul.f32 %v1510, 0.35355338
      %v1664 = vmul.f32 %v1554, 0.35355338
      %v1665 = vmul.f32 %v1557, 0.35355338
      %v1666 = vmul.f32 %v1601, 0.35355338
      %v1667 = vmul.f32 %v1604, 0.35355338
      %v1668 = vmul.f32 %v1648, 0.35355338
      %v1669 = vmul.f32 %v1651, 0.35355338
      %v1670 = vsel %vm477, %v1654, -inf
      %v1671 = vsel %vm477, %v1655, -inf
      %v1672 = vmax.f32 %v1670, %v1671
      %v1673 = vrot.slane %v1672, 4
      %v1674 = vmax.f32 %v1672, %v1673
      %v1675 = vrot.slane %v1674, 2
      %v1676 = vmax.f32 %v1674, %v1675
      %v1677 = vrot.slane %v1676, 1
      %v1678 = vmax.f32 %v1676, %v1677
      %v1679 = vsel %vm477, %v1656, -inf
      %v1680 = vsel %vm477, %v1657, -inf
      %v1681 = vmax.f32 %v1679, %v1680
      %v1682 = vrot.slane %v1681, 4
      %v1683 = vmax.f32 %v1681, %v1682
      %v1684 = vrot.slane %v1683, 2
      %v1685 = vmax.f32 %v1683, %v1684
      %v1686 = vrot.slane %v1685, 1
      %v1687 = vmax.f32 %v1685, %v1686
      %v1688 = vsel %vm477, %v1658, -inf
      %v1689 = vsel %vm477, %v1659, -inf
      %v1690 = vmax.f32 %v1688, %v1689
      %v1691 = vrot.slane %v1690, 4
      %v1692 = vmax.f32 %v1690, %v1691
      %v1693 = vrot.slane %v1692, 2
      %v1694 = vmax.f32 %v1692, %v1693
      %v1695 = vrot.slane %v1694, 1
      %v1696 = vmax.f32 %v1694, %v1695
      %v1697 = vsel %vm477, %v1660, -inf
      %v1698 = vsel %vm477, %v1661, -inf
      %v1699 = vmax.f32 %v1697, %v1698
      %v1700 = vrot.slane %v1699, 4
      %v1701 = vmax.f32 %v1699, %v1700
      %v1702 = vrot.slane %v1701, 2
      %v1703 = vmax.f32 %v1701, %v1702
      %v1704 = vrot.slane %v1703, 1
      %v1705 = vmax.f32 %v1703, %v1704
      %v1706 = vsel %vm477, %v1662, -inf
      %v1707 = vsel %vm477, %v1663, -inf
      %v1708 = vmax.f32 %v1706, %v1707
      %v1709 = vrot.slane %v1708, 4
      %v1710 = vmax.f32 %v1708, %v1709
      %v1711 = vrot.slane %v1710, 2
      %v1712 = vmax.f32 %v1710, %v1711
      %v1713 = vrot.slane %v1712, 1
      %v1714 = vmax.f32 %v1712, %v1713
      %v1715 = vsel %vm477, %v1664, -inf
      %v1716 = vsel %vm477, %v1665, -inf
      %v1717 = vmax.f32 %v1715, %v1716
      %v1718 = vrot.slane %v1717, 4
      %v1719 = vmax.f32 %v1717, %v1718
      %v1720 = vrot.slane %v1719, 2
      %v1721 = vmax.f32 %v1719, %v1720
      %v1722 = vrot.slane %v1721, 1
      %v1723 = vmax.f32 %v1721, %v1722
      %v1724 = vsel %vm477, %v1666, -inf
      %v1725 = vsel %vm477, %v1667, -inf
      %v1726 = vmax.f32 %v1724, %v1725
      %v1727 = vrot.slane %v1726, 4
      %v1728 = vmax.f32 %v1726, %v1727
      %v1729 = vrot.slane %v1728, 2
      %v1730 = vmax.f32 %v1728, %v1729
      %v1731 = vrot.slane %v1730, 1
      %v1732 = vmax.f32 %v1730, %v1731
      %v1733 = vsel %vm477, %v1668, -inf
      %v1734 = vsel %vm477, %v1669, -inf
      %v1735 = vmax.f32 %v1733, %v1734
      %v1736 = vrot.slane %v1735, 4
      %v1737 = vmax.f32 %v1735, %v1736
      %v1738 = vrot.slane %v1737, 2
      %v1739 = vmax.f32 %v1737, %v1738
      %v1740 = vrot.slane %v1739, 1
      %v1741 = vmax.f32 %v1739, %v1740
      %v1742 = vsub.f32 %v1654, %v1678
      %v1743 = vsub.f32 %v1655, %v1678
      %v1744 = vsub.f32 %v1656, %v1687
      %v1745 = vsub.f32 %v1657, %v1687
      %v1746 = vsub.f32 %v1658, %v1696
      %v1747 = vsub.f32 %v1659, %v1696
      %v1748 = vsub.f32 %v1660, %v1705
      %v1749 = vsub.f32 %v1661, %v1705
      %v1750 = vsub.f32 %v1662, %v1714
      %v1751 = vsub.f32 %v1663, %v1714
      %v1752 = vsub.f32 %v1664, %v1723
      %v1753 = vsub.f32 %v1665, %v1723
      %v1754 = vsub.f32 %v1666, %v1732
      %v1755 = vsub.f32 %v1667, %v1732
      %v1756 = vsub.f32 %v1668, %v1741
      %v1757 = vsub.f32 %v1669, %v1741
      %v1758 = vmul.f32 %v1742, 1.442695
      %v1759 = vpow.pop %v1758
      %v1760 = vmul.f32 %v1743, 1.442695
      %v1761 = vpow.pop %v1760
      %v1762 = vmul.f32 %v1744, 1.442695
      %v1763 = vpow.pop %v1762
      %v1764 = vmul.f32 %v1745, 1.442695
      %v1765 = vpow.pop %v1764
      %v1766 = vmul.f32 %v1746, 1.442695
      %v1767 = vpow.pop %v1766
      %v1768 = vmul.f32 %v1747, 1.442695
      %v1769 = vpow.pop %v1768
      %v1770 = vmul.f32 %v1748, 1.442695
      %v1771 = vpow.pop %v1770
      %v1772 = vmul.f32 %v1749, 1.442695
      %v1773 = vpow.pop %v1772
      %v1774 = vmul.f32 %v1750, 1.442695
      %v1775 = vpow.pop %v1774
      %v1776 = vmul.f32 %v1751, 1.442695
      %v1777 = vpow.pop %v1776
      %v1778 = vmul.f32 %v1752, 1.442695
      %v1779 = vpow.pop %v1778
      %v1780 = vmul.f32 %v1753, 1.442695
      %v1781 = vpow.pop %v1780
      %v1782 = vmul.f32 %v1754, 1.442695
      %v1783 = vpow.pop %v1782
      %v1784 = vmul.f32 %v1755, 1.442695
      %v1785 = vpow.pop %v1784
      %v1786 = vmul.f32 %v1756, 1.442695
      %v1787 = vpow.pop %v1786
      %v1788 = vmul.f32 %v1757, 1.442695
      %v1789 = vpow.pop %v1788
      %v1790 = vsel %vm477, %v1759, 0.0
      %v1791 = vsel %vm477, %v1761, 0.0
      %v1792 = vadd.f32 %v1790, %v1791
      %v1793 = vrot.slane %v1792, 4
      %v1794 = vadd.f32 %v1792, %v1793
      %v1795 = vrot.slane %v1794, 2
      %v1796 = vadd.f32 %v1794, %v1795
      %v1797 = vrot.slane %v1796, 1
      %v1798 = vadd.f32 %v1796, %v1797
      %v1799 = vsel %vm477, %v1763, 0.0
      %v1800 = vsel %vm477, %v1765, 0.0
      %v1801 = vadd.f32 %v1799, %v1800
      %v1802 = vrot.slane %v1801, 4
      %v1803 = vadd.f32 %v1801, %v1802
      %v1804 = vrot.slane %v1803, 2
      %v1805 = vadd.f32 %v1803, %v1804
      %v1806 = vrot.slane %v1805, 1
      %v1807 = vadd.f32 %v1805, %v1806
      %v1808 = vsel %vm477, %v1767, 0.0
      %v1809 = vsel %vm477, %v1769, 0.0
      %v1810 = vadd.f32 %v1808, %v1809
      %v1811 = vrot.slane %v1810, 4
      %v1812 = vadd.f32 %v1810, %v1811
      %v1813 = vrot.slane %v1812, 2
      %v1814 = vadd.f32 %v1812, %v1813
      %v1815 = vrot.slane %v1814, 1
      %v1816 = vadd.f32 %v1814, %v1815
      %v1817 = vsel %vm477, %v1771, 0.0
      %v1818 = vsel %vm477, %v1773, 0.0
      %v1819 = vadd.f32 %v1817, %v1818
      %v1820 = vrot.slane %v1819, 4
      %v1821 = vadd.f32 %v1819, %v1820
      %v1822 = vrot.slane %v1821, 2
      %v1823 = vadd.f32 %v1821, %v1822
      %v1824 = vrot.slane %v1823, 1
      %v1825 = vadd.f32 %v1823, %v1824
      %v1826 = vsel %vm477, %v1775, 0.0
      %v1827 = vsel %vm477, %v1777, 0.0
      %v1828 = vadd.f32 %v1826, %v1827
      %v1829 = vrot.slane %v1828, 4
      %v1830 = vadd.f32 %v1828, %v1829
      %v1831 = vrot.slane %v1830, 2
      %v1832 = vadd.f32 %v1830, %v1831
      %v1833 = vrot.slane %v1832, 1
      %v1834 = vadd.f32 %v1832, %v1833
      %v1835 = vsel %vm477, %v1779, 0.0
      %v1836 = vsel %vm477, %v1781, 0.0
      %v1837 = vadd.f32 %v1835, %v1836
      %v1838 = vrot.slane %v1837, 4
      %v1839 = vadd.f32 %v1837, %v1838
      %v1840 = vrot.slane %v1839, 2
      %v1841 = vadd.f32 %v1839, %v1840
      %v1842 = vrot.slane %v1841, 1
      %v1843 = vadd.f32 %v1841, %v1842
      %v1844 = vsel %vm477, %v1783, 0.0
      %v1845 = vsel %vm477, %v1785, 0.0
      %v1846 = vadd.f32 %v1844, %v1845
      %v1847 = vrot.slane %v1846, 4
      %v1848 = vadd.f32 %v1846, %v1847
      %v1849 = vrot.slane %v1848, 2
      %v1850 = vadd.f32 %v1848, %v1849
      %v1851 = vrot.slane %v1850, 1
      %v1852 = vadd.f32 %v1850, %v1851
      %v1853 = vsel %vm477, %v1787, 0.0
      %v1854 = vsel %vm477, %v1789, 0.0
      %v1855 = vadd.f32 %v1853, %v1854
      %v1856 = vrot.slane %v1855, 4
      %v1857 = vadd.f32 %v1855, %v1856
      %v1858 = vrot.slane %v1857, 2
      %v1859 = vadd.f32 %v1857, %v1858
      %v1860 = vrot.slane %v1859, 1
      %v1861 = vadd.f32 %v1859, %v1860
      %v1862 = vrcp.pop %v1798
      %v1863 = vrcp.pop %v1807
      %v1864 = vrcp.pop %v1816
      %v1865 = vrcp.pop %v1825
      %v1866 = vrcp.pop %v1834
      %v1867 = vrcp.pop %v1843
      %v1868 = vrcp.pop %v1852
      %v1869 = vrcp.pop %v1861
      %v1870 = vmul.f32 %v1798, %v1862
      %v1871 = vmul.f32 %v1807, %v1863
      %v1872 = vmul.f32 %v1816, %v1864
      %v1873 = vmul.f32 %v1825, %v1865
      %v1874 = vmul.f32 %v1834, %v1866
      %v1875 = vmul.f32 %v1843, %v1867
      %v1876 = vmul.f32 %v1852, %v1868
      %v1877 = vmul.f32 %v1861, %v1869
      %v1878 = vsub.f32 2.0, %v1870
      %v1879 = vsub.f32 2.0, %v1871
      %v1880 = vsub.f32 2.0, %v1872
      %v1881 = vsub.f32 2.0, %v1873
      %v1882 = vsub.f32 2.0, %v1874
      %v1883 = vsub.f32 2.0, %v1875
      %v1884 = vsub.f32 2.0, %v1876
      %v1885 = vsub.f32 2.0, %v1877
      %v1886 = vmul.f32 %v1862, %v1878
      %v1887 = vmul.f32 %v1863, %v1879
      %v1888 = vmul.f32 %v1864, %v1880
      %v1889 = vmul.f32 %v1865, %v1881
      %v1890 = vmul.f32 %v1866, %v1882
      %v1891 = vmul.f32 %v1867, %v1883
      %v1892 = vmul.f32 %v1868, %v1884
      %v1893 = vmul.f32 %v1869, %v1885
      %v1894 = vmul.f32 %v1759, %v1886
      %v1895 = vmul.f32 %v1761, %v1886
      %v1896 = vmul.f32 %v1763, %v1887
      %v1897 = vmul.f32 %v1765, %v1887
      %v1898 = vmul.f32 %v1767, %v1888
      %v1899 = vmul.f32 %v1769, %v1888
      %v1900 = vmul.f32 %v1771, %v1889
      %v1901 = vmul.f32 %v1773, %v1889
      %v1902 = vmul.f32 %v1775, %v1890
      %v1903 = vmul.f32 %v1777, %v1890
      %v1904 = vmul.f32 %v1779, %v1891
      %v1905 = vmul.f32 %v1781, %v1891
      %v1906 = vmul.f32 %v1783, %v1892
      %v1907 = vmul.f32 %v1785, %v1892
      %v1908 = vmul.f32 %v1787, %v1893
      %v1909 = vmul.f32 %v1789, %v1893
      %v1910 = vpack.c.bf16 %v1895, %v1894
      %v1911 = vpack.c.bf16 %v1897, %v1896
      %v1912 = vpack.c.bf16 %v1899, %v1898
      %v1913 = vpack.c.bf16 %v1901, %v1900
      %v1914 = vpack.c.bf16 %v1903, %v1902
      %v1915 = vpack.c.bf16 %v1905, %v1904
      %v1916 = vpack.c.bf16 %v1907, %v1906
      %v1917 = vpack.c.bf16 %v1909, %v1908
      %v1919 = vsel %vm477, %v1910, 0
      %1921 = vmatprep.subr.bf16.mxu0 0
      %1922 = vmatpush1.bf16.msra.mxu0 0
      %1923 = vmatprep.subr.bf16.mxu0 0
      %1924 = vmatpush1.bf16.msra.mxu0 0
      %1925 = vmatprep.subr.bf16.mxu0 0
      %1926 = vmatpush1.bf16.msra.mxu0 0
      %1927 = vmatprep.subr.bf16.mxu0 0
      %1928 = vmatpush1.bf16.msra.mxu0 0
      %1929 = vmatprep.subr.bf16.mxu0 0
      %1930 = vmatpush1.bf16.msra.mxu0 0
      %1931 = vmatprep.subr.bf16.mxu0 0
      %1932 = vmatpush1.bf16.msra.mxu0 0
      %1933 = vmatprep.subr.bf16.mxu0 0
      %1934 = vmatpush1.bf16.msra.mxu0 0
      %1935 = vmatprep.subr.bf16.mxu0 0
      %1936 = vmatpush1.bf16.msra.mxu0 %v1269
      %1937 = vmatprep.subr.bf16.mxu0 0
      %1938 = vmatpush2.bf16.msra.mxu0 0
      %1939 = vmatprep.subr.bf16.mxu0 0
      %1940 = vmatpush2.bf16.msra.mxu0 0
      %1941 = vmatprep.subr.bf16.mxu0 0
      %1942 = vmatpush2.bf16.msra.mxu0 0
      %1943 = vmatprep.subr.bf16.mxu0 0
      %1944 = vmatpush2.bf16.msra.mxu0 0
      %1945 = vmatprep.subr.bf16.mxu0 0
      %1946 = vmatpush2.bf16.msra.mxu0 0
      %1947 = vmatprep.subr.bf16.mxu0 0
      %1948 = vmatpush2.bf16.msra.mxu0 0
      %1949 = vmatprep.subr.bf16.mxu0 0
      %1950 = vmatpush2.bf16.msra.mxu0 0
      %1951 = vmatprep.subr.bf16.mxu0 0
      %1952 = vmatpush2.bf16.msra.mxu0 0
      %1953 = vmatprep.mubr.bf16.mxu0 0
      %1954 = vmatmul.mubr.bf16.gmra.mxu0 %v1919
      %v1955 = vpop.f32.mrf.mxu0
      %v1956 = vadd.f32 0.0, %v1955
      %v1957 = vpop.f32.mrf.mxu0
      %v1958 = vpop.f32.mrf.mxu0
      %v1959 = vadd.f32 0.0, %v1958
      %v1960 = vpop.f32.mrf.mxu0
      %1961 = vdwg.mxu0
      %v1963 = vsel %vm477, %v1911, 0
      %1965 = vmatprep.subr.bf16.mxu0 0
      %1966 = vmatpush1.bf16.msra.mxu0 0
      %1967 = vmatprep.subr.bf16.mxu0 0
      %1968 = vmatpush1.bf16.msra.mxu0 0
      %1969 = vmatprep.subr.bf16.mxu0 0
      %1970 = vmatpush1.bf16.msra.mxu0 0
      %1971 = vmatprep.subr.bf16.mxu0 0
      %1972 = vmatpush1.bf16.msra.mxu0 0
      %1973 = vmatprep.subr.bf16.mxu0 0
      %1974 = vmatpush1.bf16.msra.mxu0 0
      %1975 = vmatprep.subr.bf16.mxu0 0
      %1976 = vmatpush1.bf16.msra.mxu0 0
      %1977 = vmatprep.subr.bf16.mxu0 0
      %1978 = vmatpush1.bf16.msra.mxu0 0
      %1979 = vmatprep.subr.bf16.mxu0 0
      %1980 = vmatpush1.bf16.msra.mxu0 %v1270
      %1981 = vmatprep.subr.bf16.mxu0 0
      %1982 = vmatpush2.bf16.msra.mxu0 0
      %1983 = vmatprep.subr.bf16.mxu0 0
      %1984 = vmatpush2.bf16.msra.mxu0 0
      %1985 = vmatprep.subr.bf16.mxu0 0
      %1986 = vmatpush2.bf16.msra.mxu0 0
      %1987 = vmatprep.subr.bf16.mxu0 0
      %1988 = vmatpush2.bf16.msra.mxu0 0
      %1989 = vmatprep.subr.bf16.mxu0 0
      %1990 = vmatpush2.bf16.msra.mxu0 0
      %1991 = vmatprep.subr.bf16.mxu0 0
      %1992 = vmatpush2.bf16.msra.mxu0 0
      %1993 = vmatprep.subr.bf16.mxu0 0
      %1994 = vmatpush2.bf16.msra.mxu0 0
      %1995 = vmatprep.subr.bf16.mxu0 0
      %1996 = vmatpush2.bf16.msra.mxu0 0
      %1997 = vmatprep.mubr.bf16.mxu0 0
      %1998 = vmatmul.mubr.bf16.gmra.mxu0 %v1963
      %v1999 = vpop.f32.mrf.mxu0
      %v2000 = vadd.f32 0.0, %v1999
      %v2001 = vpop.f32.mrf.mxu0
      %v2002 = vpop.f32.mrf.mxu0
      %v2003 = vadd.f32 0.0, %v2002
      %v2004 = vpop.f32.mrf.mxu0
      %2005 = vdwg.mxu0
      %v2007 = vsel %vm477, %v1912, 0
      %2009 = vmatprep.subr.bf16.mxu0 0
      %2010 = vmatpush1.bf16.msra.mxu0 0
      %2011 = vmatprep.subr.bf16.mxu0 0
      %2012 = vmatpush1.bf16.msra.mxu0 0
      %2013 = vmatprep.subr.bf16.mxu0 0
      %2014 = vmatpush1.bf16.msra.mxu0 0
      %2015 = vmatprep.subr.bf16.mxu0 0
      %2016 = vmatpush1.bf16.msra.mxu0 0
      %2017 = vmatprep.subr.bf16.mxu0 0
      %2018 = vmatpush1.bf16.msra.mxu0 0
      %2019 = vmatprep.subr.bf16.mxu0 0
      %2020 = vmatpush1.bf16.msra.mxu0 0
      %2021 = vmatprep.subr.bf16.mxu0 0
      %2022 = vmatpush1.bf16.msra.mxu0 0
      %2023 = vmatprep.subr.bf16.mxu0 0
      %2024 = vmatpush1.bf16.msra.mxu0 %v1271
      %2025 = vmatprep.subr.bf16.mxu0 0
      %2026 = vmatpush2.bf16.msra.mxu0 0
      %2027 = vmatprep.subr.bf16.mxu0 0
      %2028 = vmatpush2.bf16.msra.mxu0 0
      %2029 = vmatprep.subr.bf16.mxu0 0
      %2030 = vmatpush2.bf16.msra.mxu0 0
      %2031 = vmatprep.subr.bf16.mxu0 0
      %2032 = vmatpush2.bf16.msra.mxu0 0
      %2033 = vmatprep.subr.bf16.mxu0 0
      %2034 = vmatpush2.bf16.msra.mxu0 0
      %2035 = vmatprep.subr.bf16.mxu0 0
      %2036 = vmatpush2.bf16.msra.mxu0 0
      %2037 = vmatprep.subr.bf16.mxu0 0
      %2038 = vmatpush2.bf16.msra.mxu0 0
      %2039 = vmatprep.subr.bf16.mxu0 0
      %2040 = vmatpush2.bf16.msra.mxu0 0
      %2041 = vmatprep.mubr.bf16.mxu0 0
      %2042 = vmatmul.mubr.bf16.gmra.mxu0 %v2007
      %v2043 = vpop.f32.mrf.mxu0
      %v2044 = vadd.f32 0.0, %v2043
      %v2045 = vpop.f32.mrf.mxu0
      %v2046 = vpop.f32.mrf.mxu0
      %v2047 = vadd.f32 0.0, %v2046
      %v2048 = vpop.f32.mrf.mxu0
      %2049 = vdwg.mxu0
      %v2051 = vsel %vm477, %v1913, 0
      %2053 = vmatprep.subr.bf16.mxu0 0
      %2054 = vmatpush1.bf16.msra.mxu0 0
      %2055 = vmatprep.subr.bf16.mxu0 0
      %2056 = vmatpush1.bf16.msra.mxu0 0
      %2057 = vmatprep.subr.bf16.mxu0 0
      %2058 = vmatpush1.bf16.msra.mxu0 0
      %2059 = vmatprep.subr.bf16.mxu0 0
      %2060 = vmatpush1.bf16.msra.mxu0 0
      %2061 = vmatprep.subr.bf16.mxu0 0
      %2062 = vmatpush1.bf16.msra.mxu0 0
      %2063 = vmatprep.subr.bf16.mxu0 0
      %2064 = vmatpush1.bf16.msra.mxu0 0
      %2065 = vmatprep.subr.bf16.mxu0 0
      %2066 = vmatpush1.bf16.msra.mxu0 0
      %2067 = vmatprep.subr.bf16.mxu0 0
      %2068 = vmatpush1.bf16.msra.mxu0 %v1272
      %2069 = vmatprep.subr.bf16.mxu0 0
      %2070 = vmatpush2.bf16.msra.mxu0 0
      %2071 = vmatprep.subr.bf16.mxu0 0
      %2072 = vmatpush2.bf16.msra.mxu0 0
      %2073 = vmatprep.subr.bf16.mxu0 0
      %2074 = vmatpush2.bf16.msra.mxu0 0
      %2075 = vmatprep.subr.bf16.mxu0 0
      %2076 = vmatpush2.bf16.msra.mxu0 0
      %2077 = vmatprep.subr.bf16.mxu0 0
      %2078 = vmatpush2.bf16.msra.mxu0 0
      %2079 = vmatprep.subr.bf16.mxu0 0
      %2080 = vmatpush2.bf16.msra.mxu0 0
      %2081 = vmatprep.subr.bf16.mxu0 0
      %2082 = vmatpush2.bf16.msra.mxu0 0
      %2083 = vmatprep.subr.bf16.mxu0 0
      %2084 = vmatpush2.bf16.msra.mxu0 0
      %2085 = vmatprep.mubr.bf16.mxu0 0
      %2086 = vmatmul.mubr.bf16.gmra.mxu0 %v2051
      %v2087 = vpop.f32.mrf.mxu0
      %v2088 = vadd.f32 0.0, %v2087
      %v2089 = vpop.f32.mrf.mxu0
      %v2090 = vpop.f32.mrf.mxu0
      %v2091 = vadd.f32 0.0, %v2090
      %v2092 = vpop.f32.mrf.mxu0
      %2093 = vdwg.mxu0
      %v2095 = vsel %vm477, %v1914, 0
      %2097 = vmatprep.subr.bf16.mxu0 0
      %2098 = vmatpush1.bf16.msra.mxu0 0
      %2099 = vmatprep.subr.bf16.mxu0 0
      %2100 = vmatpush1.bf16.msra.mxu0 0
      %2101 = vmatprep.subr.bf16.mxu0 0
      %2102 = vmatpush1.bf16.msra.mxu0 0
      %2103 = vmatprep.subr.bf16.mxu0 0
      %2104 = vmatpush1.bf16.msra.mxu0 0
      %2105 = vmatprep.subr.bf16.mxu0 0
      %2106 = vmatpush1.bf16.msra.mxu0 0
      %2107 = vmatprep.subr.bf16.mxu0 0
      %2108 = vmatpush1.bf16.msra.mxu0 0
      %2109 = vmatprep.subr.bf16.mxu0 0
      %2110 = vmatpush1.bf16.msra.mxu0 0
      %2111 = vmatprep.subr.bf16.mxu0 0
      %2112 = vmatpush1.bf16.msra.mxu0 %v1273
      %2113 = vmatprep.subr.bf16.mxu0 0
      %2114 = vmatpush2.bf16.msra.mxu0 0
      %2115 = vmatprep.subr.bf16.mxu0 0
      %2116 = vmatpush2.bf16.msra.mxu0 0
      %2117 = vmatprep.subr.bf16.mxu0 0
      %2118 = vmatpush2.bf16.msra.mxu0 0
      %2119 = vmatprep.subr.bf16.mxu0 0
      %2120 = vmatpush2.bf16.msra.mxu0 0
      %2121 = vmatprep.subr.bf16.mxu0 0
      %2122 = vmatpush2.bf16.msra.mxu0 0
      %2123 = vmatprep.subr.bf16.mxu0 0
      %2124 = vmatpush2.bf16.msra.mxu0 0
      %2125 = vmatprep.subr.bf16.mxu0 0
      %2126 = vmatpush2.bf16.msra.mxu0 0
      %2127 = vmatprep.subr.bf16.mxu0 0
      %2128 = vmatpush2.bf16.msra.mxu0 0
      %2129 = vmatprep.mubr.bf16.mxu0 0
      %2130 = vmatmul.mubr.bf16.gmra.mxu0 %v2095
      %v2131 = vpop.f32.mrf.mxu0
      %v2132 = vadd.f32 0.0, %v2131
      %v2133 = vpop.f32.mrf.mxu0
      %v2134 = vpop.f32.mrf.mxu0
      %v2135 = vadd.f32 0.0, %v2134
      %v2136 = vpop.f32.mrf.mxu0
      %2137 = vdwg.mxu0
      %v2139 = vsel %vm477, %v1915, 0
      %2141 = vmatprep.subr.bf16.mxu0 0
      %2142 = vmatpush1.bf16.msra.mxu0 0
      %2143 = vmatprep.subr.bf16.mxu0 0
      %2144 = vmatpush1.bf16.msra.mxu0 0
      %2145 = vmatprep.subr.bf16.mxu0 0
      %2146 = vmatpush1.bf16.msra.mxu0 0
      %2147 = vmatprep.subr.bf16.mxu0 0
      %2148 = vmatpush1.bf16.msra.mxu0 0
      %2149 = vmatprep.subr.bf16.mxu0 0
      %2150 = vmatpush1.bf16.msra.mxu0 0
      %2151 = vmatprep.subr.bf16.mxu0 0
      %2152 = vmatpush1.bf16.msra.mxu0 0
      %2153 = vmatprep.subr.bf16.mxu0 0
      %2154 = vmatpush1.bf16.msra.mxu0 0
      %2155 = vmatprep.subr.bf16.mxu0 0
      %2156 = vmatpush1.bf16.msra.mxu0 %v1274
      %2157 = vmatprep.subr.bf16.mxu0 0
      %2158 = vmatpush2.bf16.msra.mxu0 0
      %2159 = vmatprep.subr.bf16.mxu0 0
      %2160 = vmatpush2.bf16.msra.mxu0 0
      %2161 = vmatprep.subr.bf16.mxu0 0
      %2162 = vmatpush2.bf16.msra.mxu0 0
      %2163 = vmatprep.subr.bf16.mxu0 0
      %2164 = vmatpush2.bf16.msra.mxu0 0
      %2165 = vmatprep.subr.bf16.mxu0 0
      %2166 = vmatpush2.bf16.msra.mxu0 0
      %2167 = vmatprep.subr.bf16.mxu0 0
      %2168 = vmatpush2.bf16.msra.mxu0 0
      %2169 = vmatprep.subr.bf16.mxu0 0
      %2170 = vmatpush2.bf16.msra.mxu0 0
      %2171 = vmatprep.subr.bf16.mxu0 0
      %2172 = vmatpush2.bf16.msra.mxu0 0
      %2173 = vmatprep.mubr.bf16.mxu0 0
      %2174 = vmatmul.mubr.bf16.gmra.mxu0 %v2139
      %v2175 = vpop.f32.mrf.mxu0
      %v2176 = vadd.f32 0.0, %v2175
      %v2177 = vpop.f32.mrf.mxu0
      %v2178 = vpop.f32.mrf.mxu0
      %v2179 = vadd.f32 0.0, %v2178
      %v2180 = vpop.f32.mrf.mxu0
      %2181 = vdwg.mxu0
      %v2183 = vsel %vm477, %v1916, 0
      %2185 = vmatprep.subr.bf16.mxu0 0
      %2186 = vmatpush1.bf16.msra.mxu0 0
      %2187 = vmatprep.subr.bf16.mxu0 0
      %2188 = vmatpush1.bf16.msra.mxu0 0
      %2189 = vmatprep.subr.bf16.mxu0 0
      %2190 = vmatpush1.bf16.msra.mxu0 0
      %2191 = vmatprep.subr.bf16.mxu0 0
      %2192 = vmatpush1.bf16.msra.mxu0 0
      %2193 = vmatprep.subr.bf16.mxu0 0
      %2194 = vmatpush1.bf16.msra.mxu0 0
      %2195 = vmatprep.subr.bf16.mxu0 0
      %2196 = vmatpush1.bf16.msra.mxu0 0
      %2197 = vmatprep.subr.bf16.mxu0 0
      %2198 = vmatpush1.bf16.msra.mxu0 0
      %2199 = vmatprep.subr.bf16.mxu0 0
      %2200 = vmatpush1.bf16.msra.mxu0 %v1275
      %2201 = vmatprep.subr.bf16.mxu0 0
      %2202 = vmatpush2.bf16.msra.mxu0 0
      %2203 = vmatprep.subr.bf16.mxu0 0
      %2204 = vmatpush2.bf16.msra.mxu0 0
      %2205 = vmatprep.subr.bf16.mxu0 0
      %2206 = vmatpush2.bf16.msra.mxu0 0
      %2207 = vmatprep.subr.bf16.mxu0 0
      %2208 = vmatpush2.bf16.msra.mxu0 0
      %2209 = vmatprep.subr.bf16.mxu0 0
      %2210 = vmatpush2.bf16.msra.mxu0 0
      %2211 = vmatprep.subr.bf16.mxu0 0
      %2212 = vmatpush2.bf16.msra.mxu0 0
      %2213 = vmatprep.subr.bf16.mxu0 0
      %2214 = vmatpush2.bf16.msra.mxu0 0
      %2215 = vmatprep.subr.bf16.mxu0 0
      %2216 = vmatpush2.bf16.msra.mxu0 0
      %2217 = vmatprep.mubr.bf16.mxu0 0
      %2218 = vmatmul.mubr.bf16.gmra.mxu0 %v2183
      %v2219 = vpop.f32.mrf.mxu0
      %v2220 = vadd.f32 0.0, %v2219
      %v2221 = vpop.f32.mrf.mxu0
      %v2222 = vpop.f32.mrf.mxu0
      %v2223 = vadd.f32 0.0, %v2222
      %v2224 = vpop.f32.mrf.mxu0
      %2225 = vdwg.mxu0
      %v2227 = vsel %vm477, %v1917, 0
      %2229 = vmatprep.subr.bf16.mxu0 0
      %2230 = vmatpush1.bf16.msra.mxu0 0
      %2231 = vmatprep.subr.bf16.mxu0 0
      %2232 = vmatpush1.bf16.msra.mxu0 0
      %2233 = vmatprep.subr.bf16.mxu0 0
      %2234 = vmatpush1.bf16.msra.mxu0 0
      %2235 = vmatprep.subr.bf16.mxu0 0
      %2236 = vmatpush1.bf16.msra.mxu0 0
      %2237 = vmatprep.subr.bf16.mxu0 0
      %2238 = vmatpush1.bf16.msra.mxu0 0
      %2239 = vmatprep.subr.bf16.mxu0 0
      %2240 = vmatpush1.bf16.msra.mxu0 0
      %2241 = vmatprep.subr.bf16.mxu0 0
      %2242 = vmatpush1.bf16.msra.mxu0 0
      %2243 = vmatprep.subr.bf16.mxu0 0
      %2244 = vmatpush1.bf16.msra.mxu0 %v1276
      %2245 = vmatprep.subr.bf16.mxu0 0
      %2246 = vmatpush2.bf16.msra.mxu0 0
      %2247 = vmatprep.subr.bf16.mxu0 0
      %2248 = vmatpush2.bf16.msra.mxu0 0
      %2249 = vmatprep.subr.bf16.mxu0 0
      %2250 = vmatpush2.bf16.msra.mxu0 0
      %2251 = vmatprep.subr.bf16.mxu0 0
      %2252 = vmatpush2.bf16.msra.mxu0 0
      %2253 = vmatprep.subr.bf16.mxu0 0
      %2254 = vmatpush2.bf16.msra.mxu0 0
      %2255 = vmatprep.subr.bf16.mxu0 0
      %2256 = vmatpush2.bf16.msra.mxu0 0
      %2257 = vmatprep.subr.bf16.mxu0 0
      %2258 = vmatpush2.bf16.msra.mxu0 0
      %2259 = vmatprep.subr.bf16.mxu0 0
      %2260 = vmatpush2.bf16.msra.mxu0 0
      %2261 = vmatprep.mubr.bf16.mxu0 0
      %2262 = vmatmul.mubr.bf16.gmra.mxu0 %v2227
      %v2263 = vpop.f32.mrf.mxu0
      %v2264 = vadd.f32 0.0, %v2263
      %v2265 = vpop.f32.mrf.mxu0
      %v2266 = vpop.f32.mrf.mxu0
      %v2267 = vadd.f32 0.0, %v2266
      %v2268 = vpop.f32.mrf.mxu0
      %2269 = vdwg.mxu0
      %v2270 = vpack.c.bf16 %v1959, %v1956
      %v2271 = vpack.c.bf16 %v2003, %v2000
      %v2272 = vpack.c.bf16 %v2047, %v2044
      %v2273 = vpack.c.bf16 %v2091, %v2088
      %v2274 = vld [vmem:[%s9] sm:$0xf]
      %v2275 = vpack.c.bf16 %v2135, %v2132
      %v2276 = vpack.c.bf16 %v2179, %v2176
      %v2277 = vpack.c.bf16 %v2223, %v2220
      %v2278 = vpack.c.bf16 %v2267, %v2264
      %s2279 = scalar_lea.vmem %s9, 4
      %v2280 = vld [vmem:[%s2279] sm:$0xf]
      %v2282 = vsel %vm1277, %v2275, 0
      %v2285 = vsel %vm1277, %v2276, 0
      %v2288 = vsel %vm1277, %v2277, 0
      %v2291 = vsel %vm1277, %v2278, 0
      %vm2293 = vcmask 1043456
      %v2295 = vsel %vm2293, %v2280, 0
      %2297 = vmatprep.subr.bf16.mxu0 0
      %2298 = vmatpush1.bf16.msra.mxu0 0
      %2299 = vmatprep.subr.bf16.mxu0 0
      %2300 = vmatpush1.bf16.msra.mxu0 0
      %2301 = vmatprep.subr.bf16.mxu0 0
      %2302 = vmatpush1.bf16.msra.mxu0 0
      %2303 = vmatprep.subr.bf16.mxu0 0
      %2304 = vmatpush1.bf16.msra.mxu0 0
      %2305 = vmatprep.subr.bf16.mxu0 0
      %2306 = vmatpush1.bf16.msra.mxu0 0
      %2307 = vmatprep.subr.bf16.mxu0 0
      %2308 = vmatpush1.bf16.msra.mxu0 0
      %2309 = vmatprep.subr.bf16.mxu0 0
      %2310 = vmatpush1.bf16.msra.mxu0 0
      %2311 = vmatprep.subr.bf16.mxu0 0
      %2312 = vmatpush1.bf16.msra.mxu0 %v2295
      %2313 = vmatprep.subr.bf16.mxu0 0
      %2314 = vmatpush2.bf16.msra.mxu0 0
      %2315 = vmatprep.subr.bf16.mxu0 0
      %2316 = vmatpush2.bf16.msra.mxu0 0
      %2317 = vmatprep.subr.bf16.mxu0 0
      %2318 = vmatpush2.bf16.msra.mxu0 0
      %2319 = vmatprep.subr.bf16.mxu0 0
      %2320 = vmatpush2.bf16.msra.mxu0 0
      %2321 = vmatprep.subr.bf16.mxu0 0
      %2322 = vmatpush2.bf16.msra.mxu0 0
      %2323 = vmatprep.subr.bf16.mxu0 0
      %2324 = vmatpush2.bf16.msra.mxu0 0
      %2325 = vmatprep.subr.bf16.mxu0 0
      %2326 = vmatpush2.bf16.msra.mxu0 0
      %2327 = vmatprep.subr.bf16.mxu0 0
      %2328 = vmatpush2.bf16.msra.mxu0 0
      %2329 = vmatprep.mubr.bf16.mxu0 0
      %2330 = vmatmul.mubr.bf16.gmra.mxu0 %v2282
      %v2331 = vpop.f32.mrf.mxu0
      %v2332 = vadd.f32 0.0, %v2331
      %v2333 = vpop.f32.mrf.mxu0
      %v2334 = vpop.f32.mrf.mxu0
      %v2335 = vadd.f32 0.0, %v2334
      %v2336 = vpop.f32.mrf.mxu0
      %2337 = vmatprep.mubr.bf16.mxu0 0
      %2338 = vmatmul.mubr.bf16.gmra.mxu0 %v2285
      %v2339 = vpop.f32.mrf.mxu0
      %v2340 = vadd.f32 0.0, %v2339
      %v2341 = vpop.f32.mrf.mxu0
      %v2342 = vpop.f32.mrf.mxu0
      %v2343 = vadd.f32 0.0, %v2342
      %v2344 = vpop.f32.mrf.mxu0
      %2345 = vmatprep.mubr.bf16.mxu0 0
      %2346 = vmatmul.mubr.bf16.gmra.mxu0 %v2288
      %v2347 = vpop.f32.mrf.mxu0
      %v2348 = vadd.f32 0.0, %v2347
      %v2349 = vpop.f32.mrf.mxu0
      %v2350 = vpop.f32.mrf.mxu0
      %v2351 = vadd.f32 0.0, %v2350
      %v2352 = vpop.f32.mrf.mxu0
      %2353 = vmatprep.mubr.bf16.mxu0 0
      %2354 = vmatmul.mubr.bf16.gmra.mxu0 %v2291
      %v2355 = vpop.f32.mrf.mxu0
      %v2356 = vadd.f32 0.0, %v2355
      %v2357 = vpop.f32.mrf.mxu0
      %v2358 = vpop.f32.mrf.mxu0
      %v2359 = vadd.f32 0.0, %v2358
      %v2360 = vpop.f32.mrf.mxu0
      %2361 = vdwg.mxu0
      %v2363 = vsel %vm1277, %v2270, 0
      %v2366 = vsel %vm1277, %v2271, 0
      %v2369 = vsel %vm1277, %v2272, 0
      %v2372 = vsel %vm1277, %v2273, 0
      %v2375 = vsel %vm2293, %v2274, 0
      %2377 = vmatprep.subr.bf16.mxu0 0
      %2378 = vmatpush1.bf16.msra.mxu0 0
      %2379 = vmatprep.subr.bf16.mxu0 0
      %2380 = vmatpush1.bf16.msra.mxu0 0
      %2381 = vmatprep.subr.bf16.mxu0 0
      %2382 = vmatpush1.bf16.msra.mxu0 0
      %2383 = vmatprep.subr.bf16.mxu0 0
      %2384 = vmatpush1.bf16.msra.mxu0 0
      %2385 = vmatprep.subr.bf16.mxu0 0
      %2386 = vmatpush1.bf16.msra.mxu0 0
      %2387 = vmatprep.subr.bf16.mxu0 0
      %2388 = vmatpush1.bf16.msra.mxu0 0
      %2389 = vmatprep.subr.bf16.mxu0 0
      %2390 = vmatpush1.bf16.msra.mxu0 0
      %2391 = vmatprep.subr.bf16.mxu0 0
      %2392 = vmatpush1.bf16.msra.mxu0 %v2375
      %2393 = vmatprep.subr.bf16.mxu0 0
      %2394 = vmatpush2.bf16.msra.mxu0 0
      %2395 = vmatprep.subr.bf16.mxu0 0
      %2396 = vmatpush2.bf16.msra.mxu0 0
      %2397 = vmatprep.subr.bf16.mxu0 0
      %2398 = vmatpush2.bf16.msra.mxu0 0
      %2399 = vmatprep.subr.bf16.mxu0 0
      %2400 = vmatpush2.bf16.msra.mxu0 0
      %2401 = vmatprep.subr.bf16.mxu0 0
      %2402 = vmatpush2.bf16.msra.mxu0 0
      %2403 = vmatprep.subr.bf16.mxu0 0
      %2404 = vmatpush2.bf16.msra.mxu0 0
      %2405 = vmatprep.subr.bf16.mxu0 0
      %2406 = vmatpush2.bf16.msra.mxu0 0
      %2407 = vmatprep.subr.bf16.mxu0 0
      %2408 = vmatpush2.bf16.msra.mxu0 0
      %2409 = vmatprep.mubr.bf16.mxu0 0
      %2410 = vmatmul.mubr.bf16.gmra.mxu0 %v2363
      %v2411 = vpop.f32.mrf.mxu0
      %v2412 = vadd.f32 %v2332, %v2411
      %v2413 = vpop.f32.mrf.mxu0
      %v2414 = vpop.f32.mrf.mxu0
      %v2415 = vadd.f32 %v2335, %v2414
      %v2416 = vpop.f32.mrf.mxu0
      %2417 = vmatprep.mubr.bf16.mxu0 0
      %2418 = vmatmul.mubr.bf16.gmra.mxu0 %v2366
      %v2419 = vpop.f32.mrf.mxu0
      %v2420 = vadd.f32 %v2340, %v2419
      %v2421 = vpop.f32.mrf.mxu0
      %v2422 = vpop.f32.mrf.mxu0
      %v2423 = vadd.f32 %v2343, %v2422
      %v2424 = vpop.f32.mrf.mxu0
      %2425 = vmatprep.mubr.bf16.mxu0 0
      %2426 = vmatmul.mubr.bf16.gmra.mxu0 %v2369
      %v2427 = vpop.f32.mrf.mxu0
      %v2428 = vadd.f32 %v2348, %v2427
      %v2429 = vpop.f32.mrf.mxu0
      %v2430 = vpop.f32.mrf.mxu0
      %v2431 = vadd.f32 %v2351, %v2430
      %v2432 = vpop.f32.mrf.mxu0
      %2433 = vmatprep.mubr.bf16.mxu0 0
      %2434 = vmatmul.mubr.bf16.gmra.mxu0 %v2372
      %v2435 = vpop.f32.mrf.mxu0
      %v2436 = vadd.f32 %v2356, %v2435
      %v2437 = vpop.f32.mrf.mxu0
      %v2438 = vpop.f32.mrf.mxu0
      %v2439 = vadd.f32 %v2359, %v2438
      %v2440 = vpop.f32.mrf.mxu0
      %2441 = vdwg.mxu0
      %v2442 = vld [vmem:[%s10] sm:$0x1]
      %v2444 = vlaneseq
      %v2445 = vshrl.u32 %v2444, 7
      %v2446 = vsub.s32 0, %v2445
      %v2447 = vrot.slane %v2442, %v2446
      %v2449 = vadd.f32 %v2412, %v2447
      %v2450 = vadd.f32 %v2415, %v2447
      %v2451 = vadd.f32 %v2420, %v2447
      %v2452 = vadd.f32 %v2423, %v2447
      %v2453 = vadd.f32 %v2428, %v2447
      %v2454 = vadd.f32 %v2431, %v2447
      %v2455 = vadd.f32 %v2436, %v2447
      %v2456 = vadd.f32 %v2439, %v2447
      %v2457 = vand.u32 2147483647, %v2449
      %v2458 = vand.u32 2147483647, %v2450
      %v2459 = vand.u32 2147483647, %v2451
      %v2460 = vand.u32 2147483647, %v2452
      %v2461 = vand.u32 2147483647, %v2453
      %v2462 = vand.u32 2147483647, %v2454
      %v2463 = vand.u32 2147483647, %v2455
      %v2464 = vand.u32 2147483647, %v2456
      %v2465 = vsub.f32 0.0, %v2457
      %v2466 = vsub.f32 0.0, %v2458
      %v2467 = vsub.f32 0.0, %v2459
      %v2468 = vsub.f32 0.0, %v2460
      %v2469 = vsub.f32 0.0, %v2461
      %v2470 = vsub.f32 0.0, %v2462
      %v2471 = vsub.f32 0.0, %v2463
      %v2472 = vsub.f32 0.0, %v2464
      %v2473 = vmul.f32 %v2465, 1.442695
      %v2474 = vpow.pop %v2473
      %v2475 = vmul.f32 %v2466, 1.442695
      %v2476 = vpow.pop %v2475
      %v2477 = vmul.f32 %v2467, 1.442695
      %v2478 = vpow.pop %v2477
      %v2479 = vmul.f32 %v2468, 1.442695
      %v2480 = vpow.pop %v2479
      %v2481 = vmul.f32 %v2469, 1.442695
      %v2482 = vpow.pop %v2481
      %v2483 = vmul.f32 %v2470, 1.442695
      %v2484 = vpow.pop %v2483
      %v2485 = vmul.f32 %v2471, 1.442695
      %v2486 = vpow.pop %v2485
      %v2487 = vmul.f32 %v2472, 1.442695
      %v2488 = vpow.pop %v2487
      %v2489 = vmul.f32 %v2474, %v2474
      %v2490 = vmul.f32 %v2476, %v2476
      %v2491 = vmul.f32 %v2478, %v2478
      %v2492 = vmul.f32 %v2480, %v2480
      %v2493 = vmul.f32 %v2482, %v2482
      %v2494 = vmul.f32 %v2484, %v2484
      %v2495 = vmul.f32 %v2486, %v2486
      %v2496 = vmul.f32 %v2488, %v2488
      %vm2497 = vcmp.ge.f32.partialorder %v2449, 0.0
      %vm2498 = vcmp.ge.f32.partialorder %v2450, 0.0
      %vm2499 = vcmp.ge.f32.partialorder %v2451, 0.0
      %vm2500 = vcmp.ge.f32.partialorder %v2452, 0.0
      %vm2501 = vcmp.ge.f32.partialorder %v2453, 0.0
      %vm2502 = vcmp.ge.f32.partialorder %v2454, 0.0
      %vm2503 = vcmp.ge.f32.partialorder %v2455, 0.0
      %vm2504 = vcmp.ge.f32.partialorder %v2456, 0.0
      %v2505 = vmul.f32 %v2474, 2.0
      %v2506 = vmul.f32 %v2476, 2.0
      %v2507 = vmul.f32 %v2478, 2.0
      %v2508 = vmul.f32 %v2480, 2.0
      %v2509 = vmul.f32 %v2482, 2.0
      %v2510 = vmul.f32 %v2484, 2.0
      %v2511 = vmul.f32 %v2486, 2.0
      %v2512 = vmul.f32 %v2488, 2.0
      %v2513 = vadd.f32 %v2505, 1.0
      %v2514 = vadd.f32 %v2506, 1.0
      %v2515 = vadd.f32 %v2507, 1.0
      %v2516 = vadd.f32 %v2508, 1.0
      %v2517 = vadd.f32 %v2509, 1.0
      %v2518 = vadd.f32 %v2510, 1.0
      %v2519 = vadd.f32 %v2511, 1.0
      %v2520 = vadd.f32 %v2512, 1.0
      %v2521 = vadd.f32 %v2505, %v2489
      %v2522 = vadd.f32 %v2506, %v2490
      %v2523 = vadd.f32 %v2507, %v2491
      %v2524 = vadd.f32 %v2508, %v2492
      %v2525 = vadd.f32 %v2509, %v2493
      %v2526 = vadd.f32 %v2510, %v2494
      %v2527 = vadd.f32 %v2511, %v2495
      %v2528 = vadd.f32 %v2512, %v2496
      %v2529 = vsel %vm2497, %v2513, %v2521
      %v2530 = vsel %vm2498, %v2514, %v2522
      %v2531 = vsel %vm2499, %v2515, %v2523
      %v2532 = vsel %vm2500, %v2516, %v2524
      %v2533 = vsel %vm2501, %v2517, %v2525
      %v2534 = vsel %vm2502, %v2518, %v2526
      %v2535 = vsel %vm2503, %v2519, %v2527
      %v2536 = vsel %vm2504, %v2520, %v2528
      %v2537 = vmul.f32 %v2489, 2.0
      %v2538 = vmul.f32 %v2490, 2.0
      %v2539 = vmul.f32 %v2491, 2.0
      %v2540 = vmul.f32 %v2492, 2.0
      %v2541 = vmul.f32 %v2493, 2.0
      %v2542 = vmul.f32 %v2494, 2.0
      %v2543 = vmul.f32 %v2495, 2.0
      %v2544 = vmul.f32 %v2496, 2.0
      %v2545 = vadd.f32 %v2513, %v2537
      %v2546 = vadd.f32 %v2514, %v2538
      %v2547 = vadd.f32 %v2515, %v2539
      %v2548 = vadd.f32 %v2516, %v2540
      %v2549 = vadd.f32 %v2517, %v2541
      %v2550 = vadd.f32 %v2518, %v2542
      %v2551 = vadd.f32 %v2519, %v2543
      %v2552 = vadd.f32 %v2520, %v2544
      %v2553 = vadd.f32 %v2505, 2.0
      %v2554 = vadd.f32 %v2506, 2.0
      %v2555 = vadd.f32 %v2507, 2.0
      %v2556 = vadd.f32 %v2508, 2.0
      %v2557 = vadd.f32 %v2509, 2.0
      %v2558 = vadd.f32 %v2510, 2.0
      %v2559 = vadd.f32 %v2511, 2.0
      %v2560 = vadd.f32 %v2512, 2.0
      %v2561 = vadd.f32 %v2553, %v2489
      %v2562 = vadd.f32 %v2554, %v2490
      %v2563 = vadd.f32 %v2555, %v2491
      %v2564 = vadd.f32 %v2556, %v2492
      %v2565 = vadd.f32 %v2557, %v2493
      %v2566 = vadd.f32 %v2558, %v2494
      %v2567 = vadd.f32 %v2559, %v2495
      %v2568 = vadd.f32 %v2560, %v2496
      %v2569 = vsel %vm2497, %v2545, %v2561
      %v2570 = vsel %vm2498, %v2546, %v2562
      %v2571 = vsel %vm2499, %v2547, %v2563
      %v2572 = vsel %vm2500, %v2548, %v2564
      %v2573 = vsel %vm2501, %v2549, %v2565
      %v2574 = vsel %vm2502, %v2550, %v2566
      %v2575 = vsel %vm2503, %v2551, %v2567
      %v2576 = vsel %vm2504, %v2552, %v2568
      %v2577 = vrcp.pop %v2569
      %v2578 = vrcp.pop %v2570
      %v2579 = vrcp.pop %v2571
      %v2580 = vrcp.pop %v2572
      %v2581 = vrcp.pop %v2573
      %v2582 = vrcp.pop %v2574
      %v2583 = vrcp.pop %v2575
      %v2584 = vrcp.pop %v2576
      %v2585 = vmul.f32 %v2569, %v2577
      %v2586 = vmul.f32 %v2570, %v2578
      %v2587 = vmul.f32 %v2571, %v2579
      %v2588 = vmul.f32 %v2572, %v2580
      %v2589 = vmul.f32 %v2573, %v2581
      %v2590 = vmul.f32 %v2574, %v2582
      %v2591 = vmul.f32 %v2575, %v2583
      %v2592 = vmul.f32 %v2576, %v2584
      %v2593 = vsub.f32 2.0, %v2585
      %v2594 = vsub.f32 2.0, %v2586
      %v2595 = vsub.f32 2.0, %v2587
      %v2596 = vsub.f32 2.0, %v2588
      %v2597 = vsub.f32 2.0, %v2589
      %v2598 = vsub.f32 2.0, %v2590
      %v2599 = vsub.f32 2.0, %v2591
      %v2600 = vsub.f32 2.0, %v2592
      %v2601 = vmul.f32 %v2577, %v2593
      %v2602 = vmul.f32 %v2578, %v2594
      %v2603 = vmul.f32 %v2579, %v2595
      %v2604 = vmul.f32 %v2580, %v2596
      %v2605 = vmul.f32 %v2581, %v2597
      %v2606 = vmul.f32 %v2582, %v2598
      %v2607 = vmul.f32 %v2583, %v2599
      %v2608 = vmul.f32 %v2584, %v2600
      %v2609 = vmul.f32 %v2449, %v2529
      %v2610 = vmul.f32 %v2450, %v2530
      %v2611 = vmul.f32 %v2451, %v2531
      %v2612 = vmul.f32 %v2452, %v2532
      %v2613 = vmul.f32 %v2453, %v2533
      %v2614 = vmul.f32 %v2454, %v2534
      %v2615 = vmul.f32 %v2455, %v2535
      %v2616 = vmul.f32 %v2456, %v2536
      %v2617 = vmul.f32 %v2609, %v2601
      %v2618 = vmul.f32 %v2610, %v2602
      %v2619 = vmul.f32 %v2611, %v2603
      %v2620 = vmul.f32 %v2612, %v2604
      %v2621 = vmul.f32 %v2613, %v2605
      %v2622 = vmul.f32 %v2614, %v2606
      %v2623 = vmul.f32 %v2615, %v2607
      %v2624 = vmul.f32 %v2616, %v2608
      %v2625 = vpack.c.bf16 %v2618, %v2617
      %v2626 = vpack.c.bf16 %v2620, %v2619
      %v2627 = vpack.c.bf16 %v2622, %v2621
      %v2628 = vpack.c.bf16 %v2624, %v2623
      %v2629 = vld [vmem:[%s11] sm:$0xf]
      %v2630 = vld [vmem:[%s11 + $0x4] sm:$0xf]
      %v2631 = vld [vmem:[%s12] sm:$0x1]
      %v2633 = vlaneseq
      %v2634 = vshrl.u32 %v2633, 7
      %v2635 = vsub.s32 0, %v2634
      %v2636 = vrot.slane %v2631, %v2635
      %v2640 = vunpack.c.l.b16 %v2629
      %v2641 = vunpack.c.l.b16 %v2630
      %v2642 = vpack.c.b16 %v2641, %v2640
      %v2645 = vsel %vm477, %v2625, 0
      %v2648 = vsel %vm477, %v2626, 0
      %v2651 = vsel %vm477, %v2627, 0
      %v2654 = vsel %vm477, %v2628, 0
      %2656 = vmatprep.subr.bf16.mxu0 0
      %2657 = vmatpush1.bf16.msra.mxu0 0
      %2658 = vmatprep.subr.bf16.mxu0 0
      %2659 = vmatpush1.bf16.msra.mxu0 0
      %2660 = vmatprep.subr.bf16.mxu0 0
      %2661 = vmatpush1.bf16.msra.mxu0 0
      %2662 = vmatprep.subr.bf16.mxu0 0
      %2663 = vmatpush1.bf16.msra.mxu0 0
      %2664 = vmatprep.subr.bf16.mxu0 0
      %2665 = vmatpush1.bf16.msra.mxu0 0
      %2666 = vmatprep.subr.bf16.mxu0 0
      %2667 = vmatpush1.bf16.msra.mxu0 0
      %2668 = vmatprep.subr.bf16.mxu0 0
      %2669 = vmatpush1.bf16.msra.mxu0 0
      %2670 = vmatprep.subr.bf16.mxu0 0
      %2671 = vmatpush1.bf16.msra.mxu0 %v2642
      %2672 = vmatprep.subr.bf16.mxu0 0
      %2673 = vmatpush2.bf16.msra.mxu0 0
      %2674 = vmatprep.subr.bf16.mxu0 0
      %2675 = vmatpush2.bf16.msra.mxu0 0
      %2676 = vmatprep.subr.bf16.mxu0 0
      %2677 = vmatpush2.bf16.msra.mxu0 0
      %2678 = vmatprep.subr.bf16.mxu0 0
      %2679 = vmatpush2.bf16.msra.mxu0 0
      %2680 = vmatprep.subr.bf16.mxu0 0
      %2681 = vmatpush2.bf16.msra.mxu0 0
      %2682 = vmatprep.subr.bf16.mxu0 0
      %2683 = vmatpush2.bf16.msra.mxu0 0
      %2684 = vmatprep.subr.bf16.mxu0 0
      %2685 = vmatpush2.bf16.msra.mxu0 0
      %2686 = vmatprep.subr.bf16.mxu0 0
      %2687 = vmatpush2.bf16.msra.mxu0 0
      %2688 = vmatprep.mubr.bf16.mxu0 0
      %2689 = vmatmul.mubr.bf16.gmra.mxu0 %v2645
      %v2690 = vpop.f32.mrf.mxu0
      %v2691 = vadd.f32 %v2636, %v2690
      %v2692 = vpop.f32.mrf.mxu0
      %v2693 = vpop.f32.mrf.mxu0
      %v2694 = vadd.f32 %v2636, %v2693
      %v2695 = vpop.f32.mrf.mxu0
      %2696 = vmatprep.mubr.bf16.mxu0 0
      %2697 = vmatmul.mubr.bf16.gmra.mxu0 %v2648
      %v2698 = vpop.f32.mrf.mxu0
      %v2699 = vadd.f32 %v2636, %v2698
      %v2700 = vpop.f32.mrf.mxu0
      %v2701 = vpop.f32.mrf.mxu0
      %v2702 = vadd.f32 %v2636, %v2701
      %v2703 = vpop.f32.mrf.mxu0
      %2704 = vmatprep.mubr.bf16.mxu0 0
      %2705 = vmatmul.mubr.bf16.gmra.mxu0 %v2651
      %v2706 = vpop.f32.mrf.mxu0
      %v2707 = vadd.f32 %v2636, %v2706
      %v2708 = vpop.f32.mrf.mxu0
      %v2709 = vpop.f32.mrf.mxu0
      %v2710 = vadd.f32 %v2636, %v2709
      %v2711 = vpop.f32.mrf.mxu0
      %2712 = vmatprep.mubr.bf16.mxu0 0
      %2713 = vmatmul.mubr.bf16.gmra.mxu0 %v2654
      %v2714 = vpop.f32.mrf.mxu0
      %v2715 = vadd.f32 %v2636, %v2714
      %v2716 = vpop.f32.mrf.mxu0
      %v2717 = vpop.f32.mrf.mxu0
      %v2718 = vadd.f32 %v2636, %v2717
      %v2719 = vpop.f32.mrf.mxu0
      %2720 = vdwg.mxu0
      %v2721 = vadd.f32 %v2691, %v715
      %v2722 = vadd.f32 %v2694, %v716
      %v2723 = vadd.f32 %v2699, %v717
      %v2724 = vadd.f32 %v2702, %v718
      %v2725 = vadd.f32 %v2707, %v719
      %v2726 = vadd.f32 %v2710, %v720
      %v2727 = vadd.f32 %v2715, %v721
      %v2728 = vadd.f32 %v2718, %v722
      %2729 = vst.msk [vmem:[%s447] sm:$0xff] %vm477, %v2721
      %2730 = vst.msk [vmem:[%s447 + $0x8] sm:$0xff] %vm477, %v2722
      %2731 = vst.msk [vmem:[%s447 + $0x10] sm:$0xff] %vm477, %v2723
      %2732 = vst.msk [vmem:[%s447 + $0x18] sm:$0xff] %vm477, %v2724
      %2733 = vst.msk [vmem:[%s447 + $0x20] sm:$0xff] %vm477, %v2725
      %2734 = vst.msk [vmem:[%s447 + $0x28] sm:$0xff] %vm477, %v2726
      %2735 = vst.msk [vmem:[%s447 + $0x30] sm:$0xff] %vm477, %v2727
      %2736 = vst.msk [vmem:[%s447 + $0x38] sm:$0xff] %vm477, %v2728
      %s2737 = smul.u32 4, %s24
      %p2738 = scmp.lt.s32.totalorder %s2737, 7
      %s2739 = scalar_select %p2738, %s2737, 7
      %s2740 = smul.addr %s2739, 2
      %s2741 = smul.addr %s2740, 8
      %s2742 = scalar_lea.vmem %s13, %s2741
      // Predicated region
      $region73: #{_lambda_.9} parent=71 // pred_check
        %p2743 = pneg %p320
      $region74: #{_lambda_.9} parent=71 // pred_check_branch
        %2745 = sbr.rel (%p2743) target = $region76
      $region75: #{_lambda_.9} parent=71 // pred_region
        %s2746 = smul.u32 4, %s24
      $region76: #{_lambda_.9} parent=71 // pred_fallthru
        _
    $region72: #{_lambda_.9} parent=5 // pred_fallthru
      _
    %p2747 = scmp.le.s32.totalorder 2, %s19
    // Predicated region
    $region77: #{_lambda_.9} parent=5 // pred_check
      %p2748 = pneg %p2747
    $region78: #{_lambda_.9} parent=5 // pred_check_branch
      %2750 = sbr.rel (%p2748) target = $region80
    $region79: #{_lambda_.9} parent=5 // pred_region
      %s2751 = ssub.s32 %s19, 2
      // Predicated region
      $region81: #{_lambda_.9} parent=79 // pred_check
        %p2752 = pneg %p326
      $region82: #{_lambda_.9} parent=79 // pred_check_branch
        %2754 = sbr.rel (%p2752) target = $region84
      $region83: #{_lambda_.9} parent=79 // pred_region
        %s2755 = smul.u32 4, %s25
        %p2756 = scmp.lt.s32.totalorder %s2755, 7
        %s2757 = scalar_select %p2756, %s2755, 7
        %s2758 = smul.addr %s2757, 2
        %s2759 = smul.addr %s2758, 8
        %s2760 = scalar_lea.vmem %s13, %s2759
      $region84: #{_lambda_.9} parent=79 // pred_fallthru
        _
    $region80: #{_lambda_.9} parent=5 // pred_fallthru
      _
  $region6: #{_lambda_.9} parent=0 // loop_footer
    %s23 = sadd.s32 1, %s19
  $region7: #{_lambda_.9} parent=0 // loop_footer_branch
    %18 = sbr.rel target = $region3
  $region8: #{_lambda_.9} parent=0 // loop_exit
    _

// kernel: _lambda_.11
$region0: #{_lambda_.11}
  #allocation0 [shape = 'u32[]', space=smem, size = 0x4, offset = 0x4, fixed_abs, tag = 'smem constant byte address 0x4 - core index']
  #allocation1 [shape = 'u32[144,128]{1,0:T(1,128)}', space=vmem, size = 0x12000, scoped, tag = 'internal scratch']
  %s0 = inlined_call_operand.vmem [shape: f32[8,4,32], index: 0, kind: input, shape index: {}]
  %s1 = inlined_call_operand.vmem [shape: bf16[32,32], index: 1, kind: input, shape index: {}]
  %s2 = inlined_call_operand.vmem [shape: f32[1,32], index: 2, kind: input, shape index: {}]
  %s3 = inlined_call_operand.vmem [shape: bf16[2,32,16], index: 3, kind: input, shape index: {}]
  %s4 = inlined_call_operand.vmem [shape: bf16[2,32,16], index: 4, kind: input, shape index: {}]
  %s5 = inlined_call_operand.vmem [shape: bf16[2,32,16], index: 5, kind: input, shape index: {}]
  %s6 = inlined_call_operand.vmem [shape: f32[2,4,16], index: 6, kind: input, shape index: {}]
  %s7 = inlined_call_operand.vmem [shape: f32[2,4,16], index: 7, kind: input, shape index: {}]
  %s8 = inlined_call_operand.vmem [shape: f32[2,1,16], index: 8, kind: input, shape index: {}]
  %s9 = inlined_call_operand.vmem [shape: bf16[2,16,32], index: 9, kind: input, shape index: {}]
  %s10 = inlined_call_operand.vmem [shape: f32[1,32], index: 10, kind: input, shape index: {}]
  %s11 = inlined_call_operand.vmem [shape: bf16[32,32], index: 11, kind: input, shape index: {}]
  %s12 = inlined_call_operand.vmem [shape: f32[1,32], index: 12, kind: input, shape index: {}]
  %s13 = inlined_call_operand.vmem [shape: f32[8,4,32], index: 13, kind: output, shape index: {}]
  %s14 = sld [smem:[#allocation0]]
  $region85: #{_lambda_.11} parent=0
    _
  %s16 = ssub.s32 1, %s14
  %s17 = scalar_select 0, %s16, %s14
  loop: start=0, step=1, limit=4
  $region2: #{_lambda_.11} parent=0 // loop_pre_header
    _
  $region3: #{_lambda_.11} parent=0 // loop_header
    %s19 = sphi 0, %s23
    %p20 = scmp.ge.s32.totalorder %s19, 4
    %s29 = sphi 0, %s31
    %s32 = sphi 0, %s29
    %s33 = sphi 0, %s32
    %s49 = sphi 0, %s33
    %s53 = sphi 0, %s53
    %s55 = sphi 0, %s53
    %s56 = sphi 0, %s55
    %s70 = sphi 0, %s56
    %s74 = sphi 0, %s74
    %s76 = sphi 0, %s74
    %s77 = sphi 0, %s76
    %s91 = sphi 0, %s77
    %s95 = sphi 0, %s95
    %s97 = sphi 0, %s95
    %s98 = sphi 0, %s97
    %s112 = sphi 0, %s98
    %s116 = sphi 0, %s116
    %s118 = sphi 0, %s116
    %s119 = sphi 0, %s118
    %s133 = sphi 0, %s119
    %s137 = sphi 0, %s137
    %s139 = sphi 0, %s137
    %s140 = sphi 0, %s139
    %s154 = sphi 0, %s140
    %s158 = sphi 0, %s158
    %s160 = sphi 0, %s158
    %s161 = sphi 0, %s160
    %s175 = sphi 0, %s161
    %s179 = sphi 0, %s179
    %s181 = sphi 0, %s179
    %s182 = sphi 0, %s181
    %s196 = sphi 0, %s182
    %s200 = sphi 0, %s200
    %s202 = sphi 0, %s200
    %s203 = sphi 0, %s202
    %s217 = sphi 0, %s203
    %s221 = sphi 0, %s221
    %s223 = sphi 0, %s221
    %s224 = sphi 0, %s223
    %s238 = sphi 0, %s224
    %s242 = sphi 0, %s242
    %s244 = sphi 0, %s242
    %s245 = sphi 0, %s244
    %s259 = sphi 0, %s245
    %s263 = sphi 0, %s263
    %s265 = sphi 0, %s263
    %s266 = sphi 0, %s265
    %s280 = sphi 0, %s266
    %s284 = sphi 0, %s284
    %s286 = sphi 0, %s284
    %s287 = sphi 0, %s286
    %s301 = sphi 0, %s287
    %s307 = sphi 0, %s309
    %s310 = sphi 0, %s307
    %s311 = sphi 0, %s310
    %s327 = sphi 0, %s311
  $region4: #{_lambda_.11} parent=0 // loop_header_branch
    %22 = sbr.rel (%p20) target = $region8
  $region5: #{_lambda_.11} parent=0 // loop_body
    %s24 = ssub.s32 %s19, 1
    %s25 = ssub.s32 %s19, 2
    %s26 = sadd.s32 %s19, 1
    %s27 = ssub.s32 %s19, %s26
    %p28 = scmp.eq.s32.totalorder %s27, 0
    %s30 = sadd.s32 %s29, 1
    %s31 = scalar_select %p28, %s29, %s30
    %p34 = pneg %p28
    %p35 = scmp.eq.s32.totalorder %s19, 1
    %p36 = por %p34, %p35
    %p37 = scmp.ne.s32.totalorder %s29, %s32
    %p38 = scmp.eq.s32.totalorder %s19, 0
    %p39 = por %p37, %p38
    %p40 = scmp.ne.s32.totalorder %s29, %s32
    %p41 = scmp.eq.s32.totalorder %s24, 1
    %p42 = por %p40, %p41
    %p43 = scmp.ne.s32.totalorder %s32, %s33
    %p44 = scmp.eq.s32.totalorder %s24, 0
    %p45 = por %p43, %p44
    %p46 = scmp.ne.s32.totalorder %s32, %s33
    %p47 = scmp.eq.s32.totalorder %s25, 1
    %p48 = por %p46, %p47
    %p50 = scmp.ne.s32.totalorder %s33, %s49
    %p51 = scmp.eq.s32.totalorder %s25, 0
    %p52 = por %p50, %p51
    %s54 = sadd.s32 %s53, 1
    %p57 = scmp.eq.s32.totalorder %s19, 1
    %p58 = scmp.ne.s32.totalorder %s53, %s55
    %p59 = scmp.eq.s32.totalorder %s19, 0
    %p60 = por %p58, %p59
    %p61 = scmp.ne.s32.totalorder %s53, %s55
    %p62 = scmp.eq.s32.totalorder %s24, 1
    %p63 = por %p61, %p62
    %p64 = scmp.ne.s32.totalorder %s55, %s56
    %p65 = scmp.eq.s32.totalorder %s24, 0
    %p66 = por %p64, %p65
    %p67 = scmp.ne.s32.totalorder %s55, %s56
    %p68 = scmp.eq.s32.totalorder %s25, 1
    %p69 = por %p67, %p68
    %p71 = scmp.ne.s32.totalorder %s56, %s70
    %p72 = scmp.eq.s32.totalorder %s25, 0
    %p73 = por %p71, %p72
    %s75 = sadd.s32 %s74, 1
    %p78 = scmp.eq.s32.totalorder %s19, 1
    %p79 = scmp.ne.s32.totalorder %s74, %s76
    %p80 = scmp.eq.s32.totalorder %s19, 0
    %p81 = por %p79, %p80
    %p82 = scmp.ne.s32.totalorder %s74, %s76
    %p83 = scmp.eq.s32.totalorder %s24, 1
    %p84 = por %p82, %p83
    %p85 = scmp.ne.s32.totalorder %s76, %s77
    %p86 = scmp.eq.s32.totalorder %s24, 0
    %p87 = por %p85, %p86
    %p88 = scmp.ne.s32.totalorder %s76, %s77
    %p89 = scmp.eq.s32.totalorder %s25, 1
    %p90 = por %p88, %p89
    %p92 = scmp.ne.s32.totalorder %s77, %s91
    %p93 = scmp.eq.s32.totalorder %s25, 0
    %p94 = por %p92, %p93
    %s96 = sadd.s32 %s95, 1
    %p99 = scmp.eq.s32.totalorder %s19, 1
    %p100 = scmp.ne.s32.totalorder %s95, %s97
    %p101 = scmp.eq.s32.totalorder %s19, 0
    %p102 = por %p100, %p101
    %p103 = scmp.ne.s32.totalorder %s95, %s97
    %p104 = scmp.eq.s32.totalorder %s24, 1
    %p105 = por %p103, %p104
    %p106 = scmp.ne.s32.totalorder %s97, %s98
    %p107 = scmp.eq.s32.totalorder %s24, 0
    %p108 = por %p106, %p107
    %p109 = scmp.ne.s32.totalorder %s97, %s98
    %p110 = scmp.eq.s32.totalorder %s25, 1
    %p111 = por %p109, %p110
    %p113 = scmp.ne.s32.totalorder %s98, %s112
    %p114 = scmp.eq.s32.totalorder %s25, 0
    %p115 = por %p113, %p114
    %s117 = sadd.s32 %s116, 1
    %p120 = scmp.eq.s32.totalorder %s19, 1
    %p121 = scmp.ne.s32.totalorder %s116, %s118
    %p122 = scmp.eq.s32.totalorder %s19, 0
    %p123 = por %p121, %p122
    %p124 = scmp.ne.s32.totalorder %s116, %s118
    %p125 = scmp.eq.s32.totalorder %s24, 1
    %p126 = por %p124, %p125
    %p127 = scmp.ne.s32.totalorder %s118, %s119
    %p128 = scmp.eq.s32.totalorder %s24, 0
    %p129 = por %p127, %p128
    %p130 = scmp.ne.s32.totalorder %s118, %s119
    %p131 = scmp.eq.s32.totalorder %s25, 1
    %p132 = por %p130, %p131
    %p134 = scmp.ne.s32.totalorder %s119, %s133
    %p135 = scmp.eq.s32.totalorder %s25, 0
    %p136 = por %p134, %p135
    %s138 = sadd.s32 %s137, 1
    %p141 = scmp.eq.s32.totalorder %s19, 1
    %p142 = scmp.ne.s32.totalorder %s137, %s139
    %p143 = scmp.eq.s32.totalorder %s19, 0
    %p144 = por %p142, %p143
    %p145 = scmp.ne.s32.totalorder %s137, %s139
    %p146 = scmp.eq.s32.totalorder %s24, 1
    %p147 = por %p145, %p146
    %p148 = scmp.ne.s32.totalorder %s139, %s140
    %p149 = scmp.eq.s32.totalorder %s24, 0
    %p150 = por %p148, %p149
    %p151 = scmp.ne.s32.totalorder %s139, %s140
    %p152 = scmp.eq.s32.totalorder %s25, 1
    %p153 = por %p151, %p152
    %p155 = scmp.ne.s32.totalorder %s140, %s154
    %p156 = scmp.eq.s32.totalorder %s25, 0
    %p157 = por %p155, %p156
    %s159 = sadd.s32 %s158, 1
    %p162 = scmp.eq.s32.totalorder %s19, 1
    %p163 = scmp.ne.s32.totalorder %s158, %s160
    %p164 = scmp.eq.s32.totalorder %s19, 0
    %p165 = por %p163, %p164
    %p166 = scmp.ne.s32.totalorder %s158, %s160
    %p167 = scmp.eq.s32.totalorder %s24, 1
    %p168 = por %p166, %p167
    %p169 = scmp.ne.s32.totalorder %s160, %s161
    %p170 = scmp.eq.s32.totalorder %s24, 0
    %p171 = por %p169, %p170
    %p172 = scmp.ne.s32.totalorder %s160, %s161
    %p173 = scmp.eq.s32.totalorder %s25, 1
    %p174 = por %p172, %p173
    %p176 = scmp.ne.s32.totalorder %s161, %s175
    %p177 = scmp.eq.s32.totalorder %s25, 0
    %p178 = por %p176, %p177
    %s180 = sadd.s32 %s179, 1
    %p183 = scmp.eq.s32.totalorder %s19, 1
    %p184 = scmp.ne.s32.totalorder %s179, %s181
    %p185 = scmp.eq.s32.totalorder %s19, 0
    %p186 = por %p184, %p185
    %p187 = scmp.ne.s32.totalorder %s179, %s181
    %p188 = scmp.eq.s32.totalorder %s24, 1
    %p189 = por %p187, %p188
    %p190 = scmp.ne.s32.totalorder %s181, %s182
    %p191 = scmp.eq.s32.totalorder %s24, 0
    %p192 = por %p190, %p191
    %p193 = scmp.ne.s32.totalorder %s181, %s182
    %p194 = scmp.eq.s32.totalorder %s25, 1
    %p195 = por %p193, %p194
    %p197 = scmp.ne.s32.totalorder %s182, %s196
    %p198 = scmp.eq.s32.totalorder %s25, 0
    %p199 = por %p197, %p198
    %s201 = sadd.s32 %s200, 1
    %p204 = scmp.eq.s32.totalorder %s19, 1
    %p205 = scmp.ne.s32.totalorder %s200, %s202
    %p206 = scmp.eq.s32.totalorder %s19, 0
    %p207 = por %p205, %p206
    %p208 = scmp.ne.s32.totalorder %s200, %s202
    %p209 = scmp.eq.s32.totalorder %s24, 1
    %p210 = por %p208, %p209
    %p211 = scmp.ne.s32.totalorder %s202, %s203
    %p212 = scmp.eq.s32.totalorder %s24, 0
    %p213 = por %p211, %p212
    %p214 = scmp.ne.s32.totalorder %s202, %s203
    %p215 = scmp.eq.s32.totalorder %s25, 1
    %p216 = por %p214, %p215
    %p218 = scmp.ne.s32.totalorder %s203, %s217
    %p219 = scmp.eq.s32.totalorder %s25, 0
    %p220 = por %p218, %p219
    %s222 = sadd.s32 %s221, 1
    %p225 = scmp.eq.s32.totalorder %s19, 1
    %p226 = scmp.ne.s32.totalorder %s221, %s223
    %p227 = scmp.eq.s32.totalorder %s19, 0
    %p228 = por %p226, %p227
    %p229 = scmp.ne.s32.totalorder %s221, %s223
    %p230 = scmp.eq.s32.totalorder %s24, 1
    %p231 = por %p229, %p230
    %p232 = scmp.ne.s32.totalorder %s223, %s224
    %p233 = scmp.eq.s32.totalorder %s24, 0
    %p234 = por %p232, %p233
    %p235 = scmp.ne.s32.totalorder %s223, %s224
    %p236 = scmp.eq.s32.totalorder %s25, 1
    %p237 = por %p235, %p236
    %p239 = scmp.ne.s32.totalorder %s224, %s238
    %p240 = scmp.eq.s32.totalorder %s25, 0
    %p241 = por %p239, %p240
    %s243 = sadd.s32 %s242, 1
    %p246 = scmp.eq.s32.totalorder %s19, 1
    %p247 = scmp.ne.s32.totalorder %s242, %s244
    %p248 = scmp.eq.s32.totalorder %s19, 0
    %p249 = por %p247, %p248
    %p250 = scmp.ne.s32.totalorder %s242, %s244
    %p251 = scmp.eq.s32.totalorder %s24, 1
    %p252 = por %p250, %p251
    %p253 = scmp.ne.s32.totalorder %s244, %s245
    %p254 = scmp.eq.s32.totalorder %s24, 0
    %p255 = por %p253, %p254
    %p256 = scmp.ne.s32.totalorder %s244, %s245
    %p257 = scmp.eq.s32.totalorder %s25, 1
    %p258 = por %p256, %p257
    %p260 = scmp.ne.s32.totalorder %s245, %s259
    %p261 = scmp.eq.s32.totalorder %s25, 0
    %p262 = por %p260, %p261
    %s264 = sadd.s32 %s263, 1
    %p267 = scmp.eq.s32.totalorder %s19, 1
    %p268 = scmp.ne.s32.totalorder %s263, %s265
    %p269 = scmp.eq.s32.totalorder %s19, 0
    %p270 = por %p268, %p269
    %p271 = scmp.ne.s32.totalorder %s263, %s265
    %p272 = scmp.eq.s32.totalorder %s24, 1
    %p273 = por %p271, %p272
    %p274 = scmp.ne.s32.totalorder %s265, %s266
    %p275 = scmp.eq.s32.totalorder %s24, 0
    %p276 = por %p274, %p275
    %p277 = scmp.ne.s32.totalorder %s265, %s266
    %p278 = scmp.eq.s32.totalorder %s25, 1
    %p279 = por %p277, %p278
    %p281 = scmp.ne.s32.totalorder %s266, %s280
    %p282 = scmp.eq.s32.totalorder %s25, 0
    %p283 = por %p281, %p282
    %s285 = sadd.s32 %s284, 1
    %p288 = scmp.eq.s32.totalorder %s19, 1
    %p289 = scmp.ne.s32.totalorder %s284, %s286
    %p290 = scmp.eq.s32.totalorder %s19, 0
    %p291 = por %p289, %p290
    %p292 = scmp.ne.s32.totalorder %s284, %s286
    %p293 = scmp.eq.s32.totalorder %s24, 1
    %p294 = por %p292, %p293
    %p295 = scmp.ne.s32.totalorder %s286, %s287
    %p296 = scmp.eq.s32.totalorder %s24, 0
    %p297 = por %p295, %p296
    %p298 = scmp.ne.s32.totalorder %s286, %s287
    %p299 = scmp.eq.s32.totalorder %s25, 1
    %p300 = por %p298, %p299
    %p302 = scmp.ne.s32.totalorder %s287, %s301
    %p303 = scmp.eq.s32.totalorder %s25, 0
    %p304 = por %p302, %p303
    %s305 = ssub.s32 %s19, %s26
    %p306 = scmp.eq.s32.totalorder %s305, 0
    %s308 = sadd.s32 %s307, 1
    %s309 = scalar_select %p306, %s307, %s308
    %p312 = pneg %p306
    %p313 = scmp.eq.s32.totalorder %s19, 1
    %p314 = por %p312, %p313
    %p315 = scmp.ne.s32.totalorder %s307, %s310
    %p316 = scmp.eq.s32.totalorder %s19, 0
    %p317 = por %p315, %p316
    %p318 = scmp.ne.s32.totalorder %s307, %s310
    %p319 = scmp.eq.s32.totalorder %s24, 1
    %p320 = por %p318, %p319
    %p321 = scmp.ne.s32.totalorder %s310, %s311
    %p322 = scmp.eq.s32.totalorder %s24, 0
    %p323 = por %p321, %p322
    %p324 = scmp.ne.s32.totalorder %s310, %s311
    %p325 = scmp.eq.s32.totalorder %s25, 1
    %p326 = por %p324, %p325
    %p328 = scmp.ne.s32.totalorder %s311, %s327
    %p329 = scmp.eq.s32.totalorder %s25, 0
    %p330 = por %p328, %p329
    %p331 = scmp.le.s32.totalorder 1, %s19
    %p332 = scmp.lt.s32.totalorder %s19, 3
    %p333 = pnand %p331, %p332
    %p334 = pneg %p333
    // Predicated region
    $region9: #{_lambda_.11} parent=5 // pred_check
      _
    $region10: #{_lambda_.11} parent=5 // pred_check_branch
      %336 = sbr.rel (%p333) target = $region12
    $region11: #{_lambda_.11} parent=5 // pred_region
      %s337 = ssub.s32 %s19, 1
      // Predicated region
      $region13: #{_lambda_.11} parent=11 // pred_check
        %p338 = pneg %p66
      $region14: #{_lambda_.11} parent=11 // pred_check_branch
        %340 = sbr.rel (%p338) target = $region16
      $region15: #{_lambda_.11} parent=11 // pred_region
        _
      $region16: #{_lambda_.11} parent=11 // pred_fallthru
        _
      // Predicated region
      $region17: #{_lambda_.11} parent=11 // pred_check
        %p341 = pneg %p87
      $region18: #{_lambda_.11} parent=11 // pred_check_branch
        %343 = sbr.rel (%p341) target = $region20
      $region19: #{_lambda_.11} parent=11 // pred_region
        _
      $region20: #{_lambda_.11} parent=11 // pred_fallthru
        _
      // Predicated region
      $region21: #{_lambda_.11} parent=11 // pred_check
        %p344 = pneg %p108
      $region22: #{_lambda_.11} parent=11 // pred_check_branch
        %346 = sbr.rel (%p344) target = $region24
      $region23: #{_lambda_.11} parent=11 // pred_region
        _
      $region24: #{_lambda_.11} parent=11 // pred_fallthru
        _
      // Predicated region
      $region25: #{_lambda_.11} parent=11 // pred_check
        %p347 = pneg %p129
      $region26: #{_lambda_.11} parent=11 // pred_check_branch
        %349 = sbr.rel (%p347) target = $region28
      $region27: #{_lambda_.11} parent=11 // pred_region
        _
      $region28: #{_lambda_.11} parent=11 // pred_fallthru
        _
      // Predicated region
      $region29: #{_lambda_.11} parent=11 // pred_check
        %p350 = pneg %p150
      $region30: #{_lambda_.11} parent=11 // pred_check_branch
        %352 = sbr.rel (%p350) target = $region32
      $region31: #{_lambda_.11} parent=11 // pred_region
        _
      $region32: #{_lambda_.11} parent=11 // pred_fallthru
        _
      // Predicated region
      $region33: #{_lambda_.11} parent=11 // pred_check
        %p353 = pneg %p171
      $region34: #{_lambda_.11} parent=11 // pred_check_branch
        %355 = sbr.rel (%p353) target = $region36
      $region35: #{_lambda_.11} parent=11 // pred_region
        _
      $region36: #{_lambda_.11} parent=11 // pred_fallthru
        _
      // Predicated region
      $region37: #{_lambda_.11} parent=11 // pred_check
        %p356 = pneg %p192
      $region38: #{_lambda_.11} parent=11 // pred_check_branch
        %358 = sbr.rel (%p356) target = $region40
      $region39: #{_lambda_.11} parent=11 // pred_region
        _
      $region40: #{_lambda_.11} parent=11 // pred_fallthru
        _
      // Predicated region
      $region41: #{_lambda_.11} parent=11 // pred_check
        %p359 = pneg %p213
      $region42: #{_lambda_.11} parent=11 // pred_check_branch
        %361 = sbr.rel (%p359) target = $region44
      $region43: #{_lambda_.11} parent=11 // pred_region
        _
      $region44: #{_lambda_.11} parent=11 // pred_fallthru
        _
      // Predicated region
      $region45: #{_lambda_.11} parent=11 // pred_check
        %p362 = pneg %p234
      $region46: #{_lambda_.11} parent=11 // pred_check_branch
        %364 = sbr.rel (%p362) target = $region48
      $region47: #{_lambda_.11} parent=11 // pred_region
        _
      $region48: #{_lambda_.11} parent=11 // pred_fallthru
        _
      // Predicated region
      $region49: #{_lambda_.11} parent=11 // pred_check
        %p365 = pneg %p255
      $region50: #{_lambda_.11} parent=11 // pred_check_branch
        %367 = sbr.rel (%p365) target = $region52
      $region51: #{_lambda_.11} parent=11 // pred_region
        _
      $region52: #{_lambda_.11} parent=11 // pred_fallthru
        _
      // Predicated region
      $region53: #{_lambda_.11} parent=11 // pred_check
        %p368 = pneg %p276
      $region54: #{_lambda_.11} parent=11 // pred_check_branch
        %370 = sbr.rel (%p368) target = $region56
      $region55: #{_lambda_.11} parent=11 // pred_region
        _
      $region56: #{_lambda_.11} parent=11 // pred_fallthru
        _
      // Predicated region
      $region57: #{_lambda_.11} parent=11 // pred_check
        %p371 = pneg %p297
      $region58: #{_lambda_.11} parent=11 // pred_check_branch
        %373 = sbr.rel (%p371) target = $region60
      $region59: #{_lambda_.11} parent=11 // pred_region
        _
      $region60: #{_lambda_.11} parent=11 // pred_fallthru
        _
    $region12: #{_lambda_.11} parent=5 // pred_fallthru
      _
    %p374 = scmp.lt.s32.totalorder %s19, 2
    // Predicated region
    $region61: #{_lambda_.11} parent=5 // pred_check
      %p375 = pneg %p374
    $region62: #{_lambda_.11} parent=5 // pred_check_branch
      %377 = sbr.rel (%p375) target = $region64
    $region63: #{_lambda_.11} parent=5 // pred_region
      // Predicated region
      $region65: #{_lambda_.11} parent=63 // pred_check
        %p378 = pneg %p39
      $region66: #{_lambda_.11} parent=63 // pred_check_branch
        %380 = sbr.rel (%p378) target = $region68
      $region67: #{_lambda_.11} parent=63 // pred_region
        %s381 = smul.u32 4, %s19
        %p382 = scmp.lt.s32.totalorder %s381, 7
        %s383 = scalar_select %p382, %s381, 7
        %s384 = smul.addr %s383, 4
        %s385 = scalar_lea.vmem %s0, %s384
        %s386 = smul.u32 4, %s19
      $region68: #{_lambda_.11} parent=63 // pred_fallthru
        _
    $region64: #{_lambda_.11} parent=5 // pred_fallthru
      _
    %p387 = scmp.le.s32.totalorder 1, %s19
    %p388 = scmp.lt.s32.totalorder %s19, 3
    %p389 = pnand %p387, %p388
    %p390 = pneg %p389
    // Predicated region
    $region69: #{_lambda_.11} parent=5 // pred_check
      _
    $region70: #{_lambda_.11} parent=5 // pred_check_branch
      %392 = sbr.rel (%p389) target = $region72
    $region71: #{_lambda_.11} parent=5 // pred_region
      %s393 = ssub.s32 %s19, 1
      %s394 = smul.u32 4, %s24
      %p395 = scmp.lt.s32.totalorder %s394, 7
      %s396 = scalar_select %p395, %s394, 7
      %s397 = smul.addr %s396, 4
      %s398 = scalar_lea.vmem %s0, %s397
      %p399 = pneg %p45
      %p400 = pneg %p42
      %p401 = pneg %p66
      %p402 = pneg %p63
      %p403 = pneg %p87
      %p404 = pneg %p84
      %p405 = pneg %p108
      %p406 = pneg %p105
      %p407 = pneg %p129
      %p408 = pneg %p126
      %p409 = pneg %p150
      %p410 = pneg %p147
      %p411 = pneg %p171
      %p412 = pneg %p168
      %p413 = pneg %p192
      %p414 = pneg %p189
      %p415 = pneg %p213
      %p416 = pneg %p210
      %p417 = pneg %p234
      %p418 = pneg %p231
      %p419 = pneg %p255
      %p420 = pneg %p252
      %p421 = pneg %p276
      %p422 = pneg %p273
      %p423 = pneg %p297
      %p424 = pneg %p294
      %p425 = pneg %p323
      %p426 = pneg %p320
      %s427 = smul.u32 4, %s24
      %p428 = scmp.lt.s32.totalorder %s427, 7
      %s429 = scalar_select %p428, %s427, 7
      %s430 = smul.addr %s429, 4
      %s431 = scalar_lea.vmem %s13, %s430
      %s432 = smul.u32 4, %s24
      %p433 = scmp.lt.s32.totalorder %s432, 7
      %s434 = scalar_select %p433, %s432, 7
      %s435 = smul.addr %s434, 4
      %s436 = scalar_lea.vmem %s0, %s435
      %s437 = smul.u32 4, %s24
      %s438 = smul.u32 4, %s24
      %p439 = scmp.lt.s32.totalorder %s438, 7
      %s440 = scalar_select %p439, %s438, 7
      %s441 = smul.addr %s440, 4
      %s442 = scalar_lea.vmem %s13, %s441
      %s443 = smul.u32 4, %s24
      %v445 = vld [vmem:[%s436] sm:$0xf]
      %v446 = vld [vmem:[%s436 + $0x4] sm:$0xf]
      %v447 = vld [vmem:[%s436 + $0x8] sm:$0xf]
      %v448 = vld [vmem:[%s436 + $0xc] sm:$0xf]
      %v453 = vcombine.low %v445, %v446
      %v454 = vcombine.low %v447, %v448
      %v457 = vpack.c.bf16 %v454, %v453
      %v458 = vld [vmem:[%s1] sm:$0xf]
      %v459 = vld [vmem:[%s1 + $0x4] sm:$0xf]
      %v460 = vld [vmem:[%s1 + $0x8] sm:$0xf]
      %v461 = vld [vmem:[%s1 + $0xc] sm:$0xf]
      %v462 = vld [vmem:[%s2] sm:$0x1]
      %v464 = vlaneseq
      %v465 = vshrl.u32 %v464, 7
      %v466 = vsub.s32 0, %v465
      %v467 = vrot.slane %v462, %v466
      %v473 = vunpack.c.l.b16 %v458
      %v474 = vunpack.c.l.b16 %v459
      %v475 = vunpack.c.l.b16 %v460
      %v476 = vunpack.c.l.b16 %v461
      %v477 = vpack.c.b16 %v474, %v473
      %v478 = vpack.c.b16 %v476, %v475
      %vm481 = vcmask 261120
      %v483 = vsel %vm481, %v457, 0
      %485 = vmatprep.subr.bf16.mxu0 0
      %486 = vmatpush1.bf16.msra.mxu0 0
      %487 = vmatprep.subr.bf16.mxu0 0
      %488 = vmatpush1.bf16.msra.mxu0 0
      %489 = vmatprep.subr.bf16.mxu0 0
      %490 = vmatpush1.bf16.msra.mxu0 0
      %491 = vmatprep.subr.bf16.mxu0 0
      %492 = vmatpush1.bf16.msra.mxu0 0
      %493 = vmatprep.subr.bf16.mxu0 0
      %494 = vmatpush1.bf16.msra.mxu0 0
      %495 = vmatprep.subr.bf16.mxu0 0
      %496 = vmatpush1.bf16.msra.mxu0 0
      %497 = vmatprep.subr.bf16.mxu0 0
      %498 = vmatpush1.bf16.msra.mxu0 %v478
      %499 = vmatprep.subr.bf16.mxu0 0
      %500 = vmatpush1.bf16.msra.mxu0 %v477
      %501 = vmatprep.subr.bf16.mxu0 0
      %502 = vmatpush2.bf16.msra.mxu0 0
      %503 = vmatprep.subr.bf16.mxu0 0
      %504 = vmatpush2.bf16.msra.mxu0 0
      %505 = vmatprep.subr.bf16.mxu0 0
      %506 = vmatpush2.bf16.msra.mxu0 0
      %507 = vmatprep.subr.bf16.mxu0 0
      %508 = vmatpush2.bf16.msra.mxu0 0
      %509 = vmatprep.subr.bf16.mxu0 0
      %510 = vmatpush2.bf16.msra.mxu0 0
      %511 = vmatprep.subr.bf16.mxu0 0
      %512 = vmatpush2.bf16.msra.mxu0 0
      %513 = vmatprep.subr.bf16.mxu0 0
      %514 = vmatpush2.bf16.msra.mxu0 0
      %515 = vmatprep.subr.bf16.mxu0 0
      %516 = vmatpush2.bf16.msra.mxu0 0
      %517 = vmatprep.mubr.bf16.mxu0 0
      %518 = vmatmul.mubr.bf16.gmra.mxu0 %v483
      %v519 = vpop.f32.mrf.mxu0
      %v520 = vadd.f32 %v467, %v519
      %v521 = vpop.f32.mrf.mxu0
      %v522 = vpop.f32.mrf.mxu0
      %v523 = vadd.f32 %v467, %v522
      %v524 = vpop.f32.mrf.mxu0
      %525 = vdwg.mxu0
      %v526 = vand.u32 2147483647, %v520
      %v527 = vand.u32 2147483647, %v523
      %v528 = vsub.f32 0.0, %v526
      %v529 = vsub.f32 0.0, %v527
      %v530 = vmul.f32 %v528, 1.442695
      %v531 = vpow.pop %v530
      %v532 = vmul.f32 %v529, 1.442695
      %v533 = vpow.pop %v532
      %v534 = vmul.f32 %v531, %v531
      %v535 = vmul.f32 %v533, %v533
      %vm536 = vcmp.ge.f32.partialorder %v520, 0.0
      %vm537 = vcmp.ge.f32.partialorder %v523, 0.0
      %v538 = vmul.f32 %v531, 2.0
      %v539 = vmul.f32 %v533, 2.0
      %v540 = vadd.f32 %v538, 1.0
      %v541 = vadd.f32 %v539, 1.0
      %v542 = vadd.f32 %v538, %v534
      %v543 = vadd.f32 %v539, %v535
      %v544 = vsel %vm536, %v540, %v542
      %v545 = vsel %vm537, %v541, %v543
      %v546 = vmul.f32 %v534, 2.0
      %v547 = vmul.f32 %v535, 2.0
      %v548 = vadd.f32 %v540, %v546
      %v549 = vadd.f32 %v541, %v547
      %v550 = vadd.f32 %v538, 2.0
      %v551 = vadd.f32 %v539, 2.0
      %v552 = vadd.f32 %v550, %v534
      %v553 = vadd.f32 %v551, %v535
      %v554 = vsel %vm536, %v548, %v552
      %v555 = vsel %vm537, %v549, %v553
      %v556 = vrcp.pop %v554
      %v557 = vrcp.pop %v555
      %v558 = vmul.f32 %v554, %v556
      %v559 = vmul.f32 %v555, %v557
      %v560 = vsub.f32 2.0, %v558
      %v561 = vsub.f32 2.0, %v559
      %v562 = vmul.f32 %v556, %v560
      %v563 = vmul.f32 %v557, %v561
      %v564 = vmul.f32 %v520, %v544
      %v565 = vmul.f32 %v523, %v545
      %v566 = vmul.f32 %v564, %v562
      %v567 = vmul.f32 %v565, %v563
      %v568 = vpack.c.bf16 %v567, %v566
      %v569 = vld [vmem:[%s3] sm:$0xf]
      %v570 = vld [vmem:[%s3 + $0x4] sm:$0xf]
      %v571 = vld [vmem:[%s3 + $0x8] sm:$0xf]
      %v572 = vld [vmem:[%s3 + $0xc] sm:$0xf]
      %v577 = vunpack.c.l.b16 %v569
      %v578 = vunpack.c.l.b16 %v570
      %v579 = vunpack.c.l.b16 %v571
      %v580 = vunpack.c.l.b16 %v572
      %v581 = vpack.c.b16 %v578, %v577
      %v582 = vpack.c.b16 %v580, %v579
      %v586 = vsel %vm481, %v568, 0
      %588 = vmatprep.subr.bf16.mxu0 0
      %589 = vmatpush1.bf16.msra.mxu0 0
      %590 = vmatprep.subr.bf16.mxu0 0
      %591 = vmatpush1.bf16.msra.mxu0 0
      %592 = vmatprep.subr.bf16.mxu0 0
      %593 = vmatpush1.bf16.msra.mxu0 0
      %594 = vmatprep.subr.bf16.mxu0 0
      %595 = vmatpush1.bf16.msra.mxu0 0
      %596 = vmatprep.subr.bf16.mxu0 0
      %597 = vmatpush1.bf16.msra.mxu0 0
      %598 = vmatprep.subr.bf16.mxu0 0
      %599 = vmatpush1.bf16.msra.mxu0 0
      %600 = vmatprep.subr.bf16.mxu0 0
      %601 = vmatpush1.bf16.msra.mxu0 %v582
      %602 = vmatprep.subr.bf16.mxu0 0
      %603 = vmatpush1.bf16.msra.mxu0 %v581
      %604 = vmatprep.subr.bf16.mxu0 0
      %605 = vmatpush2.bf16.msra.mxu0 0
      %606 = vmatprep.subr.bf16.mxu0 0
      %607 = vmatpush2.bf16.msra.mxu0 0
      %608 = vmatprep.subr.bf16.mxu0 0
      %609 = vmatpush2.bf16.msra.mxu0 0
      %610 = vmatprep.subr.bf16.mxu0 0
      %611 = vmatpush2.bf16.msra.mxu0 0
      %612 = vmatprep.subr.bf16.mxu0 0
      %613 = vmatpush2.bf16.msra.mxu0 0
      %614 = vmatprep.subr.bf16.mxu0 0
      %615 = vmatpush2.bf16.msra.mxu0 0
      %616 = vmatprep.subr.bf16.mxu0 0
      %617 = vmatpush2.bf16.msra.mxu0 0
      %618 = vmatprep.subr.bf16.mxu0 0
      %619 = vmatpush2.bf16.msra.mxu0 0
      %620 = vmatprep.mubr.bf16.mxu0 0
      %621 = vmatmul.mubr.bf16.gmra.mxu0 %v586
      %v622 = vpop.f32.mrf.mxu0
      %v623 = vadd.f32 0.0, %v622
      %v624 = vpop.f32.mrf.mxu0
      %v625 = vpop.f32.mrf.mxu0
      %v626 = vadd.f32 0.0, %v625
      %v627 = vpop.f32.mrf.mxu0
      %628 = vdwg.mxu0
      %v629 = vld [vmem:[%s4] sm:$0xf]
      %v630 = vld [vmem:[%s4 + $0x4] sm:$0xf]
      %v631 = vld [vmem:[%s4 + $0x8] sm:$0xf]
      %v632 = vld [vmem:[%s4 + $0xc] sm:$0xf]
      %v637 = vunpack.c.l.b16 %v629
      %v638 = vunpack.c.l.b16 %v630
      %v639 = vunpack.c.l.b16 %v631
      %v640 = vunpack.c.l.b16 %v632
      %v641 = vpack.c.b16 %v638, %v637
      %v642 = vpack.c.b16 %v640, %v639
      %645 = vmatprep.subr.bf16.mxu0 0
      %646 = vmatpush1.bf16.msra.mxu0 0
      %647 = vmatprep.subr.bf16.mxu0 0
      %648 = vmatpush1.bf16.msra.mxu0 0
      %649 = vmatprep.subr.bf16.mxu0 0
      %650 = vmatpush1.bf16.msra.mxu0 0
      %651 = vmatprep.subr.bf16.mxu0 0
      %652 = vmatpush1.bf16.msra.mxu0 0
      %653 = vmatprep.subr.bf16.mxu0 0
      %654 = vmatpush1.bf16.msra.mxu0 0
      %655 = vmatprep.subr.bf16.mxu0 0
      %656 = vmatpush1.bf16.msra.mxu0 0
      %657 = vmatprep.subr.bf16.mxu0 0
      %658 = vmatpush1.bf16.msra.mxu0 %v642
      %659 = vmatprep.subr.bf16.mxu0 0
      %660 = vmatpush1.bf16.msra.mxu0 %v641
      %661 = vmatprep.subr.bf16.mxu0 0
      %662 = vmatpush2.bf16.msra.mxu0 0
      %663 = vmatprep.subr.bf16.mxu0 0
      %664 = vmatpush2.bf16.msra.mxu0 0
      %665 = vmatprep.subr.bf16.mxu0 0
      %666 = vmatpush2.bf16.msra.mxu0 0
      %667 = vmatprep.subr.bf16.mxu0 0
      %668 = vmatpush2.bf16.msra.mxu0 0
      %669 = vmatprep.subr.bf16.mxu0 0
      %670 = vmatpush2.bf16.msra.mxu0 0
      %671 = vmatprep.subr.bf16.mxu0 0
      %672 = vmatpush2.bf16.msra.mxu0 0
      %673 = vmatprep.subr.bf16.mxu0 0
      %674 = vmatpush2.bf16.msra.mxu0 0
      %675 = vmatprep.subr.bf16.mxu0 0
      %676 = vmatpush2.bf16.msra.mxu0 0
      %677 = vmatprep.mubr.bf16.mxu0 0
      %678 = vmatmul.mubr.bf16.gmra.mxu0 %v586
      %v679 = vpop.f32.mrf.mxu0
      %v680 = vadd.f32 0.0, %v679
      %v681 = vpop.f32.mrf.mxu0
      %v682 = vpop.f32.mrf.mxu0
      %v683 = vadd.f32 0.0, %v682
      %v684 = vpop.f32.mrf.mxu0
      %685 = vdwg.mxu0
      %v686 = vld [vmem:[%s5] sm:$0xf]
      %v687 = vld [vmem:[%s5 + $0x4] sm:$0xf]
      %v688 = vld [vmem:[%s5 + $0x8] sm:$0xf]
      %v689 = vld [vmem:[%s5 + $0xc] sm:$0xf]
      %v694 = vunpack.c.l.b16 %v686
      %v695 = vunpack.c.l.b16 %v687
      %v696 = vunpack.c.l.b16 %v688
      %v697 = vunpack.c.l.b16 %v689
      %v698 = vpack.c.b16 %v695, %v694
      %v699 = vpack.c.b16 %v697, %v696
      %702 = vmatprep.subr.bf16.mxu0 0
      %703 = vmatpush1.bf16.msra.mxu0 0
      %704 = vmatprep.subr.bf16.mxu0 0
      %705 = vmatpush1.bf16.msra.mxu0 0
      %706 = vmatprep.subr.bf16.mxu0 0
      %707 = vmatpush1.bf16.msra.mxu0 0
      %708 = vmatprep.subr.bf16.mxu0 0
      %709 = vmatpush1.bf16.msra.mxu0 0
      %710 = vmatprep.subr.bf16.mxu0 0
      %711 = vmatpush1.bf16.msra.mxu0 0
      %712 = vmatprep.subr.bf16.mxu0 0
      %713 = vmatpush1.bf16.msra.mxu0 0
      %714 = vmatprep.subr.bf16.mxu0 0
      %715 = vmatpush1.bf16.msra.mxu0 %v699
      %716 = vmatprep.subr.bf16.mxu0 0
      %717 = vmatpush1.bf16.msra.mxu0 %v698
      %718 = vmatprep.subr.bf16.mxu0 0
      %719 = vmatpush2.bf16.msra.mxu0 0
      %720 = vmatprep.subr.bf16.mxu0 0
      %721 = vmatpush2.bf16.msra.mxu0 0
      %722 = vmatprep.subr.bf16.mxu0 0
      %723 = vmatpush2.bf16.msra.mxu0 0
      %724 = vmatprep.subr.bf16.mxu0 0
      %725 = vmatpush2.bf16.msra.mxu0 0
      %726 = vmatprep.subr.bf16.mxu0 0
      %727 = vmatpush2.bf16.msra.mxu0 0
      %728 = vmatprep.subr.bf16.mxu0 0
      %729 = vmatpush2.bf16.msra.mxu0 0
      %730 = vmatprep.subr.bf16.mxu0 0
      %731 = vmatpush2.bf16.msra.mxu0 0
      %732 = vmatprep.subr.bf16.mxu0 0
      %733 = vmatpush2.bf16.msra.mxu0 0
      %734 = vmatprep.mubr.bf16.mxu0 0
      %735 = vmatmul.mubr.bf16.gmra.mxu0 %v586
      %v736 = vpop.f32.mrf.mxu0
      %v737 = vadd.f32 0.0, %v736
      %v738 = vpop.f32.mrf.mxu0
      %v739 = vpop.f32.mrf.mxu0
      %v740 = vadd.f32 0.0, %v739
      %v741 = vpop.f32.mrf.mxu0
      %742 = vdwg.mxu0
      %v745 = vcombine.high %v623, %v623
      %v746 = vcombine.high %v626, %v626
      %v749 = vld [vmem:[%s6] sm:$0xf]
      %v750 = vadd.f32 %v623, %v749
      %v751 = vadd.f32 %v745, %v749
      %v752 = vadd.f32 %v626, %v749
      %v753 = vadd.f32 %v746, %v749
      %v756 = vcombine.high %v680, %v680
      %v757 = vcombine.high %v683, %v683
      %v760 = vld [vmem:[%s7] sm:$0xf]
      %v761 = vadd.f32 %v680, %v760
      %v762 = vadd.f32 %v756, %v760
      %v763 = vadd.f32 %v683, %v760
      %v764 = vadd.f32 %v757, %v760
      %v767 = vcombine.high %v737, %v737
      %v768 = vcombine.high %v740, %v740
      %v771 = vld [vmem:[%s8] sm:$0x1]
      %v773 = vlaneseq
      %v774 = vshrl.u32 %v773, 7
      %v775 = vsub.s32 0, %v774
      %v776 = vrot.slane %v771, %v775
      %v778 = vadd.f32 %v737, %v776
      %v779 = vadd.f32 %v767, %v776
      %v780 = vadd.f32 %v740, %v776
      %v781 = vadd.f32 %v768, %v776
      %s782 = scalar_lea.vmem %s3, 16
      %v783 = vld [vmem:[%s782] sm:$0xf]
      %v784 = vld [vmem:[%s782 + $0x4] sm:$0xf]
      %v785 = vld [vmem:[%s782 + $0x8] sm:$0xf]
      %v786 = vld [vmem:[%s782 + $0xc] sm:$0xf]
      %v791 = vunpack.c.l.b16 %v783
      %v792 = vunpack.c.l.b16 %v784
      %v793 = vunpack.c.l.b16 %v785
      %v794 = vunpack.c.l.b16 %v786
      %v795 = vpack.c.b16 %v792, %v791
      %v796 = vpack.c.b16 %v794, %v793
      %799 = vmatprep.subr.bf16.mxu0 0
      %800 = vmatpush1.bf16.msra.mxu0 0
      %801 = vmatprep.subr.bf16.mxu0 0
      %802 = vmatpush1.bf16.msra.mxu0 0
      %803 = vmatprep.subr.bf16.mxu0 0
      %804 = vmatpush1.bf16.msra.mxu0 0
      %805 = vmatprep.subr.bf16.mxu0 0
      %806 = vmatpush1.bf16.msra.mxu0 0
      %807 = vmatprep.subr.bf16.mxu0 0
      %808 = vmatpush1.bf16.msra.mxu0 0
      %809 = vmatprep.subr.bf16.mxu0 0
      %810 = vmatpush1.bf16.msra.mxu0 0
      %811 = vmatprep.subr.bf16.mxu0 0
      %812 = vmatpush1.bf16.msra.mxu0 %v796
      %813 = vmatprep.subr.bf16.mxu0 0
      %814 = vmatpush1.bf16.msra.mxu0 %v795
      %815 = vmatprep.subr.bf16.mxu0 0
      %816 = vmatpush2.bf16.msra.mxu0 0
      %817 = vmatprep.subr.bf16.mxu0 0
      %818 = vmatpush2.bf16.msra.mxu0 0
      %819 = vmatprep.subr.bf16.mxu0 0
      %820 = vmatpush2.bf16.msra.mxu0 0
      %821 = vmatprep.subr.bf16.mxu0 0
      %822 = vmatpush2.bf16.msra.mxu0 0
      %823 = vmatprep.subr.bf16.mxu0 0
      %824 = vmatpush2.bf16.msra.mxu0 0
      %825 = vmatprep.subr.bf16.mxu0 0
      %826 = vmatpush2.bf16.msra.mxu0 0
      %827 = vmatprep.subr.bf16.mxu0 0
      %828 = vmatpush2.bf16.msra.mxu0 0
      %829 = vmatprep.subr.bf16.mxu0 0
      %830 = vmatpush2.bf16.msra.mxu0 0
      %831 = vmatprep.mubr.bf16.mxu0 0
      %832 = vmatmul.mubr.bf16.gmra.mxu0 %v586
      %v833 = vpop.f32.mrf.mxu0
      %v834 = vadd.f32 0.0, %v833
      %v835 = vpop.f32.mrf.mxu0
      %v836 = vpop.f32.mrf.mxu0
      %v837 = vadd.f32 0.0, %v836
      %v838 = vpop.f32.mrf.mxu0
      %839 = vdwg.mxu0
      %s840 = scalar_lea.vmem %s4, 16
      %v841 = vld [vmem:[%s840] sm:$0xf]
      %v842 = vld [vmem:[%s840 + $0x4] sm:$0xf]
      %v843 = vld [vmem:[%s840 + $0x8] sm:$0xf]
      %v844 = vld [vmem:[%s840 + $0xc] sm:$0xf]
      %v849 = vunpack.c.l.b16 %v841
      %v850 = vunpack.c.l.b16 %v842
      %v851 = vunpack.c.l.b16 %v843
      %v852 = vunpack.c.l.b16 %v844
      %v853 = vpack.c.b16 %v850, %v849
      %v854 = vpack.c.b16 %v852, %v851
      %857 = vmatprep.subr.bf16.mxu0 0
      %858 = vmatpush1.bf16.msra.mxu0 0
      %859 = vmatprep.subr.bf16.mxu0 0
      %860 = vmatpush1.bf16.msra.mxu0 0
      %861 = vmatprep.subr.bf16.mxu0 0
      %862 = vmatpush1.bf16.msra.mxu0 0
      %863 = vmatprep.subr.bf16.mxu0 0
      %864 = vmatpush1.bf16.msra.mxu0 0
      %865 = vmatprep.subr.bf16.mxu0 0
      %866 = vmatpush1.bf16.msra.mxu0 0
      %867 = vmatprep.subr.bf16.mxu0 0
      %868 = vmatpush1.bf16.msra.mxu0 0
      %869 = vmatprep.subr.bf16.mxu0 0
      %870 = vmatpush1.bf16.msra.mxu0 %v854
      %871 = vmatprep.subr.bf16.mxu0 0
      %872 = vmatpush1.bf16.msra.mxu0 %v853
      %873 = vmatprep.subr.bf16.mxu0 0
      %874 = vmatpush2.bf16.msra.mxu0 0
      %875 = vmatprep.subr.bf16.mxu0 0
      %876 = vmatpush2.bf16.msra.mxu0 0
      %877 = vmatprep.subr.bf16.mxu0 0
      %878 = vmatpush2.bf16.msra.mxu0 0
      %879 = vmatprep.subr.bf16.mxu0 0
      %880 = vmatpush2.bf16.msra.mxu0 0
      %881 = vmatprep.subr.bf16.mxu0 0
      %882 = vmatpush2.bf16.msra.mxu0 0
      %883 = vmatprep.subr.bf16.mxu0 0
      %884 = vmatpush2.bf16.msra.mxu0 0
      %885 = vmatprep.subr.bf16.mxu0 0
      %886 = vmatpush2.bf16.msra.mxu0 0
      %887 = vmatprep.subr.bf16.mxu0 0
      %888 = vmatpush2.bf16.msra.mxu0 0
      %889 = vmatprep.mubr.bf16.mxu0 0
      %890 = vmatmul.mubr.bf16.gmra.mxu0 %v586
      %v891 = vpop.f32.mrf.mxu0
      %v892 = vadd.f32 0.0, %v891
      %v893 = vpop.f32.mrf.mxu0
      %v894 = vpop.f32.mrf.mxu0
      %v895 = vadd.f32 0.0, %v894
      %v896 = vpop.f32.mrf.mxu0
      %897 = vdwg.mxu0
      %s898 = scalar_lea.vmem %s5, 16
      %v899 = vld [vmem:[%s898] sm:$0xf]
      %v900 = vld [vmem:[%s898 + $0x4] sm:$0xf]
      %v901 = vld [vmem:[%s898 + $0x8] sm:$0xf]
      %v902 = vld [vmem:[%s898 + $0xc] sm:$0xf]
      %v907 = vunpack.c.l.b16 %v899
      %v908 = vunpack.c.l.b16 %v900
      %v909 = vunpack.c.l.b16 %v901
      %v910 = vunpack.c.l.b16 %v902
      %v911 = vpack.c.b16 %v908, %v907
      %v912 = vpack.c.b16 %v910, %v909
      %915 = vmatprep.subr.bf16.mxu0 0
      %916 = vmatpush1.bf16.msra.mxu0 0
      %917 = vmatprep.subr.bf16.mxu0 0
      %918 = vmatpush1.bf16.msra.mxu0 0
      %919 = vmatprep.subr.bf16.mxu0 0
      %920 = vmatpush1.bf16.msra.mxu0 0
      %921 = vmatprep.subr.bf16.mxu0 0
      %922 = vmatpush1.bf16.msra.mxu0 0
      %923 = vmatprep.subr.bf16.mxu0 0
      %924 = vmatpush1.bf16.msra.mxu0 0
      %925 = vmatprep.subr.bf16.mxu0 0
      %926 = vmatpush1.bf16.msra.mxu0 0
      %927 = vmatprep.subr.bf16.mxu0 0
      %928 = vmatpush1.bf16.msra.mxu0 %v912
      %929 = vmatprep.subr.bf16.mxu0 0
      %930 = vmatpush1.bf16.msra.mxu0 %v911
      %931 = vmatprep.subr.bf16.mxu0 0
      %932 = vmatpush2.bf16.msra.mxu0 0
      %933 = vmatprep.subr.bf16.mxu0 0
      %934 = vmatpush2.bf16.msra.mxu0 0
      %935 = vmatprep.subr.bf16.mxu0 0
      %936 = vmatpush2.bf16.msra.mxu0 0
      %937 = vmatprep.subr.bf16.mxu0 0
      %938 = vmatpush2.bf16.msra.mxu0 0
      %939 = vmatprep.subr.bf16.mxu0 0
      %940 = vmatpush2.bf16.msra.mxu0 0
      %941 = vmatprep.subr.bf16.mxu0 0
      %942 = vmatpush2.bf16.msra.mxu0 0
      %943 = vmatprep.subr.bf16.mxu0 0
      %944 = vmatpush2.bf16.msra.mxu0 0
      %945 = vmatprep.subr.bf16.mxu0 0
      %946 = vmatpush2.bf16.msra.mxu0 0
      %947 = vmatprep.mubr.bf16.mxu0 0
      %948 = vmatmul.mubr.bf16.gmra.mxu0 %v586
      %v949 = vpop.f32.mrf.mxu0
      %v950 = vadd.f32 0.0, %v949
      %v951 = vpop.f32.mrf.mxu0
      %v952 = vpop.f32.mrf.mxu0
      %v953 = vadd.f32 0.0, %v952
      %v954 = vpop.f32.mrf.mxu0
      %955 = vdwg.mxu0
      %v958 = vcombine.high %v834, %v834
      %v959 = vcombine.high %v837, %v837
      %s962 = scalar_lea.vmem %s6, 4
      %v963 = vld [vmem:[%s962] sm:$0xf]
      %v964 = vadd.f32 %v834, %v963
      %v965 = vadd.f32 %v958, %v963
      %v966 = vadd.f32 %v837, %v963
      %v967 = vadd.f32 %v959, %v963
      %v970 = vcombine.high %v892, %v892
      %v971 = vcombine.high %v895, %v895
      %s974 = scalar_lea.vmem %s7, 4
      %v975 = vld [vmem:[%s974] sm:$0xf]
      %v976 = vadd.f32 %v892, %v975
      %v977 = vadd.f32 %v970, %v975
      %v978 = vadd.f32 %v895, %v975
      %v979 = vadd.f32 %v971, %v975
      %v982 = vcombine.high %v950, %v950
      %v983 = vcombine.high %v953, %v953
      %s986 = scalar_lea.vmem %s8, 1
      %v987 = vld [vmem:[%s986] sm:$0x1]
      %v989 = vlaneseq
      %v990 = vshrl.u32 %v989, 7
      %v991 = vsub.s32 0, %v990
      %v992 = vrot.slane %v987, %v991
      %v994 = vadd.f32 %v950, %v992
      %v995 = vadd.f32 %v982, %v992
      %v996 = vadd.f32 %v953, %v992
      %v997 = vadd.f32 %v983, %v992
      %v998 = vpack.c.bf16 %v750, %v750
      %v999 = vpack.c.bf16 %v751, %v751
      %v1000 = vpack.c.bf16 %v752, %v752
      %v1001 = vpack.c.bf16 %v753, %v753
      %v1002 = vpack.c.bf16 %v964, %v964
      %v1003 = vpack.c.bf16 %v965, %v965
      %v1004 = vpack.c.bf16 %v966, %v966
      %v1005 = vpack.c.bf16 %v967, %v967
      %v1006 = vpack.c.bf16 %v761, %v761
      %v1007 = vpack.c.bf16 %v762, %v762
      %v1008 = vpack.c.bf16 %v763, %v763
      %v1009 = vpack.c.bf16 %v764, %v764
      %v1010 = vpack.c.bf16 %v976, %v976
      %v1011 = vpack.c.bf16 %v977, %v977
      %v1012 = vpack.c.bf16 %v978, %v978
      %v1013 = vpack.c.bf16 %v979, %v979
      %v1014 = vpack.c.bf16 %v778, %v778
      %v1015 = vpack.c.bf16 %v779, %v779
      %v1016 = vpack.c.bf16 %v780, %v780
      %v1017 = vpack.c.bf16 %v781, %v781
      %v1018 = vpack.c.bf16 %v994, %v994
      %v1019 = vpack.c.bf16 %v995, %v995
      %v1020 = vpack.c.bf16 %v996, %v996
      %v1021 = vpack.c.bf16 %v997, %v997
      %vm1022 = vcmask 130048
      %v1024 = vsel %vm1022, %v998, 0
      %v1027 = vsel %vm1022, %v1006, 0
      %1029 = vmatprep.subr.bf16.mxu0 0
      %1030 = vmatpush1.bf16.xpose.msra.mxu0 0
      %1031 = vmatprep.subr.bf16.mxu0 0
      %1032 = vmatpush1.bf16.xpose.msra.mxu0 0
      %1033 = vmatprep.subr.bf16.mxu0 0
      %1034 = vmatpush1.bf16.xpose.msra.mxu0 0
      %1035 = vmatprep.subr.bf16.mxu0 0
      %1036 = vmatpush1.bf16.xpose.msra.mxu0 0
      %1037 = vmatprep.subr.bf16.mxu0 0
      %1038 = vmatpush1.bf16.xpose.msra.mxu0 0
      %1039 = vmatprep.subr.bf16.mxu0 0
      %1040 = vmatpush1.bf16.xpose.msra.mxu0 0
      %1041 = vmatprep.subr.bf16.mxu0 0
      %1042 = vmatpush1.bf16.xpose.msra.mxu0 0
      %1043 = vmatprep.subr.bf16.mxu0 0
      %1044 = vmatpush1.bf16.xpose.msra.mxu0 %v1027
      %1045 = vmatprep.subr.bf16.mxu0 0
      %1046 = vmatpush2.bf16.xpose.msra.mxu0 0
      %1047 = vmatprep.subr.bf16.mxu0 0
      %1048 = vmatpush2.bf16.xpose.msra.mxu0 0
      %1049 = vmatprep.subr.bf16.mxu0 0
      %1050 = vmatpush2.bf16.xpose.msra.mxu0 0
      %1051 = vmatprep.subr.bf16.mxu0 0
      %1052 = vmatpush2.bf16.xpose.msra.mxu0 0
      %1053 = vmatprep.subr.bf16.mxu0 0
      %1054 = vmatpush2.bf16.xpose.msra.mxu0 0
      %1055 = vmatprep.subr.bf16.mxu0 0
      %1056 = vmatpush2.bf16.xpose.msra.mxu0 0
      %1057 = vmatprep.subr.bf16.mxu0 0
      %1058 = vmatpush2.bf16.xpose.msra.mxu0 0
      %1059 = vmatprep.subr.bf16.mxu0 0
      %1060 = vmatpush2.bf16.xpose.msra.mxu0 0
      %1061 = vmatprep.mubr.bf16.mxu0 0
      %1062 = vmatmul.mubr.bf16.gmra.mxu0 %v1024
      %v1063 = vpop.f32.mrf.mxu0
      %v1064 = vadd.f32 0.0, %v1063
      %v1065 = vpop.f32.mrf.mxu0
      %v1066 = vpop.f32.mrf.mxu0
      %v1067 = vpop.f32.mrf.mxu0
      %1068 = vdwg.mxu0
      %v1070 = vsel %vm1022, %v999, 0
      %v1073 = vsel %vm1022, %v1007, 0
      %1075 = vmatprep.subr.bf16.mxu0 0
      %1076 = vmatpush1.bf16.xpose.msra.mxu0 0
      %1077 = vmatprep.subr.bf16.mxu0 0
      %1078 = vmatpush1.bf16.xpose.msra.mxu0 0
      %1079 = vmatprep.subr.bf16.mxu0 0
      %1080 = vmatpush1.bf16.xpose.msra.mxu0 0
      %1081 = vmatprep.subr.bf16.mxu0 0
      %1082 = vmatpush1.bf16.xpose.msra.mxu0 0
      %1083 = vmatprep.subr.bf16.mxu0 0
      %1084 = vmatpush1.bf16.xpose.msra.mxu0 0
      %1085 = vmatprep.subr.bf16.mxu0 0
      %1086 = vmatpush1.bf16.xpose.msra.mxu0 0
      %1087 = vmatprep.subr.bf16.mxu0 0
      %1088 = vmatpush1.bf16.xpose.msra.mxu0 0
      %1089 = vmatprep.subr.bf16.mxu0 0
      %1090 = vmatpush1.bf16.xpose.msra.mxu0 %v1073
      %1091 = vmatprep.subr.bf16.mxu0 0
      %1092 = vmatpush2.bf16.xpose.msra.mxu0 0
      %1093 = vmatprep.subr.bf16.mxu0 0
      %1094 = vmatpush2.bf16.xpose.msra.mxu0 0
      %1095 = vmatprep.subr.bf16.mxu0 0
      %1096 = vmatpush2.bf16.xpose.msra.mxu0 0
      %1097 = vmatprep.subr.bf16.mxu0 0
      %1098 = vmatpush2.bf16.xpose.msra.mxu0 0
      %1099 = vmatprep.subr.bf16.mxu0 0
      %1100 = vmatpush2.bf16.xpose.msra.mxu0 0
      %1101 = vmatprep.subr.bf16.mxu0 0
      %1102 = vmatpush2.bf16.xpose.msra.mxu0 0
      %1103 = vmatprep.subr.bf16.mxu0 0
      %1104 = vmatpush2.bf16.xpose.msra.mxu0 0
      %1105 = vmatprep.subr.bf16.mxu0 0
      %1106 = vmatpush2.bf16.xpose.msra.mxu0 0
      %1107 = vmatprep.mubr.bf16.mxu0 0
      %1108 = vmatmul.mubr.bf16.gmra.mxu0 %v1070
      %v1109 = vpop.f32.mrf.mxu0
      %v1110 = vadd.f32 0.0, %v1109
      %v1111 = vpop.f32.mrf.mxu0
      %v1112 = vpop.f32.mrf.mxu0
      %v1113 = vpop.f32.mrf.mxu0
      %1114 = vdwg.mxu0
      %v1116 = vsel %vm1022, %v1000, 0
      %v1119 = vsel %vm1022, %v1008, 0
      %1121 = vmatprep.subr.bf16.mxu0 0
      %1122 = vmatpush1.bf16.xpose.msra.mxu0 0
      %1123 = vmatprep.subr.bf16.mxu0 0
      %1124 = vmatpush1.bf16.xpose.msra.mxu0 0
      %1125 = vmatprep.subr.bf16.mxu0 0
      %1126 = vmatpush1.bf16.xpose.msra.mxu0 0
      %1127 = vmatprep.subr.bf16.mxu0 0
      %1128 = vmatpush1.bf16.xpose.msra.mxu0 0
      %1129 = vmatprep.subr.bf16.mxu0 0
      %1130 = vmatpush1.bf16.xpose.msra.mxu0 0
      %1131 = vmatprep.subr.bf16.mxu0 0
      %1132 = vmatpush1.bf16.xpose.msra.mxu0 0
      %1133 = vmatprep.subr.bf16.mxu0 0
      %1134 = vmatpush1.bf16.xpose.msra.mxu0 0
      %1135 = vmatprep.subr.bf16.mxu0 0
      %1136 = vmatpush1.bf16.xpose.msra.mxu0 %v1119
      %1137 = vmatprep.subr.bf16.mxu0 0
      %1138 = vmatpush2.bf16.xpose.msra.mxu0 0
      %1139 = vmatprep.subr.bf16.mxu0 0
      %1140 = vmatpush2.bf16.xpose.msra.mxu0 0
      %1141 = vmatprep.subr.bf16.mxu0 0
      %1142 = vmatpush2.bf16.xpose.msra.mxu0 0
      %1143 = vmatprep.subr.bf16.mxu0 0
      %1144 = vmatpush2.bf16.xpose.msra.mxu0 0
      %1145 = vmatprep.subr.bf16.mxu0 0
      %1146 = vmatpush2.bf16.xpose.msra.mxu0 0
      %1147 = vmatprep.subr.bf16.mxu0 0
      %1148 = vmatpush2.bf16.xpose.msra.mxu0 0
      %1149 = vmatprep.subr.bf16.mxu0 0
      %1150 = vmatpush2.bf16.xpose.msra.mxu0 0
      %1151 = vmatprep.subr.bf16.mxu0 0
      %1152 = vmatpush2.bf16.xpose.msra.mxu0 0
      %1153 = vmatprep.mubr.bf16.mxu0 0
      %1154 = vmatmul.mubr.bf16.gmra.mxu0 %v1116
      %v1155 = vpop.f32.mrf.mxu0
      %v1156 = vadd.f32 0.0, %v1155
      %v1157 = vpop.f32.mrf.mxu0
      %v1158 = vpop.f32.mrf.mxu0
      %v1159 = vpop.f32.mrf.mxu0
      %1160 = vdwg.mxu0
      %v1162 = vsel %vm1022, %v1001, 0
      %v1165 = vsel %vm1022, %v1009, 0
      %1167 = vmatprep.subr.bf16.mxu0 0
      %1168 = vmatpush1.bf16.xpose.msra.mxu0 0
      %1169 = vmatprep.subr.bf16.mxu0 0
      %1170 = vmatpush1.bf16.xpose.msra.mxu0 0
      %1171 = vmatprep.subr.bf16.mxu0 0
      %1172 = vmatpush1.bf16.xpose.msra.mxu0 0
      %1173 = vmatprep.subr.bf16.mxu0 0
      %1174 = vmatpush1.bf16.xpose.msra.mxu0 0
      %1175 = vmatprep.subr.bf16.mxu0 0
      %1176 = vmatpush1.bf16.xpose.msra.mxu0 0
      %1177 = vmatprep.subr.bf16.mxu0 0
      %1178 = vmatpush1.bf16.xpose.msra.mxu0 0
      %1179 = vmatprep.subr.bf16.mxu0 0
      %1180 = vmatpush1.bf16.xpose.msra.mxu0 0
      %1181 = vmatprep.subr.bf16.mxu0 0
      %1182 = vmatpush1.bf16.xpose.msra.mxu0 %v1165
      %1183 = vmatprep.subr.bf16.mxu0 0
      %1184 = vmatpush2.bf16.xpose.msra.mxu0 0
      %1185 = vmatprep.subr.bf16.mxu0 0
      %1186 = vmatpush2.bf16.xpose.msra.mxu0 0
      %1187 = vmatprep.subr.bf16.mxu0 0
      %1188 = vmatpush2.bf16.xpose.msra.mxu0 0
      %1189 = vmatprep.subr.bf16.mxu0 0
      %1190 = vmatpush2.bf16.xpose.msra.mxu0 0
      %1191 = vmatprep.subr.bf16.mxu0 0
      %1192 = vmatpush2.bf16.xpose.msra.mxu0 0
      %1193 = vmatprep.subr.bf16.mxu0 0
      %1194 = vmatpush2.bf16.xpose.msra.mxu0 0
      %1195 = vmatprep.subr.bf16.mxu0 0
      %1196 = vmatpush2.bf16.xpose.msra.mxu0 0
      %1197 = vmatprep.subr.bf16.mxu0 0
      %1198 = vmatpush2.bf16.xpose.msra.mxu0 0
      %1199 = vmatprep.mubr.bf16.mxu0 0
      %1200 = vmatmul.mubr.bf16.gmra.mxu0 %v1162
      %v1201 = vpop.f32.mrf.mxu0
      %v1202 = vadd.f32 0.0, %v1201
      %v1203 = vpop.f32.mrf.mxu0
      %v1204 = vpop.f32.mrf.mxu0
      %v1205 = vpop.f32.mrf.mxu0
      %1206 = vdwg.mxu0
      %v1208 = vsel %vm1022, %v1002, 0
      %v1211 = vsel %vm1022, %v1010, 0
      %1213 = vmatprep.subr.bf16.mxu0 0
      %1214 = vmatpush1.bf16.xpose.msra.mxu0 0
      %1215 = vmatprep.subr.bf16.mxu0 0
      %1216 = vmatpush1.bf16.xpose.msra.mxu0 0
      %1217 = vmatprep.subr.bf16.mxu0 0
      %1218 = vmatpush1.bf16.xpose.msra.mxu0 0
      %1219 = vmatprep.subr.bf16.mxu0 0
      %1220 = vmatpush1.bf16.xpose.msra.mxu0 0
      %1221 = vmatprep.subr.bf16.mxu0 0
      %1222 = vmatpush1.bf16.xpose.msra.mxu0 0
      %1223 = vmatprep.subr.bf16.mxu0 0
      %1224 = vmatpush1.bf16.xpose.msra.mxu0 0
      %1225 = vmatprep.subr.bf16.mxu0 0
      %1226 = vmatpush1.bf16.xpose.msra.mxu0 0
      %1227 = vmatprep.subr.bf16.mxu0 0
      %1228 = vmatpush1.bf16.xpose.msra.mxu0 %v1211
      %1229 = vmatprep.subr.bf16.mxu0 0
      %1230 = vmatpush2.bf16.xpose.msra.mxu0 0
      %1231 = vmatprep.subr.bf16.mxu0 0
      %1232 = vmatpush2.bf16.xpose.msra.mxu0 0
      %1233 = vmatprep.subr.bf16.mxu0 0
      %1234 = vmatpush2.bf16.xpose.msra.mxu0 0
      %1235 = vmatprep.subr.bf16.mxu0 0
      %1236 = vmatpush2.bf16.xpose.msra.mxu0 0
      %1237 = vmatprep.subr.bf16.mxu0 0
      %1238 = vmatpush2.bf16.xpose.msra.mxu0 0
      %1239 = vmatprep.subr.bf16.mxu0 0
      %1240 = vmatpush2.bf16.xpose.msra.mxu0 0
      %1241 = vmatprep.subr.bf16.mxu0 0
      %1242 = vmatpush2.bf16.xpose.msra.mxu0 0
      %1243 = vmatprep.subr.bf16.mxu0 0
      %1244 = vmatpush2.bf16.xpose.msra.mxu0 0
      %1245 = vmatprep.mubr.bf16.mxu0 0
      %1246 = vmatmul.mubr.bf16.gmra.mxu0 %v1208
      %v1247 = vpop.f32.mrf.mxu0
      %v1248 = vadd.f32 0.0, %v1247
      %v1249 = vpop.f32.mrf.mxu0
      %v1250 = vpop.f32.mrf.mxu0
      %v1251 = vpop.f32.mrf.mxu0
      %1252 = vdwg.mxu0
      %v1254 = vsel %vm1022, %v1003, 0
      %v1257 = vsel %vm1022, %v1011, 0
      %1259 = vmatprep.subr.bf16.mxu0 0
      %1260 = vmatpush1.bf16.xpose.msra.mxu0 0
      %1261 = vmatprep.subr.bf16.mxu0 0
      %1262 = vmatpush1.bf16.xpose.msra.mxu0 0
      %1263 = vmatprep.subr.bf16.mxu0 0
      %1264 = vmatpush1.bf16.xpose.msra.mxu0 0
      %1265 = vmatprep.subr.bf16.mxu0 0
      %1266 = vmatpush1.bf16.xpose.msra.mxu0 0
      %1267 = vmatprep.subr.bf16.mxu0 0
      %1268 = vmatpush1.bf16.xpose.msra.mxu0 0
      %1269 = vmatprep.subr.bf16.mxu0 0
      %1270 = vmatpush1.bf16.xpose.msra.mxu0 0
      %1271 = vmatprep.subr.bf16.mxu0 0
      %1272 = vmatpush1.bf16.xpose.msra.mxu0 0
      %1273 = vmatprep.subr.bf16.mxu0 0
      %1274 = vmatpush1.bf16.xpose.msra.mxu0 %v1257
      %1275 = vmatprep.subr.bf16.mxu0 0
      %1276 = vmatpush2.bf16.xpose.msra.mxu0 0
      %1277 = vmatprep.subr.bf16.mxu0 0
      %1278 = vmatpush2.bf16.xpose.msra.mxu0 0
      %1279 = vmatprep.subr.bf16.mxu0 0
      %1280 = vmatpush2.bf16.xpose.msra.mxu0 0
      %1281 = vmatprep.subr.bf16.mxu0 0
      %1282 = vmatpush2.bf16.xpose.msra.mxu0 0
      %1283 = vmatprep.subr.bf16.mxu0 0
      %1284 = vmatpush2.bf16.xpose.msra.mxu0 0
      %1285 = vmatprep.subr.bf16.mxu0 0
      %1286 = vmatpush2.bf16.xpose.msra.mxu0 0
      %1287 = vmatprep.subr.bf16.mxu0 0
      %1288 = vmatpush2.bf16.xpose.msra.mxu0 0
      %1289 = vmatprep.subr.bf16.mxu0 0
      %1290 = vmatpush2.bf16.xpose.msra.mxu0 0
      %1291 = vmatprep.mubr.bf16.mxu0 0
      %1292 = vmatmul.mubr.bf16.gmra.mxu0 %v1254
      %v1293 = vpop.f32.mrf.mxu0
      %v1294 = vadd.f32 0.0, %v1293
      %v1295 = vpop.f32.mrf.mxu0
      %v1296 = vpop.f32.mrf.mxu0
      %v1297 = vpop.f32.mrf.mxu0
      %1298 = vdwg.mxu0
      %v1300 = vsel %vm1022, %v1004, 0
      %v1303 = vsel %vm1022, %v1012, 0
      %1305 = vmatprep.subr.bf16.mxu0 0
      %1306 = vmatpush1.bf16.xpose.msra.mxu0 0
      %1307 = vmatprep.subr.bf16.mxu0 0
      %1308 = vmatpush1.bf16.xpose.msra.mxu0 0
      %1309 = vmatprep.subr.bf16.mxu0 0
      %1310 = vmatpush1.bf16.xpose.msra.mxu0 0
      %1311 = vmatprep.subr.bf16.mxu0 0
      %1312 = vmatpush1.bf16.xpose.msra.mxu0 0
      %1313 = vmatprep.subr.bf16.mxu0 0
      %1314 = vmatpush1.bf16.xpose.msra.mxu0 0
      %1315 = vmatprep.subr.bf16.mxu0 0
      %1316 = vmatpush1.bf16.xpose.msra.mxu0 0
      %1317 = vmatprep.subr.bf16.mxu0 0
      %1318 = vmatpush1.bf16.xpose.msra.mxu0 0
      %1319 = vmatprep.subr.bf16.mxu0 0
      %1320 = vmatpush1.bf16.xpose.msra.mxu0 %v1303
      %1321 = vmatprep.subr.bf16.mxu0 0
      %1322 = vmatpush2.bf16.xpose.msra.mxu0 0
      %1323 = vmatprep.subr.bf16.mxu0 0
      %1324 = vmatpush2.bf16.xpose.msra.mxu0 0
      %1325 = vmatprep.subr.bf16.mxu0 0
      %1326 = vmatpush2.bf16.xpose.msra.mxu0 0
      %1327 = vmatprep.subr.bf16.mxu0 0
      %1328 = vmatpush2.bf16.xpose.msra.mxu0 0
      %1329 = vmatprep.subr.bf16.mxu0 0
      %1330 = vmatpush2.bf16.xpose.msra.mxu0 0
      %1331 = vmatprep.subr.bf16.mxu0 0
      %1332 = vmatpush2.bf16.xpose.msra.mxu0 0
      %1333 = vmatprep.subr.bf16.mxu0 0
      %1334 = vmatpush2.bf16.xpose.msra.mxu0 0
      %1335 = vmatprep.subr.bf16.mxu0 0
      %1336 = vmatpush2.bf16.xpose.msra.mxu0 0
      %1337 = vmatprep.mubr.bf16.mxu0 0
      %1338 = vmatmul.mubr.bf16.gmra.mxu0 %v1300
      %v1339 = vpop.f32.mrf.mxu0
      %v1340 = vadd.f32 0.0, %v1339
      %v1341 = vpop.f32.mrf.mxu0
      %v1342 = vpop.f32.mrf.mxu0
      %v1343 = vpop.f32.mrf.mxu0
      %1344 = vdwg.mxu0
      %v1346 = vsel %vm1022, %v1005, 0
      %v1349 = vsel %vm1022, %v1013, 0
      %1351 = vmatprep.subr.bf16.mxu0 0
      %1352 = vmatpush1.bf16.xpose.msra.mxu0 0
      %1353 = vmatprep.subr.bf16.mxu0 0
      %1354 = vmatpush1.bf16.xpose.msra.mxu0 0
      %1355 = vmatprep.subr.bf16.mxu0 0
      %1356 = vmatpush1.bf16.xpose.msra.mxu0 0
      %1357 = vmatprep.subr.bf16.mxu0 0
      %1358 = vmatpush1.bf16.xpose.msra.mxu0 0
      %1359 = vmatprep.subr.bf16.mxu0 0
      %1360 = vmatpush1.bf16.xpose.msra.mxu0 0
      %1361 = vmatprep.subr.bf16.mxu0 0
      %1362 = vmatpush1.bf16.xpose.msra.mxu0 0
      %1363 = vmatprep.subr.bf16.mxu0 0
      %1364 = vmatpush1.bf16.xpose.msra.mxu0 0
      %1365 = vmatprep.subr.bf16.mxu0 0
      %1366 = vmatpush1.bf16.xpose.msra.mxu0 %v1349
      %1367 = vmatprep.subr.bf16.mxu0 0
      %1368 = vmatpush2.bf16.xpose.msra.mxu0 0
      %1369 = vmatprep.subr.bf16.mxu0 0
      %1370 = vmatpush2.bf16.xpose.msra.mxu0 0
      %1371 = vmatprep.subr.bf16.mxu0 0
      %1372 = vmatpush2.bf16.xpose.msra.mxu0 0
      %1373 = vmatprep.subr.bf16.mxu0 0
      %1374 = vmatpush2.bf16.xpose.msra.mxu0 0
      %1375 = vmatprep.subr.bf16.mxu0 0
      %1376 = vmatpush2.bf16.xpose.msra.mxu0 0
      %1377 = vmatprep.subr.bf16.mxu0 0
      %1378 = vmatpush2.bf16.xpose.msra.mxu0 0
      %1379 = vmatprep.subr.bf16.mxu0 0
      %1380 = vmatpush2.bf16.xpose.msra.mxu0 0
      %1381 = vmatprep.subr.bf16.mxu0 0
      %1382 = vmatpush2.bf16.xpose.msra.mxu0 0
      %1383 = vmatprep.mubr.bf16.mxu0 0
      %1384 = vmatmul.mubr.bf16.gmra.mxu0 %v1346
      %v1385 = vpop.f32.mrf.mxu0
      %v1386 = vadd.f32 0.0, %v1385
      %v1387 = vpop.f32.mrf.mxu0
      %v1388 = vpop.f32.mrf.mxu0
      %v1389 = vpop.f32.mrf.mxu0
      %1390 = vdwg.mxu0
      %v1391 = vmul.f32 %v1064, 0.25
      %v1392 = vmul.f32 %v1110, 0.25
      %v1393 = vmul.f32 %v1156, 0.25
      %v1394 = vmul.f32 %v1202, 0.25
      %v1395 = vmul.f32 %v1248, 0.25
      %v1396 = vmul.f32 %v1294, 0.25
      %v1397 = vmul.f32 %v1340, 0.25
      %v1398 = vmul.f32 %v1386, 0.25
      %vm1399 = vcmask 27648
      %v1400 = vsel %vm1399, %v1391, -inf
      %v1401 = vrot.slane %v1400, 4
      %v1402 = vmax.f32 %v1400, %v1401
      %v1403 = vrot.slane %v1402, 2
      %v1404 = vmax.f32 %v1402, %v1403
      %v1405 = vrot.slane %v1404, 1
      %v1406 = vmax.f32 %v1404, %v1405
      %v1407 = vsel %vm1399, %v1392, -inf
      %v1408 = vrot.slane %v1407, 4
      %v1409 = vmax.f32 %v1407, %v1408
      %v1410 = vrot.slane %v1409, 2
      %v1411 = vmax.f32 %v1409, %v1410
      %v1412 = vrot.slane %v1411, 1
      %v1413 = vmax.f32 %v1411, %v1412
      %v1414 = vsel %vm1399, %v1393, -inf
      %v1415 = vrot.slane %v1414, 4
      %v1416 = vmax.f32 %v1414, %v1415
      %v1417 = vrot.slane %v1416, 2
      %v1418 = vmax.f32 %v1416, %v1417
      %v1419 = vrot.slane %v1418, 1
      %v1420 = vmax.f32 %v1418, %v1419
      %v1421 = vsel %vm1399, %v1394, -inf
      %v1422 = vrot.slane %v1421, 4
      %v1423 = vmax.f32 %v1421, %v1422
      %v1424 = vrot.slane %v1423, 2
      %v1425 = vmax.f32 %v1423, %v1424
      %v1426 = vrot.slane %v1425, 1
      %v1427 = vmax.f32 %v1425, %v1426
      %v1428 = vsel %vm1399, %v1395, -inf
      %v1429 = vrot.slane %v1428, 4
      %v1430 = vmax.f32 %v1428, %v1429
      %v1431 = vrot.slane %v1430, 2
      %v1432 = vmax.f32 %v1430, %v1431
      %v1433 = vrot.slane %v1432, 1
      %v1434 = vmax.f32 %v1432, %v1433
      %v1435 = vsel %vm1399, %v1396, -inf
      %v1436 = vrot.slane %v1435, 4
      %v1437 = vmax.f32 %v1435, %v1436
      %v1438 = vrot.slane %v1437, 2
      %v1439 = vmax.f32 %v1437, %v1438
      %v1440 = vrot.slane %v1439, 1
      %v1441 = vmax.f32 %v1439, %v1440
      %v1442 = vsel %vm1399, %v1397, -inf
      %v1443 = vrot.slane %v1442, 4
      %v1444 = vmax.f32 %v1442, %v1443
      %v1445 = vrot.slane %v1444, 2
      %v1446 = vmax.f32 %v1444, %v1445
      %v1447 = vrot.slane %v1446, 1
      %v1448 = vmax.f32 %v1446, %v1447
      %v1449 = vsel %vm1399, %v1398, -inf
      %v1450 = vrot.slane %v1449, 4
      %v1451 = vmax.f32 %v1449, %v1450
      %v1452 = vrot.slane %v1451, 2
      %v1453 = vmax.f32 %v1451, %v1452
      %v1454 = vrot.slane %v1453, 1
      %v1455 = vmax.f32 %v1453, %v1454
      %v1456 = vsub.f32 %v1391, %v1406
      %v1457 = vsub.f32 %v1392, %v1413
      %v1458 = vsub.f32 %v1393, %v1420
      %v1459 = vsub.f32 %v1394, %v1427
      %v1460 = vsub.f32 %v1395, %v1434
      %v1461 = vsub.f32 %v1396, %v1441
      %v1462 = vsub.f32 %v1397, %v1448
      %v1463 = vsub.f32 %v1398, %v1455
      %v1464 = vmul.f32 %v1456, 1.442695
      %v1465 = vpow.pop %v1464
      %v1466 = vmul.f32 %v1457, 1.442695
      %v1467 = vpow.pop %v1466
      %v1468 = vmul.f32 %v1458, 1.442695
      %v1469 = vpow.pop %v1468
      %v1470 = vmul.f32 %v1459, 1.442695
      %v1471 = vpow.pop %v1470
      %v1472 = vmul.f32 %v1460, 1.442695
      %v1473 = vpow.pop %v1472
      %v1474 = vmul.f32 %v1461, 1.442695
      %v1475 = vpow.pop %v1474
      %v1476 = vmul.f32 %v1462, 1.442695
      %v1477 = vpow.pop %v1476
      %v1478 = vmul.f32 %v1463, 1.442695
      %v1479 = vpow.pop %v1478
      %v1480 = vsel %vm1399, %v1465, 0.0
      %v1481 = vrot.slane %v1480, 4
      %v1482 = vadd.f32 %v1480, %v1481
      %v1483 = vrot.slane %v1482, 2
      %v1484 = vadd.f32 %v1482, %v1483
      %v1485 = vrot.slane %v1484, 1
      %v1486 = vadd.f32 %v1484, %v1485
      %v1487 = vsel %vm1399, %v1467, 0.0
      %v1488 = vrot.slane %v1487, 4
      %v1489 = vadd.f32 %v1487, %v1488
      %v1490 = vrot.slane %v1489, 2
      %v1491 = vadd.f32 %v1489, %v1490
      %v1492 = vrot.slane %v1491, 1
      %v1493 = vadd.f32 %v1491, %v1492
      %v1494 = vsel %vm1399, %v1469, 0.0
      %v1495 = vrot.slane %v1494, 4
      %v1496 = vadd.f32 %v1494, %v1495
      %v1497 = vrot.slane %v1496, 2
      %v1498 = vadd.f32 %v1496, %v1497
      %v1499 = vrot.slane %v1498, 1
      %v1500 = vadd.f32 %v1498, %v1499
      %v1501 = vsel %vm1399, %v1471, 0.0
      %v1502 = vrot.slane %v1501, 4
      %v1503 = vadd.f32 %v1501, %v1502
      %v1504 = vrot.slane %v1503, 2
      %v1505 = vadd.f32 %v1503, %v1504
      %v1506 = vrot.slane %v1505, 1
      %v1507 = vadd.f32 %v1505, %v1506
      %v1508 = vsel %vm1399, %v1473, 0.0
      %v1509 = vrot.slane %v1508, 4
      %v1510 = vadd.f32 %v1508, %v1509
      %v1511 = vrot.slane %v1510, 2
      %v1512 = vadd.f32 %v1510, %v1511
      %v1513 = vrot.slane %v1512, 1
      %v1514 = vadd.f32 %v1512, %v1513
      %v1515 = vsel %vm1399, %v1475, 0.0
      %v1516 = vrot.slane %v1515, 4
      %v1517 = vadd.f32 %v1515, %v1516
      %v1518 = vrot.slane %v1517, 2
      %v1519 = vadd.f32 %v1517, %v1518
      %v1520 = vrot.slane %v1519, 1
      %v1521 = vadd.f32 %v1519, %v1520
      %v1522 = vsel %vm1399, %v1477, 0.0
      %v1523 = vrot.slane %v1522, 4
      %v1524 = vadd.f32 %v1522, %v1523
      %v1525 = vrot.slane %v1524, 2
      %v1526 = vadd.f32 %v1524, %v1525
      %v1527 = vrot.slane %v1526, 1
      %v1528 = vadd.f32 %v1526, %v1527
      %v1529 = vsel %vm1399, %v1479, 0.0
      %v1530 = vrot.slane %v1529, 4
      %v1531 = vadd.f32 %v1529, %v1530
      %v1532 = vrot.slane %v1531, 2
      %v1533 = vadd.f32 %v1531, %v1532
      %v1534 = vrot.slane %v1533, 1
      %v1535 = vadd.f32 %v1533, %v1534
      %v1536 = vrcp.pop %v1486
      %v1537 = vrcp.pop %v1493
      %v1538 = vrcp.pop %v1500
      %v1539 = vrcp.pop %v1507
      %v1540 = vrcp.pop %v1514
      %v1541 = vrcp.pop %v1521
      %v1542 = vrcp.pop %v1528
      %v1543 = vrcp.pop %v1535
      %v1544 = vmul.f32 %v1486, %v1536
      %v1545 = vmul.f32 %v1493, %v1537
      %v1546 = vmul.f32 %v1500, %v1538
      %v1547 = vmul.f32 %v1507, %v1539
      %v1548 = vmul.f32 %v1514, %v1540
      %v1549 = vmul.f32 %v1521, %v1541
      %v1550 = vmul.f32 %v1528, %v1542
      %v1551 = vmul.f32 %v1535, %v1543
      %v1552 = vsub.f32 2.0, %v1544
      %v1553 = vsub.f32 2.0, %v1545
      %v1554 = vsub.f32 2.0, %v1546
      %v1555 = vsub.f32 2.0, %v1547
      %v1556 = vsub.f32 2.0, %v1548
      %v1557 = vsub.f32 2.0, %v1549
      %v1558 = vsub.f32 2.0, %v1550
      %v1559 = vsub.f32 2.0, %v1551
      %v1560 = vmul.f32 %v1536, %v1552
      %v1561 = vmul.f32 %v1537, %v1553
      %v1562 = vmul.f32 %v1538, %v1554
      %v1563 = vmul.f32 %v1539, %v1555
      %v1564 = vmul.f32 %v1540, %v1556
      %v1565 = vmul.f32 %v1541, %v1557
      %v1566 = vmul.f32 %v1542, %v1558
      %v1567 = vmul.f32 %v1543, %v1559
      %v1568 = vmul.f32 %v1465, %v1560
      %v1569 = vmul.f32 %v1467, %v1561
      %v1570 = vmul.f32 %v1469, %v1562
      %v1571 = vmul.f32 %v1471, %v1563
      %v1572 = vmul.f32 %v1473, %v1564
      %v1573 = vmul.f32 %v1475, %v1565
      %v1574 = vmul.f32 %v1477, %v1566
      %v1575 = vmul.f32 %v1479, %v1567
      %v1576 = vpack.c.bf16 %v1568, %v1568
      %v1577 = vpack.c.bf16 %v1569, %v1569
      %v1578 = vpack.c.bf16 %v1570, %v1570
      %v1579 = vpack.c.bf16 %v1571, %v1571
      %v1580 = vpack.c.bf16 %v1572, %v1572
      %v1581 = vpack.c.bf16 %v1573, %v1573
      %v1582 = vpack.c.bf16 %v1574, %v1574
      %v1583 = vpack.c.bf16 %v1575, %v1575
      %vm1584 = vcmask 31744
      %v1586 = vsel %vm1584, %v1576, 0
      %vm1588 = vcmask 1041408
      %v1590 = vsel %vm1588, %v1014, 0
      %1592 = vmatprep.subr.bf16.mxu0 0
      %1593 = vmatpush1.bf16.msra.mxu0 0
      %1594 = vmatprep.subr.bf16.mxu0 0
      %1595 = vmatpush1.bf16.msra.mxu0 0
      %1596 = vmatprep.subr.bf16.mxu0 0
      %1597 = vmatpush1.bf16.msra.mxu0 0
      %1598 = vmatprep.subr.bf16.mxu0 0
      %1599 = vmatpush1.bf16.msra.mxu0 0
      %1600 = vmatprep.subr.bf16.mxu0 0
      %1601 = vmatpush1.bf16.msra.mxu0 0
      %1602 = vmatprep.subr.bf16.mxu0 0
      %1603 = vmatpush1.bf16.msra.mxu0 0
      %1604 = vmatprep.subr.bf16.mxu0 0
      %1605 = vmatpush1.bf16.msra.mxu0 0
      %1606 = vmatprep.subr.bf16.mxu0 0
      %1607 = vmatpush1.bf16.msra.mxu0 %v1590
      %1608 = vmatprep.subr.bf16.mxu0 0
      %1609 = vmatpush2.bf16.msra.mxu0 0
      %1610 = vmatprep.subr.bf16.mxu0 0
      %1611 = vmatpush2.bf16.msra.mxu0 0
      %1612 = vmatprep.subr.bf16.mxu0 0
      %1613 = vmatpush2.bf16.msra.mxu0 0
      %1614 = vmatprep.subr.bf16.mxu0 0
      %1615 = vmatpush2.bf16.msra.mxu0 0
      %1616 = vmatprep.subr.bf16.mxu0 0
      %1617 = vmatpush2.bf16.msra.mxu0 0
      %1618 = vmatprep.subr.bf16.mxu0 0
      %1619 = vmatpush2.bf16.msra.mxu0 0
      %1620 = vmatprep.subr.bf16.mxu0 0
      %1621 = vmatpush2.bf16.msra.mxu0 0
      %1622 = vmatprep.subr.bf16.mxu0 0
      %1623 = vmatpush2.bf16.msra.mxu0 0
      %1624 = vmatprep.mubr.bf16.mxu0 0
      %1625 = vmatmul.mubr.bf16.gmra.mxu0 %v1586
      %v1626 = vpop.f32.mrf.mxu0
      %v1627 = vadd.f32 0.0, %v1626
      %v1628 = vpop.f32.mrf.mxu0
      %v1629 = vpop.f32.mrf.mxu0
      %v1630 = vpop.f32.mrf.mxu0
      %1631 = vdwg.mxu0
      %v1633 = vsel %vm1584, %v1577, 0
      %v1636 = vsel %vm1588, %v1015, 0
      %1638 = vmatprep.subr.bf16.mxu0 0
      %1639 = vmatpush1.bf16.msra.mxu0 0
      %1640 = vmatprep.subr.bf16.mxu0 0
      %1641 = vmatpush1.bf16.msra.mxu0 0
      %1642 = vmatprep.subr.bf16.mxu0 0
      %1643 = vmatpush1.bf16.msra.mxu0 0
      %1644 = vmatprep.subr.bf16.mxu0 0
      %1645 = vmatpush1.bf16.msra.mxu0 0
      %1646 = vmatprep.subr.bf16.mxu0 0
      %1647 = vmatpush1.bf16.msra.mxu0 0
      %1648 = vmatprep.subr.bf16.mxu0 0
      %1649 = vmatpush1.bf16.msra.mxu0 0
      %1650 = vmatprep.subr.bf16.mxu0 0
      %1651 = vmatpush1.bf16.msra.mxu0 0
      %1652 = vmatprep.subr.bf16.mxu0 0
      %1653 = vmatpush1.bf16.msra.mxu0 %v1636
      %1654 = vmatprep.subr.bf16.mxu0 0
      %1655 = vmatpush2.bf16.msra.mxu0 0
      %1656 = vmatprep.subr.bf16.mxu0 0
      %1657 = vmatpush2.bf16.msra.mxu0 0
      %1658 = vmatprep.subr.bf16.mxu0 0
      %1659 = vmatpush2.bf16.msra.mxu0 0
      %1660 = vmatprep.subr.bf16.mxu0 0
      %1661 = vmatpush2.bf16.msra.mxu0 0
      %1662 = vmatprep.subr.bf16.mxu0 0
      %1663 = vmatpush2.bf16.msra.mxu0 0
      %1664 = vmatprep.subr.bf16.mxu0 0
      %1665 = vmatpush2.bf16.msra.mxu0 0
      %1666 = vmatprep.subr.bf16.mxu0 0
      %1667 = vmatpush2.bf16.msra.mxu0 0
      %1668 = vmatprep.subr.bf16.mxu0 0
      %1669 = vmatpush2.bf16.msra.mxu0 0
      %1670 = vmatprep.mubr.bf16.mxu0 0
      %1671 = vmatmul.mubr.bf16.gmra.mxu0 %v1633
      %v1672 = vpop.f32.mrf.mxu0
      %v1673 = vadd.f32 0.0, %v1672
      %v1674 = vpop.f32.mrf.mxu0
      %v1675 = vpop.f32.mrf.mxu0
      %v1676 = vpop.f32.mrf.mxu0
      %1677 = vdwg.mxu0
      %v1679 = vsel %vm1584, %v1578, 0
      %v1682 = vsel %vm1588, %v1016, 0
      %1684 = vmatprep.subr.bf16.mxu0 0
      %1685 = vmatpush1.bf16.msra.mxu0 0
      %1686 = vmatprep.subr.bf16.mxu0 0
      %1687 = vmatpush1.bf16.msra.mxu0 0
      %1688 = vmatprep.subr.bf16.mxu0 0
      %1689 = vmatpush1.bf16.msra.mxu0 0
      %1690 = vmatprep.subr.bf16.mxu0 0
      %1691 = vmatpush1.bf16.msra.mxu0 0
      %1692 = vmatprep.subr.bf16.mxu0 0
      %1693 = vmatpush1.bf16.msra.mxu0 0
      %1694 = vmatprep.subr.bf16.mxu0 0
      %1695 = vmatpush1.bf16.msra.mxu0 0
      %1696 = vmatprep.subr.bf16.mxu0 0
      %1697 = vmatpush1.bf16.msra.mxu0 0
      %1698 = vmatprep.subr.bf16.mxu0 0
      %1699 = vmatpush1.bf16.msra.mxu0 %v1682
      %1700 = vmatprep.subr.bf16.mxu0 0
      %1701 = vmatpush2.bf16.msra.mxu0 0
      %1702 = vmatprep.subr.bf16.mxu0 0
      %1703 = vmatpush2.bf16.msra.mxu0 0
      %1704 = vmatprep.subr.bf16.mxu0 0
      %1705 = vmatpush2.bf16.msra.mxu0 0
      %1706 = vmatprep.subr.bf16.mxu0 0
      %1707 = vmatpush2.bf16.msra.mxu0 0
      %1708 = vmatprep.subr.bf16.mxu0 0
      %1709 = vmatpush2.bf16.msra.mxu0 0
      %1710 = vmatprep.subr.bf16.mxu0 0
      %1711 = vmatpush2.bf16.msra.mxu0 0
      %1712 = vmatprep.subr.bf16.mxu0 0
      %1713 = vmatpush2.bf16.msra.mxu0 0
      %1714 = vmatprep.subr.bf16.mxu0 0
      %1715 = vmatpush2.bf16.msra.mxu0 0
      %1716 = vmatprep.mubr.bf16.mxu0 0
      %1717 = vmatmul.mubr.bf16.gmra.mxu0 %v1679
      %v1718 = vpop.f32.mrf.mxu0
      %v1719 = vadd.f32 0.0, %v1718
      %v1720 = vpop.f32.mrf.mxu0
      %v1721 = vpop.f32.mrf.mxu0
      %v1722 = vpop.f32.mrf.mxu0
      %1723 = vdwg.mxu0
      %v1725 = vsel %vm1584, %v1579, 0
      %v1728 = vsel %vm1588, %v1017, 0
      %1730 = vmatprep.subr.bf16.mxu0 0
      %1731 = vmatpush1.bf16.msra.mxu0 0
      %1732 = vmatprep.subr.bf16.mxu0 0
      %1733 = vmatpush1.bf16.msra.mxu0 0
      %1734 = vmatprep.subr.bf16.mxu0 0
      %1735 = vmatpush1.bf16.msra.mxu0 0
      %1736 = vmatprep.subr.bf16.mxu0 0
      %1737 = vmatpush1.bf16.msra.mxu0 0
      %1738 = vmatprep.subr.bf16.mxu0 0
      %1739 = vmatpush1.bf16.msra.mxu0 0
      %1740 = vmatprep.subr.bf16.mxu0 0
      %1741 = vmatpush1.bf16.msra.mxu0 0
      %1742 = vmatprep.subr.bf16.mxu0 0
      %1743 = vmatpush1.bf16.msra.mxu0 0
      %1744 = vmatprep.subr.bf16.mxu0 0
      %1745 = vmatpush1.bf16.msra.mxu0 %v1728
      %1746 = vmatprep.subr.bf16.mxu0 0
      %1747 = vmatpush2.bf16.msra.mxu0 0
      %1748 = vmatprep.subr.bf16.mxu0 0
      %1749 = vmatpush2.bf16.msra.mxu0 0
      %1750 = vmatprep.subr.bf16.mxu0 0
      %1751 = vmatpush2.bf16.msra.mxu0 0
      %1752 = vmatprep.subr.bf16.mxu0 0
      %1753 = vmatpush2.bf16.msra.mxu0 0
      %1754 = vmatprep.subr.bf16.mxu0 0
      %1755 = vmatpush2.bf16.msra.mxu0 0
      %1756 = vmatprep.subr.bf16.mxu0 0
      %1757 = vmatpush2.bf16.msra.mxu0 0
      %1758 = vmatprep.subr.bf16.mxu0 0
      %1759 = vmatpush2.bf16.msra.mxu0 0
      %1760 = vmatprep.subr.bf16.mxu0 0
      %1761 = vmatpush2.bf16.msra.mxu0 0
      %1762 = vmatprep.mubr.bf16.mxu0 0
      %1763 = vmatmul.mubr.bf16.gmra.mxu0 %v1725
      %v1764 = vpop.f32.mrf.mxu0
      %v1765 = vadd.f32 0.0, %v1764
      %v1766 = vpop.f32.mrf.mxu0
      %v1767 = vpop.f32.mrf.mxu0
      %v1768 = vpop.f32.mrf.mxu0
      %1769 = vdwg.mxu0
      %v1771 = vsel %vm1584, %v1580, 0
      %v1774 = vsel %vm1588, %v1018, 0
      %1776 = vmatprep.subr.bf16.mxu0 0
      %1777 = vmatpush1.bf16.msra.mxu0 0
      %1778 = vmatprep.subr.bf16.mxu0 0
      %1779 = vmatpush1.bf16.msra.mxu0 0
      %1780 = vmatprep.subr.bf16.mxu0 0
      %1781 = vmatpush1.bf16.msra.mxu0 0
      %1782 = vmatprep.subr.bf16.mxu0 0
      %1783 = vmatpush1.bf16.msra.mxu0 0
      %1784 = vmatprep.subr.bf16.mxu0 0
      %1785 = vmatpush1.bf16.msra.mxu0 0
      %1786 = vmatprep.subr.bf16.mxu0 0
      %1787 = vmatpush1.bf16.msra.mxu0 0
      %1788 = vmatprep.subr.bf16.mxu0 0
      %1789 = vmatpush1.bf16.msra.mxu0 0
      %1790 = vmatprep.subr.bf16.mxu0 0
      %1791 = vmatpush1.bf16.msra.mxu0 %v1774
      %1792 = vmatprep.subr.bf16.mxu0 0
      %1793 = vmatpush2.bf16.msra.mxu0 0
      %1794 = vmatprep.subr.bf16.mxu0 0
      %1795 = vmatpush2.bf16.msra.mxu0 0
      %1796 = vmatprep.subr.bf16.mxu0 0
      %1797 = vmatpush2.bf16.msra.mxu0 0
      %1798 = vmatprep.subr.bf16.mxu0 0
      %1799 = vmatpush2.bf16.msra.mxu0 0
      %1800 = vmatprep.subr.bf16.mxu0 0
      %1801 = vmatpush2.bf16.msra.mxu0 0
      %1802 = vmatprep.subr.bf16.mxu0 0
      %1803 = vmatpush2.bf16.msra.mxu0 0
      %1804 = vmatprep.subr.bf16.mxu0 0
      %1805 = vmatpush2.bf16.msra.mxu0 0
      %1806 = vmatprep.subr.bf16.mxu0 0
      %1807 = vmatpush2.bf16.msra.mxu0 0
      %1808 = vmatprep.mubr.bf16.mxu0 0
      %1809 = vmatmul.mubr.bf16.gmra.mxu0 %v1771
      %v1810 = vpop.f32.mrf.mxu0
      %v1811 = vadd.f32 0.0, %v1810
      %v1812 = vpop.f32.mrf.mxu0
      %v1813 = vpop.f32.mrf.mxu0
      %v1814 = vpop.f32.mrf.mxu0
      %1815 = vdwg.mxu0
      %v1817 = vsel %vm1584, %v1581, 0
      %v1820 = vsel %vm1588, %v1019, 0
      %1822 = vmatprep.subr.bf16.mxu0 0
      %1823 = vmatpush1.bf16.msra.mxu0 0
      %1824 = vmatprep.subr.bf16.mxu0 0
      %1825 = vmatpush1.bf16.msra.mxu0 0
      %1826 = vmatprep.subr.bf16.mxu0 0
      %1827 = vmatpush1.bf16.msra.mxu0 0
      %1828 = vmatprep.subr.bf16.mxu0 0
      %1829 = vmatpush1.bf16.msra.mxu0 0
      %1830 = vmatprep.subr.bf16.mxu0 0
      %1831 = vmatpush1.bf16.msra.mxu0 0
      %1832 = vmatprep.subr.bf16.mxu0 0
      %1833 = vmatpush1.bf16.msra.mxu0 0
      %1834 = vmatprep.subr.bf16.mxu0 0
      %1835 = vmatpush1.bf16.msra.mxu0 0
      %1836 = vmatprep.subr.bf16.mxu0 0
      %1837 = vmatpush1.bf16.msra.mxu0 %v1820
      %1838 = vmatprep.subr.bf16.mxu0 0
      %1839 = vmatpush2.bf16.msra.mxu0 0
      %1840 = vmatprep.subr.bf16.mxu0 0
      %1841 = vmatpush2.bf16.msra.mxu0 0
      %1842 = vmatprep.subr.bf16.mxu0 0
      %1843 = vmatpush2.bf16.msra.mxu0 0
      %1844 = vmatprep.subr.bf16.mxu0 0
      %1845 = vmatpush2.bf16.msra.mxu0 0
      %1846 = vmatprep.subr.bf16.mxu0 0
      %1847 = vmatpush2.bf16.msra.mxu0 0
      %1848 = vmatprep.subr.bf16.mxu0 0
      %1849 = vmatpush2.bf16.msra.mxu0 0
      %1850 = vmatprep.subr.bf16.mxu0 0
      %1851 = vmatpush2.bf16.msra.mxu0 0
      %1852 = vmatprep.subr.bf16.mxu0 0
      %1853 = vmatpush2.bf16.msra.mxu0 0
      %1854 = vmatprep.mubr.bf16.mxu0 0
      %1855 = vmatmul.mubr.bf16.gmra.mxu0 %v1817
      %v1856 = vpop.f32.mrf.mxu0
      %v1857 = vadd.f32 0.0, %v1856
      %v1858 = vpop.f32.mrf.mxu0
      %v1859 = vpop.f32.mrf.mxu0
      %v1860 = vpop.f32.mrf.mxu0
      %1861 = vdwg.mxu0
      %v1863 = vsel %vm1584, %v1582, 0
      %v1866 = vsel %vm1588, %v1020, 0
      %1868 = vmatprep.subr.bf16.mxu0 0
      %1869 = vmatpush1.bf16.msra.mxu0 0
      %1870 = vmatprep.subr.bf16.mxu0 0
      %1871 = vmatpush1.bf16.msra.mxu0 0
      %1872 = vmatprep.subr.bf16.mxu0 0
      %1873 = vmatpush1.bf16.msra.mxu0 0
      %1874 = vmatprep.subr.bf16.mxu0 0
      %1875 = vmatpush1.bf16.msra.mxu0 0
      %1876 = vmatprep.subr.bf16.mxu0 0
      %1877 = vmatpush1.bf16.msra.mxu0 0
      %1878 = vmatprep.subr.bf16.mxu0 0
      %1879 = vmatpush1.bf16.msra.mxu0 0
      %1880 = vmatprep.subr.bf16.mxu0 0
      %1881 = vmatpush1.bf16.msra.mxu0 0
      %1882 = vmatprep.subr.bf16.mxu0 0
      %1883 = vmatpush1.bf16.msra.mxu0 %v1866
      %1884 = vmatprep.subr.bf16.mxu0 0
      %1885 = vmatpush2.bf16.msra.mxu0 0
      %1886 = vmatprep.subr.bf16.mxu0 0
      %1887 = vmatpush2.bf16.msra.mxu0 0
      %1888 = vmatprep.subr.bf16.mxu0 0
      %1889 = vmatpush2.bf16.msra.mxu0 0
      %1890 = vmatprep.subr.bf16.mxu0 0
      %1891 = vmatpush2.bf16.msra.mxu0 0
      %1892 = vmatprep.subr.bf16.mxu0 0
      %1893 = vmatpush2.bf16.msra.mxu0 0
      %1894 = vmatprep.subr.bf16.mxu0 0
      %1895 = vmatpush2.bf16.msra.mxu0 0
      %1896 = vmatprep.subr.bf16.mxu0 0
      %1897 = vmatpush2.bf16.msra.mxu0 0
      %1898 = vmatprep.subr.bf16.mxu0 0
      %1899 = vmatpush2.bf16.msra.mxu0 0
      %1900 = vmatprep.mubr.bf16.mxu0 0
      %1901 = vmatmul.mubr.bf16.gmra.mxu0 %v1863
      %v1902 = vpop.f32.mrf.mxu0
      %v1903 = vadd.f32 0.0, %v1902
      %v1904 = vpop.f32.mrf.mxu0
      %v1905 = vpop.f32.mrf.mxu0
      %v1906 = vpop.f32.mrf.mxu0
      %1907 = vdwg.mxu0
      %v1909 = vsel %vm1584, %v1583, 0
      %v1912 = vsel %vm1588, %v1021, 0
      %1914 = vmatprep.subr.bf16.mxu0 0
      %1915 = vmatpush1.bf16.msra.mxu0 0
      %1916 = vmatprep.subr.bf16.mxu0 0
      %1917 = vmatpush1.bf16.msra.mxu0 0
      %1918 = vmatprep.subr.bf16.mxu0 0
      %1919 = vmatpush1.bf16.msra.mxu0 0
      %1920 = vmatprep.subr.bf16.mxu0 0
      %1921 = vmatpush1.bf16.msra.mxu0 0
      %1922 = vmatprep.subr.bf16.mxu0 0
      %1923 = vmatpush1.bf16.msra.mxu0 0
      %1924 = vmatprep.subr.bf16.mxu0 0
      %1925 = vmatpush1.bf16.msra.mxu0 0
      %1926 = vmatprep.subr.bf16.mxu0 0
      %1927 = vmatpush1.bf16.msra.mxu0 0
      %1928 = vmatprep.subr.bf16.mxu0 0
      %1929 = vmatpush1.bf16.msra.mxu0 %v1912
      %1930 = vmatprep.subr.bf16.mxu0 0
      %1931 = vmatpush2.bf16.msra.mxu0 0
      %1932 = vmatprep.subr.bf16.mxu0 0
      %1933 = vmatpush2.bf16.msra.mxu0 0
      %1934 = vmatprep.subr.bf16.mxu0 0
      %1935 = vmatpush2.bf16.msra.mxu0 0
      %1936 = vmatprep.subr.bf16.mxu0 0
      %1937 = vmatpush2.bf16.msra.mxu0 0
      %1938 = vmatprep.subr.bf16.mxu0 0
      %1939 = vmatpush2.bf16.msra.mxu0 0
      %1940 = vmatprep.subr.bf16.mxu0 0
      %1941 = vmatpush2.bf16.msra.mxu0 0
      %1942 = vmatprep.subr.bf16.mxu0 0
      %1943 = vmatpush2.bf16.msra.mxu0 0
      %1944 = vmatprep.subr.bf16.mxu0 0
      %1945 = vmatpush2.bf16.msra.mxu0 0
      %1946 = vmatprep.mubr.bf16.mxu0 0
      %1947 = vmatmul.mubr.bf16.gmra.mxu0 %v1909
      %v1948 = vpop.f32.mrf.mxu0
      %v1949 = vadd.f32 0.0, %v1948
      %v1950 = vpop.f32.mrf.mxu0
      %v1951 = vpop.f32.mrf.mxu0
      %v1952 = vpop.f32.mrf.mxu0
      %1953 = vdwg.mxu0
      %v1958 = vcombine.low %v1627, %v1673
      %v1959 = vcombine.low %v1719, %v1765
      %v1962 = vpack.c.bf16 %v1959, %v1958
      %v1963 = vld [vmem:[%s9] sm:$0xf]
      %v1964 = vld [vmem:[%s9 + $0x4] sm:$0xf]
      %v1969 = vcombine.low %v1811, %v1857
      %v1970 = vcombine.low %v1903, %v1949
      %v1973 = vpack.c.bf16 %v1970, %v1969
      %s1974 = scalar_lea.vmem %s9, 8
      %v1975 = vld [vmem:[%s1974] sm:$0xf]
      %v1976 = vld [vmem:[%s1974 + $0x4] sm:$0xf]
      %v1979 = vunpack.c.l.b16 %v1975
      %v1980 = vunpack.c.l.b16 %v1976
      %v1981 = vpack.c.b16 %v1980, %v1979
      %v1984 = vsel %vm1022, %v1973, 0
      %1986 = vmatprep.subr.bf16.mxu0 0
      %1987 = vmatpush1.bf16.msra.mxu0 0
      %1988 = vmatprep.subr.bf16.mxu0 0
      %1989 = vmatpush1.bf16.msra.mxu0 0
      %1990 = vmatprep.subr.bf16.mxu0 0
      %1991 = vmatpush1.bf16.msra.mxu0 0
      %1992 = vmatprep.subr.bf16.mxu0 0
      %1993 = vmatpush1.bf16.msra.mxu0 0
      %1994 = vmatprep.subr.bf16.mxu0 0
      %1995 = vmatpush1.bf16.msra.mxu0 0
      %1996 = vmatprep.subr.bf16.mxu0 0
      %1997 = vmatpush1.bf16.msra.mxu0 0
      %1998 = vmatprep.subr.bf16.mxu0 0
      %1999 = vmatpush1.bf16.msra.mxu0 0
      %2000 = vmatprep.subr.bf16.mxu0 0
      %2001 = vmatpush1.bf16.msra.mxu0 %v1981
      %2002 = vmatprep.subr.bf16.mxu0 0
      %2003 = vmatpush2.bf16.msra.mxu0 0
      %2004 = vmatprep.subr.bf16.mxu0 0
      %2005 = vmatpush2.bf16.msra.mxu0 0
      %2006 = vmatprep.subr.bf16.mxu0 0
      %2007 = vmatpush2.bf16.msra.mxu0 0
      %2008 = vmatprep.subr.bf16.mxu0 0
      %2009 = vmatpush2.bf16.msra.mxu0 0
      %2010 = vmatprep.subr.bf16.mxu0 0
      %2011 = vmatpush2.bf16.msra.mxu0 0
      %2012 = vmatprep.subr.bf16.mxu0 0
      %2013 = vmatpush2.bf16.msra.mxu0 0
      %2014 = vmatprep.subr.bf16.mxu0 0
      %2015 = vmatpush2.bf16.msra.mxu0 0
      %2016 = vmatprep.subr.bf16.mxu0 0
      %2017 = vmatpush2.bf16.msra.mxu0 0
      %2018 = vmatprep.mubr.bf16.mxu0 0
      %2019 = vmatmul.mubr.bf16.gmra.mxu0 %v1984
      %v2020 = vpop.f32.mrf.mxu0
      %v2021 = vadd.f32 0.0, %v2020
      %v2022 = vpop.f32.mrf.mxu0
      %v2023 = vpop.f32.mrf.mxu0
      %v2024 = vadd.f32 0.0, %v2023
      %v2025 = vpop.f32.mrf.mxu0
      %2026 = vdwg.mxu0
      %v2029 = vunpack.c.l.b16 %v1963
      %v2030 = vunpack.c.l.b16 %v1964
      %v2031 = vpack.c.b16 %v2030, %v2029
      %v2034 = vsel %vm1022, %v1962, 0
      %2036 = vmatprep.subr.bf16.mxu0 0
      %2037 = vmatpush1.bf16.msra.mxu0 0
      %2038 = vmatprep.subr.bf16.mxu0 0
      %2039 = vmatpush1.bf16.msra.mxu0 0
      %2040 = vmatprep.subr.bf16.mxu0 0
      %2041 = vmatpush1.bf16.msra.mxu0 0
      %2042 = vmatprep.subr.bf16.mxu0 0
      %2043 = vmatpush1.bf16.msra.mxu0 0
      %2044 = vmatprep.subr.bf16.mxu0 0
      %2045 = vmatpush1.bf16.msra.mxu0 0
      %2046 = vmatprep.subr.bf16.mxu0 0
      %2047 = vmatpush1.bf16.msra.mxu0 0
      %2048 = vmatprep.subr.bf16.mxu0 0
      %2049 = vmatpush1.bf16.msra.mxu0 0
      %2050 = vmatprep.subr.bf16.mxu0 0
      %2051 = vmatpush1.bf16.msra.mxu0 %v2031
      %2052 = vmatprep.subr.bf16.mxu0 0
      %2053 = vmatpush2.bf16.msra.mxu0 0
      %2054 = vmatprep.subr.bf16.mxu0 0
      %2055 = vmatpush2.bf16.msra.mxu0 0
      %2056 = vmatprep.subr.bf16.mxu0 0
      %2057 = vmatpush2.bf16.msra.mxu0 0
      %2058 = vmatprep.subr.bf16.mxu0 0
      %2059 = vmatpush2.bf16.msra.mxu0 0
      %2060 = vmatprep.subr.bf16.mxu0 0
      %2061 = vmatpush2.bf16.msra.mxu0 0
      %2062 = vmatprep.subr.bf16.mxu0 0
      %2063 = vmatpush2.bf16.msra.mxu0 0
      %2064 = vmatprep.subr.bf16.mxu0 0
      %2065 = vmatpush2.bf16.msra.mxu0 0
      %2066 = vmatprep.subr.bf16.mxu0 0
      %2067 = vmatpush2.bf16.msra.mxu0 0
      %2068 = vmatprep.mubr.bf16.mxu0 0
      %2069 = vmatmul.mubr.bf16.gmra.mxu0 %v2034
      %v2070 = vpop.f32.mrf.mxu0
      %v2071 = vadd.f32 %v2021, %v2070
      %v2072 = vpop.f32.mrf.mxu0
      %v2073 = vpop.f32.mrf.mxu0
      %v2074 = vadd.f32 %v2024, %v2073
      %v2075 = vpop.f32.mrf.mxu0
      %2076 = vdwg.mxu0
      %v2077 = vld [vmem:[%s10] sm:$0x1]
      %v2079 = vlaneseq
      %v2080 = vshrl.u32 %v2079, 7
      %v2081 = vsub.s32 0, %v2080
      %v2082 = vrot.slane %v2077, %v2081
      %v2084 = vadd.f32 %v2071, %v2082
      %v2085 = vadd.f32 %v2074, %v2082
      %v2086 = vand.u32 2147483647, %v2084
      %v2087 = vand.u32 2147483647, %v2085
      %v2088 = vsub.f32 0.0, %v2086
      %v2089 = vsub.f32 0.0, %v2087
      %v2090 = vmul.f32 %v2088, 1.442695
      %v2091 = vpow.pop %v2090
      %v2092 = vmul.f32 %v2089, 1.442695
      %v2093 = vpow.pop %v2092
      %v2094 = vmul.f32 %v2091, %v2091
      %v2095 = vmul.f32 %v2093, %v2093
      %vm2096 = vcmp.ge.f32.partialorder %v2084, 0.0
      %vm2097 = vcmp.ge.f32.partialorder %v2085, 0.0
      %v2098 = vmul.f32 %v2091, 2.0
      %v2099 = vmul.f32 %v2093, 2.0
      %v2100 = vadd.f32 %v2098, 1.0
      %v2101 = vadd.f32 %v2099, 1.0
      %v2102 = vadd.f32 %v2098, %v2094
      %v2103 = vadd.f32 %v2099, %v2095
      %v2104 = vsel %vm2096, %v2100, %v2102
      %v2105 = vsel %vm2097, %v2101, %v2103
      %v2106 = vmul.f32 %v2094, 2.0
      %v2107 = vmul.f32 %v2095, 2.0
      %v2108 = vadd.f32 %v2100, %v2106
      %v2109 = vadd.f32 %v2101, %v2107
      %v2110 = vadd.f32 %v2098, 2.0
      %v2111 = vadd.f32 %v2099, 2.0
      %v2112 = vadd.f32 %v2110, %v2094
      %v2113 = vadd.f32 %v2111, %v2095
      %v2114 = vsel %vm2096, %v2108, %v2112
      %v2115 = vsel %vm2097, %v2109, %v2113
      %v2116 = vrcp.pop %v2114
      %v2117 = vrcp.pop %v2115
      %v2118 = vmul.f32 %v2114, %v2116
      %v2119 = vmul.f32 %v2115, %v2117
      %v2120 = vsub.f32 2.0, %v2118
      %v2121 = vsub.f32 2.0, %v2119
      %v2122 = vmul.f32 %v2116, %v2120
      %v2123 = vmul.f32 %v2117, %v2121
      %v2124 = vmul.f32 %v2084, %v2104
      %v2125 = vmul.f32 %v2085, %v2105
      %v2126 = vmul.f32 %v2124, %v2122
      %v2127 = vmul.f32 %v2125, %v2123
      %v2128 = vpack.c.bf16 %v2127, %v2126
      %v2129 = vld [vmem:[%s11] sm:$0xf]
      %v2130 = vld [vmem:[%s11 + $0x4] sm:$0xf]
      %v2131 = vld [vmem:[%s11 + $0x8] sm:$0xf]
      %v2132 = vld [vmem:[%s11 + $0xc] sm:$0xf]
      %v2133 = vld [vmem:[%s12] sm:$0x1]
      %v2135 = vlaneseq
      %v2136 = vshrl.u32 %v2135, 7
      %v2137 = vsub.s32 0, %v2136
      %v2138 = vrot.slane %v2133, %v2137
      %v2144 = vunpack.c.l.b16 %v2129
      %v2145 = vunpack.c.l.b16 %v2130
      %v2146 = vunpack.c.l.b16 %v2131
      %v2147 = vunpack.c.l.b16 %v2132
      %v2148 = vpack.c.b16 %v2145, %v2144
      %v2149 = vpack.c.b16 %v2147, %v2146
      %v2153 = vsel %vm481, %v2128, 0
      %2155 = vmatprep.subr.bf16.mxu0 0
      %2156 = vmatpush1.bf16.msra.mxu0 0
      %2157 = vmatprep.subr.bf16.mxu0 0
      %2158 = vmatpush1.bf16.msra.mxu0 0
      %2159 = vmatprep.subr.bf16.mxu0 0
      %2160 = vmatpush1.bf16.msra.mxu0 0
      %2161 = vmatprep.subr.bf16.mxu0 0
      %2162 = vmatpush1.bf16.msra.mxu0 0
      %2163 = vmatprep.subr.bf16.mxu0 0
      %2164 = vmatpush1.bf16.msra.mxu0 0
      %2165 = vmatprep.subr.bf16.mxu0 0
      %2166 = vmatpush1.bf16.msra.mxu0 0
      %2167 = vmatprep.subr.bf16.mxu0 0
      %2168 = vmatpush1.bf16.msra.mxu0 %v2149
      %2169 = vmatprep.subr.bf16.mxu0 0
      %2170 = vmatpush1.bf16.msra.mxu0 %v2148
      %2171 = vmatprep.subr.bf16.mxu0 0
      %2172 = vmatpush2.bf16.msra.mxu0 0
      %2173 = vmatprep.subr.bf16.mxu0 0
      %2174 = vmatpush2.bf16.msra.mxu0 0
      %2175 = vmatprep.subr.bf16.mxu0 0
      %2176 = vmatpush2.bf16.msra.mxu0 0
      %2177 = vmatprep.subr.bf16.mxu0 0
      %2178 = vmatpush2.bf16.msra.mxu0 0
      %2179 = vmatprep.subr.bf16.mxu0 0
      %2180 = vmatpush2.bf16.msra.mxu0 0
      %2181 = vmatprep.subr.bf16.mxu0 0
      %2182 = vmatpush2.bf16.msra.mxu0 0
      %2183 = vmatprep.subr.bf16.mxu0 0
      %2184 = vmatpush2.bf16.msra.mxu0 0
      %2185 = vmatprep.subr.bf16.mxu0 0
      %2186 = vmatpush2.bf16.msra.mxu0 0
      %2187 = vmatprep.mubr.bf16.mxu0 0
      %2188 = vmatmul.mubr.bf16.gmra.mxu0 %v2153
      %v2189 = vpop.f32.mrf.mxu0
      %v2190 = vadd.f32 %v2138, %v2189
      %v2191 = vpop.f32.mrf.mxu0
      %v2192 = vpop.f32.mrf.mxu0
      %v2193 = vadd.f32 %v2138, %v2192
      %v2194 = vpop.f32.mrf.mxu0
      %2195 = vdwg.mxu0
      %v2196 = vadd.f32 %v2190, %v566
      %v2197 = vadd.f32 %v2193, %v567
      %v2200 = vcombine.high %v2196, %v2196
      %v2201 = vcombine.high %v2197, %v2197
      %vm2204 = vcmask 257024
      %2205 = vst.msk [vmem:[%s442] sm:$0xf] %vm2204, %v2196
      %2206 = vst.msk [vmem:[%s442 + $0x4] sm:$0xf] %vm2204, %v2200
      %2207 = vst.msk [vmem:[%s442 + $0x8] sm:$0xf] %vm2204, %v2197
      %2208 = vst.msk [vmem:[%s442 + $0xc] sm:$0xf] %vm2204, %v2201
      %s2209 = smul.u32 4, %s24
      %p2210 = scmp.lt.s32.totalorder %s2209, 7
      %s2211 = scalar_select %p2210, %s2209, 7
      %s2212 = smul.addr %s2211, 4
      %s2213 = scalar_lea.vmem %s13, %s2212
      // Predicated region
      $region73: #{_lambda_.11} parent=71 // pred_check
        %p2214 = pneg %p320
      $region74: #{_lambda_.11} parent=71 // pred_check_branch
        %2216 = sbr.rel (%p2214) target = $region76
      $region75: #{_lambda_.11} parent=71 // pred_region
        %s2217 = smul.u32 4, %s24
      $region76: #{_lambda_.11} parent=71 // pred_fallthru
        _
    $region72: #{_lambda_.11} parent=5 // pred_fallthru
      _
    %p2218 = scmp.le.s32.totalorder 2, %s19
    // Predicated region
    $region77: #{_lambda_.11} parent=5 // pred_check
      %p2219 = pneg %p2218
    $region78: #{_lambda_.11} parent=5 // pred_check_branch
      %2221 = sbr.rel (%p2219) target = $region80
    $region79: #{_lambda_.11} parent=5 // pred_region
      %s2222 = ssub.s32 %s19, 2
      // Predicated region
      $region81: #{_lambda_.11} parent=79 // pred_check
        %p2223 = pneg %p326
      $region82: #{_lambda_.11} parent=79 // pred_check_branch
        %2225 = sbr.rel (%p2223) target = $region84
      $region83: #{_lambda_.11} parent=79 // pred_region
        %s2226 = smul.u32 4, %s25
        %p2227 = scmp.lt.s32.totalorder %s2226, 7
        %s2228 = scalar_select %p2227, %s2226, 7
        %s2229 = smul.addr %s2228, 4
        %s2230 = scalar_lea.vmem %s13, %s2229
      $region84: #{_lambda_.11} parent=79 // pred_fallthru
        _
    $region80: #{_lambda_.11} parent=5 // pred_fallthru
      _
  $region6: #{_lambda_.11} parent=0 // loop_footer
    %s23 = sadd.s32 1, %s19
  $region7: #{_lambda_.11} parent=0 // loop_footer_branch
    %18 = sbr.rel target = $region3
  $region8: #{_lambda_.11} parent=0 // loop_exit
    _

// kernel: _lambda_.14
$region0: #{_lambda_.14}
  #allocation0 [shape = 'u32[]', space=smem, size = 0x4, offset = 0x4, fixed_abs, tag = 'smem constant byte address 0x4 - core index']
  #allocation1 [shape = 'u32[144,128]{1,0:T(1,128)}', space=vmem, size = 0x12000, scoped, tag = 'internal scratch']
  %s0 = inlined_call_operand.vmem [shape: f32[2,256], index: 0, kind: input, shape index: {}]
  %s1 = inlined_call_operand.vmem [shape: bf16[256,128], index: 1, kind: input, shape index: {}]
  %s2 = inlined_call_operand.vmem [shape: f32[1,128], index: 2, kind: input, shape index: {}]
  %s3 = inlined_call_operand.vmem [shape: f32[2,128], index: 3, kind: output, shape index: {}]
  %s4 = sld [smem:[#allocation0]]
  $region22: #{_lambda_.14} parent=0
    _
  %s6 = ssub.s32 1, %s4
  %s7 = scalar_select 0, %s6, %s4
  // Predicated region
  $region2: #{_lambda_.14} parent=0 // pred_check
    _
  $region3: #{_lambda_.14} parent=0 // pred_check_branch
    %9 = sbr.rel (0) target = $region5
  $region4: #{_lambda_.14} parent=0 // pred_region
    _
  $region5: #{_lambda_.14} parent=0 // pred_fallthru
    _
  // Predicated region
  $region6: #{_lambda_.14} parent=0 // pred_check
    _
  $region7: #{_lambda_.14} parent=0 // pred_check_branch
    %11 = sbr.rel (0) target = $region9
  $region8: #{_lambda_.14} parent=0 // pred_region
    _
  $region9: #{_lambda_.14} parent=0 // pred_fallthru
    _
  // Predicated region
  $region10: #{_lambda_.14} parent=0 // pred_check
    _
  $region11: #{_lambda_.14} parent=0 // pred_check_branch
    %13 = sbr.rel (0) target = $region13
  $region12: #{_lambda_.14} parent=0 // pred_region
    _
  $region13: #{_lambda_.14} parent=0 // pred_fallthru
    _
  %v15 = vld [vmem:[%s0] sm:$0xf]
  %v18 = vunpack.c.l.s4 1983009808
  %v19 = vunpack.c.0.s8 %v18
  %v20 = vlaneseq
  %v21 = vshrl.u32 %v20, 7
  %v22 = vsub.s32 %v19, %v21
  %v23 = vrot.slane %v15, %v22
  %v24 = vcombine.high %v23, %v23
  %v27 = vpack.c.bf16 %v23, %v23
  %v28 = vpack.c.bf16 %v24, %v24
  %v29 = vld [vmem:[%s1] sm:$0xf]
  %v30 = vld [vmem:[%s1 + $0x4] sm:$0xf]
  %v31 = vld [vmem:[%s1 + $0x8] sm:$0xf]
  %v32 = vld [vmem:[%s1 + $0xc] sm:$0xf]
  %v33 = vld [vmem:[%s1 + $0x10] sm:$0xf]
  %v34 = vld [vmem:[%s1 + $0x14] sm:$0xf]
  %v35 = vld [vmem:[%s1 + $0x18] sm:$0xf]
  %v36 = vld [vmem:[%s1 + $0x1c] sm:$0xf]
  %v37 = vld [vmem:[%s1 + $0x20] sm:$0xf]
  %v38 = vld [vmem:[%s1 + $0x24] sm:$0xf]
  %v39 = vld [vmem:[%s1 + $0x28] sm:$0xf]
  %v40 = vld [vmem:[%s1 + $0x2c] sm:$0xf]
  %v41 = vld [vmem:[%s1 + $0x30] sm:$0xf]
  %v42 = vld [vmem:[%s1 + $0x34] sm:$0xf]
  %v43 = vld [vmem:[%s1 + $0x38] sm:$0xf]
  %v44 = vld [vmem:[%s1 + $0x3c] sm:$0xf]
  %v45 = vld [vmem:[%s1 + $0x40] sm:$0xf]
  %v46 = vld [vmem:[%s1 + $0x44] sm:$0xf]
  %v47 = vld [vmem:[%s1 + $0x48] sm:$0xf]
  %v48 = vld [vmem:[%s1 + $0x4c] sm:$0xf]
  %v49 = vld [vmem:[%s1 + $0x50] sm:$0xf]
  %v50 = vld [vmem:[%s1 + $0x54] sm:$0xf]
  %v51 = vld [vmem:[%s1 + $0x58] sm:$0xf]
  %v52 = vld [vmem:[%s1 + $0x5c] sm:$0xf]
  %v53 = vld [vmem:[%s1 + $0x60] sm:$0xf]
  %v54 = vld [vmem:[%s1 + $0x64] sm:$0xf]
  %v55 = vld [vmem:[%s1 + $0x68] sm:$0xf]
  %v56 = vld [vmem:[%s1 + $0x6c] sm:$0xf]
  %v57 = vld [vmem:[%s1 + $0x70] sm:$0xf]
  %v58 = vld [vmem:[%s1 + $0x74] sm:$0xf]
  %v59 = vld [vmem:[%s1 + $0x78] sm:$0xf]
  %v60 = vld [vmem:[%s1 + $0x7c] sm:$0xf]
  %v61 = vld [vmem:[%s2] sm:$0x1]
  %v63 = vlaneseq
  %v64 = vshrl.u32 %v63, 7
  %v65 = vsub.s32 0, %v64
  %v66 = vrot.slane %v61, %v65
  %v100 = vunpack.c.l.b16 %v29
  %v101 = vunpack.c.l.b16 %v30
  %v102 = vunpack.c.l.b16 %v31
  %v103 = vunpack.c.l.b16 %v32
  %v104 = vunpack.c.l.b16 %v33
  %v105 = vunpack.c.l.b16 %v34
  %v106 = vunpack.c.l.b16 %v35
  %v107 = vunpack.c.l.b16 %v36
  %v108 = vunpack.c.l.b16 %v37
  %v109 = vunpack.c.l.b16 %v38
  %v110 = vunpack.c.l.b16 %v39
  %v111 = vunpack.c.l.b16 %v40
  %v112 = vunpack.c.l.b16 %v41
  %v113 = vunpack.c.l.b16 %v42
  %v114 = vunpack.c.l.b16 %v43
  %v115 = vunpack.c.l.b16 %v44
  %v116 = vunpack.c.l.b16 %v45
  %v117 = vunpack.c.l.b16 %v46
  %v118 = vunpack.c.l.b16 %v47
  %v119 = vunpack.c.l.b16 %v48
  %v120 = vunpack.c.l.b16 %v49
  %v121 = vunpack.c.l.b16 %v50
  %v122 = vunpack.c.l.b16 %v51
  %v123 = vunpack.c.l.b16 %v52
  %v124 = vunpack.c.l.b16 %v53
  %v125 = vunpack.c.l.b16 %v54
  %v126 = vunpack.c.l.b16 %v55
  %v127 = vunpack.c.l.b16 %v56
  %v128 = vunpack.c.l.b16 %v57
  %v129 = vunpack.c.l.b16 %v58
  %v130 = vunpack.c.l.b16 %v59
  %v131 = vunpack.c.l.b16 %v60
  %v132 = vpack.c.b16 %v101, %v100
  %v133 = vpack.c.b16 %v103, %v102
  %v134 = vpack.c.b16 %v105, %v104
  %v135 = vpack.c.b16 %v107, %v106
  %v136 = vpack.c.b16 %v109, %v108
  %v137 = vpack.c.b16 %v111, %v110
  %v138 = vpack.c.b16 %v113, %v112
  %v139 = vpack.c.b16 %v115, %v114
  %v140 = vpack.c.b16 %v117, %v116
  %v141 = vpack.c.b16 %v119, %v118
  %v142 = vpack.c.b16 %v121, %v120
  %v143 = vpack.c.b16 %v123, %v122
  %v144 = vpack.c.b16 %v125, %v124
  %v145 = vpack.c.b16 %v127, %v126
  %v146 = vpack.c.b16 %v129, %v128
  %v147 = vpack.c.b16 %v131, %v130
  %164 = vmatprep.subr.bf16.mxu0 0
  %165 = vmatpush1.bf16.msra.mxu0 %v139
  %166 = vmatprep.subr.bf16.mxu0 0
  %167 = vmatpush1.bf16.msra.mxu0 %v138
  %168 = vmatprep.subr.bf16.mxu0 0
  %169 = vmatpush1.bf16.msra.mxu0 %v137
  %170 = vmatprep.subr.bf16.mxu0 0
  %171 = vmatpush1.bf16.msra.mxu0 %v136
  %172 = vmatprep.subr.bf16.mxu0 0
  %173 = vmatpush1.bf16.msra.mxu0 %v135
  %174 = vmatprep.subr.bf16.mxu0 0
  %175 = vmatpush1.bf16.msra.mxu0 %v134
  %176 = vmatprep.subr.bf16.mxu0 0
  %177 = vmatpush1.bf16.msra.mxu0 %v133
  %178 = vmatprep.subr.bf16.mxu0 0
  %179 = vmatpush1.bf16.msra.mxu0 %v132
  %180 = vmatprep.subr.bf16.mxu0 0
  %181 = vmatpush2.bf16.msra.mxu0 %v147
  %182 = vmatprep.subr.bf16.mxu0 0
  %183 = vmatpush2.bf16.msra.mxu0 %v146
  %184 = vmatprep.subr.bf16.mxu0 0
  %185 = vmatpush2.bf16.msra.mxu0 %v145
  %186 = vmatprep.subr.bf16.mxu0 0
  %187 = vmatpush2.bf16.msra.mxu0 %v144
  %188 = vmatprep.subr.bf16.mxu0 0
  %189 = vmatpush2.bf16.msra.mxu0 %v143
  %190 = vmatprep.subr.bf16.mxu0 0
  %191 = vmatpush2.bf16.msra.mxu0 %v142
  %192 = vmatprep.subr.bf16.mxu0 0
  %193 = vmatpush2.bf16.msra.mxu0 %v141
  %194 = vmatprep.subr.bf16.mxu0 0
  %195 = vmatpush2.bf16.msra.mxu0 %v140
  %196 = vmatprep.mubr.bf16.mxu0 %v28
  %197 = vmatmul.mubr.bf16.gmra.mxu0 %v27
  %v198 = vpop.f32.mrf.mxu0
  %v199 = vadd.f32 %v66, %v198
  %v200 = vpop.f32.mrf.mxu0
  %v201 = vpop.f32.mrf.mxu0
  %v202 = vpop.f32.mrf.mxu0
  %203 = vdwg.mxu0
  %204 = vst [vmem:[%s3] sm:$0x3] %v199
  // Predicated region
  $region14: #{_lambda_.14} parent=0 // pred_check
    _
  $region15: #{_lambda_.14} parent=0 // pred_check_branch
    %206 = sbr.rel (0) target = $region17
  $region16: #{_lambda_.14} parent=0 // pred_region
    _
  $region17: #{_lambda_.14} parent=0 // pred_fallthru
    _
  // Predicated region
  $region18: #{_lambda_.14} parent=0 // pred_check
    _
  $region19: #{_lambda_.14} parent=0 // pred_check_branch
    %208 = sbr.rel (0) target = $region21
  $region20: #{_lambda_.14} parent=0 // pred_region
    _
  $region21: #{_lambda_.14} parent=0 // pred_fallthru
    _

// kernel: _lambda_.13
$region0: #{_lambda_.13}
  #allocation0 [shape = 'u32[]', space=smem, size = 0x4, offset = 0x4, fixed_abs, tag = 'smem constant byte address 0x4 - core index']
  #allocation1 [shape = 'u32[144,128]{1,0:T(1,128)}', space=vmem, size = 0x12000, scoped, tag = 'internal scratch']
  %s0 = inlined_call_operand.vmem [shape: f32[2,4,64], index: 0, kind: input, shape index: {}]
  %s1 = inlined_call_operand.vmem [shape: bf16[64,64], index: 1, kind: input, shape index: {}]
  %s2 = inlined_call_operand.vmem [shape: f32[1,64], index: 2, kind: input, shape index: {}]
  %s3 = inlined_call_operand.vmem [shape: bf16[2,64,32], index: 3, kind: input, shape index: {}]
  %s4 = inlined_call_operand.vmem [shape: bf16[2,64,32], index: 4, kind: input, shape index: {}]
  %s5 = inlined_call_operand.vmem [shape: bf16[2,64,32], index: 5, kind: input, shape index: {}]
  %s6 = inlined_call_operand.vmem [shape: f32[2,4,32], index: 6, kind: input, shape index: {}]
  %s7 = inlined_call_operand.vmem [shape: f32[2,4,32], index: 7, kind: input, shape index: {}]
  %s8 = inlined_call_operand.vmem [shape: f32[2,1,32], index: 8, kind: input, shape index: {}]
  %s9 = inlined_call_operand.vmem [shape: bf16[2,32,64], index: 9, kind: input, shape index: {}]
  %s10 = inlined_call_operand.vmem [shape: f32[1,64], index: 10, kind: input, shape index: {}]
  %s11 = inlined_call_operand.vmem [shape: bf16[64,64], index: 11, kind: input, shape index: {}]
  %s12 = inlined_call_operand.vmem [shape: f32[1,64], index: 12, kind: input, shape index: {}]
  %s13 = inlined_call_operand.vmem [shape: f32[2,4,64], index: 13, kind: output, shape index: {}]
  %s14 = sld [smem:[#allocation0]]
  $region85: #{_lambda_.13} parent=0
    _
  %s16 = ssub.s32 1, %s14
  %s17 = scalar_select 0, %s16, %s14
  loop: start=0, step=1, limit=4
  $region2: #{_lambda_.13} parent=0 // loop_pre_header
    _
  $region3: #{_lambda_.13} parent=0 // loop_header
    %s19 = sphi 0, %s23
    %p20 = scmp.ge.s32.totalorder %s19, 4
    %s29 = sphi 0, %s31
    %s32 = sphi 0, %s29
    %s33 = sphi 0, %s32
    %s49 = sphi 0, %s33
    %s53 = sphi 0, %s53
    %s55 = sphi 0, %s53
    %s56 = sphi 0, %s55
    %s70 = sphi 0, %s56
    %s74 = sphi 0, %s74
    %s76 = sphi 0, %s74
    %s77 = sphi 0, %s76
    %s91 = sphi 0, %s77
    %s95 = sphi 0, %s95
    %s97 = sphi 0, %s95
    %s98 = sphi 0, %s97
    %s112 = sphi 0, %s98
    %s116 = sphi 0, %s116
    %s118 = sphi 0, %s116
    %s119 = sphi 0, %s118
    %s133 = sphi 0, %s119
    %s137 = sphi 0, %s137
    %s139 = sphi 0, %s137
    %s140 = sphi 0, %s139
    %s154 = sphi 0, %s140
    %s158 = sphi 0, %s158
    %s160 = sphi 0, %s158
    %s161 = sphi 0, %s160
    %s175 = sphi 0, %s161
    %s179 = sphi 0, %s179
    %s181 = sphi 0, %s179
    %s182 = sphi 0, %s181
    %s196 = sphi 0, %s182
    %s200 = sphi 0, %s200
    %s202 = sphi 0, %s200
    %s203 = sphi 0, %s202
    %s217 = sphi 0, %s203
    %s221 = sphi 0, %s221
    %s223 = sphi 0, %s221
    %s224 = sphi 0, %s223
    %s238 = sphi 0, %s224
    %s242 = sphi 0, %s242
    %s244 = sphi 0, %s242
    %s245 = sphi 0, %s244
    %s259 = sphi 0, %s245
    %s263 = sphi 0, %s263
    %s265 = sphi 0, %s263
    %s266 = sphi 0, %s265
    %s280 = sphi 0, %s266
    %s284 = sphi 0, %s284
    %s286 = sphi 0, %s284
    %s287 = sphi 0, %s286
    %s301 = sphi 0, %s287
    %s307 = sphi 0, %s309
    %s310 = sphi 0, %s307
    %s311 = sphi 0, %s310
    %s327 = sphi 0, %s311
  $region4: #{_lambda_.13} parent=0 // loop_header_branch
    %22 = sbr.rel (%p20) target = $region8
  $region5: #{_lambda_.13} parent=0 // loop_body
    %s24 = ssub.s32 %s19, 1
    %s25 = ssub.s32 %s19, 2
    %s26 = sadd.s32 %s19, 1
    %s27 = ssub.s32 %s19, %s26
    %p28 = scmp.eq.s32.totalorder %s27, 0
    %s30 = sadd.s32 %s29, 1
    %s31 = scalar_select %p28, %s29, %s30
    %p34 = pneg %p28
    %p35 = scmp.eq.s32.totalorder %s19, 1
    %p36 = por %p34, %p35
    %p37 = scmp.ne.s32.totalorder %s29, %s32
    %p38 = scmp.eq.s32.totalorder %s19, 0
    %p39 = por %p37, %p38
    %p40 = scmp.ne.s32.totalorder %s29, %s32
    %p41 = scmp.eq.s32.totalorder %s24, 1
    %p42 = por %p40, %p41
    %p43 = scmp.ne.s32.totalorder %s32, %s33
    %p44 = scmp.eq.s32.totalorder %s24, 0
    %p45 = por %p43, %p44
    %p46 = scmp.ne.s32.totalorder %s32, %s33
    %p47 = scmp.eq.s32.totalorder %s25, 1
    %p48 = por %p46, %p47
    %p50 = scmp.ne.s32.totalorder %s33, %s49
    %p51 = scmp.eq.s32.totalorder %s25, 0
    %p52 = por %p50, %p51
    %s54 = sadd.s32 %s53, 1
    %p57 = scmp.eq.s32.totalorder %s19, 1
    %p58 = scmp.ne.s32.totalorder %s53, %s55
    %p59 = scmp.eq.s32.totalorder %s19, 0
    %p60 = por %p58, %p59
    %p61 = scmp.ne.s32.totalorder %s53, %s55
    %p62 = scmp.eq.s32.totalorder %s24, 1
    %p63 = por %p61, %p62
    %p64 = scmp.ne.s32.totalorder %s55, %s56
    %p65 = scmp.eq.s32.totalorder %s24, 0
    %p66 = por %p64, %p65
    %p67 = scmp.ne.s32.totalorder %s55, %s56
    %p68 = scmp.eq.s32.totalorder %s25, 1
    %p69 = por %p67, %p68
    %p71 = scmp.ne.s32.totalorder %s56, %s70
    %p72 = scmp.eq.s32.totalorder %s25, 0
    %p73 = por %p71, %p72
    %s75 = sadd.s32 %s74, 1
    %p78 = scmp.eq.s32.totalorder %s19, 1
    %p79 = scmp.ne.s32.totalorder %s74, %s76
    %p80 = scmp.eq.s32.totalorder %s19, 0
    %p81 = por %p79, %p80
    %p82 = scmp.ne.s32.totalorder %s74, %s76
    %p83 = scmp.eq.s32.totalorder %s24, 1
    %p84 = por %p82, %p83
    %p85 = scmp.ne.s32.totalorder %s76, %s77
    %p86 = scmp.eq.s32.totalorder %s24, 0
    %p87 = por %p85, %p86
    %p88 = scmp.ne.s32.totalorder %s76, %s77
    %p89 = scmp.eq.s32.totalorder %s25, 1
    %p90 = por %p88, %p89
    %p92 = scmp.ne.s32.totalorder %s77, %s91
    %p93 = scmp.eq.s32.totalorder %s25, 0
    %p94 = por %p92, %p93
    %s96 = sadd.s32 %s95, 1
    %p99 = scmp.eq.s32.totalorder %s19, 1
    %p100 = scmp.ne.s32.totalorder %s95, %s97
    %p101 = scmp.eq.s32.totalorder %s19, 0
    %p102 = por %p100, %p101
    %p103 = scmp.ne.s32.totalorder %s95, %s97
    %p104 = scmp.eq.s32.totalorder %s24, 1
    %p105 = por %p103, %p104
    %p106 = scmp.ne.s32.totalorder %s97, %s98
    %p107 = scmp.eq.s32.totalorder %s24, 0
    %p108 = por %p106, %p107
    %p109 = scmp.ne.s32.totalorder %s97, %s98
    %p110 = scmp.eq.s32.totalorder %s25, 1
    %p111 = por %p109, %p110
    %p113 = scmp.ne.s32.totalorder %s98, %s112
    %p114 = scmp.eq.s32.totalorder %s25, 0
    %p115 = por %p113, %p114
    %s117 = sadd.s32 %s116, 1
    %p120 = scmp.eq.s32.totalorder %s19, 1
    %p121 = scmp.ne.s32.totalorder %s116, %s118
    %p122 = scmp.eq.s32.totalorder %s19, 0
    %p123 = por %p121, %p122
    %p124 = scmp.ne.s32.totalorder %s116, %s118
    %p125 = scmp.eq.s32.totalorder %s24, 1
    %p126 = por %p124, %p125
    %p127 = scmp.ne.s32.totalorder %s118, %s119
    %p128 = scmp.eq.s32.totalorder %s24, 0
    %p129 = por %p127, %p128
    %p130 = scmp.ne.s32.totalorder %s118, %s119
    %p131 = scmp.eq.s32.totalorder %s25, 1
    %p132 = por %p130, %p131
    %p134 = scmp.ne.s32.totalorder %s119, %s133
    %p135 = scmp.eq.s32.totalorder %s25, 0
    %p136 = por %p134, %p135
    %s138 = sadd.s32 %s137, 1
    %p141 = scmp.eq.s32.totalorder %s19, 1
    %p142 = scmp.ne.s32.totalorder %s137, %s139
    %p143 = scmp.eq.s32.totalorder %s19, 0
    %p144 = por %p142, %p143
    %p145 = scmp.ne.s32.totalorder %s137, %s139
    %p146 = scmp.eq.s32.totalorder %s24, 1
    %p147 = por %p145, %p146
    %p148 = scmp.ne.s32.totalorder %s139, %s140
    %p149 = scmp.eq.s32.totalorder %s24, 0
    %p150 = por %p148, %p149
    %p151 = scmp.ne.s32.totalorder %s139, %s140
    %p152 = scmp.eq.s32.totalorder %s25, 1
    %p153 = por %p151, %p152
    %p155 = scmp.ne.s32.totalorder %s140, %s154
    %p156 = scmp.eq.s32.totalorder %s25, 0
    %p157 = por %p155, %p156
    %s159 = sadd.s32 %s158, 1
    %p162 = scmp.eq.s32.totalorder %s19, 1
    %p163 = scmp.ne.s32.totalorder %s158, %s160
    %p164 = scmp.eq.s32.totalorder %s19, 0
    %p165 = por %p163, %p164
    %p166 = scmp.ne.s32.totalorder %s158, %s160
    %p167 = scmp.eq.s32.totalorder %s24, 1
    %p168 = por %p166, %p167
    %p169 = scmp.ne.s32.totalorder %s160, %s161
    %p170 = scmp.eq.s32.totalorder %s24, 0
    %p171 = por %p169, %p170
    %p172 = scmp.ne.s32.totalorder %s160, %s161
    %p173 = scmp.eq.s32.totalorder %s25, 1
    %p174 = por %p172, %p173
    %p176 = scmp.ne.s32.totalorder %s161, %s175
    %p177 = scmp.eq.s32.totalorder %s25, 0
    %p178 = por %p176, %p177
    %s180 = sadd.s32 %s179, 1
    %p183 = scmp.eq.s32.totalorder %s19, 1
    %p184 = scmp.ne.s32.totalorder %s179, %s181
    %p185 = scmp.eq.s32.totalorder %s19, 0
    %p186 = por %p184, %p185
    %p187 = scmp.ne.s32.totalorder %s179, %s181
    %p188 = scmp.eq.s32.totalorder %s24, 1
    %p189 = por %p187, %p188
    %p190 = scmp.ne.s32.totalorder %s181, %s182
    %p191 = scmp.eq.s32.totalorder %s24, 0
    %p192 = por %p190, %p191
    %p193 = scmp.ne.s32.totalorder %s181, %s182
    %p194 = scmp.eq.s32.totalorder %s25, 1
    %p195 = por %p193, %p194
    %p197 = scmp.ne.s32.totalorder %s182, %s196
    %p198 = scmp.eq.s32.totalorder %s25, 0
    %p199 = por %p197, %p198
    %s201 = sadd.s32 %s200, 1
    %p204 = scmp.eq.s32.totalorder %s19, 1
    %p205 = scmp.ne.s32.totalorder %s200, %s202
    %p206 = scmp.eq.s32.totalorder %s19, 0
    %p207 = por %p205, %p206
    %p208 = scmp.ne.s32.totalorder %s200, %s202
    %p209 = scmp.eq.s32.totalorder %s24, 1
    %p210 = por %p208, %p209
    %p211 = scmp.ne.s32.totalorder %s202, %s203
    %p212 = scmp.eq.s32.totalorder %s24, 0
    %p213 = por %p211, %p212
    %p214 = scmp.ne.s32.totalorder %s202, %s203
    %p215 = scmp.eq.s32.totalorder %s25, 1
    %p216 = por %p214, %p215
    %p218 = scmp.ne.s32.totalorder %s203, %s217
    %p219 = scmp.eq.s32.totalorder %s25, 0
    %p220 = por %p218, %p219
    %s222 = sadd.s32 %s221, 1
    %p225 = scmp.eq.s32.totalorder %s19, 1
    %p226 = scmp.ne.s32.totalorder %s221, %s223
    %p227 = scmp.eq.s32.totalorder %s19, 0
    %p228 = por %p226, %p227
    %p229 = scmp.ne.s32.totalorder %s221, %s223
    %p230 = scmp.eq.s32.totalorder %s24, 1
    %p231 = por %p229, %p230
    %p232 = scmp.ne.s32.totalorder %s223, %s224
    %p233 = scmp.eq.s32.totalorder %s24, 0
    %p234 = por %p232, %p233
    %p235 = scmp.ne.s32.totalorder %s223, %s224
    %p236 = scmp.eq.s32.totalorder %s25, 1
    %p237 = por %p235, %p236
    %p239 = scmp.ne.s32.totalorder %s224, %s238
    %p240 = scmp.eq.s32.totalorder %s25, 0
    %p241 = por %p239, %p240
    %s243 = sadd.s32 %s242, 1
    %p246 = scmp.eq.s32.totalorder %s19, 1
    %p247 = scmp.ne.s32.totalorder %s242, %s244
    %p248 = scmp.eq.s32.totalorder %s19, 0
    %p249 = por %p247, %p248
    %p250 = scmp.ne.s32.totalorder %s242, %s244
    %p251 = scmp.eq.s32.totalorder %s24, 1
    %p252 = por %p250, %p251
    %p253 = scmp.ne.s32.totalorder %s244, %s245
    %p254 = scmp.eq.s32.totalorder %s24, 0
    %p255 = por %p253, %p254
    %p256 = scmp.ne.s32.totalorder %s244, %s245
    %p257 = scmp.eq.s32.totalorder %s25, 1
    %p258 = por %p256, %p257
    %p260 = scmp.ne.s32.totalorder %s245, %s259
    %p261 = scmp.eq.s32.totalorder %s25, 0
    %p262 = por %p260, %p261
    %s264 = sadd.s32 %s263, 1
    %p267 = scmp.eq.s32.totalorder %s19, 1
    %p268 = scmp.ne.s32.totalorder %s263, %s265
    %p269 = scmp.eq.s32.totalorder %s19, 0
    %p270 = por %p268, %p269
    %p271 = scmp.ne.s32.totalorder %s263, %s265
    %p272 = scmp.eq.s32.totalorder %s24, 1
    %p273 = por %p271, %p272
    %p274 = scmp.ne.s32.totalorder %s265, %s266
    %p275 = scmp.eq.s32.totalorder %s24, 0
    %p276 = por %p274, %p275
    %p277 = scmp.ne.s32.totalorder %s265, %s266
    %p278 = scmp.eq.s32.totalorder %s25, 1
    %p279 = por %p277, %p278
    %p281 = scmp.ne.s32.totalorder %s266, %s280
    %p282 = scmp.eq.s32.totalorder %s25, 0
    %p283 = por %p281, %p282
    %s285 = sadd.s32 %s284, 1
    %p288 = scmp.eq.s32.totalorder %s19, 1
    %p289 = scmp.ne.s32.totalorder %s284, %s286
    %p290 = scmp.eq.s32.totalorder %s19, 0
    %p291 = por %p289, %p290
    %p292 = scmp.ne.s32.totalorder %s284, %s286
    %p293 = scmp.eq.s32.totalorder %s24, 1
    %p294 = por %p292, %p293
    %p295 = scmp.ne.s32.totalorder %s286, %s287
    %p296 = scmp.eq.s32.totalorder %s24, 0
    %p297 = por %p295, %p296
    %p298 = scmp.ne.s32.totalorder %s286, %s287
    %p299 = scmp.eq.s32.totalorder %s25, 1
    %p300 = por %p298, %p299
    %p302 = scmp.ne.s32.totalorder %s287, %s301
    %p303 = scmp.eq.s32.totalorder %s25, 0
    %p304 = por %p302, %p303
    %s305 = ssub.s32 %s19, %s26
    %p306 = scmp.eq.s32.totalorder %s305, 0
    %s308 = sadd.s32 %s307, 1
    %s309 = scalar_select %p306, %s307, %s308
    %p312 = pneg %p306
    %p313 = scmp.eq.s32.totalorder %s19, 1
    %p314 = por %p312, %p313
    %p315 = scmp.ne.s32.totalorder %s307, %s310
    %p316 = scmp.eq.s32.totalorder %s19, 0
    %p317 = por %p315, %p316
    %p318 = scmp.ne.s32.totalorder %s307, %s310
    %p319 = scmp.eq.s32.totalorder %s24, 1
    %p320 = por %p318, %p319
    %p321 = scmp.ne.s32.totalorder %s310, %s311
    %p322 = scmp.eq.s32.totalorder %s24, 0
    %p323 = por %p321, %p322
    %p324 = scmp.ne.s32.totalorder %s310, %s311
    %p325 = scmp.eq.s32.totalorder %s25, 1
    %p326 = por %p324, %p325
    %p328 = scmp.ne.s32.totalorder %s311, %s327
    %p329 = scmp.eq.s32.totalorder %s25, 0
    %p330 = por %p328, %p329
    %p331 = scmp.le.s32.totalorder 1, %s19
    %p332 = scmp.lt.s32.totalorder %s19, 3
    %p333 = pnand %p331, %p332
    %p334 = pneg %p333
    // Predicated region
    $region9: #{_lambda_.13} parent=5 // pred_check
      _
    $region10: #{_lambda_.13} parent=5 // pred_check_branch
      %336 = sbr.rel (%p333) target = $region12
    $region11: #{_lambda_.13} parent=5 // pred_region
      %s337 = ssub.s32 %s19, 1
      // Predicated region
      $region13: #{_lambda_.13} parent=11 // pred_check
        %p338 = pneg %p66
      $region14: #{_lambda_.13} parent=11 // pred_check_branch
        %340 = sbr.rel (%p338) target = $region16
      $region15: #{_lambda_.13} parent=11 // pred_region
        _
      $region16: #{_lambda_.13} parent=11 // pred_fallthru
        _
      // Predicated region
      $region17: #{_lambda_.13} parent=11 // pred_check
        %p341 = pneg %p87
      $region18: #{_lambda_.13} parent=11 // pred_check_branch
        %343 = sbr.rel (%p341) target = $region20
      $region19: #{_lambda_.13} parent=11 // pred_region
        _
      $region20: #{_lambda_.13} parent=11 // pred_fallthru
        _
      // Predicated region
      $region21: #{_lambda_.13} parent=11 // pred_check
        %p344 = pneg %p108
      $region22: #{_lambda_.13} parent=11 // pred_check_branch
        %346 = sbr.rel (%p344) target = $region24
      $region23: #{_lambda_.13} parent=11 // pred_region
        _
      $region24: #{_lambda_.13} parent=11 // pred_fallthru
        _
      // Predicated region
      $region25: #{_lambda_.13} parent=11 // pred_check
        %p347 = pneg %p129
      $region26: #{_lambda_.13} parent=11 // pred_check_branch
        %349 = sbr.rel (%p347) target = $region28
      $region27: #{_lambda_.13} parent=11 // pred_region
        _
      $region28: #{_lambda_.13} parent=11 // pred_fallthru
        _
      // Predicated region
      $region29: #{_lambda_.13} parent=11 // pred_check
        %p350 = pneg %p150
      $region30: #{_lambda_.13} parent=11 // pred_check_branch
        %352 = sbr.rel (%p350) target = $region32
      $region31: #{_lambda_.13} parent=11 // pred_region
        _
      $region32: #{_lambda_.13} parent=11 // pred_fallthru
        _
      // Predicated region
      $region33: #{_lambda_.13} parent=11 // pred_check
        %p353 = pneg %p171
      $region34: #{_lambda_.13} parent=11 // pred_check_branch
        %355 = sbr.rel (%p353) target = $region36
      $region35: #{_lambda_.13} parent=11 // pred_region
        _
      $region36: #{_lambda_.13} parent=11 // pred_fallthru
        _
      // Predicated region
      $region37: #{_lambda_.13} parent=11 // pred_check
        %p356 = pneg %p192
      $region38: #{_lambda_.13} parent=11 // pred_check_branch
        %358 = sbr.rel (%p356) target = $region40
      $region39: #{_lambda_.13} parent=11 // pred_region
        _
      $region40: #{_lambda_.13} parent=11 // pred_fallthru
        _
      // Predicated region
      $region41: #{_lambda_.13} parent=11 // pred_check
        %p359 = pneg %p213
      $region42: #{_lambda_.13} parent=11 // pred_check_branch
        %361 = sbr.rel (%p359) target = $region44
      $region43: #{_lambda_.13} parent=11 // pred_region
        _
      $region44: #{_lambda_.13} parent=11 // pred_fallthru
        _
      // Predicated region
      $region45: #{_lambda_.13} parent=11 // pred_check
        %p362 = pneg %p234
      $region46: #{_lambda_.13} parent=11 // pred_check_branch
        %364 = sbr.rel (%p362) target = $region48
      $region47: #{_lambda_.13} parent=11 // pred_region
        _
      $region48: #{_lambda_.13} parent=11 // pred_fallthru
        _
      // Predicated region
      $region49: #{_lambda_.13} parent=11 // pred_check
        %p365 = pneg %p255
      $region50: #{_lambda_.13} parent=11 // pred_check_branch
        %367 = sbr.rel (%p365) target = $region52
      $region51: #{_lambda_.13} parent=11 // pred_region
        _
      $region52: #{_lambda_.13} parent=11 // pred_fallthru
        _
      // Predicated region
      $region53: #{_lambda_.13} parent=11 // pred_check
        %p368 = pneg %p276
      $region54: #{_lambda_.13} parent=11 // pred_check_branch
        %370 = sbr.rel (%p368) target = $region56
      $region55: #{_lambda_.13} parent=11 // pred_region
        _
      $region56: #{_lambda_.13} parent=11 // pred_fallthru
        _
      // Predicated region
      $region57: #{_lambda_.13} parent=11 // pred_check
        %p371 = pneg %p297
      $region58: #{_lambda_.13} parent=11 // pred_check_branch
        %373 = sbr.rel (%p371) target = $region60
      $region59: #{_lambda_.13} parent=11 // pred_region
        _
      $region60: #{_lambda_.13} parent=11 // pred_fallthru
        _
    $region12: #{_lambda_.13} parent=5 // pred_fallthru
      _
    %p374 = scmp.lt.s32.totalorder %s19, 2
    // Predicated region
    $region61: #{_lambda_.13} parent=5 // pred_check
      %p375 = pneg %p374
    $region62: #{_lambda_.13} parent=5 // pred_check_branch
      %377 = sbr.rel (%p375) target = $region64
    $region63: #{_lambda_.13} parent=5 // pred_region
      // Predicated region
      $region65: #{_lambda_.13} parent=63 // pred_check
        %p378 = pneg %p39
      $region66: #{_lambda_.13} parent=63 // pred_check_branch
        %380 = sbr.rel (%p378) target = $region68
      $region67: #{_lambda_.13} parent=63 // pred_region
        %p381 = scmp.lt.s32.totalorder %s19, 1
        %s382 = scalar_select %p381, %s19, 1
        %s383 = smul.addr %s382, 4
        %s384 = scalar_lea.vmem %s0, %s383
      $region68: #{_lambda_.13} parent=63 // pred_fallthru
        _
    $region64: #{_lambda_.13} parent=5 // pred_fallthru
      _
    %p385 = scmp.le.s32.totalorder 1, %s19
    %p386 = scmp.lt.s32.totalorder %s19, 3
    %p387 = pnand %p385, %p386
    %p388 = pneg %p387
    // Predicated region
    $region69: #{_lambda_.13} parent=5 // pred_check
      _
    $region70: #{_lambda_.13} parent=5 // pred_check_branch
      %390 = sbr.rel (%p387) target = $region72
    $region71: #{_lambda_.13} parent=5 // pred_region
      %s391 = ssub.s32 %s19, 1
      %p392 = scmp.lt.s32.totalorder %s24, 1
      %s393 = scalar_select %p392, %s24, 1
      %s394 = smul.addr %s393, 4
      %s395 = scalar_lea.vmem %s0, %s394
      %p396 = pneg %p45
      %p397 = pneg %p42
      %p398 = pneg %p66
      %p399 = pneg %p63
      %p400 = pneg %p87
      %p401 = pneg %p84
      %p402 = pneg %p108
      %p403 = pneg %p105
      %p404 = pneg %p129
      %p405 = pneg %p126
      %p406 = pneg %p150
      %p407 = pneg %p147
      %p408 = pneg %p171
      %p409 = pneg %p168
      %p410 = pneg %p192
      %p411 = pneg %p189
      %p412 = pneg %p213
      %p413 = pneg %p210
      %p414 = pneg %p234
      %p415 = pneg %p231
      %p416 = pneg %p255
      %p417 = pneg %p252
      %p418 = pneg %p276
      %p419 = pneg %p273
      %p420 = pneg %p297
      %p421 = pneg %p294
      %p422 = pneg %p323
      %p423 = pneg %p320
      %p424 = scmp.lt.s32.totalorder %s24, 1
      %s425 = scalar_select %p424, %s24, 1
      %s426 = smul.addr %s425, 4
      %s427 = scalar_lea.vmem %s13, %s426
      %p428 = scmp.lt.s32.totalorder %s24, 1
      %s429 = scalar_select %p428, %s24, 1
      %s430 = smul.addr %s429, 4
      %s431 = scalar_lea.vmem %s0, %s430
      %p432 = scmp.lt.s32.totalorder %s24, 1
      %s433 = scalar_select %p432, %s24, 1
      %s434 = smul.addr %s433, 4
      %s435 = scalar_lea.vmem %s13, %s434
      %v437 = vld [vmem:[%s431] sm:$0xf]
      %v438 = vpack.c.bf16 %v437, %v437
      %v439 = vld [vmem:[%s1] sm:$0xf]
      %v440 = vld [vmem:[%s1 + $0x4] sm:$0xf]
      %v441 = vld [vmem:[%s1 + $0x8] sm:$0xf]
      %v442 = vld [vmem:[%s1 + $0xc] sm:$0xf]
      %v443 = vld [vmem:[%s1 + $0x10] sm:$0xf]
      %v444 = vld [vmem:[%s1 + $0x14] sm:$0xf]
      %v445 = vld [vmem:[%s1 + $0x18] sm:$0xf]
      %v446 = vld [vmem:[%s1 + $0x1c] sm:$0xf]
      %v447 = vld [vmem:[%s2] sm:$0x1]
      %v449 = vlaneseq
      %v450 = vshrl.u32 %v449, 7
      %v451 = vsub.s32 0, %v450
      %v452 = vrot.slane %v447, %v451
      %v462 = vunpack.c.l.b16 %v439
      %v463 = vunpack.c.l.b16 %v440
      %v464 = vunpack.c.l.b16 %v441
      %v465 = vunpack.c.l.b16 %v442
      %v466 = vunpack.c.l.b16 %v443
      %v467 = vunpack.c.l.b16 %v444
      %v468 = vunpack.c.l.b16 %v445
      %v469 = vunpack.c.l.b16 %v446
      %v470 = vpack.c.b16 %v463, %v462
      %v471 = vpack.c.b16 %v465, %v464
      %v472 = vpack.c.b16 %v467, %v466
      %v473 = vpack.c.b16 %v469, %v468
      %vm478 = vcmask 523264
      %v480 = vsel %vm478, %v438, 0
      %482 = vmatprep.subr.bf16.mxu0 0
      %483 = vmatpush1.bf16.msra.mxu0 0
      %484 = vmatprep.subr.bf16.mxu0 0
      %485 = vmatpush1.bf16.msra.mxu0 0
      %486 = vmatprep.subr.bf16.mxu0 0
      %487 = vmatpush1.bf16.msra.mxu0 0
      %488 = vmatprep.subr.bf16.mxu0 0
      %489 = vmatpush1.bf16.msra.mxu0 0
      %490 = vmatprep.subr.bf16.mxu0 0
      %491 = vmatpush1.bf16.msra.mxu0 %v473
      %492 = vmatprep.subr.bf16.mxu0 0
      %493 = vmatpush1.bf16.msra.mxu0 %v472
      %494 = vmatprep.subr.bf16.mxu0 0
      %495 = vmatpush1.bf16.msra.mxu0 %v471
      %496 = vmatprep.subr.bf16.mxu0 0
      %497 = vmatpush1.bf16.msra.mxu0 %v470
      %498 = vmatprep.subr.bf16.mxu0 0
      %499 = vmatpush2.bf16.msra.mxu0 0
      %500 = vmatprep.subr.bf16.mxu0 0
      %501 = vmatpush2.bf16.msra.mxu0 0
      %502 = vmatprep.subr.bf16.mxu0 0
      %503 = vmatpush2.bf16.msra.mxu0 0
      %504 = vmatprep.subr.bf16.mxu0 0
      %505 = vmatpush2.bf16.msra.mxu0 0
      %506 = vmatprep.subr.bf16.mxu0 0
      %507 = vmatpush2.bf16.msra.mxu0 0
      %508 = vmatprep.subr.bf16.mxu0 0
      %509 = vmatpush2.bf16.msra.mxu0 0
      %510 = vmatprep.subr.bf16.mxu0 0
      %511 = vmatpush2.bf16.msra.mxu0 0
      %512 = vmatprep.subr.bf16.mxu0 0
      %513 = vmatpush2.bf16.msra.mxu0 0
      %514 = vmatprep.mubr.bf16.mxu0 0
      %515 = vmatmul.mubr.bf16.gmra.mxu0 %v480
      %v516 = vpop.f32.mrf.mxu0
      %v517 = vadd.f32 %v452, %v516
      %v518 = vpop.f32.mrf.mxu0
      %v519 = vpop.f32.mrf.mxu0
      %v520 = vpop.f32.mrf.mxu0
      %521 = vdwg.mxu0
      %v522 = vand.u32 2147483647, %v517
      %v523 = vsub.f32 0.0, %v522
      %v524 = vmul.f32 %v523, 1.442695
      %v525 = vpow.pop %v524
      %v526 = vmul.f32 %v525, %v525
      %vm527 = vcmp.ge.f32.partialorder %v517, 0.0
      %v528 = vmul.f32 %v525, 2.0
      %v529 = vadd.f32 %v528, 1.0
      %v530 = vadd.f32 %v528, %v526
      %v531 = vsel %vm527, %v529, %v530
      %v532 = vmul.f32 %v526, 2.0
      %v533 = vadd.f32 %v529, %v532
      %v534 = vadd.f32 %v528, 2.0
      %v535 = vadd.f32 %v534, %v526
      %v536 = vsel %vm527, %v533, %v535
      %v537 = vrcp.pop %v536
      %v538 = vmul.f32 %v536, %v537
      %v539 = vsub.f32 2.0, %v538
      %v540 = vmul.f32 %v537, %v539
      %v541 = vmul.f32 %v517, %v531
      %v542 = vmul.f32 %v541, %v540
      %v543 = vpack.c.bf16 %v542, %v542
      %v544 = vld [vmem:[%s3] sm:$0xf]
      %v545 = vld [vmem:[%s3 + $0x4] sm:$0xf]
      %v546 = vld [vmem:[%s3 + $0x8] sm:$0xf]
      %v547 = vld [vmem:[%s3 + $0xc] sm:$0xf]
      %v548 = vld [vmem:[%s3 + $0x10] sm:$0xf]
      %v549 = vld [vmem:[%s3 + $0x14] sm:$0xf]
      %v550 = vld [vmem:[%s3 + $0x18] sm:$0xf]
      %v551 = vld [vmem:[%s3 + $0x1c] sm:$0xf]
      %v560 = vunpack.c.l.b16 %v544
      %v561 = vunpack.c.l.b16 %v545
      %v562 = vunpack.c.l.b16 %v546
      %v563 = vunpack.c.l.b16 %v547
      %v564 = vunpack.c.l.b16 %v548
      %v565 = vunpack.c.l.b16 %v549
      %v566 = vunpack.c.l.b16 %v550
      %v567 = vunpack.c.l.b16 %v551
      %v568 = vpack.c.b16 %v561, %v560
      %v569 = vpack.c.b16 %v563, %v562
      %v570 = vpack.c.b16 %v565, %v564
      %v571 = vpack.c.b16 %v567, %v566
      %v577 = vsel %vm478, %v543, 0
      %579 = vmatprep.subr.bf16.mxu0 0
      %580 = vmatpush1.bf16.msra.mxu0 0
      %581 = vmatprep.subr.bf16.mxu0 0
      %582 = vmatpush1.bf16.msra.mxu0 0
      %583 = vmatprep.subr.bf16.mxu0 0
      %584 = vmatpush1.bf16.msra.mxu0 0
      %585 = vmatprep.subr.bf16.mxu0 0
      %586 = vmatpush1.bf16.msra.mxu0 0
      %587 = vmatprep.subr.bf16.mxu0 0
      %588 = vmatpush1.bf16.msra.mxu0 %v571
      %589 = vmatprep.subr.bf16.mxu0 0
      %590 = vmatpush1.bf16.msra.mxu0 %v570
      %591 = vmatprep.subr.bf16.mxu0 0
      %592 = vmatpush1.bf16.msra.mxu0 %v569
      %593 = vmatprep.subr.bf16.mxu0 0
      %594 = vmatpush1.bf16.msra.mxu0 %v568
      %595 = vmatprep.subr.bf16.mxu0 0
      %596 = vmatpush2.bf16.msra.mxu0 0
      %597 = vmatprep.subr.bf16.mxu0 0
      %598 = vmatpush2.bf16.msra.mxu0 0
      %599 = vmatprep.subr.bf16.mxu0 0
      %600 = vmatpush2.bf16.msra.mxu0 0
      %601 = vmatprep.subr.bf16.mxu0 0
      %602 = vmatpush2.bf16.msra.mxu0 0
      %603 = vmatprep.subr.bf16.mxu0 0
      %604 = vmatpush2.bf16.msra.mxu0 0
      %605 = vmatprep.subr.bf16.mxu0 0
      %606 = vmatpush2.bf16.msra.mxu0 0
      %607 = vmatprep.subr.bf16.mxu0 0
      %608 = vmatpush2.bf16.msra.mxu0 0
      %609 = vmatprep.subr.bf16.mxu0 0
      %610 = vmatpush2.bf16.msra.mxu0 0
      %611 = vmatprep.mubr.bf16.mxu0 0
      %612 = vmatmul.mubr.bf16.gmra.mxu0 %v577
      %v613 = vpop.f32.mrf.mxu0
      %v614 = vadd.f32 0.0, %v613
      %v615 = vpop.f32.mrf.mxu0
      %v616 = vpop.f32.mrf.mxu0
      %v617 = vpop.f32.mrf.mxu0
      %618 = vdwg.mxu0
      %v619 = vld [vmem:[%s4] sm:$0xf]
      %v620 = vld [vmem:[%s4 + $0x4] sm:$0xf]
      %v621 = vld [vmem:[%s4 + $0x8] sm:$0xf]
      %v622 = vld [vmem:[%s4 + $0xc] sm:$0xf]
      %v623 = vld [vmem:[%s4 + $0x10] sm:$0xf]
      %v624 = vld [vmem:[%s4 + $0x14] sm:$0xf]
      %v625 = vld [vmem:[%s4 + $0x18] sm:$0xf]
      %v626 = vld [vmem:[%s4 + $0x1c] sm:$0xf]
      %v635 = vunpack.c.l.b16 %v619
      %v636 = vunpack.c.l.b16 %v620
      %v637 = vunpack.c.l.b16 %v621
      %v638 = vunpack.c.l.b16 %v622
      %v639 = vunpack.c.l.b16 %v623
      %v640 = vunpack.c.l.b16 %v624
      %v641 = vunpack.c.l.b16 %v625
      %v642 = vunpack.c.l.b16 %v626
      %v643 = vpack.c.b16 %v636, %v635
      %v644 = vpack.c.b16 %v638, %v637
      %v645 = vpack.c.b16 %v640, %v639
      %v646 = vpack.c.b16 %v642, %v641
      %651 = vmatprep.subr.bf16.mxu0 0
      %652 = vmatpush1.bf16.msra.mxu0 0
      %653 = vmatprep.subr.bf16.mxu0 0
      %654 = vmatpush1.bf16.msra.mxu0 0
      %655 = vmatprep.subr.bf16.mxu0 0
      %656 = vmatpush1.bf16.msra.mxu0 0
      %657 = vmatprep.subr.bf16.mxu0 0
      %658 = vmatpush1.bf16.msra.mxu0 0
      %659 = vmatprep.subr.bf16.mxu0 0
      %660 = vmatpush1.bf16.msra.mxu0 %v646
      %661 = vmatprep.subr.bf16.mxu0 0
      %662 = vmatpush1.bf16.msra.mxu0 %v645
      %663 = vmatprep.subr.bf16.mxu0 0
      %664 = vmatpush1.bf16.msra.mxu0 %v644
      %665 = vmatprep.subr.bf16.mxu0 0
      %666 = vmatpush1.bf16.msra.mxu0 %v643
      %667 = vmatprep.subr.bf16.mxu0 0
      %668 = vmatpush2.bf16.msra.mxu0 0
      %669 = vmatprep.subr.bf16.mxu0 0
      %670 = vmatpush2.bf16.msra.mxu0 0
      %671 = vmatprep.subr.bf16.mxu0 0
      %672 = vmatpush2.bf16.msra.mxu0 0
      %673 = vmatprep.subr.bf16.mxu0 0
      %674 = vmatpush2.bf16.msra.mxu0 0
      %675 = vmatprep.subr.bf16.mxu0 0
      %676 = vmatpush2.bf16.msra.mxu0 0
      %677 = vmatprep.subr.bf16.mxu0 0
      %678 = vmatpush2.bf16.msra.mxu0 0
      %679 = vmatprep.subr.bf16.mxu0 0
      %680 = vmatpush2.bf16.msra.mxu0 0
      %681 = vmatprep.subr.bf16.mxu0 0
      %682 = vmatpush2.bf16.msra.mxu0 0
      %683 = vmatprep.mubr.bf16.mxu0 0
      %684 = vmatmul.mubr.bf16.gmra.mxu0 %v577
      %v685 = vpop.f32.mrf.mxu0
      %v686 = vadd.f32 0.0, %v685
      %v687 = vpop.f32.mrf.mxu0
      %v688 = vpop.f32.mrf.mxu0
      %v689 = vpop.f32.mrf.mxu0
      %690 = vdwg.mxu0
      %v691 = vld [vmem:[%s5] sm:$0xf]
      %v692 = vld [vmem:[%s5 + $0x4] sm:$0xf]
      %v693 = vld [vmem:[%s5 + $0x8] sm:$0xf]
      %v694 = vld [vmem:[%s5 + $0xc] sm:$0xf]
      %v695 = vld [vmem:[%s5 + $0x10] sm:$0xf]
      %v696 = vld [vmem:[%s5 + $0x14] sm:$0xf]
      %v697 = vld [vmem:[%s5 + $0x18] sm:$0xf]
      %v698 = vld [vmem:[%s5 + $0x1c] sm:$0xf]
      %v707 = vunpack.c.l.b16 %v691
      %v708 = vunpack.c.l.b16 %v692
      %v709 = vunpack.c.l.b16 %v693
      %v710 = vunpack.c.l.b16 %v694
      %v711 = vunpack.c.l.b16 %v695
      %v712 = vunpack.c.l.b16 %v696
      %v713 = vunpack.c.l.b16 %v697
      %v714 = vunpack.c.l.b16 %v698
      %v715 = vpack.c.b16 %v708, %v707
      %v716 = vpack.c.b16 %v710, %v709
      %v717 = vpack.c.b16 %v712, %v711
      %v718 = vpack.c.b16 %v714, %v713
      %723 = vmatprep.subr.bf16.mxu0 0
      %724 = vmatpush1.bf16.msra.mxu0 0
      %725 = vmatprep.subr.bf16.mxu0 0
      %726 = vmatpush1.bf16.msra.mxu0 0
      %727 = vmatprep.subr.bf16.mxu0 0
      %728 = vmatpush1.bf16.msra.mxu0 0
      %729 = vmatprep.subr.bf16.mxu0 0
      %730 = vmatpush1.bf16.msra.mxu0 0
      %731 = vmatprep.subr.bf16.mxu0 0
      %732 = vmatpush1.bf16.msra.mxu0 %v718
      %733 = vmatprep.subr.bf16.mxu0 0
      %734 = vmatpush1.bf16.msra.mxu0 %v717
      %735 = vmatprep.subr.bf16.mxu0 0
      %736 = vmatpush1.bf16.msra.mxu0 %v716
      %737 = vmatprep.subr.bf16.mxu0 0
      %738 = vmatpush1.bf16.msra.mxu0 %v715
      %739 = vmatprep.subr.bf16.mxu0 0
      %740 = vmatpush2.bf16.msra.mxu0 0
      %741 = vmatprep.subr.bf16.mxu0 0
      %742 = vmatpush2.bf16.msra.mxu0 0
      %743 = vmatprep.subr.bf16.mxu0 0
      %744 = vmatpush2.bf16.msra.mxu0 0
      %745 = vmatprep.subr.bf16.mxu0 0
      %746 = vmatpush2.bf16.msra.mxu0 0
      %747 = vmatprep.subr.bf16.mxu0 0
      %748 = vmatpush2.bf16.msra.mxu0 0
      %749 = vmatprep.subr.bf16.mxu0 0
      %750 = vmatpush2.bf16.msra.mxu0 0
      %751 = vmatprep.subr.bf16.mxu0 0
      %752 = vmatpush2.bf16.msra.mxu0 0
      %753 = vmatprep.subr.bf16.mxu0 0
      %754 = vmatpush2.bf16.msra.mxu0 0
      %755 = vmatprep.mubr.bf16.mxu0 0
      %756 = vmatmul.mubr.bf16.gmra.mxu0 %v577
      %v757 = vpop.f32.mrf.mxu0
      %v758 = vadd.f32 0.0, %v757
      %v759 = vpop.f32.mrf.mxu0
      %v760 = vpop.f32.mrf.mxu0
      %v761 = vpop.f32.mrf.mxu0
      %762 = vdwg.mxu0
      %v763 = vld [vmem:[%s6] sm:$0xf]
      %v764 = vadd.f32 %v614, %v763
      %v765 = vld [vmem:[%s7] sm:$0xf]
      %v766 = vadd.f32 %v686, %v765
      %v767 = vld [vmem:[%s8] sm:$0x1]
      %v769 = vlaneseq
      %v770 = vshrl.u32 %v769, 7
      %v771 = vsub.s32 0, %v770
      %v772 = vrot.slane %v767, %v771
      %v774 = vadd.f32 %v758, %v772
      %s775 = scalar_lea.vmem %s3, 32
      %v776 = vld [vmem:[%s775] sm:$0xf]
      %v777 = vld [vmem:[%s775 + $0x4] sm:$0xf]
      %v778 = vld [vmem:[%s775 + $0x8] sm:$0xf]
      %v779 = vld [vmem:[%s775 + $0xc] sm:$0xf]
      %v780 = vld [vmem:[%s775 + $0x10] sm:$0xf]
      %v781 = vld [vmem:[%s775 + $0x14] sm:$0xf]
      %v782 = vld [vmem:[%s775 + $0x18] sm:$0xf]
      %v783 = vld [vmem:[%s775 + $0x1c] sm:$0xf]
      %v792 = vunpack.c.l.b16 %v776
      %v793 = vunpack.c.l.b16 %v777
      %v794 = vunpack.c.l.b16 %v778
      %v795 = vunpack.c.l.b16 %v779
      %v796 = vunpack.c.l.b16 %v780
      %v797 = vunpack.c.l.b16 %v781
      %v798 = vunpack.c.l.b16 %v782
      %v799 = vunpack.c.l.b16 %v783
      %v800 = vpack.c.b16 %v793, %v792
      %v801 = vpack.c.b16 %v795, %v794
      %v802 = vpack.c.b16 %v797, %v796
      %v803 = vpack.c.b16 %v799, %v798
      %808 = vmatprep.subr.bf16.mxu0 0
      %809 = vmatpush1.bf16.msra.mxu0 0
      %810 = vmatprep.subr.bf16.mxu0 0
      %811 = vmatpush1.bf16.msra.mxu0 0
      %812 = vmatprep.subr.bf16.mxu0 0
      %813 = vmatpush1.bf16.msra.mxu0 0
      %814 = vmatprep.subr.bf16.mxu0 0
      %815 = vmatpush1.bf16.msra.mxu0 0
      %816 = vmatprep.subr.bf16.mxu0 0
      %817 = vmatpush1.bf16.msra.mxu0 %v803
      %818 = vmatprep.subr.bf16.mxu0 0
      %819 = vmatpush1.bf16.msra.mxu0 %v802
      %820 = vmatprep.subr.bf16.mxu0 0
      %821 = vmatpush1.bf16.msra.mxu0 %v801
      %822 = vmatprep.subr.bf16.mxu0 0
      %823 = vmatpush1.bf16.msra.mxu0 %v800
      %824 = vmatprep.subr.bf16.mxu0 0
      %825 = vmatpush2.bf16.msra.mxu0 0
      %826 = vmatprep.subr.bf16.mxu0 0
      %827 = vmatpush2.bf16.msra.mxu0 0
      %828 = vmatprep.subr.bf16.mxu0 0
      %829 = vmatpush2.bf16.msra.mxu0 0
      %830 = vmatprep.subr.bf16.mxu0 0
      %831 = vmatpush2.bf16.msra.mxu0 0
      %832 = vmatprep.subr.bf16.mxu0 0
      %833 = vmatpush2.bf16.msra.mxu0 0
      %834 = vmatprep.subr.bf16.mxu0 0
      %835 = vmatpush2.bf16.msra.mxu0 0
      %836 = vmatprep.subr.bf16.mxu0 0
      %837 = vmatpush2.bf16.msra.mxu0 0
      %838 = vmatprep.subr.bf16.mxu0 0
      %839 = vmatpush2.bf16.msra.mxu0 0
      %840 = vmatprep.mubr.bf16.mxu0 0
      %841 = vmatmul.mubr.bf16.gmra.mxu0 %v577
      %v842 = vpop.f32.mrf.mxu0
      %v843 = vadd.f32 0.0, %v842
      %v844 = vpop.f32.mrf.mxu0
      %v845 = vpop.f32.mrf.mxu0
      %v846 = vpop.f32.mrf.mxu0
      %847 = vdwg.mxu0
      %s848 = scalar_lea.vmem %s4, 32
      %v849 = vld [vmem:[%s848] sm:$0xf]
      %v850 = vld [vmem:[%s848 + $0x4] sm:$0xf]
      %v851 = vld [vmem:[%s848 + $0x8] sm:$0xf]
      %v852 = vld [vmem:[%s848 + $0xc] sm:$0xf]
      %v853 = vld [vmem:[%s848 + $0x10] sm:$0xf]
      %v854 = vld [vmem:[%s848 + $0x14] sm:$0xf]
      %v855 = vld [vmem:[%s848 + $0x18] sm:$0xf]
      %v856 = vld [vmem:[%s848 + $0x1c] sm:$0xf]
      %v865 = vunpack.c.l.b16 %v849
      %v866 = vunpack.c.l.b16 %v850
      %v867 = vunpack.c.l.b16 %v851
      %v868 = vunpack.c.l.b16 %v852
      %v869 = vunpack.c.l.b16 %v853
      %v870 = vunpack.c.l.b16 %v854
      %v871 = vunpack.c.l.b16 %v855
      %v872 = vunpack.c.l.b16 %v856
      %v873 = vpack.c.b16 %v866, %v865
      %v874 = vpack.c.b16 %v868, %v867
      %v875 = vpack.c.b16 %v870, %v869
      %v876 = vpack.c.b16 %v872, %v871
      %881 = vmatprep.subr.bf16.mxu0 0
      %882 = vmatpush1.bf16.msra.mxu0 0
      %883 = vmatprep.subr.bf16.mxu0 0
      %884 = vmatpush1.bf16.msra.mxu0 0
      %885 = vmatprep.subr.bf16.mxu0 0
      %886 = vmatpush1.bf16.msra.mxu0 0
      %887 = vmatprep.subr.bf16.mxu0 0
      %888 = vmatpush1.bf16.msra.mxu0 0
      %889 = vmatprep.subr.bf16.mxu0 0
      %890 = vmatpush1.bf16.msra.mxu0 %v876
      %891 = vmatprep.subr.bf16.mxu0 0
      %892 = vmatpush1.bf16.msra.mxu0 %v875
      %893 = vmatprep.subr.bf16.mxu0 0
      %894 = vmatpush1.bf16.msra.mxu0 %v874
      %895 = vmatprep.subr.bf16.mxu0 0
      %896 = vmatpush1.bf16.msra.mxu0 %v873
      %897 = vmatprep.subr.bf16.mxu0 0
      %898 = vmatpush2.bf16.msra.mxu0 0
      %899 = vmatprep.subr.bf16.mxu0 0
      %900 = vmatpush2.bf16.msra.mxu0 0
      %901 = vmatprep.subr.bf16.mxu0 0
      %902 = vmatpush2.bf16.msra.mxu0 0
      %903 = vmatprep.subr.bf16.mxu0 0
      %904 = vmatpush2.bf16.msra.mxu0 0
      %905 = vmatprep.subr.bf16.mxu0 0
      %906 = vmatpush2.bf16.msra.mxu0 0
      %907 = vmatprep.subr.bf16.mxu0 0
      %908 = vmatpush2.bf16.msra.mxu0 0
      %909 = vmatprep.subr.bf16.mxu0 0
      %910 = vmatpush2.bf16.msra.mxu0 0
      %911 = vmatprep.subr.bf16.mxu0 0
      %912 = vmatpush2.bf16.msra.mxu0 0
      %913 = vmatprep.mubr.bf16.mxu0 0
      %914 = vmatmul.mubr.bf16.gmra.mxu0 %v577
      %v915 = vpop.f32.mrf.mxu0
      %v916 = vadd.f32 0.0, %v915
      %v917 = vpop.f32.mrf.mxu0
      %v918 = vpop.f32.mrf.mxu0
      %v919 = vpop.f32.mrf.mxu0
      %920 = vdwg.mxu0
      %s921 = scalar_lea.vmem %s5, 32
      %v922 = vld [vmem:[%s921] sm:$0xf]
      %v923 = vld [vmem:[%s921 + $0x4] sm:$0xf]
      %v924 = vld [vmem:[%s921 + $0x8] sm:$0xf]
      %v925 = vld [vmem:[%s921 + $0xc] sm:$0xf]
      %v926 = vld [vmem:[%s921 + $0x10] sm:$0xf]
      %v927 = vld [vmem:[%s921 + $0x14] sm:$0xf]
      %v928 = vld [vmem:[%s921 + $0x18] sm:$0xf]
      %v929 = vld [vmem:[%s921 + $0x1c] sm:$0xf]
      %v938 = vunpack.c.l.b16 %v922
      %v939 = vunpack.c.l.b16 %v923
      %v940 = vunpack.c.l.b16 %v924
      %v941 = vunpack.c.l.b16 %v925
      %v942 = vunpack.c.l.b16 %v926
      %v943 = vunpack.c.l.b16 %v927
      %v944 = vunpack.c.l.b16 %v928
      %v945 = vunpack.c.l.b16 %v929
      %v946 = vpack.c.b16 %v939, %v938
      %v947 = vpack.c.b16 %v941, %v940
      %v948 = vpack.c.b16 %v943, %v942
      %v949 = vpack.c.b16 %v945, %v944
      %954 = vmatprep.subr.bf16.mxu0 0
      %955 = vmatpush1.bf16.msra.mxu0 0
      %956 = vmatprep.subr.bf16.mxu0 0
      %957 = vmatpush1.bf16.msra.mxu0 0
      %958 = vmatprep.subr.bf16.mxu0 0
      %959 = vmatpush1.bf16.msra.mxu0 0
      %960 = vmatprep.subr.bf16.mxu0 0
      %961 = vmatpush1.bf16.msra.mxu0 0
      %962 = vmatprep.subr.bf16.mxu0 0
      %963 = vmatpush1.bf16.msra.mxu0 %v949
      %964 = vmatprep.subr.bf16.mxu0 0
      %965 = vmatpush1.bf16.msra.mxu0 %v948
      %966 = vmatprep.subr.bf16.mxu0 0
      %967 = vmatpush1.bf16.msra.mxu0 %v947
      %968 = vmatprep.subr.bf16.mxu0 0
      %969 = vmatpush1.bf16.msra.mxu0 %v946
      %970 = vmatprep.subr.bf16.mxu0 0
      %971 = vmatpush2.bf16.msra.mxu0 0
      %972 = vmatprep.subr.bf16.mxu0 0
      %973 = vmatpush2.bf16.msra.mxu0 0
      %974 = vmatprep.subr.bf16.mxu0 0
      %975 = vmatpush2.bf16.msra.mxu0 0
      %976 = vmatprep.subr.bf16.mxu0 0
      %977 = vmatpush2.bf16.msra.mxu0 0
      %978 = vmatprep.subr.bf16.mxu0 0
      %979 = vmatpush2.bf16.msra.mxu0 0
      %980 = vmatprep.subr.bf16.mxu0 0
      %981 = vmatpush2.bf16.msra.mxu0 0
      %982 = vmatprep.subr.bf16.mxu0 0
      %983 = vmatpush2.bf16.msra.mxu0 0
      %984 = vmatprep.subr.bf16.mxu0 0
      %985 = vmatpush2.bf16.msra.mxu0 0
      %986 = vmatprep.mubr.bf16.mxu0 0
      %987 = vmatmul.mubr.bf16.gmra.mxu0 %v577
      %v988 = vpop.f32.mrf.mxu0
      %v989 = vadd.f32 0.0, %v988
      %v990 = vpop.f32.mrf.mxu0
      %v991 = vpop.f32.mrf.mxu0
      %v992 = vpop.f32.mrf.mxu0
      %993 = vdwg.mxu0
      %s994 = scalar_lea.vmem %s6, 4
      %v995 = vld [vmem:[%s994] sm:$0xf]
      %v996 = vadd.f32 %v843, %v995
      %s997 = scalar_lea.vmem %s7, 4
      %v998 = vld [vmem:[%s997] sm:$0xf]
      %v999 = vadd.f32 %v916, %v998
      %s1000 = scalar_lea.vmem %s8, 1
      %v1001 = vld [vmem:[%s1000] sm:$0x1]
      %v1003 = vlaneseq
      %v1004 = vshrl.u32 %v1003, 7
      %v1005 = vsub.s32 0, %v1004
      %v1006 = vrot.slane %v1001, %v1005
      %v1008 = vadd.f32 %v989, %v1006
      %v1009 = vpack.c.bf16 %v764, %v764
      %v1010 = vpack.c.bf16 %v996, %v996
      %v1011 = vpack.c.bf16 %v766, %v766
      %v1012 = vpack.c.bf16 %v999, %v999
      %v1013 = vpack.c.bf16 %v774, %v774
      %v1014 = vpack.c.bf16 %v1008, %v1008
      %vm1015 = vcmask 261120
      %v1017 = vsel %vm1015, %v1009, 0
      %v1020 = vsel %vm1015, %v1011, 0
      %1022 = vmatprep.subr.bf16.mxu0 0
      %1023 = vmatpush1.bf16.xpose.msra.mxu0 0
      %1024 = vmatprep.subr.bf16.mxu0 0
      %1025 = vmatpush1.bf16.xpose.msra.mxu0 0
      %1026 = vmatprep.subr.bf16.mxu0 0
      %1027 = vmatpush1.bf16.xpose.msra.mxu0 0
      %1028 = vmatprep.subr.bf16.mxu0 0
      %1029 = vmatpush1.bf16.xpose.msra.mxu0 0
      %1030 = vmatprep.subr.bf16.mxu0 0
      %1031 = vmatpush1.bf16.xpose.msra.mxu0 0
      %1032 = vmatprep.subr.bf16.mxu0 0
      %1033 = vmatpush1.bf16.xpose.msra.mxu0 0
      %1034 = vmatprep.subr.bf16.mxu0 0
      %1035 = vmatpush1.bf16.xpose.msra.mxu0 0
      %1036 = vmatprep.subr.bf16.mxu0 0
      %1037 = vmatpush1.bf16.xpose.msra.mxu0 %v1020
      %1038 = vmatprep.subr.bf16.mxu0 0
      %1039 = vmatpush2.bf16.xpose.msra.mxu0 0
      %1040 = vmatprep.subr.bf16.mxu0 0
      %1041 = vmatpush2.bf16.xpose.msra.mxu0 0
      %1042 = vmatprep.subr.bf16.mxu0 0
      %1043 = vmatpush2.bf16.xpose.msra.mxu0 0
      %1044 = vmatprep.subr.bf16.mxu0 0
      %1045 = vmatpush2.bf16.xpose.msra.mxu0 0
      %1046 = vmatprep.subr.bf16.mxu0 0
      %1047 = vmatpush2.bf16.xpose.msra.mxu0 0
      %1048 = vmatprep.subr.bf16.mxu0 0
      %1049 = vmatpush2.bf16.xpose.msra.mxu0 0
      %1050 = vmatprep.subr.bf16.mxu0 0
      %1051 = vmatpush2.bf16.xpose.msra.mxu0 0
      %1052 = vmatprep.subr.bf16.mxu0 0
      %1053 = vmatpush2.bf16.xpose.msra.mxu0 0
      %1054 = vmatprep.mubr.bf16.mxu0 0
      %1055 = vmatmul.mubr.bf16.gmra.mxu0 %v1017
      %v1056 = vpop.f32.mrf.mxu0
      %v1057 = vadd.f32 0.0, %v1056
      %v1058 = vpop.f32.mrf.mxu0
      %v1059 = vpop.f32.mrf.mxu0
      %v1060 = vpop.f32.mrf.mxu0
      %1061 = vdwg.mxu0
      %v1063 = vsel %vm1015, %v1010, 0
      %v1066 = vsel %vm1015, %v1012, 0
      %1068 = vmatprep.subr.bf16.mxu0 0
      %1069 = vmatpush1.bf16.xpose.msra.mxu0 0
      %1070 = vmatprep.subr.bf16.mxu0 0
      %1071 = vmatpush1.bf16.xpose.msra.mxu0 0
      %1072 = vmatprep.subr.bf16.mxu0 0
      %1073 = vmatpush1.bf16.xpose.msra.mxu0 0
      %1074 = vmatprep.subr.bf16.mxu0 0
      %1075 = vmatpush1.bf16.xpose.msra.mxu0 0
      %1076 = vmatprep.subr.bf16.mxu0 0
      %1077 = vmatpush1.bf16.xpose.msra.mxu0 0
      %1078 = vmatprep.subr.bf16.mxu0 0
      %1079 = vmatpush1.bf16.xpose.msra.mxu0 0
      %1080 = vmatprep.subr.bf16.mxu0 0
      %1081 = vmatpush1.bf16.xpose.msra.mxu0 0
      %1082 = vmatprep.subr.bf16.mxu0 0
      %1083 = vmatpush1.bf16.xpose.msra.mxu0 %v1066
      %1084 = vmatprep.subr.bf16.mxu0 0
      %1085 = vmatpush2.bf16.xpose.msra.mxu0 0
      %1086 = vmatprep.subr.bf16.mxu0 0
      %1087 = vmatpush2.bf16.xpose.msra.mxu0 0
      %1088 = vmatprep.subr.bf16.mxu0 0
      %1089 = vmatpush2.bf16.xpose.msra.mxu0 0
      %1090 = vmatprep.subr.bf16.mxu0 0
      %1091 = vmatpush2.bf16.xpose.msra.mxu0 0
      %1092 = vmatprep.subr.bf16.mxu0 0
      %1093 = vmatpush2.bf16.xpose.msra.mxu0 0
      %1094 = vmatprep.subr.bf16.mxu0 0
      %1095 = vmatpush2.bf16.xpose.msra.mxu0 0
      %1096 = vmatprep.subr.bf16.mxu0 0
      %1097 = vmatpush2.bf16.xpose.msra.mxu0 0
      %1098 = vmatprep.subr.bf16.mxu0 0
      %1099 = vmatpush2.bf16.xpose.msra.mxu0 0
      %1100 = vmatprep.mubr.bf16.mxu0 0
      %1101 = vmatmul.mubr.bf16.gmra.mxu0 %v1063
      %v1102 = vpop.f32.mrf.mxu0
      %v1103 = vadd.f32 0.0, %v1102
      %v1104 = vpop.f32.mrf.mxu0
      %v1105 = vpop.f32.mrf.mxu0
      %v1106 = vpop.f32.mrf.mxu0
      %1107 = vdwg.mxu0
      %v1108 = vmul.f32 %v1057, 0.17677669
      %v1109 = vmul.f32 %v1103, 0.17677669
      %vm1110 = vcmask 27648
      %v1111 = vsel %vm1110, %v1108, -inf
      %v1112 = vrot.slane %v1111, 4
      %v1113 = vmax.f32 %v1111, %v1112
      %v1114 = vrot.slane %v1113, 2
      %v1115 = vmax.f32 %v1113, %v1114
      %v1116 = vrot.slane %v1115, 1
      %v1117 = vmax.f32 %v1115, %v1116
      %v1118 = vsel %vm1110, %v1109, -inf
      %v1119 = vrot.slane %v1118, 4
      %v1120 = vmax.f32 %v1118, %v1119
      %v1121 = vrot.slane %v1120, 2
      %v1122 = vmax.f32 %v1120, %v1121
      %v1123 = vrot.slane %v1122, 1
      %v1124 = vmax.f32 %v1122, %v1123
      %v1125 = vsub.f32 %v1108, %v1117
      %v1126 = vsub.f32 %v1109, %v1124
      %v1127 = vmul.f32 %v1125, 1.442695
      %v1128 = vpow.pop %v1127
      %v1129 = vmul.f32 %v1126, 1.442695
      %v1130 = vpow.pop %v1129
      %v1131 = vsel %vm1110, %v1128, 0.0
      %v1132 = vrot.slane %v1131, 4
      %v1133 = vadd.f32 %v1131, %v1132
      %v1134 = vrot.slane %v1133, 2
      %v1135 = vadd.f32 %v1133, %v1134
      %v1136 = vrot.slane %v1135, 1
      %v1137 = vadd.f32 %v1135, %v1136
      %v1138 = vsel %vm1110, %v1130, 0.0
      %v1139 = vrot.slane %v1138, 4
      %v1140 = vadd.f32 %v1138, %v1139
      %v1141 = vrot.slane %v1140, 2
      %v1142 = vadd.f32 %v1140, %v1141
      %v1143 = vrot.slane %v1142, 1
      %v1144 = vadd.f32 %v1142, %v1143
      %v1145 = vrcp.pop %v1137
      %v1146 = vrcp.pop %v1144
      %v1147 = vmul.f32 %v1137, %v1145
      %v1148 = vmul.f32 %v1144, %v1146
      %v1149 = vsub.f32 2.0, %v1147
      %v1150 = vsub.f32 2.0, %v1148
      %v1151 = vmul.f32 %v1145, %v1149
      %v1152 = vmul.f32 %v1146, %v1150
      %v1153 = vmul.f32 %v1128, %v1151
      %v1154 = vmul.f32 %v1130, %v1152
      %v1155 = vpack.c.bf16 %v1153, %v1153
      %v1156 = vpack.c.bf16 %v1154, %v1154
      %vm1157 = vcmask 31744
      %v1159 = vsel %vm1157, %v1155, 0
      %vm1161 = vcmask 1041408
      %v1163 = vsel %vm1161, %v1013, 0
      %1165 = vmatprep.subr.bf16.mxu0 0
      %1166 = vmatpush1.bf16.msra.mxu0 0
      %1167 = vmatprep.subr.bf16.mxu0 0
      %1168 = vmatpush1.bf16.msra.mxu0 0
      %1169 = vmatprep.subr.bf16.mxu0 0
      %1170 = vmatpush1.bf16.msra.mxu0 0
      %1171 = vmatprep.subr.bf16.mxu0 0
      %1172 = vmatpush1.bf16.msra.mxu0 0
      %1173 = vmatprep.subr.bf16.mxu0 0
      %1174 = vmatpush1.bf16.msra.mxu0 0
      %1175 = vmatprep.subr.bf16.mxu0 0
      %1176 = vmatpush1.bf16.msra.mxu0 0
      %1177 = vmatprep.subr.bf16.mxu0 0
      %1178 = vmatpush1.bf16.msra.mxu0 0
      %1179 = vmatprep.subr.bf16.mxu0 0
      %1180 = vmatpush1.bf16.msra.mxu0 %v1163
      %1181 = vmatprep.subr.bf16.mxu0 0
      %1182 = vmatpush2.bf16.msra.mxu0 0
      %1183 = vmatprep.subr.bf16.mxu0 0
      %1184 = vmatpush2.bf16.msra.mxu0 0
      %1185 = vmatprep.subr.bf16.mxu0 0
      %1186 = vmatpush2.bf16.msra.mxu0 0
      %1187 = vmatprep.subr.bf16.mxu0 0
      %1188 = vmatpush2.bf16.msra.mxu0 0
      %1189 = vmatprep.subr.bf16.mxu0 0
      %1190 = vmatpush2.bf16.msra.mxu0 0
      %1191 = vmatprep.subr.bf16.mxu0 0
      %1192 = vmatpush2.bf16.msra.mxu0 0
      %1193 = vmatprep.subr.bf16.mxu0 0
      %1194 = vmatpush2.bf16.msra.mxu0 0
      %1195 = vmatprep.subr.bf16.mxu0 0
      %1196 = vmatpush2.bf16.msra.mxu0 0
      %1197 = vmatprep.mubr.bf16.mxu0 0
      %1198 = vmatmul.mubr.bf16.gmra.mxu0 %v1159
      %v1199 = vpop.f32.mrf.mxu0
      %v1200 = vadd.f32 0.0, %v1199
      %v1201 = vpop.f32.mrf.mxu0
      %v1202 = vpop.f32.mrf.mxu0
      %v1203 = vpop.f32.mrf.mxu0
      %1204 = vdwg.mxu0
      %v1206 = vsel %vm1157, %v1156, 0
      %v1209 = vsel %vm1161, %v1014, 0
      %1211 = vmatprep.subr.bf16.mxu0 0
      %1212 = vmatpush1.bf16.msra.mxu0 0
      %1213 = vmatprep.subr.bf16.mxu0 0
      %1214 = vmatpush1.bf16.msra.mxu0 0
      %1215 = vmatprep.subr.bf16.mxu0 0
      %1216 = vmatpush1.bf16.msra.mxu0 0
      %1217 = vmatprep.subr.bf16.mxu0 0
      %1218 = vmatpush1.bf16.msra.mxu0 0
      %1219 = vmatprep.subr.bf16.mxu0 0
      %1220 = vmatpush1.bf16.msra.mxu0 0
      %1221 = vmatprep.subr.bf16.mxu0 0
      %1222 = vmatpush1.bf16.msra.mxu0 0
      %1223 = vmatprep.subr.bf16.mxu0 0
      %1224 = vmatpush1.bf16.msra.mxu0 0
      %1225 = vmatprep.subr.bf16.mxu0 0
      %1226 = vmatpush1.bf16.msra.mxu0 %v1209
      %1227 = vmatprep.subr.bf16.mxu0 0
      %1228 = vmatpush2.bf16.msra.mxu0 0
      %1229 = vmatprep.subr.bf16.mxu0 0
      %1230 = vmatpush2.bf16.msra.mxu0 0
      %1231 = vmatprep.subr.bf16.mxu0 0
      %1232 = vmatpush2.bf16.msra.mxu0 0
      %1233 = vmatprep.subr.bf16.mxu0 0
      %1234 = vmatpush2.bf16.msra.mxu0 0
      %1235 = vmatprep.subr.bf16.mxu0 0
      %1236 = vmatpush2.bf16.msra.mxu0 0
      %1237 = vmatprep.subr.bf16.mxu0 0
      %1238 = vmatpush2.bf16.msra.mxu0 0
      %1239 = vmatprep.subr.bf16.mxu0 0
      %1240 = vmatpush2.bf16.msra.mxu0 0
      %1241 = vmatprep.subr.bf16.mxu0 0
      %1242 = vmatpush2.bf16.msra.mxu0 0
      %1243 = vmatprep.mubr.bf16.mxu0 0
      %1244 = vmatmul.mubr.bf16.gmra.mxu0 %v1206
      %v1245 = vpop.f32.mrf.mxu0
      %v1246 = vadd.f32 0.0, %v1245
      %v1247 = vpop.f32.mrf.mxu0
      %v1248 = vpop.f32.mrf.mxu0
      %v1249 = vpop.f32.mrf.mxu0
      %1250 = vdwg.mxu0
      %v1251 = vpack.c.bf16 %v1200, %v1200
      %v1252 = vld [vmem:[%s9] sm:$0xf]
      %v1253 = vld [vmem:[%s9 + $0x4] sm:$0xf]
      %v1254 = vld [vmem:[%s9 + $0x8] sm:$0xf]
      %v1255 = vld [vmem:[%s9 + $0xc] sm:$0xf]
      %v1256 = vpack.c.bf16 %v1246, %v1246
      %s1257 = scalar_lea.vmem %s9, 16
      %v1258 = vld [vmem:[%s1257] sm:$0xf]
      %v1259 = vld [vmem:[%s1257 + $0x4] sm:$0xf]
      %v1260 = vld [vmem:[%s1257 + $0x8] sm:$0xf]
      %v1261 = vld [vmem:[%s1257 + $0xc] sm:$0xf]
      %v1266 = vunpack.c.l.b16 %v1258
      %v1267 = vunpack.c.l.b16 %v1259
      %v1268 = vunpack.c.l.b16 %v1260
      %v1269 = vunpack.c.l.b16 %v1261
      %v1270 = vpack.c.b16 %v1267, %v1266
      %v1271 = vpack.c.b16 %v1269, %v1268
      %v1275 = vsel %vm1015, %v1256, 0
      %1277 = vmatprep.subr.bf16.mxu0 0
      %1278 = vmatpush1.bf16.msra.mxu0 0
      %1279 = vmatprep.subr.bf16.mxu0 0
      %1280 = vmatpush1.bf16.msra.mxu0 0
      %1281 = vmatprep.subr.bf16.mxu0 0
      %1282 = vmatpush1.bf16.msra.mxu0 0
      %1283 = vmatprep.subr.bf16.mxu0 0
      %1284 = vmatpush1.bf16.msra.mxu0 0
      %1285 = vmatprep.subr.bf16.mxu0 0
      %1286 = vmatpush1.bf16.msra.mxu0 0
      %1287 = vmatprep.subr.bf16.mxu0 0
      %1288 = vmatpush1.bf16.msra.mxu0 0
      %1289 = vmatprep.subr.bf16.mxu0 0
      %1290 = vmatpush1.bf16.msra.mxu0 %v1271
      %1291 = vmatprep.subr.bf16.mxu0 0
      %1292 = vmatpush1.bf16.msra.mxu0 %v1270
      %1293 = vmatprep.subr.bf16.mxu0 0
      %1294 = vmatpush2.bf16.msra.mxu0 0
      %1295 = vmatprep.subr.bf16.mxu0 0
      %1296 = vmatpush2.bf16.msra.mxu0 0
      %1297 = vmatprep.subr.bf16.mxu0 0
      %1298 = vmatpush2.bf16.msra.mxu0 0
      %1299 = vmatprep.subr.bf16.mxu0 0
      %1300 = vmatpush2.bf16.msra.mxu0 0
      %1301 = vmatprep.subr.bf16.mxu0 0
      %1302 = vmatpush2.bf16.msra.mxu0 0
      %1303 = vmatprep.subr.bf16.mxu0 0
      %1304 = vmatpush2.bf16.msra.mxu0 0
      %1305 = vmatprep.subr.bf16.mxu0 0
      %1306 = vmatpush2.bf16.msra.mxu0 0
      %1307 = vmatprep.subr.bf16.mxu0 0
      %1308 = vmatpush2.bf16.msra.mxu0 0
      %1309 = vmatprep.mubr.bf16.mxu0 0
      %1310 = vmatmul.mubr.bf16.gmra.mxu0 %v1275
      %v1311 = vpop.f32.mrf.mxu0
      %v1312 = vadd.f32 0.0, %v1311
      %v1313 = vpop.f32.mrf.mxu0
      %v1314 = vpop.f32.mrf.mxu0
      %v1315 = vpop.f32.mrf.mxu0
      %1316 = vdwg.mxu0
      %v1321 = vunpack.c.l.b16 %v1252
      %v1322 = vunpack.c.l.b16 %v1253
      %v1323 = vunpack.c.l.b16 %v1254
      %v1324 = vunpack.c.l.b16 %v1255
      %v1325 = vpack.c.b16 %v1322, %v1321
      %v1326 = vpack.c.b16 %v1324, %v1323
      %v1330 = vsel %vm1015, %v1251, 0
      %1332 = vmatprep.subr.bf16.mxu0 0
      %1333 = vmatpush1.bf16.msra.mxu0 0
      %1334 = vmatprep.subr.bf16.mxu0 0
      %1335 = vmatpush1.bf16.msra.mxu0 0
      %1336 = vmatprep.subr.bf16.mxu0 0
      %1337 = vmatpush1.bf16.msra.mxu0 0
      %1338 = vmatprep.subr.bf16.mxu0 0
      %1339 = vmatpush1.bf16.msra.mxu0 0
      %1340 = vmatprep.subr.bf16.mxu0 0
      %1341 = vmatpush1.bf16.msra.mxu0 0
      %1342 = vmatprep.subr.bf16.mxu0 0
      %1343 = vmatpush1.bf16.msra.mxu0 0
      %1344 = vmatprep.subr.bf16.mxu0 0
      %1345 = vmatpush1.bf16.msra.mxu0 %v1326
      %1346 = vmatprep.subr.bf16.mxu0 0
      %1347 = vmatpush1.bf16.msra.mxu0 %v1325
      %1348 = vmatprep.subr.bf16.mxu0 0
      %1349 = vmatpush2.bf16.msra.mxu0 0
      %1350 = vmatprep.subr.bf16.mxu0 0
      %1351 = vmatpush2.bf16.msra.mxu0 0
      %1352 = vmatprep.subr.bf16.mxu0 0
      %1353 = vmatpush2.bf16.msra.mxu0 0
      %1354 = vmatprep.subr.bf16.mxu0 0
      %1355 = vmatpush2.bf16.msra.mxu0 0
      %1356 = vmatprep.subr.bf16.mxu0 0
      %1357 = vmatpush2.bf16.msra.mxu0 0
      %1358 = vmatprep.subr.bf16.mxu0 0
      %1359 = vmatpush2.bf16.msra.mxu0 0
      %1360 = vmatprep.subr.bf16.mxu0 0
      %1361 = vmatpush2.bf16.msra.mxu0 0
      %1362 = vmatprep.subr.bf16.mxu0 0
      %1363 = vmatpush2.bf16.msra.mxu0 0
      %1364 = vmatprep.mubr.bf16.mxu0 0
      %1365 = vmatmul.mubr.bf16.gmra.mxu0 %v1330
      %v1366 = vpop.f32.mrf.mxu0
      %v1367 = vadd.f32 %v1312, %v1366
      %v1368 = vpop.f32.mrf.mxu0
      %v1369 = vpop.f32.mrf.mxu0
      %v1370 = vpop.f32.mrf.mxu0
      %1371 = vdwg.mxu0
      %v1372 = vld [vmem:[%s10] sm:$0x1]
      %v1374 = vlaneseq
      %v1375 = vshrl.u32 %v1374, 7
      %v1376 = vsub.s32 0, %v1375
      %v1377 = vrot.slane %v1372, %v1376
      %v1379 = vadd.f32 %v1367, %v1377
      %v1380 = vand.u32 2147483647, %v1379
      %v1381 = vsub.f32 0.0, %v1380
      %v1382 = vmul.f32 %v1381, 1.442695
      %v1383 = vpow.pop %v1382
      %v1384 = vmul.f32 %v1383, %v1383
      %vm1385 = vcmp.ge.f32.partialorder %v1379, 0.0
      %v1386 = vmul.f32 %v1383, 2.0
      %v1387 = vadd.f32 %v1386, 1.0
      %v1388 = vadd.f32 %v1386, %v1384
      %v1389 = vsel %vm1385, %v1387, %v1388
      %v1390 = vmul.f32 %v1384, 2.0
      %v1391 = vadd.f32 %v1387, %v1390
      %v1392 = vadd.f32 %v1386, 2.0
      %v1393 = vadd.f32 %v1392, %v1384
      %v1394 = vsel %vm1385, %v1391, %v1393
      %v1395 = vrcp.pop %v1394
      %v1396 = vmul.f32 %v1394, %v1395
      %v1397 = vsub.f32 2.0, %v1396
      %v1398 = vmul.f32 %v1395, %v1397
      %v1399 = vmul.f32 %v1379, %v1389
      %v1400 = vmul.f32 %v1399, %v1398
      %v1401 = vpack.c.bf16 %v1400, %v1400
      %v1402 = vld [vmem:[%s11] sm:$0xf]
      %v1403 = vld [vmem:[%s11 + $0x4] sm:$0xf]
      %v1404 = vld [vmem:[%s11 + $0x8] sm:$0xf]
      %v1405 = vld [vmem:[%s11 + $0xc] sm:$0xf]
      %v1406 = vld [vmem:[%s11 + $0x10] sm:$0xf]
      %v1407 = vld [vmem:[%s11 + $0x14] sm:$0xf]
      %v1408 = vld [vmem:[%s11 + $0x18] sm:$0xf]
      %v1409 = vld [vmem:[%s11 + $0x1c] sm:$0xf]
      %v1410 = vld [vmem:[%s12] sm:$0x1]
      %v1412 = vlaneseq
      %v1413 = vshrl.u32 %v1412, 7
      %v1414 = vsub.s32 0, %v1413
      %v1415 = vrot.slane %v1410, %v1414
      %v1425 = vunpack.c.l.b16 %v1402
      %v1426 = vunpack.c.l.b16 %v1403
      %v1427 = vunpack.c.l.b16 %v1404
      %v1428 = vunpack.c.l.b16 %v1405
      %v1429 = vunpack.c.l.b16 %v1406
      %v1430 = vunpack.c.l.b16 %v1407
      %v1431 = vunpack.c.l.b16 %v1408
      %v1432 = vunpack.c.l.b16 %v1409
      %v1433 = vpack.c.b16 %v1426, %v1425
      %v1434 = vpack.c.b16 %v1428, %v1427
      %v1435 = vpack.c.b16 %v1430, %v1429
      %v1436 = vpack.c.b16 %v1432, %v1431
      %v1442 = vsel %vm478, %v1401, 0
      %1444 = vmatprep.subr.bf16.mxu0 0
      %1445 = vmatpush1.bf16.msra.mxu0 0
      %1446 = vmatprep.subr.bf16.mxu0 0
      %1447 = vmatpush1.bf16.msra.mxu0 0
      %1448 = vmatprep.subr.bf16.mxu0 0
      %1449 = vmatpush1.bf16.msra.mxu0 0
      %1450 = vmatprep.subr.bf16.mxu0 0
      %1451 = vmatpush1.bf16.msra.mxu0 0
      %1452 = vmatprep.subr.bf16.mxu0 0
      %1453 = vmatpush1.bf16.msra.mxu0 %v1436
      %1454 = vmatprep.subr.bf16.mxu0 0
      %1455 = vmatpush1.bf16.msra.mxu0 %v1435
      %1456 = vmatprep.subr.bf16.mxu0 0
      %1457 = vmatpush1.bf16.msra.mxu0 %v1434
      %1458 = vmatprep.subr.bf16.mxu0 0
      %1459 = vmatpush1.bf16.msra.mxu0 %v1433
      %1460 = vmatprep.subr.bf16.mxu0 0
      %1461 = vmatpush2.bf16.msra.mxu0 0
      %1462 = vmatprep.subr.bf16.mxu0 0
      %1463 = vmatpush2.bf16.msra.mxu0 0
      %1464 = vmatprep.subr.bf16.mxu0 0
      %1465 = vmatpush2.bf16.msra.mxu0 0
      %1466 = vmatprep.subr.bf16.mxu0 0
      %1467 = vmatpush2.bf16.msra.mxu0 0
      %1468 = vmatprep.subr.bf16.mxu0 0
      %1469 = vmatpush2.bf16.msra.mxu0 0
      %1470 = vmatprep.subr.bf16.mxu0 0
      %1471 = vmatpush2.bf16.msra.mxu0 0
      %1472 = vmatprep.subr.bf16.mxu0 0
      %1473 = vmatpush2.bf16.msra.mxu0 0
      %1474 = vmatprep.subr.bf16.mxu0 0
      %1475 = vmatpush2.bf16.msra.mxu0 0
      %1476 = vmatprep.mubr.bf16.mxu0 0
      %1477 = vmatmul.mubr.bf16.gmra.mxu0 %v1442
      %v1478 = vpop.f32.mrf.mxu0
      %v1479 = vadd.f32 %v1415, %v1478
      %v1480 = vpop.f32.mrf.mxu0
      %v1481 = vpop.f32.mrf.mxu0
      %v1482 = vpop.f32.mrf.mxu0
      %1483 = vdwg.mxu0
      %v1484 = vadd.f32 %v1479, %v542
      %vm1485 = vcmask 519168
      %1486 = vst.msk [vmem:[%s435] sm:$0xf] %vm1485, %v1484
      %p1487 = scmp.lt.s32.totalorder %s24, 1
      %s1488 = scalar_select %p1487, %s24, 1
      %s1489 = smul.addr %s1488, 4
      %s1490 = scalar_lea.vmem %s13, %s1489
      // Predicated region
      $region73: #{_lambda_.13} parent=71 // pred_check
        %p1491 = pneg %p320
      $region74: #{_lambda_.13} parent=71 // pred_check_branch
        %1493 = sbr.rel (%p1491) target = $region76
      $region75: #{_lambda_.13} parent=71 // pred_region
        _
      $region76: #{_lambda_.13} parent=71 // pred_fallthru
        _
    $region72: #{_lambda_.13} parent=5 // pred_fallthru
      _
    %p1494 = scmp.le.s32.totalorder 2, %s19
    // Predicated region
    $region77: #{_lambda_.13} parent=5 // pred_check
      %p1495 = pneg %p1494
    $region78: #{_lambda_.13} parent=5 // pred_check_branch
      %1497 = sbr.rel (%p1495) target = $region80
    $region79: #{_lambda_.13} parent=5 // pred_region
      %s1498 = ssub.s32 %s19, 2
      // Predicated region
      $region81: #{_lambda_.13} parent=79 // pred_check
        %p1499 = pneg %p326
      $region82: #{_lambda_.13} parent=79 // pred_check_branch
        %1501 = sbr.rel (%p1499) target = $region84
      $region83: #{_lambda_.13} parent=79 // pred_region
        %p1502 = scmp.lt.s32.totalorder %s25, 1
        %s1503 = scalar_select %p1502, %s25, 1
        %s1504 = smul.addr %s1503, 4
        %s1505 = scalar_lea.vmem %s13, %s1504
      $region84: #{_lambda_.13} parent=79 // pred_fallthru
        _
    $region80: #{_lambda_.13} parent=5 // pred_fallthru
      _
  $region6: #{_lambda_.13} parent=0 // loop_footer
    %s23 = sadd.s32 1, %s19
  $region7: #{_lambda_.13} parent=0 // loop_footer_branch
    %18 = sbr.rel target = $region3
  $region8: #{_lambda_.13} parent=0 // loop_exit
    _

// kernel: _lambda_.15
$region0: #{_lambda_.15}
  #allocation0 [shape = 'u32[]', space=smem, size = 0x4, offset = 0x4, fixed_abs, tag = 'smem constant byte address 0x4 - core index']
  #allocation1 [shape = 'u32[144,128]{1,0:T(1,128)}', space=vmem, size = 0x12000, scoped, tag = 'internal scratch']
  %s0 = inlined_call_operand.vmem [shape: f32[2,128], index: 0, kind: input, shape index: {}]
  %s1 = inlined_call_operand.vmem [shape: bf16[128,128], index: 1, kind: input, shape index: {}]
  %s2 = inlined_call_operand.vmem [shape: f32[1,128], index: 2, kind: input, shape index: {}]
  %s3 = inlined_call_operand.hbm [shape: f32[2,128], index: 3, kind: output, shape index: {}]
  %s4 = sld [smem:[#allocation0]]
  $region22: #{_lambda_.15} parent=0
    _
  %s6 = ssub.s32 1, %s4
  %s7 = scalar_select 0, %s6, %s4
  $region1: #{_lambda_.15} parent=0
    #allocation2 [shape = 'u8[1024]{0}', space=vmem, size = 0x400, scoped, tag = 'output window, operand 0, single buffered']
    #allocation3 [shape = 's32[1]{0}', space=sflag, size = 0x4, scoped, tag = 'scoped memory for _lambda_.15']
    %8 = vsyncpa [#allocation3], 0
    // Predicated region
    $region2: #{_lambda_.15} parent=1 // pred_check
      _
    $region3: #{_lambda_.15} parent=1 // pred_check_branch
      %10 = sbr.rel (0) target = $region5
    $region4: #{_lambda_.15} parent=1 // pred_region
      _
    $region5: #{_lambda_.15} parent=1 // pred_fallthru
      _
    // Predicated region
    $region6: #{_lambda_.15} parent=1 // pred_check
      _
    $region7: #{_lambda_.15} parent=1 // pred_check_branch
      %12 = sbr.rel (0) target = $region9
    $region8: #{_lambda_.15} parent=1 // pred_region
      _
    $region9: #{_lambda_.15} parent=1 // pred_fallthru
      _
    // Predicated region
    $region10: #{_lambda_.15} parent=1 // pred_check
      _
    $region11: #{_lambda_.15} parent=1 // pred_check_branch
      %14 = sbr.rel (0) target = $region13
    $region12: #{_lambda_.15} parent=1 // pred_region
      _
    $region13: #{_lambda_.15} parent=1 // pred_fallthru
      _
    %v16 = vld [vmem:[%s0] sm:$0x3]
    %v17 = vpack.c.bf16 %v16, %v16
    %v18 = vld [vmem:[%s1] sm:$0xf]
    %v19 = vld [vmem:[%s1 + $0x4] sm:$0xf]
    %v20 = vld [vmem:[%s1 + $0x8] sm:$0xf]
    %v21 = vld [vmem:[%s1 + $0xc] sm:$0xf]
    %v22 = vld [vmem:[%s1 + $0x10] sm:$0xf]
    %v23 = vld [vmem:[%s1 + $0x14] sm:$0xf]
    %v24 = vld [vmem:[%s1 + $0x18] sm:$0xf]
    %v25 = vld [vmem:[%s1 + $0x1c] sm:$0xf]
    %v26 = vld [vmem:[%s1 + $0x20] sm:$0xf]
    %v27 = vld [vmem:[%s1 + $0x24] sm:$0xf]
    %v28 = vld [vmem:[%s1 + $0x28] sm:$0xf]
    %v29 = vld [vmem:[%s1 + $0x2c] sm:$0xf]
    %v30 = vld [vmem:[%s1 + $0x30] sm:$0xf]
    %v31 = vld [vmem:[%s1 + $0x34] sm:$0xf]
    %v32 = vld [vmem:[%s1 + $0x38] sm:$0xf]
    %v33 = vld [vmem:[%s1 + $0x3c] sm:$0xf]
    %v34 = vld [vmem:[%s2] sm:$0x1]
    %v36 = vlaneseq
    %v37 = vshrl.u32 %v36, 7
    %v38 = vsub.s32 0, %v37
    %v39 = vrot.slane %v34, %v38
    %v57 = vunpack.c.l.b16 %v18
    %v58 = vunpack.c.l.b16 %v19
    %v59 = vunpack.c.l.b16 %v20
    %v60 = vunpack.c.l.b16 %v21
    %v61 = vunpack.c.l.b16 %v22
    %v62 = vunpack.c.l.b16 %v23
    %v63 = vunpack.c.l.b16 %v24
    %v64 = vunpack.c.l.b16 %v25
    %v65 = vunpack.c.l.b16 %v26
    %v66 = vunpack.c.l.b16 %v27
    %v67 = vunpack.c.l.b16 %v28
    %v68 = vunpack.c.l.b16 %v29
    %v69 = vunpack.c.l.b16 %v30
    %v70 = vunpack.c.l.b16 %v31
    %v71 = vunpack.c.l.b16 %v32
    %v72 = vunpack.c.l.b16 %v33
    %v73 = vpack.c.b16 %v58, %v57
    %v74 = vpack.c.b16 %v60, %v59
    %v75 = vpack.c.b16 %v62, %v61
    %v76 = vpack.c.b16 %v64, %v63
    %v77 = vpack.c.b16 %v66, %v65
    %v78 = vpack.c.b16 %v68, %v67
    %v79 = vpack.c.b16 %v70, %v69
    %v80 = vpack.c.b16 %v72, %v71
    %89 = vmatprep.subr.bf16.mxu0 0
    %90 = vmatpush1.bf16.msra.mxu0 %v80
    %91 = vmatprep.subr.bf16.mxu0 0
    %92 = vmatpush1.bf16.msra.mxu0 %v79
    %93 = vmatprep.subr.bf16.mxu0 0
    %94 = vmatpush1.bf16.msra.mxu0 %v78
    %95 = vmatprep.subr.bf16.mxu0 0
    %96 = vmatpush1.bf16.msra.mxu0 %v77
    %97 = vmatprep.subr.bf16.mxu0 0
    %98 = vmatpush1.bf16.msra.mxu0 %v76
    %99 = vmatprep.subr.bf16.mxu0 0
    %100 = vmatpush1.bf16.msra.mxu0 %v75
    %101 = vmatprep.subr.bf16.mxu0 0
    %102 = vmatpush1.bf16.msra.mxu0 %v74
    %103 = vmatprep.subr.bf16.mxu0 0
    %104 = vmatpush1.bf16.msra.mxu0 %v73
    %105 = vmatprep.subr.bf16.mxu0 0
    %106 = vmatpush2.bf16.msra.mxu0 0
    %107 = vmatprep.subr.bf16.mxu0 0
    %108 = vmatpush2.bf16.msra.mxu0 0
    %109 = vmatprep.subr.bf16.mxu0 0
    %110 = vmatpush2.bf16.msra.mxu0 0
    %111 = vmatprep.subr.bf16.mxu0 0
    %112 = vmatpush2.bf16.msra.mxu0 0
    %113 = vmatprep.subr.bf16.mxu0 0
    %114 = vmatpush2.bf16.msra.mxu0 0
    %115 = vmatprep.subr.bf16.mxu0 0
    %116 = vmatpush2.bf16.msra.mxu0 0
    %117 = vmatprep.subr.bf16.mxu0 0
    %118 = vmatpush2.bf16.msra.mxu0 0
    %119 = vmatprep.subr.bf16.mxu0 0
    %120 = vmatpush2.bf16.msra.mxu0 0
    %121 = vmatprep.mubr.bf16.mxu0 0
    %122 = vmatmul.mubr.bf16.gmra.mxu0 %v17
    %v123 = vpop.f32.mrf.mxu0
    %v124 = vadd.f32 %v39, %v123
    %v125 = vpop.f32.mrf.mxu0
    %v126 = vpop.f32.mrf.mxu0
    %v127 = vpop.f32.mrf.mxu0
    %128 = vdwg.mxu0
    %v129 = vand.u32 2147483647, %v124
    %v130 = vsub.f32 0.0, %v129
    %v131 = vmul.f32 %v130, 1.442695
    %v132 = vpow.pop %v131
    %v133 = vmul.f32 %v132, %v132
    %vm134 = vcmp.ge.f32.partialorder %v124, 0.0
    %v135 = vmul.f32 %v132, 2.0
    %v136 = vadd.f32 %v135, 1.0
    %v137 = vadd.f32 %v135, %v133
    %v138 = vsel %vm134, %v136, %v137
    %v139 = vmul.f32 %v133, 2.0
    %v140 = vadd.f32 %v136, %v139
    %v141 = vadd.f32 %v135, 2.0
    %v142 = vadd.f32 %v141, %v133
    %v143 = vsel %vm134, %v140, %v142
    %v144 = vrcp.pop %v143
    %v145 = vmul.f32 %v143, %v144
    %v146 = vsub.f32 2.0, %v145
    %v147 = vmul.f32 %v144, %v146
    %v148 = vmul.f32 %v124, %v138
    %v149 = vmul.f32 %v148, %v147
    %150 = vst [vmem:[#allocation2] sm:$0x3] %v149
    // Predicated region
    $region14: #{_lambda_.15} parent=1 // pred_check
      _
    $region15: #{_lambda_.15} parent=1 // pred_check_branch
      %152 = sbr.rel (0) target = $region17
    $region16: #{_lambda_.15} parent=1 // pred_region
      %s154 = ssub.s32 32, 32
      %155 = vsyncadd [#allocation3], %s154
      %s157 = sshll.u32 [#allocation2], 4
      %s158 = int_to_ptr.vmem [resolvable:$true] %s157
      %160 = dma.vmem_to_hbm [thread:$0]  %s158, 32, %s3, [#allocation3]
    $region17: #{_lambda_.15} parent=1 // pred_fallthru
      _
    // Predicated region
    $region18: #{_lambda_.15} parent=1 // pred_check
      _
    $region19: #{_lambda_.15} parent=1 // pred_check_branch
      %162 = sbr.rel (0) target = $region21
    $region20: #{_lambda_.15} parent=1 // pred_region
      %163 = dma.done [#allocation3], 32
    $region21: #{_lambda_.15} parent=1 // pred_fallthru
      _
    %164 = vsyncpa [#allocation3], 1

</llo_original>
